<compile_context>
chip_gen: v5e
topology: v5e:2x2
jax: 0.10.0
libtpu: 0.0.40
codegen_flags: <defaults>
</compile_context>

<pallas_src>
import functools

import jax
import jax.numpy as jnp
from jax import lax
from jax.experimental import pallas as pl
from jax.experimental.pallas import tpu as pltpu


def _round_up(x, m):
    return (x + m - 1) // m * m


# ---------------------------------------------------------------------------
# Pallas kernel: Y = ELU(X @ W + b), tiled over rows of X.  X/W are bf16,
# accumulation + bias + ELU in f32, output stored in o_ref.dtype.
# ---------------------------------------------------------------------------
def _mm_bias_elu_kernel(x_ref, w_ref, b_ref, o_ref):
    y = jnp.dot(x_ref[...], w_ref[...], preferred_element_type=jnp.float32)
    y = y + b_ref[...]
    # ELU(alpha=1); exp only sees non-positive arguments (no inf on the dead branch).
    y = jnp.where(y > 0, y, jnp.exp(jnp.minimum(y, 0.0)) - 1.0)
    o_ref[...] = y.astype(o_ref.dtype)


def matmul_bias_elu(x, w, b, out_dtype=jnp.bfloat16):
    """x: (M, K), w: (K, N), b: (N,)  ->  ELU(x @ w + b): (M, N) in out_dtype."""
    M, K = x.shape
    N = w.shape[1]
    Kp = _round_up(K, 128)
    Np = _round_up(N, 128)
    TM = 512 if M >= 512 else _round_up(max(M, 1), 8)
    Mp = _round_up(M, TM)

    xb = x.astype(jnp.bfloat16)
    wb = w.astype(jnp.bfloat16)
    if (Mp, Kp) != (M, K):
        xb = jnp.pad(xb, ((0, Mp - M), (0, Kp - K)))
    if (Kp, Np) != (K, N):
        wb = jnp.pad(wb, ((0, Kp - K), (0, Np - N)))
    bp = jnp.pad(b.astype(jnp.float32), (0, Np - N)).reshape(1, Np)

    out = pl.pallas_call(
        _mm_bias_elu_kernel,
        out_shape=jax.ShapeDtypeStruct((Mp, Np), out_dtype),
        grid=(Mp // TM,),
        in_specs=[
            pl.BlockSpec((TM, Kp), lambda i: (i, 0)),
            pl.BlockSpec((Kp, Np), lambda i: (0, 0)),
            pl.BlockSpec((1, Np), lambda i: (0, 0)),
        ],
        out_specs=pl.BlockSpec((TM, Np), lambda i: (i, 0)),
        compiler_params=pltpu.CompilerParams(dimension_semantics=("parallel",)),
        cost_estimate=pl.CostEstimate(
            flops=2 * Mp * Kp * Np,
            transcendentals=Mp * Np,
            bytes_accessed=(Mp * Kp + Kp * Np) * 2
            + Mp * Np * jnp.dtype(out_dtype).itemsize,
        ),
    )(xb, wb, bp)
    return out[:M, :N]


# ---------------------------------------------------------------------------
# Conv via NHWC im2col (glue in plain JAX, no activation transposes)
# + Pallas matmul kernel for the hot path.
# ---------------------------------------------------------------------------
def conv2d_elu_nhwc(x, w, b, stride):
    """x: (N, H, W, Cin) ; w: (Cout, Cin, k, k) torch layout ; b: (Cout,)."""
    Cout, Cin, k, _ = w.shape
    Nb, H, W, _ = x.shape
    Ho = (H - k) // stride + 1
    Wo = (W - k) // stride + 1
    cols = []
    for kh in range(k):
        for kw in range(k):
            cols.append(
                x[:, kh:kh + stride * Ho:stride, kw:kw + stride * Wo:stride, :]
            )
    patches = jnp.concatenate(cols, axis=-1)          # (N, Ho, Wo, k*k*Cin), (kh,kw,ci) order
    xm = patches.reshape(Nb * Ho * Wo, k * k * Cin)
    wm = w.transpose(2, 3, 1, 0).reshape(k * k * Cin, Cout)  # rows in (kh,kw,ci) order
    y = matmul_bias_elu(xm, wm, b, out_dtype=jnp.bfloat16)   # (N*Ho*Wo, Cout)
    return y.reshape(Nb, Ho, Wo, Cout)                       # stay NHWC


# ---------------------------------------------------------------------------
# Fused FC head: fc1+ELU -> fc2+ELU -> fc3 -> masked softmax, one pallas_call.
# All (padded) weights live untiled in VMEM (< 1 MB total).
# ---------------------------------------------------------------------------
def _fc_head_kernel(x_ref, w1_ref, b1_ref, w2_ref, b2_ref, w3_ref, b3_ref,
                    o_ref, *, n_classes):
    h = jnp.dot(x_ref[...], w1_ref[...], preferred_element_type=jnp.float32)
    h = h + b1_ref[...]
    h = jnp.where(h > 0, h, jnp.exp(jnp.minimum(h, 0.0)) - 1.0)

    h = jnp.dot(h.astype(jnp.bfloat16), w2_ref[...],
                preferred_element_type=jnp.float32)
    h = h + b2_ref[...]
    h = jnp.where(h > 0, h, jnp.exp(jnp.minimum(h, 0.0)) - 1.0)

    logits = jnp.dot(h.astype(jnp.bfloat16), w3_ref[...],
                     preferred_element_type=jnp.float32)
    logits = logits + b3_ref[...]

    lane = lax.broadcasted_iota(jnp.int32, logits.shape, 1)
    logits = jnp.where(lane < n_classes, logits, -1e30)
    m = jnp.max(logits, axis=-1, keepdims=True)
    e = jnp.exp(logits - m)
    denom = jnp.sum(e, axis=-1, keepdims=True)
    o_ref[...] = (e * pl.reciprocal(denom, approx=True)).astype(o_ref.dtype)


def fc_head(x, params):
    """x: (B, 1152) -> softmax probs (B, 10) f32."""
    (w1, b1), (w2, b2), (w3, b3) = params["fc1"], params["fc2"], params["fc3"]
    B, K1 = x.shape
    H1, H2, NC = w1.shape[1], w2.shape[1], w3.shape[1]
    K1p = _round_up(K1, 128)
    H1p = _round_up(H1, 128)
    H2p = _round_up(H2, 128)
    NCp = _round_up(NC, 128)
    TM = 512 if B >= 512 else _round_up(max(B, 1), 8)
    Bp = _round_up(B, TM)

    xp = jnp.pad(x.astype(jnp.bfloat16), ((0, Bp - B), (0, K1p - K1)))
    w1p = jnp.pad(w1.astype(jnp.bfloat16), ((0, K1p - K1), (0, H1p - H1)))
    b1p = jnp.pad(b1.astype(jnp.float32), (0, H1p - H1)).reshape(1, H1p)
    w2p = jnp.pad(w2.astype(jnp.bfloat16), ((0, H1p - H1), (0, H2p - H2)))
    b2p = jnp.pad(b2.astype(jnp.float32), (0, H2p - H2)).reshape(1, H2p)
    w3p = jnp.pad(w3.astype(jnp.bfloat16), ((0, H2p - H2), (0, NCp - NC)))
    b3p = jnp.pad(b3.astype(jnp.float32), (0, NCp - NC)).reshape(1, NCp)

    kern = functools.partial(_fc_head_kernel, n_classes=NC)
    out = pl.pallas_call(
        kern,
        out_shape=jax.ShapeDtypeStruct((Bp, NCp), jnp.float32),
        grid=(Bp // TM,),
        in_specs=[
            pl.BlockSpec((TM, K1p), lambda i: (i, 0)),
            pl.BlockSpec((K1p, H1p), lambda i: (0, 0)),
            pl.BlockSpec((1, H1p), lambda i: (0, 0)),
            pl.BlockSpec((H1p, H2p), lambda i: (0, 0)),
            pl.BlockSpec((1, H2p), lambda i: (0, 0)),
            pl.BlockSpec((H2p, NCp), lambda i: (0, 0)),
            pl.BlockSpec((1, NCp), lambda i: (0, 0)),
        ],
        out_specs=pl.BlockSpec((TM, NCp), lambda i: (i, 0)),
        compiler_params=pltpu.CompilerParams(dimension_semantics=("parallel",)),
        cost_estimate=pl.CostEstimate(
            flops=2 * Bp * (K1p * H1p + H1p * H2p + H2p * NCp),
            transcendentals=Bp * (H1p + H2p + NCp),
            bytes_accessed=(Bp * K1p + K1p * H1p + H1p * H2p + H2p * NCp) * 2
            + Bp * NCp * 4,
        ),
    )(xp, w1p, b1p, w2p, b2p, w3p, b3p)
    return out[:B, :NC]


# ---------------------------------------------------------------------------
# Parameters (deterministic synthetic init, torch-layout conv weights)
# and the forward pass.
# ---------------------------------------------------------------------------
DATA_DIM = 3
INPUT_H = 66     # torch code's `input_width` lands on the conv H axis
INPUT_W = 200    # torch code's `input_height` lands on the conv W axis
TO_LINEAR = 64 * 1 * 18  # 1152, as traced by the torch module's __init__


def init_params(key):
    def conv_p(k, cout, cin, ksz):
        k1, k2 = jax.random.split(k)
        fan = cin * ksz * ksz
        w = jax.random.normal(k1, (cout, cin, ksz, ksz), jnp.float32) / jnp.sqrt(fan)
        b = 0.01 * jax.random.normal(k2, (cout,), jnp.float32)
        return w, b

    def lin_p(k, cin, cout):
        k1, k2 = jax.random.split(k)
        w = jax.random.normal(k1, (cin, cout), jnp.float32) / jnp.sqrt(cin)
        b = 0.01 * jax.random.normal(k2, (cout,), jnp.float32)
        return w, b

    ks = jax.random.split(key, 8)
    return {
        "conv1": conv_p(ks[0], 24, DATA_DIM, 5),
        "conv2": conv_p(ks[1], 36, 24, 5),
        "conv3": conv_p(ks[2], 48, 36, 5),
        "conv4": conv_p(ks[3], 64, 48, 3),
        "conv5": conv_p(ks[4], 64, 64, 3),
        "fc1": lin_p(ks[5], TO_LINEAR, 100),
        "fc2": lin_p(ks[6], 100, 50),
        "fc3": lin_p(ks[7], 50, 10),
    }


def net_forward(x_nchw, params):
    x = jnp.transpose(x_nchw, (0, 2, 3, 1))            # NCHW -> NHWC once
    x = conv2d_elu_nhwc(x, *params["conv1"], stride=2)  # (N, 31, 98, 24)
    x = conv2d_elu_nhwc(x, *params["conv2"], stride=2)  # (N, 14, 47, 36)
    x = conv2d_elu_nhwc(x, *params["conv3"], stride=2)  # (N,  5, 22, 48)
    x = conv2d_elu_nhwc(x, *params["conv4"], stride=1)  # (N,  3, 20, 64)
    x = conv2d_elu_nhwc(x, *params["conv5"], stride=1)  # (N,  1, 18, 64)
    n = x.shape[0]
    # Flatten in torch's NCHW (C, H, W) order to match .view(-1, 1152); tiny tensor.
    x = jnp.transpose(x, (0, 3, 1, 2)).reshape(n, TO_LINEAR)
    return fc_head(x, params)                           # (N, 10) f32, rows sum to 1


if __name__ == "__main__":
    key = jax.random.PRNGKey(0)
    kx, kp = jax.random.split(key)
    batch = 2
    x = jax.random.normal(kx, (batch, DATA_DIM, INPUT_H, INPUT_W), jnp.float32)
    params = init_params(kp)

    out = jax.jit(net_forward)(x, params)
    out = jax.block_until_ready(out)

    assert out.shape == (batch, 10), out.shape
    assert bool(jnp.all(jnp.isfinite(out)))
    row_sums = jnp.sum(out, axis=1)
    assert bool(jnp.all(jnp.abs(row_sums - 1.0) < 2e-3)), row_sums
    print("KERNEL_OK")
</pallas_src>

<mosaic_0001>
module attributes {stable_mosaic.version = 11 : i64} {
  func.func @_mm_bias_elu_kernel(%arg0: i32, %arg1: memref<512x128xbf16, #tpu.memory_space<vmem>>, %arg2: memref<128x128xbf16, #tpu.memory_space<vmem>>, %arg3: memref<1x128xf32, #tpu.memory_space<vmem>>, %arg4: memref<512x128xbf16, #tpu.memory_space<vmem>>) attributes {dimension_semantics = [#tpu.dimension_semantics<parallel>], iteration_bounds = array<i64: 12>, scalar_prefetch = 0 : i64, scratch_operands = 0 : i64, tpu.core_type = #tpu.core_type<tc>, window_params = [{transform_indices = @transform_0, window_bounds = array<i64: 512, 128>}, {pipeline_mode = #tpu.pipeline_mode<synchronous>, transform_indices = @transform_1, window_bounds = array<i64: 128, 128>}, {pipeline_mode = #tpu.pipeline_mode<synchronous>, transform_indices = @transform_2, window_bounds = array<i64: 1, 128>}, {transform_indices = @transform_3, window_bounds = array<i64: 512, 128>}]} {
    %c0 = arith.constant 0 : index
    %c0_0 = arith.constant 0 : index
    %0 = vector.load %arg1[%c0, %c0_0] : memref<512x128xbf16, #tpu.memory_space<vmem>>, vector<512x128xbf16>
    %c0_1 = arith.constant 0 : index
    %c0_2 = arith.constant 0 : index
    %1 = vector.load %arg2[%c0_1, %c0_2] : memref<128x128xbf16, #tpu.memory_space<vmem>>, vector<128x128xbf16>
    %cst = arith.constant dense<0.000000e+00> : vector<512x128xf32>
    %2 = tpu.matmul %0, %1, %cst {dimension_numbers = #tpu.dot_dimension_numbers<[1], [0], [0], [1], [0, 0, 1, 1], [], []>} : vector<512x128xbf16>, vector<128x128xbf16>, vector<512x128xf32> -> vector<512x128xf32>
    %c0_3 = arith.constant 0 : index
    %c0_4 = arith.constant 0 : index
    %3 = vector.load %arg3[%c0_3, %c0_4] : memref<1x128xf32, #tpu.memory_space<vmem>>, vector<1x128xf32>
    %4 = vector.broadcast %3 : vector<1x128xf32> to vector<512x128xf32>
    %5 = arith.addf %2, %4 : vector<512x128xf32>
    %cst_5 = arith.constant 0.000000e+00 : f32
    %6 = vector.broadcast %cst_5 : f32 to vector<512x128xf32>
    %7 = arith.cmpf ogt, %5, %6 : vector<512x128xf32>
    %cst_6 = arith.constant 0.000000e+00 : f32
    %8 = vector.broadcast %cst_6 : f32 to vector<512x128xf32>
    %9 = arith.minimumf %5, %8 : vector<512x128xf32>
    %10 = math.exp %9 : vector<512x128xf32>
    %cst_7 = arith.constant 1.000000e+00 : f32
    %11 = vector.broadcast %cst_7 : f32 to vector<512x128xf32>
    %12 = arith.subf %10, %11 : vector<512x128xf32>
    %13 = arith.select %7, %5, %12 : vector<512x128xi1>, vector<512x128xf32>
    %14 = arith.truncf %13 : vector<512x128xf32> to vector<512x128xbf16>
    %c0_8 = arith.constant 0 : index
    %c0_9 = arith.constant 0 : index
    %15 = vector.load %arg4[%c0_8, %c0_9] : memref<512x128xbf16, #tpu.memory_space<vmem>>, vector<512x128xbf16>
    tpu.vector_store %arg4[%c0_8, %c0_9], %14 {strides = array<i32>} : memref<512x128xbf16, #tpu.memory_space<vmem>>, vector<512x128xbf16>,
    return
  }
  func.func @transform_0(%arg0: i32) -> (i32, i32) {
    %c0_i32 = arith.constant 0 : i32
    %c0_i32_0 = arith.constant 0 : i32
    return %arg0, %c0_i32 : i32, i32
  }
  func.func @transform_1(%arg0: i32) -> (i32, i32) {
    %c0_i32 = arith.constant 0 : i32
    %c0_i32_0 = arith.constant 0 : i32
    %c0_i32_1 = arith.constant 0 : i32
    return %c0_i32, %c0_i32_0 : i32, i32
  }
  func.func @transform_2(%arg0: i32) -> (i32, i32) {
    %c0_i32 = arith.constant 0 : i32
    %c0_i32_0 = arith.constant 0 : i32
    %c0_i32_1 = arith.constant 0 : i32
    return %c0_i32, %c0_i32_0 : i32, i32
  }
  func.func @transform_3(%arg0: i32) -> (i32, i32) {
    %c0_i32 = arith.constant 0 : i32
    %c0_i32_0 = arith.constant 0 : i32
    return %arg0, %c0_i32 : i32, i32
  }
}

module attributes {stable_mosaic.version = 11 : i64} {
  func.func @_mm_bias_elu_kernel(%arg0: i32, %arg1: memref<512x640xbf16, #tpu.memory_space<vmem>>, %arg2: memref<640x128xbf16, #tpu.memory_space<vmem>>, %arg3: memref<1x128xf32, #tpu.memory_space<vmem>>, %arg4: memref<512x128xbf16, #tpu.memory_space<vmem>>) attributes {dimension_semantics = [#tpu.dimension_semantics<parallel>], iteration_bounds = array<i64: 3>, scalar_prefetch = 0 : i64, scratch_operands = 0 : i64, tpu.core_type = #tpu.core_type<tc>, window_params = [{transform_indices = @transform_0, window_bounds = array<i64: 512, 640>}, {pipeline_mode = #tpu.pipeline_mode<synchronous>, transform_indices = @transform_1, window_bounds = array<i64: 640, 128>}, {pipeline_mode = #tpu.pipeline_mode<synchronous>, transform_indices = @transform_2, window_bounds = array<i64: 1, 128>}, {transform_indices = @transform_3, window_bounds = array<i64: 512, 128>}]} {
    %c0 = arith.constant 0 : index
    %c0_0 = arith.constant 0 : index
    %0 = vector.load %arg1[%c0, %c0_0] : memref<512x640xbf16, #tpu.memory_space<vmem>>, vector<512x640xbf16>
    %c0_1 = arith.constant 0 : index
    %c0_2 = arith.constant 0 : index
    %1 = vector.load %arg2[%c0_1, %c0_2] : memref<640x128xbf16, #tpu.memory_space<vmem>>, vector<640x128xbf16>
    %cst = arith.constant dense<0.000000e+00> : vector<512x128xf32>
    %2 = tpu.matmul %0, %1, %cst {dimension_numbers = #tpu.dot_dimension_numbers<[1], [0], [0], [1], [0, 0, 1, 1], [], []>} : vector<512x640xbf16>, vector<640x128xbf16>, vector<512x128xf32> -> vector<512x128xf32>
    %c0_3 = arith.constant 0 : index
    %c0_4 = arith.constant 0 : index
    %3 = vector.load %arg3[%c0_3, %c0_4] : memref<1x128xf32, #tpu.memory_space<vmem>>, vector<1x128xf32>
    %4 = vector.broadcast %3 : vector<1x128xf32> to vector<512x128xf32>
    %5 = arith.addf %2, %4 : vector<512x128xf32>
    %cst_5 = arith.constant 0.000000e+00 : f32
    %6 = vector.broadcast %cst_5 : f32 to vector<512x128xf32>
    %7 = arith.cmpf ogt, %5, %6 : vector<512x128xf32>
    %cst_6 = arith.constant 0.000000e+00 : f32
    %8 = vector.broadcast %cst_6 : f32 to vector<512x128xf32>
    %9 = arith.minimumf %5, %8 : vector<512x128xf32>
    %10 = math.exp %9 : vector<512x128xf32>
    %cst_7 = arith.constant 1.000000e+00 : f32
    %11 = vector.broadcast %cst_7 : f32 to vector<512x128xf32>
    %12 = arith.subf %10, %11 : vector<512x128xf32>
    %13 = arith.select %7, %5, %12 : vector<512x128xi1>, vector<512x128xf32>
    %14 = arith.truncf %13 : vector<512x128xf32> to vector<512x128xbf16>
    %c0_8 = arith.constant 0 : index
    %c0_9 = arith.constant 0 : index
    %15 = vector.load %arg4[%c0_8, %c0_9] : memref<512x128xbf16, #tpu.memory_space<vmem>>, vector<512x128xbf16>
    tpu.vector_store %arg4[%c0_8, %c0_9], %14 {strides = array<i32>} : memref<512x128xbf16, #tpu.memory_space<vmem>>, vector<512x128xbf16>,
    return
  }
  func.func @transform_0(%arg0: i32) -> (i32, i32) {
    %c0_i32 = arith.constant 0 : i32
    %c0_i32_0 = arith.constant 0 : i32
    return %arg0, %c0_i32 : i32, i32
  }
  func.func @transform_1(%arg0: i32) -> (i32, i32) {
    %c0_i32 = arith.constant 0 : i32
    %c0_i32_0 = arith.constant 0 : i32
    %c0_i32_1 = arith.constant 0 : i32
    return %c0_i32, %c0_i32_0 : i32, i32
  }
  func.func @transform_2(%arg0: i32) -> (i32, i32) {
    %c0_i32 = arith.constant 0 : i32
    %c0_i32_0 = arith.constant 0 : i32
    %c0_i32_1 = arith.constant 0 : i32
    return %c0_i32, %c0_i32_0 : i32, i32
  }
  func.func @transform_3(%arg0: i32) -> (i32, i32) {
    %c0_i32 = arith.constant 0 : i32
    %c0_i32_0 = arith.constant 0 : i32
    return %arg0, %c0_i32 : i32, i32
  }
}

module attributes {stable_mosaic.version = 11 : i64} {
  func.func @_mm_bias_elu_kernel(%arg0: i32, %arg1: memref<224x1024xbf16, #tpu.memory_space<vmem>>, %arg2: memref<1024x128xbf16, #tpu.memory_space<vmem>>, %arg3: memref<1x128xf32, #tpu.memory_space<vmem>>, %arg4: memref<224x128xbf16, #tpu.memory_space<vmem>>) attributes {dimension_semantics = [#tpu.dimension_semantics<parallel>], iteration_bounds = array<i64: 1>, scalar_prefetch = 0 : i64, scratch_operands = 0 : i64, tpu.core_type = #tpu.core_type<tc>, window_params = [{transform_indices = @transform_0, window_bounds = array<i64: 224, 1024>}, {pipeline_mode = #tpu.pipeline_mode<synchronous>, transform_indices = @transform_1, window_bounds = array<i64: 1024, 128>}, {pipeline_mode = #tpu.pipeline_mode<synchronous>, transform_indices = @transform_2, window_bounds = array<i64: 1, 128>}, {transform_indices = @transform_3, window_bounds = array<i64: 224, 128>}]} {
    %c0 = arith.constant 0 : index
    %c0_0 = arith.constant 0 : index
    %0 = vector.load %arg1[%c0, %c0_0] : memref<224x1024xbf16, #tpu.memory_space<vmem>>, vector<224x1024xbf16>
    %c0_1 = arith.constant 0 : index
    %c0_2 = arith.constant 0 : index
    %1 = vector.load %arg2[%c0_1, %c0_2] : memref<1024x128xbf16, #tpu.memory_space<vmem>>, vector<1024x128xbf16>
    %cst = arith.constant dense<0.000000e+00> : vector<224x128xf32>
    %2 = tpu.matmul %0, %1, %cst {dimension_numbers = #tpu.dot_dimension_numbers<[1], [0], [0], [1], [0, 0, 1, 1], [], []>} : vector<224x1024xbf16>, vector<1024x128xbf16>, vector<224x128xf32> -> vector<224x128xf32>
    %c0_3 = arith.constant 0 : index
    %c0_4 = arith.constant 0 : index
    %3 = vector.load %arg3[%c0_3, %c0_4] : memref<1x128xf32, #tpu.memory_space<vmem>>, vector<1x128xf32>
    %4 = vector.broadcast %3 : vector<1x128xf32> to vector<224x128xf32>
    %5 = arith.addf %2, %4 : vector<224x128xf32>
    %cst_5 = arith.constant 0.000000e+00 : f32
    %6 = vector.broadcast %cst_5 : f32 to vector<224x128xf32>
    %7 = arith.cmpf ogt, %5, %6 : vector<224x128xf32>
    %cst_6 = arith.constant 0.000000e+00 : f32
    %8 = vector.broadcast %cst_6 : f32 to vector<224x128xf32>
    %9 = arith.minimumf %5, %8 : vector<224x128xf32>
    %10 = math.exp %9 : vector<224x128xf32>
    %cst_7 = arith.constant 1.000000e+00 : f32
    %11 = vector.broadcast %cst_7 : f32 to vector<224x128xf32>
    %12 = arith.subf %10, %11 : vector<224x128xf32>
    %13 = arith.select %7, %5, %12 : vector<224x128xi1>, vector<224x128xf32>
    %14 = arith.truncf %13 : vector<224x128xf32> to vector<224x128xbf16>
    %c0_8 = arith.constant 0 : index
    %c0_9 = arith.constant 0 : index
    %15 = vector.load %arg4[%c0_8, %c0_9] : memref<224x128xbf16, #tpu.memory_space<vmem>>, vector<224x128xbf16>
    tpu.vector_store %arg4[%c0_8, %c0_9], %14 {strides = array<i32>} : memref<224x128xbf16, #tpu.memory_space<vmem>>, vector<224x128xbf16>,
    return
  }
  func.func @transform_0(%arg0: i32) -> (i32, i32) {
    %c0_i32 = arith.constant 0 : i32
    %c0_i32_0 = arith.constant 0 : i32
    return %arg0, %c0_i32 : i32, i32
  }
  func.func @transform_1(%arg0: i32) -> (i32, i32) {
    %c0_i32 = arith.constant 0 : i32
    %c0_i32_0 = arith.constant 0 : i32
    %c0_i32_1 = arith.constant 0 : i32
    return %c0_i32, %c0_i32_0 : i32, i32
  }
  func.func @transform_2(%arg0: i32) -> (i32, i32) {
    %c0_i32 = arith.constant 0 : i32
    %c0_i32_0 = arith.constant 0 : i32
    %c0_i32_1 = arith.constant 0 : i32
    return %c0_i32, %c0_i32_0 : i32, i32
  }
  func.func @transform_3(%arg0: i32) -> (i32, i32) {
    %c0_i32 = arith.constant 0 : i32
    %c0_i32_0 = arith.constant 0 : i32
    return %arg0, %c0_i32 : i32, i32
  }
}

module attributes {stable_mosaic.version = 11 : i64} {
  func.func @_mm_bias_elu_kernel(%arg0: i32, %arg1: memref<120x512xbf16, #tpu.memory_space<vmem>>, %arg2: memref<512x128xbf16, #tpu.memory_space<vmem>>, %arg3: memref<1x128xf32, #tpu.memory_space<vmem>>, %arg4: memref<120x128xbf16, #tpu.memory_space<vmem>>) attributes {dimension_semantics = [#tpu.dimension_semantics<parallel>], iteration_bounds = array<i64: 1>, scalar_prefetch = 0 : i64, scratch_operands = 0 : i64, tpu.core_type = #tpu.core_type<tc>, window_params = [{transform_indices = @transform_0, window_bounds = array<i64: 120, 512>}, {pipeline_mode = #tpu.pipeline_mode<synchronous>, transform_indices = @transform_1, window_bounds = array<i64: 512, 128>}, {pipeline_mode = #tpu.pipeline_mode<synchronous>, transform_indices = @transform_2, window_bounds = array<i64: 1, 128>}, {transform_indices = @transform_3, window_bounds = array<i64: 120, 128>}]} {
    %c0 = arith.constant 0 : index
    %c0_0 = arith.constant 0 : index
    %0 = vector.load %arg1[%c0, %c0_0] : memref<120x512xbf16, #tpu.memory_space<vmem>>, vector<120x512xbf16>
    %c0_1 = arith.constant 0 : index
    %c0_2 = arith.constant 0 : index
    %1 = vector.load %arg2[%c0_1, %c0_2] : memref<512x128xbf16, #tpu.memory_space<vmem>>, vector<512x128xbf16>
    %cst = arith.constant dense<0.000000e+00> : vector<120x128xf32>
    %2 = tpu.matmul %0, %1, %cst {dimension_numbers = #tpu.dot_dimension_numbers<[1], [0], [0], [1], [0, 0, 1, 1], [], []>} : vector<120x512xbf16>, vector<512x128xbf16>, vector<120x128xf32> -> vector<120x128xf32>
    %c0_3 = arith.constant 0 : index
    %c0_4 = arith.constant 0 : index
    %3 = vector.load %arg3[%c0_3, %c0_4] : memref<1x128xf32, #tpu.memory_space<vmem>>, vector<1x128xf32>
    %4 = vector.broadcast %3 : vector<1x128xf32> to vector<120x128xf32>
    %5 = arith.addf %2, %4 : vector<120x128xf32>
    %cst_5 = arith.constant 0.000000e+00 : f32
    %6 = vector.broadcast %cst_5 : f32 to vector<120x128xf32>
    %7 = arith.cmpf ogt, %5, %6 : vector<120x128xf32>
    %cst_6 = arith.constant 0.000000e+00 : f32
    %8 = vector.broadcast %cst_6 : f32 to vector<120x128xf32>
    %9 = arith.minimumf %5, %8 : vector<120x128xf32>
    %10 = math.exp %9 : vector<120x128xf32>
    %cst_7 = arith.constant 1.000000e+00 : f32
    %11 = vector.broadcast %cst_7 : f32 to vector<120x128xf32>
    %12 = arith.subf %10, %11 : vector<120x128xf32>
    %13 = arith.select %7, %5, %12 : vector<120x128xi1>, vector<120x128xf32>
    %14 = arith.truncf %13 : vector<120x128xf32> to vector<120x128xbf16>
    %c0_8 = arith.constant 0 : index
    %c0_9 = arith.constant 0 : index
    %15 = vector.load %arg4[%c0_8, %c0_9] : memref<120x128xbf16, #tpu.memory_space<vmem>>, vector<120x128xbf16>
    tpu.vector_store %arg4[%c0_8, %c0_9], %14 {strides = array<i32>} : memref<120x128xbf16, #tpu.memory_space<vmem>>, vector<120x128xbf16>,
    return
  }
  func.func @transform_0(%arg0: i32) -> (i32, i32) {
    %c0_i32 = arith.constant 0 : i32
    %c0_i32_0 = arith.constant 0 : i32
    return %arg0, %c0_i32 : i32, i32
  }
  func.func @transform_1(%arg0: i32) -> (i32, i32) {
    %c0_i32 = arith.constant 0 : i32
    %c0_i32_0 = arith.constant 0 : i32
    %c0_i32_1 = arith.constant 0 : i32
    return %c0_i32, %c0_i32_0 : i32, i32
  }
  func.func @transform_2(%arg0: i32) -> (i32, i32) {
    %c0_i32 = arith.constant 0 : i32
    %c0_i32_0 = arith.constant 0 : i32
    %c0_i32_1 = arith.constant 0 : i32
    return %c0_i32, %c0_i32_0 : i32, i32
  }
  func.func @transform_3(%arg0: i32) -> (i32, i32) {
    %c0_i32 = arith.constant 0 : i32
    %c0_i32_0 = arith.constant 0 : i32
    return %arg0, %c0_i32 : i32, i32
  }
}

module attributes {stable_mosaic.version = 11 : i64} {
  func.func @_mm_bias_elu_kernel(%arg0: i32, %arg1: memref<40x640xbf16, #tpu.memory_space<vmem>>, %arg2: memref<640x128xbf16, #tpu.memory_space<vmem>>, %arg3: memref<1x128xf32, #tpu.memory_space<vmem>>, %arg4: memref<40x128xbf16, #tpu.memory_space<vmem>>) attributes {dimension_semantics = [#tpu.dimension_semantics<parallel>], iteration_bounds = array<i64: 1>, scalar_prefetch = 0 : i64, scratch_operands = 0 : i64, tpu.core_type = #tpu.core_type<tc>, window_params = [{transform_indices = @transform_0, window_bounds = array<i64: 40, 640>}, {pipeline_mode = #tpu.pipeline_mode<synchronous>, transform_indices = @transform_1, window_bounds = array<i64: 640, 128>}, {pipeline_mode = #tpu.pipeline_mode<synchronous>, transform_indices = @transform_2, window_bounds = array<i64: 1, 128>}, {transform_indices = @transform_3, window_bounds = array<i64: 40, 128>}]} {
    %c0 = arith.constant 0 : index
    %c0_0 = arith.constant 0 : index
    %0 = vector.load %arg1[%c0, %c0_0] : memref<40x640xbf16, #tpu.memory_space<vmem>>, vector<40x640xbf16>
    %c0_1 = arith.constant 0 : index
    %c0_2 = arith.constant 0 : index
    %1 = vector.load %arg2[%c0_1, %c0_2] : memref<640x128xbf16, #tpu.memory_space<vmem>>, vector<640x128xbf16>
    %cst = arith.constant dense<0.000000e+00> : vector<40x128xf32>
    %2 = tpu.matmul %0, %1, %cst {dimension_numbers = #tpu.dot_dimension_numbers<[1], [0], [0], [1], [0, 0, 1, 1], [], []>} : vector<40x640xbf16>, vector<640x128xbf16>, vector<40x128xf32> -> vector<40x128xf32>
    %c0_3 = arith.constant 0 : index
    %c0_4 = arith.constant 0 : index
    %3 = vector.load %arg3[%c0_3, %c0_4] : memref<1x128xf32, #tpu.memory_space<vmem>>, vector<1x128xf32>
    %4 = vector.broadcast %3 : vector<1x128xf32> to vector<40x128xf32>
    %5 = arith.addf %2, %4 : vector<40x128xf32>
    %cst_5 = arith.constant 0.000000e+00 : f32
    %6 = vector.broadcast %cst_5 : f32 to vector<40x128xf32>
    %7 = arith.cmpf ogt, %5, %6 : vector<40x128xf32>
    %cst_6 = arith.constant 0.000000e+00 : f32
    %8 = vector.broadcast %cst_6 : f32 to vector<40x128xf32>
    %9 = arith.minimumf %5, %8 : vector<40x128xf32>
    %10 = math.exp %9 : vector<40x128xf32>
    %cst_7 = arith.constant 1.000000e+00 : f32
    %11 = vector.broadcast %cst_7 : f32 to vector<40x128xf32>
    %12 = arith.subf %10, %11 : vector<40x128xf32>
    %13 = arith.select %7, %5, %12 : vector<40x128xi1>, vector<40x128xf32>
    %14 = arith.truncf %13 : vector<40x128xf32> to vector<40x128xbf16>
    %c0_8 = arith.constant 0 : index
    %c0_9 = arith.constant 0 : index
    %15 = vector.load %arg4[%c0_8, %c0_9] : memref<40x128xbf16, #tpu.memory_space<vmem>>, vector<40x128xbf16>
    tpu.vector_store %arg4[%c0_8, %c0_9], %14 {strides = array<i32>} : memref<40x128xbf16, #tpu.memory_space<vmem>>, vector<40x128xbf16>,
    return
  }
  func.func @transform_0(%arg0: i32) -> (i32, i32) {
    %c0_i32 = arith.constant 0 : i32
    %c0_i32_0 = arith.constant 0 : i32
    return %arg0, %c0_i32 : i32, i32
  }
  func.func @transform_1(%arg0: i32) -> (i32, i32) {
    %c0_i32 = arith.constant 0 : i32
    %c0_i32_0 = arith.constant 0 : i32
    %c0_i32_1 = arith.constant 0 : i32
    return %c0_i32, %c0_i32_0 : i32, i32
  }
  func.func @transform_2(%arg0: i32) -> (i32, i32) {
    %c0_i32 = arith.constant 0 : i32
    %c0_i32_0 = arith.constant 0 : i32
    %c0_i32_1 = arith.constant 0 : i32
    return %c0_i32, %c0_i32_0 : i32, i32
  }
  func.func @transform_3(%arg0: i32) -> (i32, i32) {
    %c0_i32 = arith.constant 0 : i32
    %c0_i32_0 = arith.constant 0 : i32
    return %arg0, %c0_i32 : i32, i32
  }
}

module attributes {stable_mosaic.version = 11 : i64} {
  func.func @_fc_head_kernel(%arg0: i32, %arg1: memref<8x1152xbf16, #tpu.memory_space<vmem>>, %arg2: memref<1152x128xbf16, #tpu.memory_space<vmem>>, %arg3: memref<1x128xf32, #tpu.memory_space<vmem>>, %arg4: memref<128x128xbf16, #tpu.memory_space<vmem>>, %arg5: memref<1x128xf32, #tpu.memory_space<vmem>>, %arg6: memref<128x128xbf16, #tpu.memory_space<vmem>>, %arg7: memref<1x128xf32, #tpu.memory_space<vmem>>, %arg8: memref<8x128xf32, #tpu.memory_space<vmem>>) attributes {dimension_semantics = [#tpu.dimension_semantics<parallel>], iteration_bounds = array<i64: 1>, scalar_prefetch = 0 : i64, scratch_operands = 0 : i64, tpu.core_type = #tpu.core_type<tc>, window_params = [{transform_indices = @transform_0, window_bounds = array<i64: 8, 1152>}, {pipeline_mode = #tpu.pipeline_mode<synchronous>, transform_indices = @transform_1, window_bounds = array<i64: 1152, 128>}, {pipeline_mode = #tpu.pipeline_mode<synchronous>, transform_indices = @transform_2, window_bounds = array<i64: 1, 128>}, {pipeline_mode = #tpu.pipeline_mode<synchronous>, transform_indices = @transform_3, window_bounds = array<i64: 128, 128>}, {pipeline_mode = #tpu.pipeline_mode<synchronous>, transform_indices = @transform_4, window_bounds = array<i64: 1, 128>}, {pipeline_mode = #tpu.pipeline_mode<synchronous>, transform_indices = @transform_5, window_bounds = array<i64: 128, 128>}, {pipeline_mode = #tpu.pipeline_mode<synchronous>, transform_indices = @transform_6, window_bounds = array<i64: 1, 128>}, {transform_indices = @transform_7, window_bounds = array<i64: 8, 128>}]} {
    %c0 = arith.constant 0 : index
    %c0_0 = arith.constant 0 : index
    %0 = vector.load %arg1[%c0, %c0_0] : memref<8x1152xbf16, #tpu.memory_space<vmem>>, vector<8x1152xbf16>
    %c0_1 = arith.constant 0 : index
    %c0_2 = arith.constant 0 : index
    %1 = vector.load %arg2[%c0_1, %c0_2] : memref<1152x128xbf16, #tpu.memory_space<vmem>>, vector<1152x128xbf16>
    %cst = arith.constant dense<0.000000e+00> : vector<8x128xf32>
    %2 = tpu.matmul %0, %1, %cst {dimension_numbers = #tpu.dot_dimension_numbers<[1], [0], [0], [1], [0, 0, 1, 1], [], []>} : vector<8x1152xbf16>, vector<1152x128xbf16>, vector<8x128xf32> -> vector<8x128xf32>
    %c0_3 = arith.constant 0 : index
    %c0_4 = arith.constant 0 : index
    %3 = vector.load %arg3[%c0_3, %c0_4] : memref<1x128xf32, #tpu.memory_space<vmem>>, vector<1x128xf32>
    %4 = vector.broadcast %3 : vector<1x128xf32> to vector<8x128xf32>
    %5 = arith.addf %2, %4 : vector<8x128xf32>
    %cst_5 = arith.constant 0.000000e+00 : f32
    %6 = vector.broadcast %cst_5 : f32 to vector<8x128xf32>
    %7 = arith.cmpf ogt, %5, %6 : vector<8x128xf32>
    %cst_6 = arith.constant 0.000000e+00 : f32
    %8 = vector.broadcast %cst_6 : f32 to vector<8x128xf32>
    %9 = arith.minimumf %5, %8 : vector<8x128xf32>
    %10 = math.exp %9 : vector<8x128xf32>
    %cst_7 = arith.constant 1.000000e+00 : f32
    %11 = vector.broadcast %cst_7 : f32 to vector<8x128xf32>
    %12 = arith.subf %10, %11 : vector<8x128xf32>
    %13 = arith.select %7, %5, %12 : vector<8x128xi1>, vector<8x128xf32>
    %14 = arith.truncf %13 : vector<8x128xf32> to vector<8x128xbf16>
    %c0_8 = arith.constant 0 : index
    %c0_9 = arith.constant 0 : index
    %15 = vector.load %arg4[%c0_8, %c0_9] : memref<128x128xbf16, #tpu.memory_space<vmem>>, vector<128x128xbf16>
    %cst_10 = arith.constant dense<0.000000e+00> : vector<8x128xf32>
    %16 = tpu.matmul %14, %15, %cst_10 {dimension_numbers = #tpu.dot_dimension_numbers<[1], [0], [0], [1], [0, 0, 1, 1], [], []>} : vector<8x128xbf16>, vector<128x128xbf16>, vector<8x128xf32> -> vector<8x128xf32>
    %c0_11 = arith.constant 0 : index
    %c0_12 = arith.constant 0 : index
    %17 = vector.load %arg5[%c0_11, %c0_12] : memref<1x128xf32, #tpu.memory_space<vmem>>, vector<1x128xf32>
    %18 = vector.broadcast %17 : vector<1x128xf32> to vector<8x128xf32>
    %19 = arith.addf %16, %18 : vector<8x128xf32>
    %cst_13 = arith.constant 0.000000e+00 : f32
    %20 = vector.broadcast %cst_13 : f32 to vector<8x128xf32>
    %21 = arith.cmpf ogt, %19, %20 : vector<8x128xf32>
    %cst_14 = arith.constant 0.000000e+00 : f32
    %22 = vector.broadcast %cst_14 : f32 to vector<8x128xf32>
    %23 = arith.minimumf %19, %22 : vector<8x128xf32>
    %24 = math.exp %23 : vector<8x128xf32>
    %cst_15 = arith.constant 1.000000e+00 : f32
    %25 = vector.broadcast %cst_15 : f32 to vector<8x128xf32>
    %26 = arith.subf %24, %25 : vector<8x128xf32>
    %27 = arith.select %21, %19, %26 : vector<8x128xi1>, vector<8x128xf32>
    %28 = arith.truncf %27 : vector<8x128xf32> to vector<8x128xbf16>
    %c0_16 = arith.constant 0 : index
    %c0_17 = arith.constant 0 : index
    %29 = vector.load %arg6[%c0_16, %c0_17] : memref<128x128xbf16, #tpu.memory_space<vmem>>, vector<128x128xbf16>
    %cst_18 = arith.constant dense<0.000000e+00> : vector<8x128xf32>
    %30 = tpu.matmul %28, %29, %cst_18 {dimension_numbers = #tpu.dot_dimension_numbers<[1], [0], [0], [1], [0, 0, 1, 1], [], []>} : vector<8x128xbf16>, vector<128x128xbf16>, vector<8x128xf32> -> vector<8x128xf32>
    %c0_19 = arith.constant 0 : index
    %c0_20 = arith.constant 0 : index
    %31 = vector.load %arg7[%c0_19, %c0_20] : memref<1x128xf32, #tpu.memory_space<vmem>>, vector<1x128xf32>
    %32 = vector.broadcast %31 : vector<1x128xf32> to vector<8x128xf32>
    %33 = arith.addf %30, %32 : vector<8x128xf32>
    %34 = tpu.iota {dimensions = array<i32: 1>} : vector<8x128xi32>
    %c10_i32 = arith.constant 10 : i32
    %35 = vector.broadcast %c10_i32 : i32 to vector<8x128xi32>
    %36 = arith.cmpi slt, %34, %35 : vector<8x128xi32>
    %cst_21 = arith.constant -1.000000e+30 : f32
    %37 = vector.broadcast %cst_21 : f32 to vector<8x128xf32>
    %38 = arith.select %36, %33, %37 : vector<8x128xi1>, vector<8x128xf32>
    %cst_22 = arith.constant dense<0xFF800000> : vector<8xf32>
    %39 = vector.multi_reduction <maximumf>, %38, %cst_22 [1] : vector<8x128xf32> to vector<8xf32>
    %40 = vector.shape_cast %39 : vector<8xf32> to vector<8x1xf32>
    %41 = vector.broadcast %40 : vector<8x1xf32> to vector<8x128xf32>
    %42 = arith.subf %38, %41 : vector<8x128xf32>
    %43 = math.exp %42 : vector<8x128xf32>
    %cst_23 = arith.constant dense<0.000000e+00> : vector<8xf32>
    %44 = vector.multi_reduction <add>, %43, %cst_23 [1] : vector<8x128xf32> to vector<8xf32>
    %45 = vector.shape_cast %44 : vector<8xf32> to vector<8x1xf32>
    %46 = tpu.reciprocal %45 {approx = true} : vector<8x1xf32> -> vector<8x1xf32>
    %47 = vector.broadcast %46 : vector<8x1xf32> to vector<8x128xf32>
    %48 = arith.mulf %43, %47 : vector<8x128xf32>
    %c0_24 = arith.constant 0 : index
    %c0_25 = arith.constant 0 : index
    %49 = vector.load %arg8[%c0_24, %c0_25] : memref<8x128xf32, #tpu.memory_space<vmem>>, vector<8x128xf32>
    tpu.vector_store %arg8[%c0_24, %c0_25], %48 {strides = array<i32>} : memref<8x128xf32, #tpu.memory_space<vmem>>, vector<8x128xf32>,
    return
  }
  func.func @transform_0(%arg0: i32) -> (i32, i32) {
    %c0_i32 = arith.constant 0 : i32
    %c0_i32_0 = arith.constant 0 : i32
    return %arg0, %c0_i32 : i32, i32
  }
  func.func @transform_1(%arg0: i32) -> (i32, i32) {
    %c0_i32 = arith.constant 0 : i32
    %c0_i32_0 = arith.constant 0 : i32
    %c0_i32_1 = arith.constant 0 : i32
    return %c0_i32, %c0_i32_0 : i32, i32
  }
  func.func @transform_2(%arg0: i32) -> (i32, i32) {
    %c0_i32 = arith.constant 0 : i32
    %c0_i32_0 = arith.constant 0 : i32
    %c0_i32_1 = arith.constant 0 : i32
    return %c0_i32, %c0_i32_0 : i32, i32
  }
  func.func @transform_3(%arg0: i32) -> (i32, i32) {
    %c0_i32 = arith.constant 0 : i32
    %c0_i32_0 = arith.constant 0 : i32
    %c0_i32_1 = arith.constant 0 : i32
    return %c0_i32, %c0_i32_0 : i32, i32
  }
  func.func @transform_4(%arg0: i32) -> (i32, i32) {
    %c0_i32 = arith.constant 0 : i32
    %c0_i32_0 = arith.constant 0 : i32
    %c0_i32_1 = arith.constant 0 : i32
    return %c0_i32, %c0_i32_0 : i32, i32
  }
  func.func @transform_5(%arg0: i32) -> (i32, i32) {
    %c0_i32 = arith.constant 0 : i32
    %c0_i32_0 = arith.constant 0 : i32
    %c0_i32_1 = arith.constant 0 : i32
    return %c0_i32, %c0_i32_0 : i32, i32
  }
  func.func @transform_6(%arg0: i32) -> (i32, i32) {
    %c0_i32 = arith.constant 0 : i32
    %c0_i32_0 = arith.constant 0 : i32
    %c0_i32_1 = arith.constant 0 : i32
    return %c0_i32, %c0_i32_0 : i32, i32
  }
  func.func @transform_7(%arg0: i32) -> (i32, i32) {
    %c0_i32 = arith.constant 0 : i32
    %c0_i32_0 = arith.constant 0 : i32
    return %arg0, %c0_i32 : i32, i32
  }
}

</mosaic_0001>

<llo_original>
// kernel: net_forward.6
$region0: #{net_forward.6}
  #allocation0 [shape = 'u32[]', space=smem, size = 0x4, offset = 0x4, fixed_abs, tag = 'smem constant byte address 0x4 - core index']
  #allocation1 [shape = 'u32[72,128]{1,0:T(1,128)}', space=vmem, size = 0x9000, scoped, tag = 'internal scratch']
  %s0 = inlined_call_operand.vmem [shape: bf16[6144,128], index: 0, kind: input, shape index: {}]
  %s1 = inlined_call_operand.vmem [shape: bf16[128,128], index: 1, kind: input, shape index: {}]
  %s2 = inlined_call_operand.vmem [shape: f32[1,128], index: 2, kind: input, shape index: {}]
  %s3 = inlined_call_operand.vmem [shape: bf16[6144,128], index: 3, kind: output, shape index: {}]
  %s4 = sld [smem:[#allocation0]]
  $region45: #{net_forward.6} parent=0
    _
  %s6 = ssub.s32 1, %s4
  %s7 = scalar_select 0, %s6, %s4
  loop: start=0, step=1, limit=14
  $region2: #{net_forward.6} parent=0 // loop_pre_header
    _
  $region3: #{net_forward.6} parent=0 // loop_header
    %s9 = sphi 0, %s13
    %p10 = scmp.ge.s32.totalorder %s9, 14
    %s19 = sphi 0, %s21
    %s22 = sphi 0, %s19
    %s23 = sphi 0, %s22
    %s39 = sphi 0, %s23
    %s43 = sphi 0, %s43
    %s45 = sphi 0, %s43
    %s46 = sphi 0, %s45
    %s60 = sphi 0, %s46
    %s64 = sphi 0, %s64
    %s66 = sphi 0, %s64
    %s67 = sphi 0, %s66
    %s81 = sphi 0, %s67
    %s87 = sphi 0, %s89
    %s90 = sphi 0, %s87
    %s91 = sphi 0, %s90
    %s107 = sphi 0, %s91
  $region4: #{net_forward.6} parent=0 // loop_header_branch
    %12 = sbr.rel (%p10) target = $region8
  $region5: #{net_forward.6} parent=0 // loop_body
    %s14 = ssub.s32 %s9, 1
    %s15 = ssub.s32 %s9, 2
    %s16 = sadd.s32 %s9, 1
    %s17 = ssub.s32 %s9, %s16
    %p18 = scmp.eq.s32.totalorder %s17, 0
    %s20 = sadd.s32 %s19, 1
    %s21 = scalar_select %p18, %s19, %s20
    %p24 = pneg %p18
    %p25 = scmp.eq.s32.totalorder %s9, 11
    %p26 = por %p24, %p25
    %p27 = scmp.ne.s32.totalorder %s19, %s22
    %p28 = scmp.eq.s32.totalorder %s9, 0
    %p29 = por %p27, %p28
    %p30 = scmp.ne.s32.totalorder %s19, %s22
    %p31 = scmp.eq.s32.totalorder %s14, 11
    %p32 = por %p30, %p31
    %p33 = scmp.ne.s32.totalorder %s22, %s23
    %p34 = scmp.eq.s32.totalorder %s14, 0
    %p35 = por %p33, %p34
    %p36 = scmp.ne.s32.totalorder %s22, %s23
    %p37 = scmp.eq.s32.totalorder %s15, 11
    %p38 = por %p36, %p37
    %p40 = scmp.ne.s32.totalorder %s23, %s39
    %p41 = scmp.eq.s32.totalorder %s15, 0
    %p42 = por %p40, %p41
    %s44 = sadd.s32 %s43, 1
    %p47 = scmp.eq.s32.totalorder %s9, 11
    %p48 = scmp.ne.s32.totalorder %s43, %s45
    %p49 = scmp.eq.s32.totalorder %s9, 0
    %p50 = por %p48, %p49
    %p51 = scmp.ne.s32.totalorder %s43, %s45
    %p52 = scmp.eq.s32.totalorder %s14, 11
    %p53 = por %p51, %p52
    %p54 = scmp.ne.s32.totalorder %s45, %s46
    %p55 = scmp.eq.s32.totalorder %s14, 0
    %p56 = por %p54, %p55
    %p57 = scmp.ne.s32.totalorder %s45, %s46
    %p58 = scmp.eq.s32.totalorder %s15, 11
    %p59 = por %p57, %p58
    %p61 = scmp.ne.s32.totalorder %s46, %s60
    %p62 = scmp.eq.s32.totalorder %s15, 0
    %p63 = por %p61, %p62
    %s65 = sadd.s32 %s64, 1
    %p68 = scmp.eq.s32.totalorder %s9, 11
    %p69 = scmp.ne.s32.totalorder %s64, %s66
    %p70 = scmp.eq.s32.totalorder %s9, 0
    %p71 = por %p69, %p70
    %p72 = scmp.ne.s32.totalorder %s64, %s66
    %p73 = scmp.eq.s32.totalorder %s14, 11
    %p74 = por %p72, %p73
    %p75 = scmp.ne.s32.totalorder %s66, %s67
    %p76 = scmp.eq.s32.totalorder %s14, 0
    %p77 = por %p75, %p76
    %p78 = scmp.ne.s32.totalorder %s66, %s67
    %p79 = scmp.eq.s32.totalorder %s15, 11
    %p80 = por %p78, %p79
    %p82 = scmp.ne.s32.totalorder %s67, %s81
    %p83 = scmp.eq.s32.totalorder %s15, 0
    %p84 = por %p82, %p83
    %s85 = ssub.s32 %s9, %s16
    %p86 = scmp.eq.s32.totalorder %s85, 0
    %s88 = sadd.s32 %s87, 1
    %s89 = scalar_select %p86, %s87, %s88
    %p92 = pneg %p86
    %p93 = scmp.eq.s32.totalorder %s9, 11
    %p94 = por %p92, %p93
    %p95 = scmp.ne.s32.totalorder %s87, %s90
    %p96 = scmp.eq.s32.totalorder %s9, 0
    %p97 = por %p95, %p96
    %p98 = scmp.ne.s32.totalorder %s87, %s90
    %p99 = scmp.eq.s32.totalorder %s14, 11
    %p100 = por %p98, %p99
    %p101 = scmp.ne.s32.totalorder %s90, %s91
    %p102 = scmp.eq.s32.totalorder %s14, 0
    %p103 = por %p101, %p102
    %p104 = scmp.ne.s32.totalorder %s90, %s91
    %p105 = scmp.eq.s32.totalorder %s15, 11
    %p106 = por %p104, %p105
    %p108 = scmp.ne.s32.totalorder %s91, %s107
    %p109 = scmp.eq.s32.totalorder %s15, 0
    %p110 = por %p108, %p109
    %p111 = scmp.le.s32.totalorder 1, %s9
    %p112 = scmp.lt.s32.totalorder %s9, 13
    %p113 = pnand %p111, %p112
    %p114 = pneg %p113
    // Predicated region
    $region9: #{net_forward.6} parent=5 // pred_check
      _
    $region10: #{net_forward.6} parent=5 // pred_check_branch
      %116 = sbr.rel (%p113) target = $region12
    $region11: #{net_forward.6} parent=5 // pred_region
      %s117 = ssub.s32 %s9, 1
      // Predicated region
      $region13: #{net_forward.6} parent=11 // pred_check
        %p118 = pneg %p56
      $region14: #{net_forward.6} parent=11 // pred_check_branch
        %120 = sbr.rel (%p118) target = $region16
      $region15: #{net_forward.6} parent=11 // pred_region
        _
      $region16: #{net_forward.6} parent=11 // pred_fallthru
        _
      // Predicated region
      $region17: #{net_forward.6} parent=11 // pred_check
        %p121 = pneg %p77
      $region18: #{net_forward.6} parent=11 // pred_check_branch
        %123 = sbr.rel (%p121) target = $region20
      $region19: #{net_forward.6} parent=11 // pred_region
        _
      $region20: #{net_forward.6} parent=11 // pred_fallthru
        _
    $region12: #{net_forward.6} parent=5 // pred_fallthru
      _
    %p124 = scmp.lt.s32.totalorder %s9, 12
    // Predicated region
    $region21: #{net_forward.6} parent=5 // pred_check
      %p125 = pneg %p124
    $region22: #{net_forward.6} parent=5 // pred_check_branch
      %127 = sbr.rel (%p125) target = $region24
    $region23: #{net_forward.6} parent=5 // pred_region
      // Predicated region
      $region25: #{net_forward.6} parent=23 // pred_check
        %p128 = pneg %p29
      $region26: #{net_forward.6} parent=23 // pred_check_branch
        %130 = sbr.rel (%p128) target = $region28
      $region27: #{net_forward.6} parent=23 // pred_region
        %s131 = smul.u32 64, %s9
        %p132 = scmp.lt.s32.totalorder %s131, 767
        %s133 = scalar_select %p132, %s131, 767
        %s134 = smul.addr %s133, 4
        %s135 = scalar_lea.vmem %s0, %s134
        %s136 = smul.u32 64, %s9
      $region28: #{net_forward.6} parent=23 // pred_fallthru
        _
    $region24: #{net_forward.6} parent=5 // pred_fallthru
      _
    %p137 = scmp.le.s32.totalorder 1, %s9
    %p138 = scmp.lt.s32.totalorder %s9, 13
    %p139 = pnand %p137, %p138
    %p140 = pneg %p139
    // Predicated region
    $region29: #{net_forward.6} parent=5 // pred_check
      _
    $region30: #{net_forward.6} parent=5 // pred_check_branch
      %142 = sbr.rel (%p139) target = $region32
    $region31: #{net_forward.6} parent=5 // pred_region
      %s143 = ssub.s32 %s9, 1
      %s144 = smul.u32 64, %s14
      %p145 = scmp.lt.s32.totalorder %s144, 767
      %s146 = scalar_select %p145, %s144, 767
      %s147 = smul.addr %s146, 4
      %s148 = scalar_lea.vmem %s0, %s147
      %p149 = pneg %p35
      %p150 = pneg %p32
      %p151 = pneg %p56
      %p152 = pneg %p53
      %p153 = pneg %p77
      %p154 = pneg %p74
      %p155 = pneg %p103
      %p156 = pneg %p100
      %s157 = smul.u32 64, %s14
      %p158 = scmp.lt.s32.totalorder %s157, 767
      %s159 = scalar_select %p158, %s157, 767
      %s160 = smul.addr %s159, 4
      %s161 = scalar_lea.vmem %s3, %s160
      %s162 = smul.u32 64, %s14
      %p163 = scmp.lt.s32.totalorder %s162, 767
      %s164 = scalar_select %p163, %s162, 767
      %s165 = smul.addr %s164, 4
      %s166 = scalar_lea.vmem %s0, %s165
      %s167 = smul.u32 64, %s14
      %s168 = smul.u32 64, %s14
      %p169 = scmp.lt.s32.totalorder %s168, 767
      %s170 = scalar_select %p169, %s168, 767
      %s171 = smul.addr %s170, 4
      %s172 = scalar_lea.vmem %s3, %s171
      %s173 = smul.u32 64, %s14
      %v174 = vld [vmem:[%s166] sm:$0xf]
      %v175 = vld [vmem:[%s166 + $0x4] sm:$0xf]
      %v176 = vld [vmem:[%s166 + $0x8] sm:$0xf]
      %v177 = vld [vmem:[%s166 + $0xc] sm:$0xf]
      %v178 = vld [vmem:[%s166 + $0x10] sm:$0xf]
      %v179 = vld [vmem:[%s166 + $0x14] sm:$0xf]
      %v180 = vld [vmem:[%s166 + $0x18] sm:$0xf]
      %v181 = vld [vmem:[%s166 + $0x1c] sm:$0xf]
      %v182 = vld [vmem:[%s166 + $0x20] sm:$0xf]
      %v183 = vld [vmem:[%s166 + $0x24] sm:$0xf]
      %v184 = vld [vmem:[%s166 + $0x28] sm:$0xf]
      %v185 = vld [vmem:[%s166 + $0x2c] sm:$0xf]
      %v186 = vld [vmem:[%s166 + $0x30] sm:$0xf]
      %v187 = vld [vmem:[%s166 + $0x34] sm:$0xf]
      %v188 = vld [vmem:[%s166 + $0x38] sm:$0xf]
      %v189 = vld [vmem:[%s166 + $0x3c] sm:$0xf]
      %v190 = vld [vmem:[%s166 + $0x40] sm:$0xf]
      %v191 = vld [vmem:[%s166 + $0x44] sm:$0xf]
      %v192 = vld [vmem:[%s166 + $0x48] sm:$0xf]
      %v193 = vld [vmem:[%s166 + $0x4c] sm:$0xf]
      %v194 = vld [vmem:[%s166 + $0x50] sm:$0xf]
      %v195 = vld [vmem:[%s166 + $0x54] sm:$0xf]
      %v196 = vld [vmem:[%s166 + $0x58] sm:$0xf]
      %v197 = vld [vmem:[%s166 + $0x5c] sm:$0xf]
      %v198 = vld [vmem:[%s166 + $0x60] sm:$0xf]
      %v199 = vld [vmem:[%s166 + $0x64] sm:$0xf]
      %v200 = vld [vmem:[%s166 + $0x68] sm:$0xf]
      %v201 = vld [vmem:[%s166 + $0x6c] sm:$0xf]
      %v202 = vld [vmem:[%s166 + $0x70] sm:$0xf]
      %v203 = vld [vmem:[%s166 + $0x74] sm:$0xf]
      %v204 = vld [vmem:[%s166 + $0x78] sm:$0xf]
      %v205 = vld [vmem:[%s166 + $0x7c] sm:$0xf]
      %v206 = vld [vmem:[%s166 + $0x80] sm:$0xf]
      %v207 = vld [vmem:[%s166 + $0x84] sm:$0xf]
      %v208 = vld [vmem:[%s166 + $0x88] sm:$0xf]
      %v209 = vld [vmem:[%s166 + $0x8c] sm:$0xf]
      %v210 = vld [vmem:[%s166 + $0x90] sm:$0xf]
      %v211 = vld [vmem:[%s166 + $0x94] sm:$0xf]
      %v212 = vld [vmem:[%s166 + $0x98] sm:$0xf]
      %v213 = vld [vmem:[%s166 + $0x9c] sm:$0xf]
      %v214 = vld [vmem:[%s166 + $0xa0] sm:$0xf]
      %v215 = vld [vmem:[%s166 + $0xa4] sm:$0xf]
      %v216 = vld [vmem:[%s166 + $0xa8] sm:$0xf]
      %v217 = vld [vmem:[%s166 + $0xac] sm:$0xf]
      %v218 = vld [vmem:[%s166 + $0xb0] sm:$0xf]
      %v219 = vld [vmem:[%s166 + $0xb4] sm:$0xf]
      %v220 = vld [vmem:[%s166 + $0xb8] sm:$0xf]
      %v221 = vld [vmem:[%s166 + $0xbc] sm:$0xf]
      %v222 = vld [vmem:[%s166 + $0xc0] sm:$0xf]
      %v223 = vld [vmem:[%s166 + $0xc4] sm:$0xf]
      %v224 = vld [vmem:[%s166 + $0xc8] sm:$0xf]
      %v225 = vld [vmem:[%s166 + $0xcc] sm:$0xf]
      %v226 = vld [vmem:[%s166 + $0xd0] sm:$0xf]
      %v227 = vld [vmem:[%s166 + $0xd4] sm:$0xf]
      %v228 = vld [vmem:[%s166 + $0xd8] sm:$0xf]
      %v229 = vld [vmem:[%s166 + $0xdc] sm:$0xf]
      %v230 = vld [vmem:[%s166 + $0xe0] sm:$0xf]
      %v231 = vld [vmem:[%s166 + $0xe4] sm:$0xf]
      %v232 = vld [vmem:[%s166 + $0xe8] sm:$0xf]
      %v233 = vld [vmem:[%s166 + $0xec] sm:$0xf]
      %v234 = vld [vmem:[%s166 + $0xf0] sm:$0xf]
      %v235 = vld [vmem:[%s166 + $0xf4] sm:$0xf]
      %v236 = vld [vmem:[%s166 + $0xf8] sm:$0xf]
      %v237 = vld [vmem:[%s166 + $0xfc] sm:$0xf]
      %v238 = vld [vmem:[%s1] sm:$0xf]
      %v239 = vld [vmem:[%s1 + $0x4] sm:$0xf]
      %v240 = vld [vmem:[%s1 + $0x8] sm:$0xf]
      %v241 = vld [vmem:[%s1 + $0xc] sm:$0xf]
      %v242 = vld [vmem:[%s1 + $0x10] sm:$0xf]
      %v243 = vld [vmem:[%s1 + $0x14] sm:$0xf]
      %v244 = vld [vmem:[%s1 + $0x18] sm:$0xf]
      %v245 = vld [vmem:[%s1 + $0x1c] sm:$0xf]
      %v246 = vld [vmem:[%s1 + $0x20] sm:$0xf]
      %v247 = vld [vmem:[%s1 + $0x24] sm:$0xf]
      %v248 = vld [vmem:[%s1 + $0x28] sm:$0xf]
      %v249 = vld [vmem:[%s1 + $0x2c] sm:$0xf]
      %v250 = vld [vmem:[%s1 + $0x30] sm:$0xf]
      %v251 = vld [vmem:[%s1 + $0x34] sm:$0xf]
      %v252 = vld [vmem:[%s1 + $0x38] sm:$0xf]
      %v253 = vld [vmem:[%s1 + $0x3c] sm:$0xf]
      %v254 = vld [vmem:[%s2] sm:$0x1]
      %v256 = vperm.slane %v254, 0
      %v322 = vunpack.c.l.b16 %v174
      %v323 = vunpack.c.l.b16 %v175
      %v324 = vunpack.c.l.b16 %v176
      %v325 = vunpack.c.l.b16 %v177
      %v326 = vunpack.c.l.b16 %v178
      %v327 = vunpack.c.l.b16 %v179
      %v328 = vunpack.c.l.b16 %v180
      %v329 = vunpack.c.l.b16 %v181
      %v330 = vunpack.c.l.b16 %v182
      %v331 = vunpack.c.l.b16 %v183
      %v332 = vunpack.c.l.b16 %v184
      %v333 = vunpack.c.l.b16 %v185
      %v334 = vunpack.c.l.b16 %v186
      %v335 = vunpack.c.l.b16 %v187
      %v336 = vunpack.c.l.b16 %v188
      %v337 = vunpack.c.l.b16 %v189
      %v338 = vunpack.c.l.b16 %v190
      %v339 = vunpack.c.l.b16 %v191
      %v340 = vunpack.c.l.b16 %v192
      %v341 = vunpack.c.l.b16 %v193
      %v342 = vunpack.c.l.b16 %v194
      %v343 = vunpack.c.l.b16 %v195
      %v344 = vunpack.c.l.b16 %v196
      %v345 = vunpack.c.l.b16 %v197
      %v346 = vunpack.c.l.b16 %v198
      %v347 = vunpack.c.l.b16 %v199
      %v348 = vunpack.c.l.b16 %v200
      %v349 = vunpack.c.l.b16 %v201
      %v350 = vunpack.c.l.b16 %v202
      %v351 = vunpack.c.l.b16 %v203
      %v352 = vunpack.c.l.b16 %v204
      %v353 = vunpack.c.l.b16 %v205
      %v354 = vunpack.c.l.b16 %v206
      %v355 = vunpack.c.l.b16 %v207
      %v356 = vunpack.c.l.b16 %v208
      %v357 = vunpack.c.l.b16 %v209
      %v358 = vunpack.c.l.b16 %v210
      %v359 = vunpack.c.l.b16 %v211
      %v360 = vunpack.c.l.b16 %v212
      %v361 = vunpack.c.l.b16 %v213
      %v362 = vunpack.c.l.b16 %v214
      %v363 = vunpack.c.l.b16 %v215
      %v364 = vunpack.c.l.b16 %v216
      %v365 = vunpack.c.l.b16 %v217
      %v366 = vunpack.c.l.b16 %v218
      %v367 = vunpack.c.l.b16 %v219
      %v368 = vunpack.c.l.b16 %v220
      %v369 = vunpack.c.l.b16 %v221
      %v370 = vunpack.c.l.b16 %v222
      %v371 = vunpack.c.l.b16 %v223
      %v372 = vunpack.c.l.b16 %v224
      %v373 = vunpack.c.l.b16 %v225
      %v374 = vunpack.c.l.b16 %v226
      %v375 = vunpack.c.l.b16 %v227
      %v376 = vunpack.c.l.b16 %v228
      %v377 = vunpack.c.l.b16 %v229
      %v378 = vunpack.c.l.b16 %v230
      %v379 = vunpack.c.l.b16 %v231
      %v380 = vunpack.c.l.b16 %v232
      %v381 = vunpack.c.l.b16 %v233
      %v382 = vunpack.c.l.b16 %v234
      %v383 = vunpack.c.l.b16 %v235
      %v384 = vunpack.c.l.b16 %v236
      %v385 = vunpack.c.l.b16 %v237
      %v386 = vpack.c.b16 %v323, %v322
      %v387 = vpack.c.b16 %v325, %v324
      %v388 = vpack.c.b16 %v327, %v326
      %v389 = vpack.c.b16 %v329, %v328
      %v390 = vpack.c.b16 %v331, %v330
      %v391 = vpack.c.b16 %v333, %v332
      %v392 = vpack.c.b16 %v335, %v334
      %v393 = vpack.c.b16 %v337, %v336
      %v394 = vpack.c.b16 %v339, %v338
      %v395 = vpack.c.b16 %v341, %v340
      %v396 = vpack.c.b16 %v343, %v342
      %v397 = vpack.c.b16 %v345, %v344
      %v398 = vpack.c.b16 %v347, %v346
      %v399 = vpack.c.b16 %v349, %v348
      %v400 = vpack.c.b16 %v351, %v350
      %v401 = vpack.c.b16 %v353, %v352
      %v402 = vpack.c.b16 %v355, %v354
      %v403 = vpack.c.b16 %v357, %v356
      %v404 = vpack.c.b16 %v359, %v358
      %v405 = vpack.c.b16 %v361, %v360
      %v406 = vpack.c.b16 %v363, %v362
      %v407 = vpack.c.b16 %v365, %v364
      %v408 = vpack.c.b16 %v367, %v366
      %v409 = vpack.c.b16 %v369, %v368
      %v410 = vpack.c.b16 %v371, %v370
      %v411 = vpack.c.b16 %v373, %v372
      %v412 = vpack.c.b16 %v375, %v374
      %v413 = vpack.c.b16 %v377, %v376
      %v414 = vpack.c.b16 %v379, %v378
      %v415 = vpack.c.b16 %v381, %v380
      %v416 = vpack.c.b16 %v383, %v382
      %v417 = vpack.c.b16 %v385, %v384
      %v466 = vunpack.c.l.b16 %v238
      %v467 = vunpack.c.l.b16 %v239
      %v468 = vunpack.c.l.b16 %v240
      %v469 = vunpack.c.l.b16 %v241
      %v470 = vunpack.c.l.b16 %v242
      %v471 = vunpack.c.l.b16 %v243
      %v472 = vunpack.c.l.b16 %v244
      %v473 = vunpack.c.l.b16 %v245
      %v474 = vunpack.c.l.b16 %v246
      %v475 = vunpack.c.l.b16 %v247
      %v476 = vunpack.c.l.b16 %v248
      %v477 = vunpack.c.l.b16 %v249
      %v478 = vunpack.c.l.b16 %v250
      %v479 = vunpack.c.l.b16 %v251
      %v480 = vunpack.c.l.b16 %v252
      %v481 = vunpack.c.l.b16 %v253
      %v482 = vpack.c.b16 %v467, %v466
      %v483 = vpack.c.b16 %v469, %v468
      %v484 = vpack.c.b16 %v471, %v470
      %v485 = vpack.c.b16 %v473, %v472
      %v486 = vpack.c.b16 %v475, %v474
      %v487 = vpack.c.b16 %v477, %v476
      %v488 = vpack.c.b16 %v479, %v478
      %v489 = vpack.c.b16 %v481, %v480
      %498 = vmatpush.bf16.msra.mxu0 %v489
      %499 = vmatpush.bf16.msra.mxu0 %v488
      %500 = vmatpush.bf16.msra.mxu0 %v487
      %501 = vmatpush.bf16.msra.mxu0 %v486
      %502 = vmatpush.bf16.msra.mxu0 %v485
      %503 = vmatpush.bf16.msra.mxu0 %v484
      %504 = vmatpush.bf16.msra.mxu0 %v483
      %505 = vmatpush.bf16.msra.mxu0 %v482
      %506 = vmatmul.bf16.gmra.mxu0 %v386
      %v507 = vpop.f32.mrf.mxu0
      %v508 = vadd.f32 %v256, %v507
      %v509 = vpop.f32.mrf.mxu0
      %v510 = vadd.f32 %v256, %v509
      %511 = vmatmul.bf16.gmra.mxu0 %v387
      %v512 = vpop.f32.mrf.mxu0
      %v513 = vadd.f32 %v256, %v512
      %v514 = vpop.f32.mrf.mxu0
      %v515 = vadd.f32 %v256, %v514
      %516 = vmatmul.bf16.gmra.mxu0 %v388
      %v517 = vpop.f32.mrf.mxu0
      %v518 = vadd.f32 %v256, %v517
      %v519 = vpop.f32.mrf.mxu0
      %v520 = vadd.f32 %v256, %v519
      %521 = vmatmul.bf16.gmra.mxu0 %v389
      %v522 = vpop.f32.mrf.mxu0
      %v523 = vadd.f32 %v256, %v522
      %v524 = vpop.f32.mrf.mxu0
      %v525 = vadd.f32 %v256, %v524
      %526 = vmatmul.bf16.gmra.mxu0 %v390
      %v527 = vpop.f32.mrf.mxu0
      %v528 = vadd.f32 %v256, %v527
      %v529 = vpop.f32.mrf.mxu0
      %v530 = vadd.f32 %v256, %v529
      %531 = vmatmul.bf16.gmra.mxu0 %v391
      %v532 = vpop.f32.mrf.mxu0
      %v533 = vadd.f32 %v256, %v532
      %v534 = vpop.f32.mrf.mxu0
      %v535 = vadd.f32 %v256, %v534
      %536 = vmatmul.bf16.gmra.mxu0 %v392
      %v537 = vpop.f32.mrf.mxu0
      %v538 = vadd.f32 %v256, %v537
      %v539 = vpop.f32.mrf.mxu0
      %v540 = vadd.f32 %v256, %v539
      %541 = vmatmul.bf16.gmra.mxu0 %v393
      %v542 = vpop.f32.mrf.mxu0
      %v543 = vadd.f32 %v256, %v542
      %v544 = vpop.f32.mrf.mxu0
      %v545 = vadd.f32 %v256, %v544
      %546 = vmatmul.bf16.gmra.mxu0 %v394
      %v547 = vpop.f32.mrf.mxu0
      %v548 = vadd.f32 %v256, %v547
      %v549 = vpop.f32.mrf.mxu0
      %v550 = vadd.f32 %v256, %v549
      %551 = vmatmul.bf16.gmra.mxu0 %v395
      %v552 = vpop.f32.mrf.mxu0
      %v553 = vadd.f32 %v256, %v552
      %v554 = vpop.f32.mrf.mxu0
      %v555 = vadd.f32 %v256, %v554
      %556 = vmatmul.bf16.gmra.mxu0 %v396
      %v557 = vpop.f32.mrf.mxu0
      %v558 = vadd.f32 %v256, %v557
      %v559 = vpop.f32.mrf.mxu0
      %v560 = vadd.f32 %v256, %v559
      %561 = vmatmul.bf16.gmra.mxu0 %v397
      %v562 = vpop.f32.mrf.mxu0
      %v563 = vadd.f32 %v256, %v562
      %v564 = vpop.f32.mrf.mxu0
      %v565 = vadd.f32 %v256, %v564
      %566 = vmatmul.bf16.gmra.mxu0 %v398
      %v567 = vpop.f32.mrf.mxu0
      %v568 = vadd.f32 %v256, %v567
      %v569 = vpop.f32.mrf.mxu0
      %v570 = vadd.f32 %v256, %v569
      %571 = vmatmul.bf16.gmra.mxu0 %v399
      %v572 = vpop.f32.mrf.mxu0
      %v573 = vadd.f32 %v256, %v572
      %v574 = vpop.f32.mrf.mxu0
      %v575 = vadd.f32 %v256, %v574
      %576 = vmatmul.bf16.gmra.mxu0 %v400
      %v577 = vpop.f32.mrf.mxu0
      %v578 = vadd.f32 %v256, %v577
      %v579 = vpop.f32.mrf.mxu0
      %v580 = vadd.f32 %v256, %v579
      %581 = vmatmul.bf16.gmra.mxu0 %v401
      %v582 = vpop.f32.mrf.mxu0
      %v583 = vadd.f32 %v256, %v582
      %v584 = vpop.f32.mrf.mxu0
      %v585 = vadd.f32 %v256, %v584
      %586 = vmatmul.bf16.gmra.mxu0 %v402
      %v587 = vpop.f32.mrf.mxu0
      %v588 = vadd.f32 %v256, %v587
      %v589 = vpop.f32.mrf.mxu0
      %v590 = vadd.f32 %v256, %v589
      %591 = vmatmul.bf16.gmra.mxu0 %v403
      %v592 = vpop.f32.mrf.mxu0
      %v593 = vadd.f32 %v256, %v592
      %v594 = vpop.f32.mrf.mxu0
      %v595 = vadd.f32 %v256, %v594
      %596 = vmatmul.bf16.gmra.mxu0 %v404
      %v597 = vpop.f32.mrf.mxu0
      %v598 = vadd.f32 %v256, %v597
      %v599 = vpop.f32.mrf.mxu0
      %v600 = vadd.f32 %v256, %v599
      %601 = vmatmul.bf16.gmra.mxu0 %v405
      %v602 = vpop.f32.mrf.mxu0
      %v603 = vadd.f32 %v256, %v602
      %v604 = vpop.f32.mrf.mxu0
      %v605 = vadd.f32 %v256, %v604
      %606 = vmatmul.bf16.gmra.mxu0 %v406
      %v607 = vpop.f32.mrf.mxu0
      %v608 = vadd.f32 %v256, %v607
      %v609 = vpop.f32.mrf.mxu0
      %v610 = vadd.f32 %v256, %v609
      %611 = vmatmul.bf16.gmra.mxu0 %v407
      %v612 = vpop.f32.mrf.mxu0
      %v613 = vadd.f32 %v256, %v612
      %v614 = vpop.f32.mrf.mxu0
      %v615 = vadd.f32 %v256, %v614
      %616 = vmatmul.bf16.gmra.mxu0 %v408
      %v617 = vpop.f32.mrf.mxu0
      %v618 = vadd.f32 %v256, %v617
      %v619 = vpop.f32.mrf.mxu0
      %v620 = vadd.f32 %v256, %v619
      %621 = vmatmul.bf16.gmra.mxu0 %v409
      %v622 = vpop.f32.mrf.mxu0
      %v623 = vadd.f32 %v256, %v622
      %v624 = vpop.f32.mrf.mxu0
      %v625 = vadd.f32 %v256, %v624
      %626 = vmatmul.bf16.gmra.mxu0 %v410
      %v627 = vpop.f32.mrf.mxu0
      %v628 = vadd.f32 %v256, %v627
      %v629 = vpop.f32.mrf.mxu0
      %v630 = vadd.f32 %v256, %v629
      %631 = vmatmul.bf16.gmra.mxu0 %v411
      %v632 = vpop.f32.mrf.mxu0
      %v633 = vadd.f32 %v256, %v632
      %v634 = vpop.f32.mrf.mxu0
      %v635 = vadd.f32 %v256, %v634
      %636 = vmatmul.bf16.gmra.mxu0 %v412
      %v637 = vpop.f32.mrf.mxu0
      %v638 = vadd.f32 %v256, %v637
      %v639 = vpop.f32.mrf.mxu0
      %v640 = vadd.f32 %v256, %v639
      %641 = vmatmul.bf16.gmra.mxu0 %v413
      %v642 = vpop.f32.mrf.mxu0
      %v643 = vadd.f32 %v256, %v642
      %v644 = vpop.f32.mrf.mxu0
      %v645 = vadd.f32 %v256, %v644
      %646 = vmatmul.bf16.gmra.mxu0 %v414
      %v647 = vpop.f32.mrf.mxu0
      %v648 = vadd.f32 %v256, %v647
      %v649 = vpop.f32.mrf.mxu0
      %v650 = vadd.f32 %v256, %v649
      %651 = vmatmul.bf16.gmra.mxu0 %v415
      %v652 = vpop.f32.mrf.mxu0
      %v653 = vadd.f32 %v256, %v652
      %v654 = vpop.f32.mrf.mxu0
      %v655 = vadd.f32 %v256, %v654
      %656 = vmatmul.bf16.gmra.mxu0 %v416
      %v657 = vpop.f32.mrf.mxu0
      %v658 = vadd.f32 %v256, %v657
      %v659 = vpop.f32.mrf.mxu0
      %v660 = vadd.f32 %v256, %v659
      %661 = vmatmul.bf16.gmra.mxu0 %v417
      %v662 = vpop.f32.mrf.mxu0
      %v663 = vadd.f32 %v256, %v662
      %v664 = vpop.f32.mrf.mxu0
      %v665 = vadd.f32 %v256, %v664
      %666 = vdwg.mxu0
      %vm667 = vcmp.gt.f32.partialorder %v508, 0.0
      %vm668 = vcmp.gt.f32.partialorder %v510, 0.0
      %vm669 = vcmp.gt.f32.partialorder %v513, 0.0
      %vm670 = vcmp.gt.f32.partialorder %v515, 0.0
      %vm671 = vcmp.gt.f32.partialorder %v518, 0.0
      %vm672 = vcmp.gt.f32.partialorder %v520, 0.0
      %vm673 = vcmp.gt.f32.partialorder %v523, 0.0
      %vm674 = vcmp.gt.f32.partialorder %v525, 0.0
      %vm675 = vcmp.gt.f32.partialorder %v528, 0.0
      %vm676 = vcmp.gt.f32.partialorder %v530, 0.0
      %vm677 = vcmp.gt.f32.partialorder %v533, 0.0
      %vm678 = vcmp.gt.f32.partialorder %v535, 0.0
      %vm679 = vcmp.gt.f32.partialorder %v538, 0.0
      %vm680 = vcmp.gt.f32.partialorder %v540, 0.0
      %vm681 = vcmp.gt.f32.partialorder %v543, 0.0
      %vm682 = vcmp.gt.f32.partialorder %v545, 0.0
      %vm683 = vcmp.gt.f32.partialorder %v548, 0.0
      %vm684 = vcmp.gt.f32.partialorder %v550, 0.0
      %vm685 = vcmp.gt.f32.partialorder %v553, 0.0
      %vm686 = vcmp.gt.f32.partialorder %v555, 0.0
      %vm687 = vcmp.gt.f32.partialorder %v558, 0.0
      %vm688 = vcmp.gt.f32.partialorder %v560, 0.0
      %vm689 = vcmp.gt.f32.partialorder %v563, 0.0
      %vm690 = vcmp.gt.f32.partialorder %v565, 0.0
      %vm691 = vcmp.gt.f32.partialorder %v568, 0.0
      %vm692 = vcmp.gt.f32.partialorder %v570, 0.0
      %vm693 = vcmp.gt.f32.partialorder %v573, 0.0
      %vm694 = vcmp.gt.f32.partialorder %v575, 0.0
      %vm695 = vcmp.gt.f32.partialorder %v578, 0.0
      %vm696 = vcmp.gt.f32.partialorder %v580, 0.0
      %vm697 = vcmp.gt.f32.partialorder %v583, 0.0
      %vm698 = vcmp.gt.f32.partialorder %v585, 0.0
      %vm699 = vcmp.gt.f32.partialorder %v588, 0.0
      %vm700 = vcmp.gt.f32.partialorder %v590, 0.0
      %vm701 = vcmp.gt.f32.partialorder %v593, 0.0
      %vm702 = vcmp.gt.f32.partialorder %v595, 0.0
      %vm703 = vcmp.gt.f32.partialorder %v598, 0.0
      %vm704 = vcmp.gt.f32.partialorder %v600, 0.0
      %vm705 = vcmp.gt.f32.partialorder %v603, 0.0
      %vm706 = vcmp.gt.f32.partialorder %v605, 0.0
      %vm707 = vcmp.gt.f32.partialorder %v608, 0.0
      %vm708 = vcmp.gt.f32.partialorder %v610, 0.0
      %vm709 = vcmp.gt.f32.partialorder %v613, 0.0
      %vm710 = vcmp.gt.f32.partialorder %v615, 0.0
      %vm711 = vcmp.gt.f32.partialorder %v618, 0.0
      %vm712 = vcmp.gt.f32.partialorder %v620, 0.0
      %vm713 = vcmp.gt.f32.partialorder %v623, 0.0
      %vm714 = vcmp.gt.f32.partialorder %v625, 0.0
      %vm715 = vcmp.gt.f32.partialorder %v628, 0.0
      %vm716 = vcmp.gt.f32.partialorder %v630, 0.0
      %vm717 = vcmp.gt.f32.partialorder %v633, 0.0
      %vm718 = vcmp.gt.f32.partialorder %v635, 0.0
      %vm719 = vcmp.gt.f32.partialorder %v638, 0.0
      %vm720 = vcmp.gt.f32.partialorder %v640, 0.0
      %vm721 = vcmp.gt.f32.partialorder %v643, 0.0
      %vm722 = vcmp.gt.f32.partialorder %v645, 0.0
      %vm723 = vcmp.gt.f32.partialorder %v648, 0.0
      %vm724 = vcmp.gt.f32.partialorder %v650, 0.0
      %vm725 = vcmp.gt.f32.partialorder %v653, 0.0
      %vm726 = vcmp.gt.f32.partialorder %v655, 0.0
      %vm727 = vcmp.gt.f32.partialorder %v658, 0.0
      %vm728 = vcmp.gt.f32.partialorder %v660, 0.0
      %vm729 = vcmp.gt.f32.partialorder %v663, 0.0
      %vm730 = vcmp.gt.f32.partialorder %v665, 0.0
      %v731 = vmin.f32 %v508, 0.0
      %v732 = vmin.f32 %v510, 0.0
      %v733 = vmin.f32 %v513, 0.0
      %v734 = vmin.f32 %v515, 0.0
      %v735 = vmin.f32 %v518, 0.0
      %v736 = vmin.f32 %v520, 0.0
      %v737 = vmin.f32 %v523, 0.0
      %v738 = vmin.f32 %v525, 0.0
      %v739 = vmin.f32 %v528, 0.0
      %v740 = vmin.f32 %v530, 0.0
      %v741 = vmin.f32 %v533, 0.0
      %v742 = vmin.f32 %v535, 0.0
      %v743 = vmin.f32 %v538, 0.0
      %v744 = vmin.f32 %v540, 0.0
      %v745 = vmin.f32 %v543, 0.0
      %v746 = vmin.f32 %v545, 0.0
      %v747 = vmin.f32 %v548, 0.0
      %v748 = vmin.f32 %v550, 0.0
      %v749 = vmin.f32 %v553, 0.0
      %v750 = vmin.f32 %v555, 0.0
      %v751 = vmin.f32 %v558, 0.0
      %v752 = vmin.f32 %v560, 0.0
      %v753 = vmin.f32 %v563, 0.0
      %v754 = vmin.f32 %v565, 0.0
      %v755 = vmin.f32 %v568, 0.0
      %v756 = vmin.f32 %v570, 0.0
      %v757 = vmin.f32 %v573, 0.0
      %v758 = vmin.f32 %v575, 0.0
      %v759 = vmin.f32 %v578, 0.0
      %v760 = vmin.f32 %v580, 0.0
      %v761 = vmin.f32 %v583, 0.0
      %v762 = vmin.f32 %v585, 0.0
      %v763 = vmin.f32 %v588, 0.0
      %v764 = vmin.f32 %v590, 0.0
      %v765 = vmin.f32 %v593, 0.0
      %v766 = vmin.f32 %v595, 0.0
      %v767 = vmin.f32 %v598, 0.0
      %v768 = vmin.f32 %v600, 0.0
      %v769 = vmin.f32 %v603, 0.0
      %v770 = vmin.f32 %v605, 0.0
      %v771 = vmin.f32 %v608, 0.0
      %v772 = vmin.f32 %v610, 0.0
      %v773 = vmin.f32 %v613, 0.0
      %v774 = vmin.f32 %v615, 0.0
      %v775 = vmin.f32 %v618, 0.0
      %v776 = vmin.f32 %v620, 0.0
      %v777 = vmin.f32 %v623, 0.0
      %v778 = vmin.f32 %v625, 0.0
      %v779 = vmin.f32 %v628, 0.0
      %v780 = vmin.f32 %v630, 0.0
      %v781 = vmin.f32 %v633, 0.0
      %v782 = vmin.f32 %v635, 0.0
      %v783 = vmin.f32 %v638, 0.0
      %v784 = vmin.f32 %v640, 0.0
      %v785 = vmin.f32 %v643, 0.0
      %v786 = vmin.f32 %v645, 0.0
      %v787 = vmin.f32 %v648, 0.0
      %v788 = vmin.f32 %v650, 0.0
      %v789 = vmin.f32 %v653, 0.0
      %v790 = vmin.f32 %v655, 0.0
      %v791 = vmin.f32 %v658, 0.0
      %v792 = vmin.f32 %v660, 0.0
      %v793 = vmin.f32 %v663, 0.0
      %v794 = vmin.f32 %v665, 0.0
      %v795 = vmul.f32 %v731, 1.442695
      %v796 = vpow.pop %v795
      %v797 = vmul.f32 %v732, 1.442695
      %v798 = vpow.pop %v797
      %v799 = vmul.f32 %v733, 1.442695
      %v800 = vpow.pop %v799
      %v801 = vmul.f32 %v734, 1.442695
      %v802 = vpow.pop %v801
      %v803 = vmul.f32 %v735, 1.442695
      %v804 = vpow.pop %v803
      %v805 = vmul.f32 %v736, 1.442695
      %v806 = vpow.pop %v805
      %v807 = vmul.f32 %v737, 1.442695
      %v808 = vpow.pop %v807
      %v809 = vmul.f32 %v738, 1.442695
      %v810 = vpow.pop %v809
      %v811 = vmul.f32 %v739, 1.442695
      %v812 = vpow.pop %v811
      %v813 = vmul.f32 %v740, 1.442695
      %v814 = vpow.pop %v813
      %v815 = vmul.f32 %v741, 1.442695
      %v816 = vpow.pop %v815
      %v817 = vmul.f32 %v742, 1.442695
      %v818 = vpow.pop %v817
      %v819 = vmul.f32 %v743, 1.442695
      %v820 = vpow.pop %v819
      %v821 = vmul.f32 %v744, 1.442695
      %v822 = vpow.pop %v821
      %v823 = vmul.f32 %v745, 1.442695
      %v824 = vpow.pop %v823
      %v825 = vmul.f32 %v746, 1.442695
      %v826 = vpow.pop %v825
      %v827 = vmul.f32 %v747, 1.442695
      %v828 = vpow.pop %v827
      %v829 = vmul.f32 %v748, 1.442695
      %v830 = vpow.pop %v829
      %v831 = vmul.f32 %v749, 1.442695
      %v832 = vpow.pop %v831
      %v833 = vmul.f32 %v750, 1.442695
      %v834 = vpow.pop %v833
      %v835 = vmul.f32 %v751, 1.442695
      %v836 = vpow.pop %v835
      %v837 = vmul.f32 %v752, 1.442695
      %v838 = vpow.pop %v837
      %v839 = vmul.f32 %v753, 1.442695
      %v840 = vpow.pop %v839
      %v841 = vmul.f32 %v754, 1.442695
      %v842 = vpow.pop %v841
      %v843 = vmul.f32 %v755, 1.442695
      %v844 = vpow.pop %v843
      %v845 = vmul.f32 %v756, 1.442695
      %v846 = vpow.pop %v845
      %v847 = vmul.f32 %v757, 1.442695
      %v848 = vpow.pop %v847
      %v849 = vmul.f32 %v758, 1.442695
      %v850 = vpow.pop %v849
      %v851 = vmul.f32 %v759, 1.442695
      %v852 = vpow.pop %v851
      %v853 = vmul.f32 %v760, 1.442695
      %v854 = vpow.pop %v853
      %v855 = vmul.f32 %v761, 1.442695
      %v856 = vpow.pop %v855
      %v857 = vmul.f32 %v762, 1.442695
      %v858 = vpow.pop %v857
      %v859 = vmul.f32 %v763, 1.442695
      %v860 = vpow.pop %v859
      %v861 = vmul.f32 %v764, 1.442695
      %v862 = vpow.pop %v861
      %v863 = vmul.f32 %v765, 1.442695
      %v864 = vpow.pop %v863
      %v865 = vmul.f32 %v766, 1.442695
      %v866 = vpow.pop %v865
      %v867 = vmul.f32 %v767, 1.442695
      %v868 = vpow.pop %v867
      %v869 = vmul.f32 %v768, 1.442695
      %v870 = vpow.pop %v869
      %v871 = vmul.f32 %v769, 1.442695
      %v872 = vpow.pop %v871
      %v873 = vmul.f32 %v770, 1.442695
      %v874 = vpow.pop %v873
      %v875 = vmul.f32 %v771, 1.442695
      %v876 = vpow.pop %v875
      %v877 = vmul.f32 %v772, 1.442695
      %v878 = vpow.pop %v877
      %v879 = vmul.f32 %v773, 1.442695
      %v880 = vpow.pop %v879
      %v881 = vmul.f32 %v774, 1.442695
      %v882 = vpow.pop %v881
      %v883 = vmul.f32 %v775, 1.442695
      %v884 = vpow.pop %v883
      %v885 = vmul.f32 %v776, 1.442695
      %v886 = vpow.pop %v885
      %v887 = vmul.f32 %v777, 1.442695
      %v888 = vpow.pop %v887
      %v889 = vmul.f32 %v778, 1.442695
      %v890 = vpow.pop %v889
      %v891 = vmul.f32 %v779, 1.442695
      %v892 = vpow.pop %v891
      %v893 = vmul.f32 %v780, 1.442695
      %v894 = vpow.pop %v893
      %v895 = vmul.f32 %v781, 1.442695
      %v896 = vpow.pop %v895
      %v897 = vmul.f32 %v782, 1.442695
      %v898 = vpow.pop %v897
      %v899 = vmul.f32 %v783, 1.442695
      %v900 = vpow.pop %v899
      %v901 = vmul.f32 %v784, 1.442695
      %v902 = vpow.pop %v901
      %v903 = vmul.f32 %v785, 1.442695
      %v904 = vpow.pop %v903
      %v905 = vmul.f32 %v786, 1.442695
      %v906 = vpow.pop %v905
      %v907 = vmul.f32 %v787, 1.442695
      %v908 = vpow.pop %v907
      %v909 = vmul.f32 %v788, 1.442695
      %v910 = vpow.pop %v909
      %v911 = vmul.f32 %v789, 1.442695
      %v912 = vpow.pop %v911
      %v913 = vmul.f32 %v790, 1.442695
      %v914 = vpow.pop %v913
      %v915 = vmul.f32 %v791, 1.442695
      %v916 = vpow.pop %v915
      %v917 = vmul.f32 %v792, 1.442695
      %v918 = vpow.pop %v917
      %v919 = vmul.f32 %v793, 1.442695
      %v920 = vpow.pop %v919
      %v921 = vmul.f32 %v794, 1.442695
      %v922 = vpow.pop %v921
      %v923 = vsub.f32 %v796, 1.0
      %v924 = vsub.f32 %v798, 1.0
      %v925 = vsub.f32 %v800, 1.0
      %v926 = vsub.f32 %v802, 1.0
      %v927 = vsub.f32 %v804, 1.0
      %v928 = vsub.f32 %v806, 1.0
      %v929 = vsub.f32 %v808, 1.0
      %v930 = vsub.f32 %v810, 1.0
      %v931 = vsub.f32 %v812, 1.0
      %v932 = vsub.f32 %v814, 1.0
      %v933 = vsub.f32 %v816, 1.0
      %v934 = vsub.f32 %v818, 1.0
      %v935 = vsub.f32 %v820, 1.0
      %v936 = vsub.f32 %v822, 1.0
      %v937 = vsub.f32 %v824, 1.0
      %v938 = vsub.f32 %v826, 1.0
      %v939 = vsub.f32 %v828, 1.0
      %v940 = vsub.f32 %v830, 1.0
      %v941 = vsub.f32 %v832, 1.0
      %v942 = vsub.f32 %v834, 1.0
      %v943 = vsub.f32 %v836, 1.0
      %v944 = vsub.f32 %v838, 1.0
      %v945 = vsub.f32 %v840, 1.0
      %v946 = vsub.f32 %v842, 1.0
      %v947 = vsub.f32 %v844, 1.0
      %v948 = vsub.f32 %v846, 1.0
      %v949 = vsub.f32 %v848, 1.0
      %v950 = vsub.f32 %v850, 1.0
      %v951 = vsub.f32 %v852, 1.0
      %v952 = vsub.f32 %v854, 1.0
      %v953 = vsub.f32 %v856, 1.0
      %v954 = vsub.f32 %v858, 1.0
      %v955 = vsub.f32 %v860, 1.0
      %v956 = vsub.f32 %v862, 1.0
      %v957 = vsub.f32 %v864, 1.0
      %v958 = vsub.f32 %v866, 1.0
      %v959 = vsub.f32 %v868, 1.0
      %v960 = vsub.f32 %v870, 1.0
      %v961 = vsub.f32 %v872, 1.0
      %v962 = vsub.f32 %v874, 1.0
      %v963 = vsub.f32 %v876, 1.0
      %v964 = vsub.f32 %v878, 1.0
      %v965 = vsub.f32 %v880, 1.0
      %v966 = vsub.f32 %v882, 1.0
      %v967 = vsub.f32 %v884, 1.0
      %v968 = vsub.f32 %v886, 1.0
      %v969 = vsub.f32 %v888, 1.0
      %v970 = vsub.f32 %v890, 1.0
      %v971 = vsub.f32 %v892, 1.0
      %v972 = vsub.f32 %v894, 1.0
      %v973 = vsub.f32 %v896, 1.0
      %v974 = vsub.f32 %v898, 1.0
      %v975 = vsub.f32 %v900, 1.0
      %v976 = vsub.f32 %v902, 1.0
      %v977 = vsub.f32 %v904, 1.0
      %v978 = vsub.f32 %v906, 1.0
      %v979 = vsub.f32 %v908, 1.0
      %v980 = vsub.f32 %v910, 1.0
      %v981 = vsub.f32 %v912, 1.0
      %v982 = vsub.f32 %v914, 1.0
      %v983 = vsub.f32 %v916, 1.0
      %v984 = vsub.f32 %v918, 1.0
      %v985 = vsub.f32 %v920, 1.0
      %v986 = vsub.f32 %v922, 1.0
      %v987 = vsel %vm667, %v508, %v923
      %v988 = vsel %vm668, %v510, %v924
      %v989 = vsel %vm669, %v513, %v925
      %v990 = vsel %vm670, %v515, %v926
      %v991 = vsel %vm671, %v518, %v927
      %v992 = vsel %vm672, %v520, %v928
      %v993 = vsel %vm673, %v523, %v929
      %v994 = vsel %vm674, %v525, %v930
      %v995 = vsel %vm675, %v528, %v931
      %v996 = vsel %vm676, %v530, %v932
      %v997 = vsel %vm677, %v533, %v933
      %v998 = vsel %vm678, %v535, %v934
      %v999 = vsel %vm679, %v538, %v935
      %v1000 = vsel %vm680, %v540, %v936
      %v1001 = vsel %vm681, %v543, %v937
      %v1002 = vsel %vm682, %v545, %v938
      %v1003 = vsel %vm683, %v548, %v939
      %v1004 = vsel %vm684, %v550, %v940
      %v1005 = vsel %vm685, %v553, %v941
      %v1006 = vsel %vm686, %v555, %v942
      %v1007 = vsel %vm687, %v558, %v943
      %v1008 = vsel %vm688, %v560, %v944
      %v1009 = vsel %vm689, %v563, %v945
      %v1010 = vsel %vm690, %v565, %v946
      %v1011 = vsel %vm691, %v568, %v947
      %v1012 = vsel %vm692, %v570, %v948
      %v1013 = vsel %vm693, %v573, %v949
      %v1014 = vsel %vm694, %v575, %v950
      %v1015 = vsel %vm695, %v578, %v951
      %v1016 = vsel %vm696, %v580, %v952
      %v1017 = vsel %vm697, %v583, %v953
      %v1018 = vsel %vm698, %v585, %v954
      %v1019 = vsel %vm699, %v588, %v955
      %v1020 = vsel %vm700, %v590, %v956
      %v1021 = vsel %vm701, %v593, %v957
      %v1022 = vsel %vm702, %v595, %v958
      %v1023 = vsel %vm703, %v598, %v959
      %v1024 = vsel %vm704, %v600, %v960
      %v1025 = vsel %vm705, %v603, %v961
      %v1026 = vsel %vm706, %v605, %v962
      %v1027 = vsel %vm707, %v608, %v963
      %v1028 = vsel %vm708, %v610, %v964
      %v1029 = vsel %vm709, %v613, %v965
      %v1030 = vsel %vm710, %v615, %v966
      %v1031 = vsel %vm711, %v618, %v967
      %v1032 = vsel %vm712, %v620, %v968
      %v1033 = vsel %vm713, %v623, %v969
      %v1034 = vsel %vm714, %v625, %v970
      %v1035 = vsel %vm715, %v628, %v971
      %v1036 = vsel %vm716, %v630, %v972
      %v1037 = vsel %vm717, %v633, %v973
      %v1038 = vsel %vm718, %v635, %v974
      %v1039 = vsel %vm719, %v638, %v975
      %v1040 = vsel %vm720, %v640, %v976
      %v1041 = vsel %vm721, %v643, %v977
      %v1042 = vsel %vm722, %v645, %v978
      %v1043 = vsel %vm723, %v648, %v979
      %v1044 = vsel %vm724, %v650, %v980
      %v1045 = vsel %vm725, %v653, %v981
      %v1046 = vsel %vm726, %v655, %v982
      %v1047 = vsel %vm727, %v658, %v983
      %v1048 = vsel %vm728, %v660, %v984
      %v1049 = vsel %vm729, %v663, %v985
      %v1050 = vsel %vm730, %v665, %v986
      %v1051 = vpack.c.bf16 %v987, %v987
      %v1052 = vpack.c.bf16 %v988, %v988
      %v1053 = vpack.c.bf16 %v989, %v989
      %v1054 = vpack.c.bf16 %v990, %v990
      %v1055 = vpack.c.bf16 %v991, %v991
      %v1056 = vpack.c.bf16 %v992, %v992
      %v1057 = vpack.c.bf16 %v993, %v993
      %v1058 = vpack.c.bf16 %v994, %v994
      %v1059 = vpack.c.bf16 %v995, %v995
      %v1060 = vpack.c.bf16 %v996, %v996
      %v1061 = vpack.c.bf16 %v997, %v997
      %v1062 = vpack.c.bf16 %v998, %v998
      %v1063 = vpack.c.bf16 %v999, %v999
      %v1064 = vpack.c.bf16 %v1000, %v1000
      %v1065 = vpack.c.bf16 %v1001, %v1001
      %v1066 = vpack.c.bf16 %v1002, %v1002
      %v1067 = vpack.c.bf16 %v1003, %v1003
      %v1068 = vpack.c.bf16 %v1004, %v1004
      %v1069 = vpack.c.bf16 %v1005, %v1005
      %v1070 = vpack.c.bf16 %v1006, %v1006
      %v1071 = vpack.c.bf16 %v1007, %v1007
      %v1072 = vpack.c.bf16 %v1008, %v1008
      %v1073 = vpack.c.bf16 %v1009, %v1009
      %v1074 = vpack.c.bf16 %v1010, %v1010
      %v1075 = vpack.c.bf16 %v1011, %v1011
      %v1076 = vpack.c.bf16 %v1012, %v1012
      %v1077 = vpack.c.bf16 %v1013, %v1013
      %v1078 = vpack.c.bf16 %v1014, %v1014
      %v1079 = vpack.c.bf16 %v1015, %v1015
      %v1080 = vpack.c.bf16 %v1016, %v1016
      %v1081 = vpack.c.bf16 %v1017, %v1017
      %v1082 = vpack.c.bf16 %v1018, %v1018
      %v1083 = vpack.c.bf16 %v1019, %v1019
      %v1084 = vpack.c.bf16 %v1020, %v1020
      %v1085 = vpack.c.bf16 %v1021, %v1021
      %v1086 = vpack.c.bf16 %v1022, %v1022
      %v1087 = vpack.c.bf16 %v1023, %v1023
      %v1088 = vpack.c.bf16 %v1024, %v1024
      %v1089 = vpack.c.bf16 %v1025, %v1025
      %v1090 = vpack.c.bf16 %v1026, %v1026
      %v1091 = vpack.c.bf16 %v1027, %v1027
      %v1092 = vpack.c.bf16 %v1028, %v1028
      %v1093 = vpack.c.bf16 %v1029, %v1029
      %v1094 = vpack.c.bf16 %v1030, %v1030
      %v1095 = vpack.c.bf16 %v1031, %v1031
      %v1096 = vpack.c.bf16 %v1032, %v1032
      %v1097 = vpack.c.bf16 %v1033, %v1033
      %v1098 = vpack.c.bf16 %v1034, %v1034
      %v1099 = vpack.c.bf16 %v1035, %v1035
      %v1100 = vpack.c.bf16 %v1036, %v1036
      %v1101 = vpack.c.bf16 %v1037, %v1037
      %v1102 = vpack.c.bf16 %v1038, %v1038
      %v1103 = vpack.c.bf16 %v1039, %v1039
      %v1104 = vpack.c.bf16 %v1040, %v1040
      %v1105 = vpack.c.bf16 %v1041, %v1041
      %v1106 = vpack.c.bf16 %v1042, %v1042
      %v1107 = vpack.c.bf16 %v1043, %v1043
      %v1108 = vpack.c.bf16 %v1044, %v1044
      %v1109 = vpack.c.bf16 %v1045, %v1045
      %v1110 = vpack.c.bf16 %v1046, %v1046
      %v1111 = vpack.c.bf16 %v1047, %v1047
      %v1112 = vpack.c.bf16 %v1048, %v1048
      %v1113 = vpack.c.bf16 %v1049, %v1049
      %v1114 = vpack.c.bf16 %v1050, %v1050
      %1115 = vst [vmem:[%s172] sm:$0xf] %v1051
      %1116 = vst [vmem:[%s172 + $0x4] sm:$0xf] %v1052
      %1117 = vst [vmem:[%s172 + $0x8] sm:$0xf] %v1053
      %1118 = vst [vmem:[%s172 + $0xc] sm:$0xf] %v1054
      %1119 = vst [vmem:[%s172 + $0x10] sm:$0xf] %v1055
      %1120 = vst [vmem:[%s172 + $0x14] sm:$0xf] %v1056
      %1121 = vst [vmem:[%s172 + $0x18] sm:$0xf] %v1057
      %1122 = vst [vmem:[%s172 + $0x1c] sm:$0xf] %v1058
      %1123 = vst [vmem:[%s172 + $0x20] sm:$0xf] %v1059
      %1124 = vst [vmem:[%s172 + $0x24] sm:$0xf] %v1060
      %1125 = vst [vmem:[%s172 + $0x28] sm:$0xf] %v1061
      %1126 = vst [vmem:[%s172 + $0x2c] sm:$0xf] %v1062
      %1127 = vst [vmem:[%s172 + $0x30] sm:$0xf] %v1063
      %1128 = vst [vmem:[%s172 + $0x34] sm:$0xf] %v1064
      %1129 = vst [vmem:[%s172 + $0x38] sm:$0xf] %v1065
      %1130 = vst [vmem:[%s172 + $0x3c] sm:$0xf] %v1066
      %1131 = vst [vmem:[%s172 + $0x40] sm:$0xf] %v1067
      %1132 = vst [vmem:[%s172 + $0x44] sm:$0xf] %v1068
      %1133 = vst [vmem:[%s172 + $0x48] sm:$0xf] %v1069
      %1134 = vst [vmem:[%s172 + $0x4c] sm:$0xf] %v1070
      %1135 = vst [vmem:[%s172 + $0x50] sm:$0xf] %v1071
      %1136 = vst [vmem:[%s172 + $0x54] sm:$0xf] %v1072
      %1137 = vst [vmem:[%s172 + $0x58] sm:$0xf] %v1073
      %1138 = vst [vmem:[%s172 + $0x5c] sm:$0xf] %v1074
      %1139 = vst [vmem:[%s172 + $0x60] sm:$0xf] %v1075
      %1140 = vst [vmem:[%s172 + $0x64] sm:$0xf] %v1076
      %1141 = vst [vmem:[%s172 + $0x68] sm:$0xf] %v1077
      %1142 = vst [vmem:[%s172 + $0x6c] sm:$0xf] %v1078
      %1143 = vst [vmem:[%s172 + $0x70] sm:$0xf] %v1079
      %1144 = vst [vmem:[%s172 + $0x74] sm:$0xf] %v1080
      %1145 = vst [vmem:[%s172 + $0x78] sm:$0xf] %v1081
      %1146 = vst [vmem:[%s172 + $0x7c] sm:$0xf] %v1082
      %1147 = vst [vmem:[%s172 + $0x80] sm:$0xf] %v1083
      %1148 = vst [vmem:[%s172 + $0x84] sm:$0xf] %v1084
      %1149 = vst [vmem:[%s172 + $0x88] sm:$0xf] %v1085
      %1150 = vst [vmem:[%s172 + $0x8c] sm:$0xf] %v1086
      %1151 = vst [vmem:[%s172 + $0x90] sm:$0xf] %v1087
      %1152 = vst [vmem:[%s172 + $0x94] sm:$0xf] %v1088
      %1153 = vst [vmem:[%s172 + $0x98] sm:$0xf] %v1089
      %1154 = vst [vmem:[%s172 + $0x9c] sm:$0xf] %v1090
      %1155 = vst [vmem:[%s172 + $0xa0] sm:$0xf] %v1091
      %1156 = vst [vmem:[%s172 + $0xa4] sm:$0xf] %v1092
      %1157 = vst [vmem:[%s172 + $0xa8] sm:$0xf] %v1093
      %1158 = vst [vmem:[%s172 + $0xac] sm:$0xf] %v1094
      %1159 = vst [vmem:[%s172 + $0xb0] sm:$0xf] %v1095
      %1160 = vst [vmem:[%s172 + $0xb4] sm:$0xf] %v1096
      %1161 = vst [vmem:[%s172 + $0xb8] sm:$0xf] %v1097
      %1162 = vst [vmem:[%s172 + $0xbc] sm:$0xf] %v1098
      %1163 = vst [vmem:[%s172 + $0xc0] sm:$0xf] %v1099
      %1164 = vst [vmem:[%s172 + $0xc4] sm:$0xf] %v1100
      %1165 = vst [vmem:[%s172 + $0xc8] sm:$0xf] %v1101
      %1166 = vst [vmem:[%s172 + $0xcc] sm:$0xf] %v1102
      %1167 = vst [vmem:[%s172 + $0xd0] sm:$0xf] %v1103
      %1168 = vst [vmem:[%s172 + $0xd4] sm:$0xf] %v1104
      %1169 = vst [vmem:[%s172 + $0xd8] sm:$0xf] %v1105
      %1170 = vst [vmem:[%s172 + $0xdc] sm:$0xf] %v1106
      %1171 = vst [vmem:[%s172 + $0xe0] sm:$0xf] %v1107
      %1172 = vst [vmem:[%s172 + $0xe4] sm:$0xf] %v1108
      %1173 = vst [vmem:[%s172 + $0xe8] sm:$0xf] %v1109
      %1174 = vst [vmem:[%s172 + $0xec] sm:$0xf] %v1110
      %1175 = vst [vmem:[%s172 + $0xf0] sm:$0xf] %v1111
      %1176 = vst [vmem:[%s172 + $0xf4] sm:$0xf] %v1112
      %1177 = vst [vmem:[%s172 + $0xf8] sm:$0xf] %v1113
      %1178 = vst [vmem:[%s172 + $0xfc] sm:$0xf] %v1114
      %s1179 = smul.u32 64, %s14
      %p1180 = scmp.lt.s32.totalorder %s1179, 767
      %s1181 = scalar_select %p1180, %s1179, 767
      %s1182 = smul.addr %s1181, 4
      %s1183 = scalar_lea.vmem %s3, %s1182
      // Predicated region
      $region33: #{net_forward.6} parent=31 // pred_check
        %p1184 = pneg %p100
      $region34: #{net_forward.6} parent=31 // pred_check_branch
        %1186 = sbr.rel (%p1184) target = $region36
      $region35: #{net_forward.6} parent=31 // pred_region
        %s1187 = smul.u32 64, %s14
      $region36: #{net_forward.6} parent=31 // pred_fallthru
        _
    $region32: #{net_forward.6} parent=5 // pred_fallthru
      _
    %p1188 = scmp.le.s32.totalorder 2, %s9
    // Predicated region
    $region37: #{net_forward.6} parent=5 // pred_check
      %p1189 = pneg %p1188
    $region38: #{net_forward.6} parent=5 // pred_check_branch
      %1191 = sbr.rel (%p1189) target = $region40
    $region39: #{net_forward.6} parent=5 // pred_region
      %s1192 = ssub.s32 %s9, 2
      // Predicated region
      $region41: #{net_forward.6} parent=39 // pred_check
        %p1193 = pneg %p106
      $region42: #{net_forward.6} parent=39 // pred_check_branch
        %1195 = sbr.rel (%p1193) target = $region44
      $region43: #{net_forward.6} parent=39 // pred_region
        %s1196 = smul.u32 64, %s15
        %p1197 = scmp.lt.s32.totalorder %s1196, 767
        %s1198 = scalar_select %p1197, %s1196, 767
        %s1199 = smul.addr %s1198, 4
        %s1200 = scalar_lea.vmem %s3, %s1199
      $region44: #{net_forward.6} parent=39 // pred_fallthru
        _
    $region40: #{net_forward.6} parent=5 // pred_fallthru
      _
  $region6: #{net_forward.6} parent=0 // loop_footer
    %s13 = sadd.s32 1, %s9
  $region7: #{net_forward.6} parent=0 // loop_footer_branch
    %8 = sbr.rel target = $region3
  $region8: #{net_forward.6} parent=0 // loop_exit
    _

// kernel: net_forward.7
$region0: #{net_forward.7}
  #allocation0 [shape = 'u32[]', space=smem, size = 0x4, offset = 0x4, fixed_abs, tag = 'smem constant byte address 0x4 - core index']
  #allocation1 [shape = 'u32[72,128]{1,0:T(1,128)}', space=vmem, size = 0x9000, scoped, tag = 'internal scratch']
  %s0 = inlined_call_operand.vmem [shape: bf16[1536,640], index: 0, kind: input, shape index: {}]
  %s1 = inlined_call_operand.vmem [shape: bf16[640,128], index: 1, kind: input, shape index: {}]
  %s2 = inlined_call_operand.vmem [shape: f32[1,128], index: 2, kind: input, shape index: {}]
  %s3 = inlined_call_operand.vmem [shape: bf16[1536,128], index: 3, kind: output, shape index: {}]
  %s4 = sld [smem:[#allocation0]]
  $region45: #{net_forward.7} parent=0
    _
  %s6 = ssub.s32 1, %s4
  %s7 = scalar_select 0, %s6, %s4
  loop: start=0, step=1, limit=5
  $region2: #{net_forward.7} parent=0 // loop_pre_header
    _
  $region3: #{net_forward.7} parent=0 // loop_header
    %s9 = sphi 0, %s13
    %p10 = scmp.ge.s32.totalorder %s9, 5
    %s19 = sphi 0, %s21
    %s22 = sphi 0, %s19
    %s23 = sphi 0, %s22
    %s39 = sphi 0, %s23
    %s43 = sphi 0, %s43
    %s45 = sphi 0, %s43
    %s46 = sphi 0, %s45
    %s60 = sphi 0, %s46
    %s64 = sphi 0, %s64
    %s66 = sphi 0, %s64
    %s67 = sphi 0, %s66
    %s81 = sphi 0, %s67
    %s87 = sphi 0, %s89
    %s90 = sphi 0, %s87
    %s91 = sphi 0, %s90
    %s107 = sphi 0, %s91
  $region4: #{net_forward.7} parent=0 // loop_header_branch
    %12 = sbr.rel (%p10) target = $region8
  $region5: #{net_forward.7} parent=0 // loop_body
    %s14 = ssub.s32 %s9, 1
    %s15 = ssub.s32 %s9, 2
    %s16 = sadd.s32 %s9, 1
    %s17 = ssub.s32 %s9, %s16
    %p18 = scmp.eq.s32.totalorder %s17, 0
    %s20 = sadd.s32 %s19, 1
    %s21 = scalar_select %p18, %s19, %s20
    %p24 = pneg %p18
    %p25 = scmp.eq.s32.totalorder %s9, 2
    %p26 = por %p24, %p25
    %p27 = scmp.ne.s32.totalorder %s19, %s22
    %p28 = scmp.eq.s32.totalorder %s9, 0
    %p29 = por %p27, %p28
    %p30 = scmp.ne.s32.totalorder %s19, %s22
    %p31 = scmp.eq.s32.totalorder %s14, 2
    %p32 = por %p30, %p31
    %p33 = scmp.ne.s32.totalorder %s22, %s23
    %p34 = scmp.eq.s32.totalorder %s14, 0
    %p35 = por %p33, %p34
    %p36 = scmp.ne.s32.totalorder %s22, %s23
    %p37 = scmp.eq.s32.totalorder %s15, 2
    %p38 = por %p36, %p37
    %p40 = scmp.ne.s32.totalorder %s23, %s39
    %p41 = scmp.eq.s32.totalorder %s15, 0
    %p42 = por %p40, %p41
    %s44 = sadd.s32 %s43, 1
    %p47 = scmp.eq.s32.totalorder %s9, 2
    %p48 = scmp.ne.s32.totalorder %s43, %s45
    %p49 = scmp.eq.s32.totalorder %s9, 0
    %p50 = por %p48, %p49
    %p51 = scmp.ne.s32.totalorder %s43, %s45
    %p52 = scmp.eq.s32.totalorder %s14, 2
    %p53 = por %p51, %p52
    %p54 = scmp.ne.s32.totalorder %s45, %s46
    %p55 = scmp.eq.s32.totalorder %s14, 0
    %p56 = por %p54, %p55
    %p57 = scmp.ne.s32.totalorder %s45, %s46
    %p58 = scmp.eq.s32.totalorder %s15, 2
    %p59 = por %p57, %p58
    %p61 = scmp.ne.s32.totalorder %s46, %s60
    %p62 = scmp.eq.s32.totalorder %s15, 0
    %p63 = por %p61, %p62
    %s65 = sadd.s32 %s64, 1
    %p68 = scmp.eq.s32.totalorder %s9, 2
    %p69 = scmp.ne.s32.totalorder %s64, %s66
    %p70 = scmp.eq.s32.totalorder %s9, 0
    %p71 = por %p69, %p70
    %p72 = scmp.ne.s32.totalorder %s64, %s66
    %p73 = scmp.eq.s32.totalorder %s14, 2
    %p74 = por %p72, %p73
    %p75 = scmp.ne.s32.totalorder %s66, %s67
    %p76 = scmp.eq.s32.totalorder %s14, 0
    %p77 = por %p75, %p76
    %p78 = scmp.ne.s32.totalorder %s66, %s67
    %p79 = scmp.eq.s32.totalorder %s15, 2
    %p80 = por %p78, %p79
    %p82 = scmp.ne.s32.totalorder %s67, %s81
    %p83 = scmp.eq.s32.totalorder %s15, 0
    %p84 = por %p82, %p83
    %s85 = ssub.s32 %s9, %s16
    %p86 = scmp.eq.s32.totalorder %s85, 0
    %s88 = sadd.s32 %s87, 1
    %s89 = scalar_select %p86, %s87, %s88
    %p92 = pneg %p86
    %p93 = scmp.eq.s32.totalorder %s9, 2
    %p94 = por %p92, %p93
    %p95 = scmp.ne.s32.totalorder %s87, %s90
    %p96 = scmp.eq.s32.totalorder %s9, 0
    %p97 = por %p95, %p96
    %p98 = scmp.ne.s32.totalorder %s87, %s90
    %p99 = scmp.eq.s32.totalorder %s14, 2
    %p100 = por %p98, %p99
    %p101 = scmp.ne.s32.totalorder %s90, %s91
    %p102 = scmp.eq.s32.totalorder %s14, 0
    %p103 = por %p101, %p102
    %p104 = scmp.ne.s32.totalorder %s90, %s91
    %p105 = scmp.eq.s32.totalorder %s15, 2
    %p106 = por %p104, %p105
    %p108 = scmp.ne.s32.totalorder %s91, %s107
    %p109 = scmp.eq.s32.totalorder %s15, 0
    %p110 = por %p108, %p109
    %p111 = scmp.le.s32.totalorder 1, %s9
    %p112 = scmp.lt.s32.totalorder %s9, 4
    %p113 = pnand %p111, %p112
    %p114 = pneg %p113
    // Predicated region
    $region9: #{net_forward.7} parent=5 // pred_check
      _
    $region10: #{net_forward.7} parent=5 // pred_check_branch
      %116 = sbr.rel (%p113) target = $region12
    $region11: #{net_forward.7} parent=5 // pred_region
      %s117 = ssub.s32 %s9, 1
      // Predicated region
      $region13: #{net_forward.7} parent=11 // pred_check
        %p118 = pneg %p56
      $region14: #{net_forward.7} parent=11 // pred_check_branch
        %120 = sbr.rel (%p118) target = $region16
      $region15: #{net_forward.7} parent=11 // pred_region
        _
      $region16: #{net_forward.7} parent=11 // pred_fallthru
        _
      // Predicated region
      $region17: #{net_forward.7} parent=11 // pred_check
        %p121 = pneg %p77
      $region18: #{net_forward.7} parent=11 // pred_check_branch
        %123 = sbr.rel (%p121) target = $region20
      $region19: #{net_forward.7} parent=11 // pred_region
        _
      $region20: #{net_forward.7} parent=11 // pred_fallthru
        _
    $region12: #{net_forward.7} parent=5 // pred_fallthru
      _
    %p124 = scmp.lt.s32.totalorder %s9, 3
    // Predicated region
    $region21: #{net_forward.7} parent=5 // pred_check
      %p125 = pneg %p124
    $region22: #{net_forward.7} parent=5 // pred_check_branch
      %127 = sbr.rel (%p125) target = $region24
    $region23: #{net_forward.7} parent=5 // pred_region
      // Predicated region
      $region25: #{net_forward.7} parent=23 // pred_check
        %p128 = pneg %p29
      $region26: #{net_forward.7} parent=23 // pred_check_branch
        %130 = sbr.rel (%p128) target = $region28
      $region27: #{net_forward.7} parent=23 // pred_region
        %s131 = smul.u32 64, %s9
        %p132 = scmp.lt.s32.totalorder %s131, 191
        %s133 = scalar_select %p132, %s131, 191
        %s134 = smul.addr %s133, 5
        %s135 = smul.addr %s134, 4
        %s136 = scalar_lea.vmem %s0, %s135
        %s137 = smul.u32 64, %s9
      $region28: #{net_forward.7} parent=23 // pred_fallthru
        _
    $region24: #{net_forward.7} parent=5 // pred_fallthru
      _
    %p138 = scmp.le.s32.totalorder 1, %s9
    %p139 = scmp.lt.s32.totalorder %s9, 4
    %p140 = pnand %p138, %p139
    %p141 = pneg %p140
    // Predicated region
    $region29: #{net_forward.7} parent=5 // pred_check
      _
    $region30: #{net_forward.7} parent=5 // pred_check_branch
      %143 = sbr.rel (%p140) target = $region32
    $region31: #{net_forward.7} parent=5 // pred_region
      %s144 = ssub.s32 %s9, 1
      %s145 = smul.u32 64, %s14
      %p146 = scmp.lt.s32.totalorder %s145, 191
      %s147 = scalar_select %p146, %s145, 191
      %s148 = smul.addr %s147, 5
      %s149 = smul.addr %s148, 4
      %s150 = scalar_lea.vmem %s0, %s149
      %p151 = pneg %p35
      %p152 = pneg %p32
      %p153 = pneg %p56
      %p154 = pneg %p53
      %p155 = pneg %p77
      %p156 = pneg %p74
      %p157 = pneg %p103
      %p158 = pneg %p100
      %s159 = smul.u32 64, %s14
      %p160 = scmp.lt.s32.totalorder %s159, 191
      %s161 = scalar_select %p160, %s159, 191
      %s162 = smul.addr %s161, 4
      %s163 = scalar_lea.vmem %s3, %s162
      %s164 = smul.u32 64, %s14
      %p165 = scmp.lt.s32.totalorder %s164, 191
      %s166 = scalar_select %p165, %s164, 191
      %s167 = smul.addr %s166, 5
      %s168 = smul.addr %s167, 4
      %s169 = scalar_lea.vmem %s0, %s168
      %s170 = smul.u32 64, %s14
      %s171 = smul.u32 64, %s14
      %p172 = scmp.lt.s32.totalorder %s171, 191
      %s173 = scalar_select %p172, %s171, 191
      %s174 = smul.addr %s173, 4
      %s175 = scalar_lea.vmem %s3, %s174
      %s176 = smul.u32 64, %s14
      %v177 = vld [vmem:[%s169] sm:$0xff]
      %v178 = vld [vmem:[%s169 + $0x8] sm:$0xff]
      %v179 = vld [vmem:[%s169 + $0x10] sm:$0xf]
      %v180 = vld [vmem:[%s169 + $0x14] sm:$0xff]
      %v181 = vld [vmem:[%s169 + $0x1c] sm:$0xff]
      %v182 = vld [vmem:[%s169 + $0x24] sm:$0xf]
      %v183 = vld [vmem:[%s169 + $0x28] sm:$0xff]
      %v184 = vld [vmem:[%s169 + $0x30] sm:$0xff]
      %v185 = vld [vmem:[%s169 + $0x38] sm:$0xf]
      %v186 = vld [vmem:[%s169 + $0x3c] sm:$0xff]
      %v187 = vld [vmem:[%s169 + $0x44] sm:$0xff]
      %v188 = vld [vmem:[%s169 + $0x4c] sm:$0xf]
      %v189 = vld [vmem:[%s169 + $0x50] sm:$0xff]
      %v190 = vld [vmem:[%s169 + $0x58] sm:$0xff]
      %v191 = vld [vmem:[%s169 + $0x60] sm:$0xf]
      %v192 = vld [vmem:[%s169 + $0x64] sm:$0xff]
      %v193 = vld [vmem:[%s169 + $0x6c] sm:$0xff]
      %v194 = vld [vmem:[%s169 + $0x74] sm:$0xf]
      %v195 = vld [vmem:[%s169 + $0x78] sm:$0xff]
      %v196 = vld [vmem:[%s169 + $0x80] sm:$0xff]
      %v197 = vld [vmem:[%s169 + $0x88] sm:$0xf]
      %v198 = vld [vmem:[%s169 + $0x8c] sm:$0xff]
      %v199 = vld [vmem:[%s169 + $0x94] sm:$0xff]
      %v200 = vld [vmem:[%s169 + $0x9c] sm:$0xf]
      %v201 = vld [vmem:[%s169 + $0xa0] sm:$0xff]
      %v202 = vld [vmem:[%s169 + $0xa8] sm:$0xff]
      %v203 = vld [vmem:[%s169 + $0xb0] sm:$0xf]
      %v204 = vld [vmem:[%s169 + $0xb4] sm:$0xff]
      %v205 = vld [vmem:[%s169 + $0xbc] sm:$0xff]
      %v206 = vld [vmem:[%s169 + $0xc4] sm:$0xf]
      %v207 = vld [vmem:[%s169 + $0xc8] sm:$0xff]
      %v208 = vld [vmem:[%s169 + $0xd0] sm:$0xff]
      %v209 = vld [vmem:[%s169 + $0xd8] sm:$0xf]
      %v210 = vld [vmem:[%s169 + $0xdc] sm:$0xff]
      %v211 = vld [vmem:[%s169 + $0xe4] sm:$0xff]
      %v212 = vld [vmem:[%s169 + $0xec] sm:$0xf]
      %v213 = vld [vmem:[%s169 + $0xf0] sm:$0xff]
      %v214 = vld [vmem:[%s169 + $0xf8] sm:$0xff]
      %v215 = vld [vmem:[%s169 + $0x100] sm:$0xf]
      %v216 = vld [vmem:[%s169 + $0x104] sm:$0xff]
      %v217 = vld [vmem:[%s169 + $0x10c] sm:$0xff]
      %v218 = vld [vmem:[%s169 + $0x114] sm:$0xf]
      %v219 = vld [vmem:[%s169 + $0x118] sm:$0xff]
      %v220 = vld [vmem:[%s169 + $0x120] sm:$0xff]
      %v221 = vld [vmem:[%s169 + $0x128] sm:$0xf]
      %v222 = vld [vmem:[%s169 + $0x12c] sm:$0xff]
      %v223 = vld [vmem:[%s169 + $0x134] sm:$0xff]
      %v224 = vld [vmem:[%s169 + $0x13c] sm:$0xf]
      %v225 = vld [vmem:[%s169 + $0x140] sm:$0xff]
      %v226 = vld [vmem:[%s169 + $0x148] sm:$0xff]
      %v227 = vld [vmem:[%s169 + $0x150] sm:$0xf]
      %v228 = vld [vmem:[%s169 + $0x154] sm:$0xff]
      %v229 = vld [vmem:[%s169 + $0x15c] sm:$0xff]
      %v230 = vld [vmem:[%s169 + $0x164] sm:$0xf]
      %v231 = vld [vmem:[%s169 + $0x168] sm:$0xff]
      %v232 = vld [vmem:[%s169 + $0x170] sm:$0xff]
      %v233 = vld [vmem:[%s169 + $0x178] sm:$0xf]
      %v234 = vld [vmem:[%s169 + $0x17c] sm:$0xff]
      %v235 = vld [vmem:[%s169 + $0x184] sm:$0xff]
      %v236 = vld [vmem:[%s169 + $0x18c] sm:$0xf]
      %v237 = vld [vmem:[%s169 + $0x190] sm:$0xff]
      %v238 = vld [vmem:[%s169 + $0x198] sm:$0xff]
      %v239 = vld [vmem:[%s169 + $0x1a0] sm:$0xf]
      %v240 = vld [vmem:[%s169 + $0x1a4] sm:$0xff]
      %v241 = vld [vmem:[%s169 + $0x1ac] sm:$0xff]
      %v242 = vld [vmem:[%s169 + $0x1b4] sm:$0xf]
      %v243 = vld [vmem:[%s169 + $0x1b8] sm:$0xff]
      %v244 = vld [vmem:[%s169 + $0x1c0] sm:$0xff]
      %v245 = vld [vmem:[%s169 + $0x1c8] sm:$0xf]
      %v246 = vld [vmem:[%s169 + $0x1cc] sm:$0xff]
      %v247 = vld [vmem:[%s169 + $0x1d4] sm:$0xff]
      %v248 = vld [vmem:[%s169 + $0x1dc] sm:$0xf]
      %v249 = vld [vmem:[%s169 + $0x1e0] sm:$0xff]
      %v250 = vld [vmem:[%s169 + $0x1e8] sm:$0xff]
      %v251 = vld [vmem:[%s169 + $0x1f0] sm:$0xf]
      %v252 = vld [vmem:[%s169 + $0x1f4] sm:$0xff]
      %v253 = vld [vmem:[%s169 + $0x1fc] sm:$0xff]
      %v254 = vld [vmem:[%s169 + $0x204] sm:$0xf]
      %v255 = vld [vmem:[%s169 + $0x208] sm:$0xff]
      %v256 = vld [vmem:[%s169 + $0x210] sm:$0xff]
      %v257 = vld [vmem:[%s169 + $0x218] sm:$0xf]
      %v258 = vld [vmem:[%s169 + $0x21c] sm:$0xff]
      %v259 = vld [vmem:[%s169 + $0x224] sm:$0xff]
      %v260 = vld [vmem:[%s169 + $0x22c] sm:$0xf]
      %v261 = vld [vmem:[%s169 + $0x230] sm:$0xff]
      %v262 = vld [vmem:[%s169 + $0x238] sm:$0xff]
      %v263 = vld [vmem:[%s169 + $0x240] sm:$0xf]
      %v264 = vld [vmem:[%s169 + $0x244] sm:$0xff]
      %v265 = vld [vmem:[%s169 + $0x24c] sm:$0xff]
      %v266 = vld [vmem:[%s169 + $0x254] sm:$0xf]
      %v267 = vld [vmem:[%s169 + $0x258] sm:$0xff]
      %v268 = vld [vmem:[%s169 + $0x260] sm:$0xff]
      %v269 = vld [vmem:[%s169 + $0x268] sm:$0xf]
      %v270 = vld [vmem:[%s169 + $0x26c] sm:$0xff]
      %v271 = vld [vmem:[%s169 + $0x274] sm:$0xff]
      %v272 = vld [vmem:[%s169 + $0x27c] sm:$0xf]
      %v273 = vld [vmem:[%s169 + $0x280] sm:$0xff]
      %v274 = vld [vmem:[%s169 + $0x288] sm:$0xff]
      %v275 = vld [vmem:[%s169 + $0x290] sm:$0xf]
      %v276 = vld [vmem:[%s169 + $0x294] sm:$0xff]
      %v277 = vld [vmem:[%s169 + $0x29c] sm:$0xff]
      %v278 = vld [vmem:[%s169 + $0x2a4] sm:$0xf]
      %v279 = vld [vmem:[%s169 + $0x2a8] sm:$0xff]
      %v280 = vld [vmem:[%s169 + $0x2b0] sm:$0xff]
      %v281 = vld [vmem:[%s169 + $0x2b8] sm:$0xf]
      %v282 = vld [vmem:[%s169 + $0x2bc] sm:$0xff]
      %v283 = vld [vmem:[%s169 + $0x2c4] sm:$0xff]
      %v284 = vld [vmem:[%s169 + $0x2cc] sm:$0xf]
      %v285 = vld [vmem:[%s169 + $0x2d0] sm:$0xff]
      %v286 = vld [vmem:[%s169 + $0x2d8] sm:$0xff]
      %v287 = vld [vmem:[%s169 + $0x2e0] sm:$0xf]
      %v288 = vld [vmem:[%s169 + $0x2e4] sm:$0xff]
      %v289 = vld [vmem:[%s169 + $0x2ec] sm:$0xff]
      %v290 = vld [vmem:[%s169 + $0x2f4] sm:$0xf]
      %v291 = vld [vmem:[%s169 + $0x2f8] sm:$0xff]
      %v292 = vld [vmem:[%s169 + $0x300] sm:$0xff]
      %v293 = vld [vmem:[%s169 + $0x308] sm:$0xf]
      %v294 = vld [vmem:[%s169 + $0x30c] sm:$0xff]
      %v295 = vld [vmem:[%s169 + $0x314] sm:$0xff]
      %v296 = vld [vmem:[%s169 + $0x31c] sm:$0xf]
      %v297 = vld [vmem:[%s169 + $0x320] sm:$0xff]
      %v298 = vld [vmem:[%s169 + $0x328] sm:$0xff]
      %v299 = vld [vmem:[%s169 + $0x330] sm:$0xf]
      %v300 = vld [vmem:[%s169 + $0x334] sm:$0xff]
      %v301 = vld [vmem:[%s169 + $0x33c] sm:$0xff]
      %v302 = vld [vmem:[%s169 + $0x344] sm:$0xf]
      %v303 = vld [vmem:[%s169 + $0x348] sm:$0xff]
      %v304 = vld [vmem:[%s169 + $0x350] sm:$0xff]
      %v305 = vld [vmem:[%s169 + $0x358] sm:$0xf]
      %v306 = vld [vmem:[%s169 + $0x35c] sm:$0xff]
      %v307 = vld [vmem:[%s169 + $0x364] sm:$0xff]
      %v308 = vld [vmem:[%s169 + $0x36c] sm:$0xf]
      %v309 = vld [vmem:[%s169 + $0x370] sm:$0xff]
      %v310 = vld [vmem:[%s169 + $0x378] sm:$0xff]
      %v311 = vld [vmem:[%s169 + $0x380] sm:$0xf]
      %v312 = vld [vmem:[%s169 + $0x384] sm:$0xff]
      %v313 = vld [vmem:[%s169 + $0x38c] sm:$0xff]
      %v314 = vld [vmem:[%s169 + $0x394] sm:$0xf]
      %v315 = vld [vmem:[%s169 + $0x398] sm:$0xff]
      %v316 = vld [vmem:[%s169 + $0x3a0] sm:$0xff]
      %v317 = vld [vmem:[%s169 + $0x3a8] sm:$0xf]
      %v318 = vld [vmem:[%s169 + $0x3ac] sm:$0xff]
      %v319 = vld [vmem:[%s169 + $0x3b4] sm:$0xff]
      %v320 = vld [vmem:[%s169 + $0x3bc] sm:$0xf]
      %v321 = vld [vmem:[%s169 + $0x3c0] sm:$0xff]
      %v322 = vld [vmem:[%s169 + $0x3c8] sm:$0xff]
      %v323 = vld [vmem:[%s169 + $0x3d0] sm:$0xf]
      %v324 = vld [vmem:[%s169 + $0x3d4] sm:$0xff]
      %v325 = vld [vmem:[%s169 + $0x3dc] sm:$0xff]
      %v326 = vld [vmem:[%s169 + $0x3e4] sm:$0xf]
      %v327 = vld [vmem:[%s169 + $0x3e8] sm:$0xff]
      %v328 = vld [vmem:[%s169 + $0x3f0] sm:$0xff]
      %v329 = vld [vmem:[%s169 + $0x3f8] sm:$0xf]
      %v330 = vld [vmem:[%s169 + $0x3fc] sm:$0xff]
      %v331 = vld [vmem:[%s169 + $0x404] sm:$0xff]
      %v332 = vld [vmem:[%s169 + $0x40c] sm:$0xf]
      %v333 = vld [vmem:[%s169 + $0x410] sm:$0xff]
      %v334 = vld [vmem:[%s169 + $0x418] sm:$0xff]
      %v335 = vld [vmem:[%s169 + $0x420] sm:$0xf]
      %v336 = vld [vmem:[%s169 + $0x424] sm:$0xff]
      %v337 = vld [vmem:[%s169 + $0x42c] sm:$0xff]
      %v338 = vld [vmem:[%s169 + $0x434] sm:$0xf]
      %v339 = vld [vmem:[%s169 + $0x438] sm:$0xff]
      %v340 = vld [vmem:[%s169 + $0x440] sm:$0xff]
      %v341 = vld [vmem:[%s169 + $0x448] sm:$0xf]
      %v342 = vld [vmem:[%s169 + $0x44c] sm:$0xff]
      %v343 = vld [vmem:[%s169 + $0x454] sm:$0xff]
      %v344 = vld [vmem:[%s169 + $0x45c] sm:$0xf]
      %v345 = vld [vmem:[%s169 + $0x460] sm:$0xff]
      %v346 = vld [vmem:[%s169 + $0x468] sm:$0xff]
      %v347 = vld [vmem:[%s169 + $0x470] sm:$0xf]
      %v348 = vld [vmem:[%s169 + $0x474] sm:$0xff]
      %v349 = vld [vmem:[%s169 + $0x47c] sm:$0xff]
      %v350 = vld [vmem:[%s169 + $0x484] sm:$0xf]
      %v351 = vld [vmem:[%s169 + $0x488] sm:$0xff]
      %v352 = vld [vmem:[%s169 + $0x490] sm:$0xff]
      %v353 = vld [vmem:[%s169 + $0x498] sm:$0xf]
      %v354 = vld [vmem:[%s169 + $0x49c] sm:$0xff]
      %v355 = vld [vmem:[%s169 + $0x4a4] sm:$0xff]
      %v356 = vld [vmem:[%s169 + $0x4ac] sm:$0xf]
      %v357 = vld [vmem:[%s169 + $0x4b0] sm:$0xff]
      %v358 = vld [vmem:[%s169 + $0x4b8] sm:$0xff]
      %v359 = vld [vmem:[%s169 + $0x4c0] sm:$0xf]
      %v360 = vld [vmem:[%s169 + $0x4c4] sm:$0xff]
      %v361 = vld [vmem:[%s169 + $0x4cc] sm:$0xff]
      %v362 = vld [vmem:[%s169 + $0x4d4] sm:$0xf]
      %v363 = vld [vmem:[%s169 + $0x4d8] sm:$0xff]
      %v364 = vld [vmem:[%s169 + $0x4e0] sm:$0xff]
      %v365 = vld [vmem:[%s169 + $0x4e8] sm:$0xf]
      %v366 = vld [vmem:[%s169 + $0x4ec] sm:$0xff]
      %v367 = vld [vmem:[%s169 + $0x4f4] sm:$0xff]
      %v368 = vld [vmem:[%s169 + $0x4fc] sm:$0xf]
      %v369 = vld [vmem:[%s1] sm:$0xf]
      %v370 = vld [vmem:[%s1 + $0x4] sm:$0xf]
      %v371 = vld [vmem:[%s1 + $0x8] sm:$0xf]
      %v372 = vld [vmem:[%s1 + $0xc] sm:$0xf]
      %v373 = vld [vmem:[%s1 + $0x10] sm:$0xf]
      %v374 = vld [vmem:[%s1 + $0x14] sm:$0xf]
      %v375 = vld [vmem:[%s1 + $0x18] sm:$0xf]
      %v376 = vld [vmem:[%s1 + $0x1c] sm:$0xf]
      %v377 = vld [vmem:[%s1 + $0x20] sm:$0xf]
      %v378 = vld [vmem:[%s1 + $0x24] sm:$0xf]
      %v379 = vld [vmem:[%s1 + $0x28] sm:$0xf]
      %v380 = vld [vmem:[%s1 + $0x2c] sm:$0xf]
      %v381 = vld [vmem:[%s1 + $0x30] sm:$0xf]
      %v382 = vld [vmem:[%s1 + $0x34] sm:$0xf]
      %v383 = vld [vmem:[%s1 + $0x38] sm:$0xf]
      %v384 = vld [vmem:[%s1 + $0x3c] sm:$0xf]
      %v385 = vld [vmem:[%s1 + $0x40] sm:$0xf]
      %v386 = vld [vmem:[%s1 + $0x44] sm:$0xf]
      %v387 = vld [vmem:[%s1 + $0x48] sm:$0xf]
      %v388 = vld [vmem:[%s1 + $0x4c] sm:$0xf]
      %v389 = vld [vmem:[%s1 + $0x50] sm:$0xf]
      %v390 = vld [vmem:[%s1 + $0x54] sm:$0xf]
      %v391 = vld [vmem:[%s1 + $0x58] sm:$0xf]
      %v392 = vld [vmem:[%s1 + $0x5c] sm:$0xf]
      %v393 = vld [vmem:[%s1 + $0x60] sm:$0xf]
      %v394 = vld [vmem:[%s1 + $0x64] sm:$0xf]
      %v395 = vld [vmem:[%s1 + $0x68] sm:$0xf]
      %v396 = vld [vmem:[%s1 + $0x6c] sm:$0xf]
      %v397 = vld [vmem:[%s1 + $0x70] sm:$0xf]
      %v398 = vld [vmem:[%s1 + $0x74] sm:$0xf]
      %v399 = vld [vmem:[%s1 + $0x78] sm:$0xf]
      %v400 = vld [vmem:[%s1 + $0x7c] sm:$0xf]
      %v401 = vld [vmem:[%s1 + $0x80] sm:$0xf]
      %v402 = vld [vmem:[%s1 + $0x84] sm:$0xf]
      %v403 = vld [vmem:[%s1 + $0x88] sm:$0xf]
      %v404 = vld [vmem:[%s1 + $0x8c] sm:$0xf]
      %v405 = vld [vmem:[%s1 + $0x90] sm:$0xf]
      %v406 = vld [vmem:[%s1 + $0x94] sm:$0xf]
      %v407 = vld [vmem:[%s1 + $0x98] sm:$0xf]
      %v408 = vld [vmem:[%s1 + $0x9c] sm:$0xf]
      %v409 = vld [vmem:[%s1 + $0xa0] sm:$0xf]
      %v410 = vld [vmem:[%s1 + $0xa4] sm:$0xf]
      %v411 = vld [vmem:[%s1 + $0xa8] sm:$0xf]
      %v412 = vld [vmem:[%s1 + $0xac] sm:$0xf]
      %v413 = vld [vmem:[%s1 + $0xb0] sm:$0xf]
      %v414 = vld [vmem:[%s1 + $0xb4] sm:$0xf]
      %v415 = vld [vmem:[%s1 + $0xb8] sm:$0xf]
      %v416 = vld [vmem:[%s1 + $0xbc] sm:$0xf]
      %v417 = vld [vmem:[%s1 + $0xc0] sm:$0xf]
      %v418 = vld [vmem:[%s1 + $0xc4] sm:$0xf]
      %v419 = vld [vmem:[%s1 + $0xc8] sm:$0xf]
      %v420 = vld [vmem:[%s1 + $0xcc] sm:$0xf]
      %v421 = vld [vmem:[%s1 + $0xd0] sm:$0xf]
      %v422 = vld [vmem:[%s1 + $0xd4] sm:$0xf]
      %v423 = vld [vmem:[%s1 + $0xd8] sm:$0xf]
      %v424 = vld [vmem:[%s1 + $0xdc] sm:$0xf]
      %v425 = vld [vmem:[%s1 + $0xe0] sm:$0xf]
      %v426 = vld [vmem:[%s1 + $0xe4] sm:$0xf]
      %v427 = vld [vmem:[%s1 + $0xe8] sm:$0xf]
      %v428 = vld [vmem:[%s1 + $0xec] sm:$0xf]
      %v429 = vld [vmem:[%s1 + $0xf0] sm:$0xf]
      %v430 = vld [vmem:[%s1 + $0xf4] sm:$0xf]
      %v431 = vld [vmem:[%s1 + $0xf8] sm:$0xf]
      %v432 = vld [vmem:[%s1 + $0xfc] sm:$0xf]
      %v433 = vld [vmem:[%s1 + $0x100] sm:$0xf]
      %v434 = vld [vmem:[%s1 + $0x104] sm:$0xf]
      %v435 = vld [vmem:[%s1 + $0x108] sm:$0xf]
      %v436 = vld [vmem:[%s1 + $0x10c] sm:$0xf]
      %v437 = vld [vmem:[%s1 + $0x110] sm:$0xf]
      %v438 = vld [vmem:[%s1 + $0x114] sm:$0xf]
      %v439 = vld [vmem:[%s1 + $0x118] sm:$0xf]
      %v440 = vld [vmem:[%s1 + $0x11c] sm:$0xf]
      %v441 = vld [vmem:[%s1 + $0x120] sm:$0xf]
      %v442 = vld [vmem:[%s1 + $0x124] sm:$0xf]
      %v443 = vld [vmem:[%s1 + $0x128] sm:$0xf]
      %v444 = vld [vmem:[%s1 + $0x12c] sm:$0xf]
      %v445 = vld [vmem:[%s1 + $0x130] sm:$0xf]
      %v446 = vld [vmem:[%s1 + $0x134] sm:$0xf]
      %v447 = vld [vmem:[%s1 + $0x138] sm:$0xf]
      %v448 = vld [vmem:[%s1 + $0x13c] sm:$0xf]
      %v449 = vld [vmem:[%s2] sm:$0x1]
      %v451 = vperm.slane %v449, 0
      %v645 = vunpack.c.l.b16 %v177
      %v646 = vunpack.c.h.b16 %v177
      %v647 = vunpack.c.l.b16 %v178
      %v648 = vunpack.c.h.b16 %v178
      %v649 = vunpack.c.l.b16 %v179
      %v650 = vunpack.c.l.b16 %v180
      %v651 = vunpack.c.h.b16 %v180
      %v652 = vunpack.c.l.b16 %v181
      %v653 = vunpack.c.h.b16 %v181
      %v654 = vunpack.c.l.b16 %v182
      %v655 = vunpack.c.l.b16 %v183
      %v656 = vunpack.c.h.b16 %v183
      %v657 = vunpack.c.l.b16 %v184
      %v658 = vunpack.c.h.b16 %v184
      %v659 = vunpack.c.l.b16 %v185
      %v660 = vunpack.c.l.b16 %v186
      %v661 = vunpack.c.h.b16 %v186
      %v662 = vunpack.c.l.b16 %v187
      %v663 = vunpack.c.h.b16 %v187
      %v664 = vunpack.c.l.b16 %v188
      %v665 = vunpack.c.l.b16 %v189
      %v666 = vunpack.c.h.b16 %v189
      %v667 = vunpack.c.l.b16 %v190
      %v668 = vunpack.c.h.b16 %v190
      %v669 = vunpack.c.l.b16 %v191
      %v670 = vunpack.c.l.b16 %v192
      %v671 = vunpack.c.h.b16 %v192
      %v672 = vunpack.c.l.b16 %v193
      %v673 = vunpack.c.h.b16 %v193
      %v674 = vunpack.c.l.b16 %v194
      %v675 = vunpack.c.l.b16 %v195
      %v676 = vunpack.c.h.b16 %v195
      %v677 = vunpack.c.l.b16 %v196
      %v678 = vunpack.c.h.b16 %v196
      %v679 = vunpack.c.l.b16 %v197
      %v680 = vunpack.c.l.b16 %v198
      %v681 = vunpack.c.h.b16 %v198
      %v682 = vunpack.c.l.b16 %v199
      %v683 = vunpack.c.h.b16 %v199
      %v684 = vunpack.c.l.b16 %v200
      %v685 = vunpack.c.l.b16 %v201
      %v686 = vunpack.c.h.b16 %v201
      %v687 = vunpack.c.l.b16 %v202
      %v688 = vunpack.c.h.b16 %v202
      %v689 = vunpack.c.l.b16 %v203
      %v690 = vunpack.c.l.b16 %v204
      %v691 = vunpack.c.h.b16 %v204
      %v692 = vunpack.c.l.b16 %v205
      %v693 = vunpack.c.h.b16 %v205
      %v694 = vunpack.c.l.b16 %v206
      %v695 = vunpack.c.l.b16 %v207
      %v696 = vunpack.c.h.b16 %v207
      %v697 = vunpack.c.l.b16 %v208
      %v698 = vunpack.c.h.b16 %v208
      %v699 = vunpack.c.l.b16 %v209
      %v700 = vunpack.c.l.b16 %v210
      %v701 = vunpack.c.h.b16 %v210
      %v702 = vunpack.c.l.b16 %v211
      %v703 = vunpack.c.h.b16 %v211
      %v704 = vunpack.c.l.b16 %v212
      %v705 = vunpack.c.l.b16 %v213
      %v706 = vunpack.c.h.b16 %v213
      %v707 = vunpack.c.l.b16 %v214
      %v708 = vunpack.c.h.b16 %v214
      %v709 = vunpack.c.l.b16 %v215
      %v710 = vunpack.c.l.b16 %v216
      %v711 = vunpack.c.h.b16 %v216
      %v712 = vunpack.c.l.b16 %v217
      %v713 = vunpack.c.h.b16 %v217
      %v714 = vunpack.c.l.b16 %v218
      %v715 = vunpack.c.l.b16 %v219
      %v716 = vunpack.c.h.b16 %v219
      %v717 = vunpack.c.l.b16 %v220
      %v718 = vunpack.c.h.b16 %v220
      %v719 = vunpack.c.l.b16 %v221
      %v720 = vunpack.c.l.b16 %v222
      %v721 = vunpack.c.h.b16 %v222
      %v722 = vunpack.c.l.b16 %v223
      %v723 = vunpack.c.h.b16 %v223
      %v724 = vunpack.c.l.b16 %v224
      %v725 = vunpack.c.l.b16 %v225
      %v726 = vunpack.c.h.b16 %v225
      %v727 = vunpack.c.l.b16 %v226
      %v728 = vunpack.c.h.b16 %v226
      %v729 = vunpack.c.l.b16 %v227
      %v730 = vunpack.c.l.b16 %v228
      %v731 = vunpack.c.h.b16 %v228
      %v732 = vunpack.c.l.b16 %v229
      %v733 = vunpack.c.h.b16 %v229
      %v734 = vunpack.c.l.b16 %v230
      %v735 = vunpack.c.l.b16 %v231
      %v736 = vunpack.c.h.b16 %v231
      %v737 = vunpack.c.l.b16 %v232
      %v738 = vunpack.c.h.b16 %v232
      %v739 = vunpack.c.l.b16 %v233
      %v740 = vunpack.c.l.b16 %v234
      %v741 = vunpack.c.h.b16 %v234
      %v742 = vunpack.c.l.b16 %v235
      %v743 = vunpack.c.h.b16 %v235
      %v744 = vunpack.c.l.b16 %v236
      %v745 = vunpack.c.l.b16 %v237
      %v746 = vunpack.c.h.b16 %v237
      %v747 = vunpack.c.l.b16 %v238
      %v748 = vunpack.c.h.b16 %v238
      %v749 = vunpack.c.l.b16 %v239
      %v750 = vunpack.c.l.b16 %v240
      %v751 = vunpack.c.h.b16 %v240
      %v752 = vunpack.c.l.b16 %v241
      %v753 = vunpack.c.h.b16 %v241
      %v754 = vunpack.c.l.b16 %v242
      %v755 = vunpack.c.l.b16 %v243
      %v756 = vunpack.c.h.b16 %v243
      %v757 = vunpack.c.l.b16 %v244
      %v758 = vunpack.c.h.b16 %v244
      %v759 = vunpack.c.l.b16 %v245
      %v760 = vunpack.c.l.b16 %v246
      %v761 = vunpack.c.h.b16 %v246
      %v762 = vunpack.c.l.b16 %v247
      %v763 = vunpack.c.h.b16 %v247
      %v764 = vunpack.c.l.b16 %v248
      %v765 = vunpack.c.l.b16 %v249
      %v766 = vunpack.c.h.b16 %v249
      %v767 = vunpack.c.l.b16 %v250
      %v768 = vunpack.c.h.b16 %v250
      %v769 = vunpack.c.l.b16 %v251
      %v770 = vunpack.c.l.b16 %v252
      %v771 = vunpack.c.h.b16 %v252
      %v772 = vunpack.c.l.b16 %v253
      %v773 = vunpack.c.h.b16 %v253
      %v774 = vunpack.c.l.b16 %v254
      %v775 = vunpack.c.l.b16 %v255
      %v776 = vunpack.c.h.b16 %v255
      %v777 = vunpack.c.l.b16 %v256
      %v778 = vunpack.c.h.b16 %v256
      %v779 = vunpack.c.l.b16 %v257
      %v780 = vunpack.c.l.b16 %v258
      %v781 = vunpack.c.h.b16 %v258
      %v782 = vunpack.c.l.b16 %v259
      %v783 = vunpack.c.h.b16 %v259
      %v784 = vunpack.c.l.b16 %v260
      %v785 = vunpack.c.l.b16 %v261
      %v786 = vunpack.c.h.b16 %v261
      %v787 = vunpack.c.l.b16 %v262
      %v788 = vunpack.c.h.b16 %v262
      %v789 = vunpack.c.l.b16 %v263
      %v790 = vunpack.c.l.b16 %v264
      %v791 = vunpack.c.h.b16 %v264
      %v792 = vunpack.c.l.b16 %v265
      %v793 = vunpack.c.h.b16 %v265
      %v794 = vunpack.c.l.b16 %v266
      %v795 = vunpack.c.l.b16 %v267
      %v796 = vunpack.c.h.b16 %v267
      %v797 = vunpack.c.l.b16 %v268
      %v798 = vunpack.c.h.b16 %v268
      %v799 = vunpack.c.l.b16 %v269
      %v800 = vunpack.c.l.b16 %v270
      %v801 = vunpack.c.h.b16 %v270
      %v802 = vunpack.c.l.b16 %v271
      %v803 = vunpack.c.h.b16 %v271
      %v804 = vunpack.c.l.b16 %v272
      %v805 = vunpack.c.l.b16 %v273
      %v806 = vunpack.c.h.b16 %v273
      %v807 = vunpack.c.l.b16 %v274
      %v808 = vunpack.c.h.b16 %v274
      %v809 = vunpack.c.l.b16 %v275
      %v810 = vunpack.c.l.b16 %v276
      %v811 = vunpack.c.h.b16 %v276
      %v812 = vunpack.c.l.b16 %v277
      %v813 = vunpack.c.h.b16 %v277
      %v814 = vunpack.c.l.b16 %v278
      %v815 = vunpack.c.l.b16 %v279
      %v816 = vunpack.c.h.b16 %v279
      %v817 = vunpack.c.l.b16 %v280
      %v818 = vunpack.c.h.b16 %v280
      %v819 = vunpack.c.l.b16 %v281
      %v820 = vunpack.c.l.b16 %v282
      %v821 = vunpack.c.h.b16 %v282
      %v822 = vunpack.c.l.b16 %v283
      %v823 = vunpack.c.h.b16 %v283
      %v824 = vunpack.c.l.b16 %v284
      %v825 = vunpack.c.l.b16 %v285
      %v826 = vunpack.c.h.b16 %v285
      %v827 = vunpack.c.l.b16 %v286
      %v828 = vunpack.c.h.b16 %v286
      %v829 = vunpack.c.l.b16 %v287
      %v830 = vunpack.c.l.b16 %v288
      %v831 = vunpack.c.h.b16 %v288
      %v832 = vunpack.c.l.b16 %v289
      %v833 = vunpack.c.h.b16 %v289
      %v834 = vunpack.c.l.b16 %v290
      %v835 = vunpack.c.l.b16 %v291
      %v836 = vunpack.c.h.b16 %v291
      %v837 = vunpack.c.l.b16 %v292
      %v838 = vunpack.c.h.b16 %v292
      %v839 = vunpack.c.l.b16 %v293
      %v840 = vunpack.c.l.b16 %v294
      %v841 = vunpack.c.h.b16 %v294
      %v842 = vunpack.c.l.b16 %v295
      %v843 = vunpack.c.h.b16 %v295
      %v844 = vunpack.c.l.b16 %v296
      %v845 = vunpack.c.l.b16 %v297
      %v846 = vunpack.c.h.b16 %v297
      %v847 = vunpack.c.l.b16 %v298
      %v848 = vunpack.c.h.b16 %v298
      %v849 = vunpack.c.l.b16 %v299
      %v850 = vunpack.c.l.b16 %v300
      %v851 = vunpack.c.h.b16 %v300
      %v852 = vunpack.c.l.b16 %v301
      %v853 = vunpack.c.h.b16 %v301
      %v854 = vunpack.c.l.b16 %v302
      %v855 = vunpack.c.l.b16 %v303
      %v856 = vunpack.c.h.b16 %v303
      %v857 = vunpack.c.l.b16 %v304
      %v858 = vunpack.c.h.b16 %v304
      %v859 = vunpack.c.l.b16 %v305
      %v860 = vunpack.c.l.b16 %v306
      %v861 = vunpack.c.h.b16 %v306
      %v862 = vunpack.c.l.b16 %v307
      %v863 = vunpack.c.h.b16 %v307
      %v864 = vunpack.c.l.b16 %v308
      %v865 = vunpack.c.l.b16 %v309
      %v866 = vunpack.c.h.b16 %v309
      %v867 = vunpack.c.l.b16 %v310
      %v868 = vunpack.c.h.b16 %v310
      %v869 = vunpack.c.l.b16 %v311
      %v870 = vunpack.c.l.b16 %v312
      %v871 = vunpack.c.h.b16 %v312
      %v872 = vunpack.c.l.b16 %v313
      %v873 = vunpack.c.h.b16 %v313
      %v874 = vunpack.c.l.b16 %v314
      %v875 = vunpack.c.l.b16 %v315
      %v876 = vunpack.c.h.b16 %v315
      %v877 = vunpack.c.l.b16 %v316
      %v878 = vunpack.c.h.b16 %v316
      %v879 = vunpack.c.l.b16 %v317
      %v880 = vunpack.c.l.b16 %v318
      %v881 = vunpack.c.h.b16 %v318
      %v882 = vunpack.c.l.b16 %v319
      %v883 = vunpack.c.h.b16 %v319
      %v884 = vunpack.c.l.b16 %v320
      %v885 = vunpack.c.l.b16 %v321
      %v886 = vunpack.c.h.b16 %v321
      %v887 = vunpack.c.l.b16 %v322
      %v888 = vunpack.c.h.b16 %v322
      %v889 = vunpack.c.l.b16 %v323
      %v890 = vunpack.c.l.b16 %v324
      %v891 = vunpack.c.h.b16 %v324
      %v892 = vunpack.c.l.b16 %v325
      %v893 = vunpack.c.h.b16 %v325
      %v894 = vunpack.c.l.b16 %v326
      %v895 = vunpack.c.l.b16 %v327
      %v896 = vunpack.c.h.b16 %v327
      %v897 = vunpack.c.l.b16 %v328
      %v898 = vunpack.c.h.b16 %v328
      %v899 = vunpack.c.l.b16 %v329
      %v900 = vunpack.c.l.b16 %v330
      %v901 = vunpack.c.h.b16 %v330
      %v902 = vunpack.c.l.b16 %v331
      %v903 = vunpack.c.h.b16 %v331
      %v904 = vunpack.c.l.b16 %v332
      %v905 = vunpack.c.l.b16 %v333
      %v906 = vunpack.c.h.b16 %v333
      %v907 = vunpack.c.l.b16 %v334
      %v908 = vunpack.c.h.b16 %v334
      %v909 = vunpack.c.l.b16 %v335
      %v910 = vunpack.c.l.b16 %v336
      %v911 = vunpack.c.h.b16 %v336
      %v912 = vunpack.c.l.b16 %v337
      %v913 = vunpack.c.h.b16 %v337
      %v914 = vunpack.c.l.b16 %v338
      %v915 = vunpack.c.l.b16 %v339
      %v916 = vunpack.c.h.b16 %v339
      %v917 = vunpack.c.l.b16 %v340
      %v918 = vunpack.c.h.b16 %v340
      %v919 = vunpack.c.l.b16 %v341
      %v920 = vunpack.c.l.b16 %v342
      %v921 = vunpack.c.h.b16 %v342
      %v922 = vunpack.c.l.b16 %v343
      %v923 = vunpack.c.h.b16 %v343
      %v924 = vunpack.c.l.b16 %v344
      %v925 = vunpack.c.l.b16 %v345
      %v926 = vunpack.c.h.b16 %v345
      %v927 = vunpack.c.l.b16 %v346
      %v928 = vunpack.c.h.b16 %v346
      %v929 = vunpack.c.l.b16 %v347
      %v930 = vunpack.c.l.b16 %v348
      %v931 = vunpack.c.h.b16 %v348
      %v932 = vunpack.c.l.b16 %v349
      %v933 = vunpack.c.h.b16 %v349
      %v934 = vunpack.c.l.b16 %v350
      %v935 = vunpack.c.l.b16 %v351
      %v936 = vunpack.c.h.b16 %v351
      %v937 = vunpack.c.l.b16 %v352
      %v938 = vunpack.c.h.b16 %v352
      %v939 = vunpack.c.l.b16 %v353
      %v940 = vunpack.c.l.b16 %v354
      %v941 = vunpack.c.h.b16 %v354
      %v942 = vunpack.c.l.b16 %v355
      %v943 = vunpack.c.h.b16 %v355
      %v944 = vunpack.c.l.b16 %v356
      %v945 = vunpack.c.l.b16 %v357
      %v946 = vunpack.c.h.b16 %v357
      %v947 = vunpack.c.l.b16 %v358
      %v948 = vunpack.c.h.b16 %v358
      %v949 = vunpack.c.l.b16 %v359
      %v950 = vunpack.c.l.b16 %v360
      %v951 = vunpack.c.h.b16 %v360
      %v952 = vunpack.c.l.b16 %v361
      %v953 = vunpack.c.h.b16 %v361
      %v954 = vunpack.c.l.b16 %v362
      %v955 = vunpack.c.l.b16 %v363
      %v956 = vunpack.c.h.b16 %v363
      %v957 = vunpack.c.l.b16 %v364
      %v958 = vunpack.c.h.b16 %v364
      %v959 = vunpack.c.l.b16 %v365
      %v960 = vunpack.c.l.b16 %v366
      %v961 = vunpack.c.h.b16 %v366
      %v962 = vunpack.c.l.b16 %v367
      %v963 = vunpack.c.h.b16 %v367
      %v964 = vunpack.c.l.b16 %v368
      %v965 = vpack.c.b16 %v650, %v645
      %v966 = vpack.c.b16 %v651, %v646
      %v967 = vpack.c.b16 %v652, %v647
      %v968 = vpack.c.b16 %v653, %v648
      %v969 = vpack.c.b16 %v654, %v649
      %v970 = vpack.c.b16 %v660, %v655
      %v971 = vpack.c.b16 %v661, %v656
      %v972 = vpack.c.b16 %v662, %v657
      %v973 = vpack.c.b16 %v663, %v658
      %v974 = vpack.c.b16 %v664, %v659
      %v975 = vpack.c.b16 %v670, %v665
      %v976 = vpack.c.b16 %v671, %v666
      %v977 = vpack.c.b16 %v672, %v667
      %v978 = vpack.c.b16 %v673, %v668
      %v979 = vpack.c.b16 %v674, %v669
      %v980 = vpack.c.b16 %v680, %v675
      %v981 = vpack.c.b16 %v681, %v676
      %v982 = vpack.c.b16 %v682, %v677
      %v983 = vpack.c.b16 %v683, %v678
      %v984 = vpack.c.b16 %v684, %v679
      %v985 = vpack.c.b16 %v690, %v685
      %v986 = vpack.c.b16 %v691, %v686
      %v987 = vpack.c.b16 %v692, %v687
      %v988 = vpack.c.b16 %v693, %v688
      %v989 = vpack.c.b16 %v694, %v689
      %v990 = vpack.c.b16 %v700, %v695
      %v991 = vpack.c.b16 %v701, %v696
      %v992 = vpack.c.b16 %v702, %v697
      %v993 = vpack.c.b16 %v703, %v698
      %v994 = vpack.c.b16 %v704, %v699
      %v995 = vpack.c.b16 %v710, %v705
      %v996 = vpack.c.b16 %v711, %v706
      %v997 = vpack.c.b16 %v712, %v707
      %v998 = vpack.c.b16 %v713, %v708
      %v999 = vpack.c.b16 %v714, %v709
      %v1000 = vpack.c.b16 %v720, %v715
      %v1001 = vpack.c.b16 %v721, %v716
      %v1002 = vpack.c.b16 %v722, %v717
      %v1003 = vpack.c.b16 %v723, %v718
      %v1004 = vpack.c.b16 %v724, %v719
      %v1005 = vpack.c.b16 %v730, %v725
      %v1006 = vpack.c.b16 %v731, %v726
      %v1007 = vpack.c.b16 %v732, %v727
      %v1008 = vpack.c.b16 %v733, %v728
      %v1009 = vpack.c.b16 %v734, %v729
      %v1010 = vpack.c.b16 %v740, %v735
      %v1011 = vpack.c.b16 %v741, %v736
      %v1012 = vpack.c.b16 %v742, %v737
      %v1013 = vpack.c.b16 %v743, %v738
      %v1014 = vpack.c.b16 %v744, %v739
      %v1015 = vpack.c.b16 %v750, %v745
      %v1016 = vpack.c.b16 %v751, %v746
      %v1017 = vpack.c.b16 %v752, %v747
      %v1018 = vpack.c.b16 %v753, %v748
      %v1019 = vpack.c.b16 %v754, %v749
      %v1020 = vpack.c.b16 %v760, %v755
      %v1021 = vpack.c.b16 %v761, %v756
      %v1022 = vpack.c.b16 %v762, %v757
      %v1023 = vpack.c.b16 %v763, %v758
      %v1024 = vpack.c.b16 %v764, %v759
      %v1025 = vpack.c.b16 %v770, %v765
      %v1026 = vpack.c.b16 %v771, %v766
      %v1027 = vpack.c.b16 %v772, %v767
      %v1028 = vpack.c.b16 %v773, %v768
      %v1029 = vpack.c.b16 %v774, %v769
      %v1030 = vpack.c.b16 %v780, %v775
      %v1031 = vpack.c.b16 %v781, %v776
      %v1032 = vpack.c.b16 %v782, %v777
      %v1033 = vpack.c.b16 %v783, %v778
      %v1034 = vpack.c.b16 %v784, %v779
      %v1035 = vpack.c.b16 %v790, %v785
      %v1036 = vpack.c.b16 %v791, %v786
      %v1037 = vpack.c.b16 %v792, %v787
      %v1038 = vpack.c.b16 %v793, %v788
      %v1039 = vpack.c.b16 %v794, %v789
      %v1040 = vpack.c.b16 %v800, %v795
      %v1041 = vpack.c.b16 %v801, %v796
      %v1042 = vpack.c.b16 %v802, %v797
      %v1043 = vpack.c.b16 %v803, %v798
      %v1044 = vpack.c.b16 %v804, %v799
      %v1045 = vpack.c.b16 %v810, %v805
      %v1046 = vpack.c.b16 %v811, %v806
      %v1047 = vpack.c.b16 %v812, %v807
      %v1048 = vpack.c.b16 %v813, %v808
      %v1049 = vpack.c.b16 %v814, %v809
      %v1050 = vpack.c.b16 %v820, %v815
      %v1051 = vpack.c.b16 %v821, %v816
      %v1052 = vpack.c.b16 %v822, %v817
      %v1053 = vpack.c.b16 %v823, %v818
      %v1054 = vpack.c.b16 %v824, %v819
      %v1055 = vpack.c.b16 %v830, %v825
      %v1056 = vpack.c.b16 %v831, %v826
      %v1057 = vpack.c.b16 %v832, %v827
      %v1058 = vpack.c.b16 %v833, %v828
      %v1059 = vpack.c.b16 %v834, %v829
      %v1060 = vpack.c.b16 %v840, %v835
      %v1061 = vpack.c.b16 %v841, %v836
      %v1062 = vpack.c.b16 %v842, %v837
      %v1063 = vpack.c.b16 %v843, %v838
      %v1064 = vpack.c.b16 %v844, %v839
      %v1065 = vpack.c.b16 %v850, %v845
      %v1066 = vpack.c.b16 %v851, %v846
      %v1067 = vpack.c.b16 %v852, %v847
      %v1068 = vpack.c.b16 %v853, %v848
      %v1069 = vpack.c.b16 %v854, %v849
      %v1070 = vpack.c.b16 %v860, %v855
      %v1071 = vpack.c.b16 %v861, %v856
      %v1072 = vpack.c.b16 %v862, %v857
      %v1073 = vpack.c.b16 %v863, %v858
      %v1074 = vpack.c.b16 %v864, %v859
      %v1075 = vpack.c.b16 %v870, %v865
      %v1076 = vpack.c.b16 %v871, %v866
      %v1077 = vpack.c.b16 %v872, %v867
      %v1078 = vpack.c.b16 %v873, %v868
      %v1079 = vpack.c.b16 %v874, %v869
      %v1080 = vpack.c.b16 %v880, %v875
      %v1081 = vpack.c.b16 %v881, %v876
      %v1082 = vpack.c.b16 %v882, %v877
      %v1083 = vpack.c.b16 %v883, %v878
      %v1084 = vpack.c.b16 %v884, %v879
      %v1085 = vpack.c.b16 %v890, %v885
      %v1086 = vpack.c.b16 %v891, %v886
      %v1087 = vpack.c.b16 %v892, %v887
      %v1088 = vpack.c.b16 %v893, %v888
      %v1089 = vpack.c.b16 %v894, %v889
      %v1090 = vpack.c.b16 %v900, %v895
      %v1091 = vpack.c.b16 %v901, %v896
      %v1092 = vpack.c.b16 %v902, %v897
      %v1093 = vpack.c.b16 %v903, %v898
      %v1094 = vpack.c.b16 %v904, %v899
      %v1095 = vpack.c.b16 %v910, %v905
      %v1096 = vpack.c.b16 %v911, %v906
      %v1097 = vpack.c.b16 %v912, %v907
      %v1098 = vpack.c.b16 %v913, %v908
      %v1099 = vpack.c.b16 %v914, %v909
      %v1100 = vpack.c.b16 %v920, %v915
      %v1101 = vpack.c.b16 %v921, %v916
      %v1102 = vpack.c.b16 %v922, %v917
      %v1103 = vpack.c.b16 %v923, %v918
      %v1104 = vpack.c.b16 %v924, %v919
      %v1105 = vpack.c.b16 %v930, %v925
      %v1106 = vpack.c.b16 %v931, %v926
      %v1107 = vpack.c.b16 %v932, %v927
      %v1108 = vpack.c.b16 %v933, %v928
      %v1109 = vpack.c.b16 %v934, %v929
      %v1110 = vpack.c.b16 %v940, %v935
      %v1111 = vpack.c.b16 %v941, %v936
      %v1112 = vpack.c.b16 %v942, %v937
      %v1113 = vpack.c.b16 %v943, %v938
      %v1114 = vpack.c.b16 %v944, %v939
      %v1115 = vpack.c.b16 %v950, %v945
      %v1116 = vpack.c.b16 %v951, %v946
      %v1117 = vpack.c.b16 %v952, %v947
      %v1118 = vpack.c.b16 %v953, %v948
      %v1119 = vpack.c.b16 %v954, %v949
      %v1120 = vpack.c.b16 %v960, %v955
      %v1121 = vpack.c.b16 %v961, %v956
      %v1122 = vpack.c.b16 %v962, %v957
      %v1123 = vpack.c.b16 %v963, %v958
      %v1124 = vpack.c.b16 %v964, %v959
      %v1365 = vunpack.c.l.b16 %v369
      %v1366 = vunpack.c.l.b16 %v370
      %v1367 = vunpack.c.l.b16 %v371
      %v1368 = vunpack.c.l.b16 %v372
      %v1369 = vunpack.c.l.b16 %v373
      %v1370 = vunpack.c.l.b16 %v374
      %v1371 = vunpack.c.l.b16 %v375
      %v1372 = vunpack.c.l.b16 %v376
      %v1373 = vunpack.c.l.b16 %v377
      %v1374 = vunpack.c.l.b16 %v378
      %v1375 = vunpack.c.l.b16 %v379
      %v1376 = vunpack.c.l.b16 %v380
      %v1377 = vunpack.c.l.b16 %v381
      %v1378 = vunpack.c.l.b16 %v382
      %v1379 = vunpack.c.l.b16 %v383
      %v1380 = vunpack.c.l.b16 %v384
      %v1381 = vunpack.c.l.b16 %v385
      %v1382 = vunpack.c.l.b16 %v386
      %v1383 = vunpack.c.l.b16 %v387
      %v1384 = vunpack.c.l.b16 %v388
      %v1385 = vunpack.c.l.b16 %v389
      %v1386 = vunpack.c.l.b16 %v390
      %v1387 = vunpack.c.l.b16 %v391
      %v1388 = vunpack.c.l.b16 %v392
      %v1389 = vunpack.c.l.b16 %v393
      %v1390 = vunpack.c.l.b16 %v394
      %v1391 = vunpack.c.l.b16 %v395
      %v1392 = vunpack.c.l.b16 %v396
      %v1393 = vunpack.c.l.b16 %v397
      %v1394 = vunpack.c.l.b16 %v398
      %v1395 = vunpack.c.l.b16 %v399
      %v1396 = vunpack.c.l.b16 %v400
      %v1397 = vunpack.c.l.b16 %v401
      %v1398 = vunpack.c.l.b16 %v402
      %v1399 = vunpack.c.l.b16 %v403
      %v1400 = vunpack.c.l.b16 %v404
      %v1401 = vunpack.c.l.b16 %v405
      %v1402 = vunpack.c.l.b16 %v406
      %v1403 = vunpack.c.l.b16 %v407
      %v1404 = vunpack.c.l.b16 %v408
      %v1405 = vunpack.c.l.b16 %v409
      %v1406 = vunpack.c.l.b16 %v410
      %v1407 = vunpack.c.l.b16 %v411
      %v1408 = vunpack.c.l.b16 %v412
      %v1409 = vunpack.c.l.b16 %v413
      %v1410 = vunpack.c.l.b16 %v414
      %v1411 = vunpack.c.l.b16 %v415
      %v1412 = vunpack.c.l.b16 %v416
      %v1413 = vunpack.c.l.b16 %v417
      %v1414 = vunpack.c.l.b16 %v418
      %v1415 = vunpack.c.l.b16 %v419
      %v1416 = vunpack.c.l.b16 %v420
      %v1417 = vunpack.c.l.b16 %v421
      %v1418 = vunpack.c.l.b16 %v422
      %v1419 = vunpack.c.l.b16 %v423
      %v1420 = vunpack.c.l.b16 %v424
      %v1421 = vunpack.c.l.b16 %v425
      %v1422 = vunpack.c.l.b16 %v426
      %v1423 = vunpack.c.l.b16 %v427
      %v1424 = vunpack.c.l.b16 %v428
      %v1425 = vunpack.c.l.b16 %v429
      %v1426 = vunpack.c.l.b16 %v430
      %v1427 = vunpack.c.l.b16 %v431
      %v1428 = vunpack.c.l.b16 %v432
      %v1429 = vunpack.c.l.b16 %v433
      %v1430 = vunpack.c.l.b16 %v434
      %v1431 = vunpack.c.l.b16 %v435
      %v1432 = vunpack.c.l.b16 %v436
      %v1433 = vunpack.c.l.b16 %v437
      %v1434 = vunpack.c.l.b16 %v438
      %v1435 = vunpack.c.l.b16 %v439
      %v1436 = vunpack.c.l.b16 %v440
      %v1437 = vunpack.c.l.b16 %v441
      %v1438 = vunpack.c.l.b16 %v442
      %v1439 = vunpack.c.l.b16 %v443
      %v1440 = vunpack.c.l.b16 %v444
      %v1441 = vunpack.c.l.b16 %v445
      %v1442 = vunpack.c.l.b16 %v446
      %v1443 = vunpack.c.l.b16 %v447
      %v1444 = vunpack.c.l.b16 %v448
      %v1445 = vpack.c.b16 %v1366, %v1365
      %v1446 = vpack.c.b16 %v1368, %v1367
      %v1447 = vpack.c.b16 %v1370, %v1369
      %v1448 = vpack.c.b16 %v1372, %v1371
      %v1449 = vpack.c.b16 %v1374, %v1373
      %v1450 = vpack.c.b16 %v1376, %v1375
      %v1451 = vpack.c.b16 %v1378, %v1377
      %v1452 = vpack.c.b16 %v1380, %v1379
      %v1453 = vpack.c.b16 %v1382, %v1381
      %v1454 = vpack.c.b16 %v1384, %v1383
      %v1455 = vpack.c.b16 %v1386, %v1385
      %v1456 = vpack.c.b16 %v1388, %v1387
      %v1457 = vpack.c.b16 %v1390, %v1389
      %v1458 = vpack.c.b16 %v1392, %v1391
      %v1459 = vpack.c.b16 %v1394, %v1393
      %v1460 = vpack.c.b16 %v1396, %v1395
      %v1461 = vpack.c.b16 %v1398, %v1397
      %v1462 = vpack.c.b16 %v1400, %v1399
      %v1463 = vpack.c.b16 %v1402, %v1401
      %v1464 = vpack.c.b16 %v1404, %v1403
      %v1465 = vpack.c.b16 %v1406, %v1405
      %v1466 = vpack.c.b16 %v1408, %v1407
      %v1467 = vpack.c.b16 %v1410, %v1409
      %v1468 = vpack.c.b16 %v1412, %v1411
      %v1469 = vpack.c.b16 %v1414, %v1413
      %v1470 = vpack.c.b16 %v1416, %v1415
      %v1471 = vpack.c.b16 %v1418, %v1417
      %v1472 = vpack.c.b16 %v1420, %v1419
      %v1473 = vpack.c.b16 %v1422, %v1421
      %v1474 = vpack.c.b16 %v1424, %v1423
      %v1475 = vpack.c.b16 %v1426, %v1425
      %v1476 = vpack.c.b16 %v1428, %v1427
      %v1477 = vpack.c.b16 %v1430, %v1429
      %v1478 = vpack.c.b16 %v1432, %v1431
      %v1479 = vpack.c.b16 %v1434, %v1433
      %v1480 = vpack.c.b16 %v1436, %v1435
      %v1481 = vpack.c.b16 %v1438, %v1437
      %v1482 = vpack.c.b16 %v1440, %v1439
      %v1483 = vpack.c.b16 %v1442, %v1441
      %v1484 = vpack.c.b16 %v1444, %v1443
      %1525 = vmatpush.bf16.msra.mxu0 %v1452
      %1526 = vmatpush.bf16.msra.mxu0 %v1451
      %1527 = vmatpush.bf16.msra.mxu0 %v1450
      %1528 = vmatpush.bf16.msra.mxu0 %v1449
      %1529 = vmatpush.bf16.msra.mxu0 %v1448
      %1530 = vmatpush.bf16.msra.mxu0 %v1447
      %1531 = vmatpush.bf16.msra.mxu0 %v1446
      %1532 = vmatpush.bf16.msra.mxu0 %v1445
      %1533 = vmatmul.bf16.gmra.mxu0 %v965
      %v1534 = vpop.f32.mrf.mxu0
      %v1535 = vadd.f32 %v451, %v1534
      %v1536 = vpop.f32.mrf.mxu0
      %v1537 = vadd.f32 %v451, %v1536
      %1538 = vmatmul.bf16.gmra.mxu0 %v970
      %v1539 = vpop.f32.mrf.mxu0
      %v1540 = vadd.f32 %v451, %v1539
      %v1541 = vpop.f32.mrf.mxu0
      %v1542 = vadd.f32 %v451, %v1541
      %1543 = vmatmul.bf16.gmra.mxu0 %v975
      %v1544 = vpop.f32.mrf.mxu0
      %v1545 = vadd.f32 %v451, %v1544
      %v1546 = vpop.f32.mrf.mxu0
      %v1547 = vadd.f32 %v451, %v1546
      %1548 = vmatmul.bf16.gmra.mxu0 %v980
      %v1549 = vpop.f32.mrf.mxu0
      %v1550 = vadd.f32 %v451, %v1549
      %v1551 = vpop.f32.mrf.mxu0
      %v1552 = vadd.f32 %v451, %v1551
      %1553 = vmatmul.bf16.gmra.mxu0 %v985
      %v1554 = vpop.f32.mrf.mxu0
      %v1555 = vadd.f32 %v451, %v1554
      %v1556 = vpop.f32.mrf.mxu0
      %v1557 = vadd.f32 %v451, %v1556
      %1558 = vmatmul.bf16.gmra.mxu0 %v990
      %v1559 = vpop.f32.mrf.mxu0
      %v1560 = vadd.f32 %v451, %v1559
      %v1561 = vpop.f32.mrf.mxu0
      %v1562 = vadd.f32 %v451, %v1561
      %1563 = vmatmul.bf16.gmra.mxu0 %v995
      %v1564 = vpop.f32.mrf.mxu0
      %v1565 = vadd.f32 %v451, %v1564
      %v1566 = vpop.f32.mrf.mxu0
      %v1567 = vadd.f32 %v451, %v1566
      %1568 = vmatmul.bf16.gmra.mxu0 %v1000
      %v1569 = vpop.f32.mrf.mxu0
      %v1570 = vadd.f32 %v451, %v1569
      %v1571 = vpop.f32.mrf.mxu0
      %v1572 = vadd.f32 %v451, %v1571
      %1573 = vmatmul.bf16.gmra.mxu0 %v1005
      %v1574 = vpop.f32.mrf.mxu0
      %v1575 = vadd.f32 %v451, %v1574
      %v1576 = vpop.f32.mrf.mxu0
      %v1577 = vadd.f32 %v451, %v1576
      %1578 = vmatmul.bf16.gmra.mxu0 %v1010
      %v1579 = vpop.f32.mrf.mxu0
      %v1580 = vadd.f32 %v451, %v1579
      %v1581 = vpop.f32.mrf.mxu0
      %v1582 = vadd.f32 %v451, %v1581
      %1583 = vmatmul.bf16.gmra.mxu0 %v1015
      %v1584 = vpop.f32.mrf.mxu0
      %v1585 = vadd.f32 %v451, %v1584
      %v1586 = vpop.f32.mrf.mxu0
      %v1587 = vadd.f32 %v451, %v1586
      %1588 = vmatmul.bf16.gmra.mxu0 %v1020
      %v1589 = vpop.f32.mrf.mxu0
      %v1590 = vadd.f32 %v451, %v1589
      %v1591 = vpop.f32.mrf.mxu0
      %v1592 = vadd.f32 %v451, %v1591
      %1593 = vmatmul.bf16.gmra.mxu0 %v1025
      %v1594 = vpop.f32.mrf.mxu0
      %v1595 = vadd.f32 %v451, %v1594
      %v1596 = vpop.f32.mrf.mxu0
      %v1597 = vadd.f32 %v451, %v1596
      %1598 = vmatmul.bf16.gmra.mxu0 %v1030
      %v1599 = vpop.f32.mrf.mxu0
      %v1600 = vadd.f32 %v451, %v1599
      %v1601 = vpop.f32.mrf.mxu0
      %v1602 = vadd.f32 %v451, %v1601
      %1603 = vmatmul.bf16.gmra.mxu0 %v1035
      %v1604 = vpop.f32.mrf.mxu0
      %v1605 = vadd.f32 %v451, %v1604
      %v1606 = vpop.f32.mrf.mxu0
      %v1607 = vadd.f32 %v451, %v1606
      %1608 = vmatmul.bf16.gmra.mxu0 %v1040
      %v1609 = vpop.f32.mrf.mxu0
      %v1610 = vadd.f32 %v451, %v1609
      %v1611 = vpop.f32.mrf.mxu0
      %v1612 = vadd.f32 %v451, %v1611
      %1613 = vmatmul.bf16.gmra.mxu0 %v1045
      %v1614 = vpop.f32.mrf.mxu0
      %v1615 = vadd.f32 %v451, %v1614
      %v1616 = vpop.f32.mrf.mxu0
      %v1617 = vadd.f32 %v451, %v1616
      %1618 = vmatmul.bf16.gmra.mxu0 %v1050
      %v1619 = vpop.f32.mrf.mxu0
      %v1620 = vadd.f32 %v451, %v1619
      %v1621 = vpop.f32.mrf.mxu0
      %v1622 = vadd.f32 %v451, %v1621
      %1623 = vmatmul.bf16.gmra.mxu0 %v1055
      %v1624 = vpop.f32.mrf.mxu0
      %v1625 = vadd.f32 %v451, %v1624
      %v1626 = vpop.f32.mrf.mxu0
      %v1627 = vadd.f32 %v451, %v1626
      %1628 = vmatmul.bf16.gmra.mxu0 %v1060
      %v1629 = vpop.f32.mrf.mxu0
      %v1630 = vadd.f32 %v451, %v1629
      %v1631 = vpop.f32.mrf.mxu0
      %v1632 = vadd.f32 %v451, %v1631
      %1633 = vmatmul.bf16.gmra.mxu0 %v1065
      %v1634 = vpop.f32.mrf.mxu0
      %v1635 = vadd.f32 %v451, %v1634
      %v1636 = vpop.f32.mrf.mxu0
      %v1637 = vadd.f32 %v451, %v1636
      %1638 = vmatmul.bf16.gmra.mxu0 %v1070
      %v1639 = vpop.f32.mrf.mxu0
      %v1640 = vadd.f32 %v451, %v1639
      %v1641 = vpop.f32.mrf.mxu0
      %v1642 = vadd.f32 %v451, %v1641
      %1643 = vmatmul.bf16.gmra.mxu0 %v1075
      %v1644 = vpop.f32.mrf.mxu0
      %v1645 = vadd.f32 %v451, %v1644
      %v1646 = vpop.f32.mrf.mxu0
      %v1647 = vadd.f32 %v451, %v1646
      %1648 = vmatmul.bf16.gmra.mxu0 %v1080
      %v1649 = vpop.f32.mrf.mxu0
      %v1650 = vadd.f32 %v451, %v1649
      %v1651 = vpop.f32.mrf.mxu0
      %v1652 = vadd.f32 %v451, %v1651
      %1653 = vmatmul.bf16.gmra.mxu0 %v1085
      %v1654 = vpop.f32.mrf.mxu0
      %v1655 = vadd.f32 %v451, %v1654
      %v1656 = vpop.f32.mrf.mxu0
      %v1657 = vadd.f32 %v451, %v1656
      %1658 = vmatmul.bf16.gmra.mxu0 %v1090
      %v1659 = vpop.f32.mrf.mxu0
      %v1660 = vadd.f32 %v451, %v1659
      %v1661 = vpop.f32.mrf.mxu0
      %v1662 = vadd.f32 %v451, %v1661
      %1663 = vmatmul.bf16.gmra.mxu0 %v1095
      %v1664 = vpop.f32.mrf.mxu0
      %v1665 = vadd.f32 %v451, %v1664
      %v1666 = vpop.f32.mrf.mxu0
      %v1667 = vadd.f32 %v451, %v1666
      %1668 = vmatmul.bf16.gmra.mxu0 %v1100
      %v1669 = vpop.f32.mrf.mxu0
      %v1670 = vadd.f32 %v451, %v1669
      %v1671 = vpop.f32.mrf.mxu0
      %v1672 = vadd.f32 %v451, %v1671
      %1673 = vmatmul.bf16.gmra.mxu0 %v1105
      %v1674 = vpop.f32.mrf.mxu0
      %v1675 = vadd.f32 %v451, %v1674
      %v1676 = vpop.f32.mrf.mxu0
      %v1677 = vadd.f32 %v451, %v1676
      %1678 = vmatmul.bf16.gmra.mxu0 %v1110
      %v1679 = vpop.f32.mrf.mxu0
      %v1680 = vadd.f32 %v451, %v1679
      %v1681 = vpop.f32.mrf.mxu0
      %v1682 = vadd.f32 %v451, %v1681
      %1683 = vmatmul.bf16.gmra.mxu0 %v1115
      %v1684 = vpop.f32.mrf.mxu0
      %v1685 = vadd.f32 %v451, %v1684
      %v1686 = vpop.f32.mrf.mxu0
      %v1687 = vadd.f32 %v451, %v1686
      %1688 = vmatmul.bf16.gmra.mxu0 %v1120
      %v1689 = vpop.f32.mrf.mxu0
      %v1690 = vadd.f32 %v451, %v1689
      %v1691 = vpop.f32.mrf.mxu0
      %v1692 = vadd.f32 %v451, %v1691
      %1693 = vdwg.mxu0
      %1694 = vmatpush.bf16.msra.mxu0 %v1460
      %1695 = vmatpush.bf16.msra.mxu0 %v1459
      %1696 = vmatpush.bf16.msra.mxu0 %v1458
      %1697 = vmatpush.bf16.msra.mxu0 %v1457
      %1698 = vmatpush.bf16.msra.mxu0 %v1456
      %1699 = vmatpush.bf16.msra.mxu0 %v1455
      %1700 = vmatpush.bf16.msra.mxu0 %v1454
      %1701 = vmatpush.bf16.msra.mxu0 %v1453
      %1702 = vmatmul.bf16.gmra.mxu0 %v966
      %v1703 = vpop.f32.mrf.mxu0
      %v1704 = vadd.f32 %v1535, %v1703
      %v1705 = vpop.f32.mrf.mxu0
      %v1706 = vadd.f32 %v1537, %v1705
      %1707 = vmatmul.bf16.gmra.mxu0 %v971
      %v1708 = vpop.f32.mrf.mxu0
      %v1709 = vadd.f32 %v1540, %v1708
      %v1710 = vpop.f32.mrf.mxu0
      %v1711 = vadd.f32 %v1542, %v1710
      %1712 = vmatmul.bf16.gmra.mxu0 %v976
      %v1713 = vpop.f32.mrf.mxu0
      %v1714 = vadd.f32 %v1545, %v1713
      %v1715 = vpop.f32.mrf.mxu0
      %v1716 = vadd.f32 %v1547, %v1715
      %1717 = vmatmul.bf16.gmra.mxu0 %v981
      %v1718 = vpop.f32.mrf.mxu0
      %v1719 = vadd.f32 %v1550, %v1718
      %v1720 = vpop.f32.mrf.mxu0
      %v1721 = vadd.f32 %v1552, %v1720
      %1722 = vmatmul.bf16.gmra.mxu0 %v986
      %v1723 = vpop.f32.mrf.mxu0
      %v1724 = vadd.f32 %v1555, %v1723
      %v1725 = vpop.f32.mrf.mxu0
      %v1726 = vadd.f32 %v1557, %v1725
      %1727 = vmatmul.bf16.gmra.mxu0 %v991
      %v1728 = vpop.f32.mrf.mxu0
      %v1729 = vadd.f32 %v1560, %v1728
      %v1730 = vpop.f32.mrf.mxu0
      %v1731 = vadd.f32 %v1562, %v1730
      %1732 = vmatmul.bf16.gmra.mxu0 %v996
      %v1733 = vpop.f32.mrf.mxu0
      %v1734 = vadd.f32 %v1565, %v1733
      %v1735 = vpop.f32.mrf.mxu0
      %v1736 = vadd.f32 %v1567, %v1735
      %1737 = vmatmul.bf16.gmra.mxu0 %v1001
      %v1738 = vpop.f32.mrf.mxu0
      %v1739 = vadd.f32 %v1570, %v1738
      %v1740 = vpop.f32.mrf.mxu0
      %v1741 = vadd.f32 %v1572, %v1740
      %1742 = vmatmul.bf16.gmra.mxu0 %v1006
      %v1743 = vpop.f32.mrf.mxu0
      %v1744 = vadd.f32 %v1575, %v1743
      %v1745 = vpop.f32.mrf.mxu0
      %v1746 = vadd.f32 %v1577, %v1745
      %1747 = vmatmul.bf16.gmra.mxu0 %v1011
      %v1748 = vpop.f32.mrf.mxu0
      %v1749 = vadd.f32 %v1580, %v1748
      %v1750 = vpop.f32.mrf.mxu0
      %v1751 = vadd.f32 %v1582, %v1750
      %1752 = vmatmul.bf16.gmra.mxu0 %v1016
      %v1753 = vpop.f32.mrf.mxu0
      %v1754 = vadd.f32 %v1585, %v1753
      %v1755 = vpop.f32.mrf.mxu0
      %v1756 = vadd.f32 %v1587, %v1755
      %1757 = vmatmul.bf16.gmra.mxu0 %v1021
      %v1758 = vpop.f32.mrf.mxu0
      %v1759 = vadd.f32 %v1590, %v1758
      %v1760 = vpop.f32.mrf.mxu0
      %v1761 = vadd.f32 %v1592, %v1760
      %1762 = vmatmul.bf16.gmra.mxu0 %v1026
      %v1763 = vpop.f32.mrf.mxu0
      %v1764 = vadd.f32 %v1595, %v1763
      %v1765 = vpop.f32.mrf.mxu0
      %v1766 = vadd.f32 %v1597, %v1765
      %1767 = vmatmul.bf16.gmra.mxu0 %v1031
      %v1768 = vpop.f32.mrf.mxu0
      %v1769 = vadd.f32 %v1600, %v1768
      %v1770 = vpop.f32.mrf.mxu0
      %v1771 = vadd.f32 %v1602, %v1770
      %1772 = vmatmul.bf16.gmra.mxu0 %v1036
      %v1773 = vpop.f32.mrf.mxu0
      %v1774 = vadd.f32 %v1605, %v1773
      %v1775 = vpop.f32.mrf.mxu0
      %v1776 = vadd.f32 %v1607, %v1775
      %1777 = vmatmul.bf16.gmra.mxu0 %v1041
      %v1778 = vpop.f32.mrf.mxu0
      %v1779 = vadd.f32 %v1610, %v1778
      %v1780 = vpop.f32.mrf.mxu0
      %v1781 = vadd.f32 %v1612, %v1780
      %1782 = vmatmul.bf16.gmra.mxu0 %v1046
      %v1783 = vpop.f32.mrf.mxu0
      %v1784 = vadd.f32 %v1615, %v1783
      %v1785 = vpop.f32.mrf.mxu0
      %v1786 = vadd.f32 %v1617, %v1785
      %1787 = vmatmul.bf16.gmra.mxu0 %v1051
      %v1788 = vpop.f32.mrf.mxu0
      %v1789 = vadd.f32 %v1620, %v1788
      %v1790 = vpop.f32.mrf.mxu0
      %v1791 = vadd.f32 %v1622, %v1790
      %1792 = vmatmul.bf16.gmra.mxu0 %v1056
      %v1793 = vpop.f32.mrf.mxu0
      %v1794 = vadd.f32 %v1625, %v1793
      %v1795 = vpop.f32.mrf.mxu0
      %v1796 = vadd.f32 %v1627, %v1795
      %1797 = vmatmul.bf16.gmra.mxu0 %v1061
      %v1798 = vpop.f32.mrf.mxu0
      %v1799 = vadd.f32 %v1630, %v1798
      %v1800 = vpop.f32.mrf.mxu0
      %v1801 = vadd.f32 %v1632, %v1800
      %1802 = vmatmul.bf16.gmra.mxu0 %v1066
      %v1803 = vpop.f32.mrf.mxu0
      %v1804 = vadd.f32 %v1635, %v1803
      %v1805 = vpop.f32.mrf.mxu0
      %v1806 = vadd.f32 %v1637, %v1805
      %1807 = vmatmul.bf16.gmra.mxu0 %v1071
      %v1808 = vpop.f32.mrf.mxu0
      %v1809 = vadd.f32 %v1640, %v1808
      %v1810 = vpop.f32.mrf.mxu0
      %v1811 = vadd.f32 %v1642, %v1810
      %1812 = vmatmul.bf16.gmra.mxu0 %v1076
      %v1813 = vpop.f32.mrf.mxu0
      %v1814 = vadd.f32 %v1645, %v1813
      %v1815 = vpop.f32.mrf.mxu0
      %v1816 = vadd.f32 %v1647, %v1815
      %1817 = vmatmul.bf16.gmra.mxu0 %v1081
      %v1818 = vpop.f32.mrf.mxu0
      %v1819 = vadd.f32 %v1650, %v1818
      %v1820 = vpop.f32.mrf.mxu0
      %v1821 = vadd.f32 %v1652, %v1820
      %1822 = vmatmul.bf16.gmra.mxu0 %v1086
      %v1823 = vpop.f32.mrf.mxu0
      %v1824 = vadd.f32 %v1655, %v1823
      %v1825 = vpop.f32.mrf.mxu0
      %v1826 = vadd.f32 %v1657, %v1825
      %1827 = vmatmul.bf16.gmra.mxu0 %v1091
      %v1828 = vpop.f32.mrf.mxu0
      %v1829 = vadd.f32 %v1660, %v1828
      %v1830 = vpop.f32.mrf.mxu0
      %v1831 = vadd.f32 %v1662, %v1830
      %1832 = vmatmul.bf16.gmra.mxu0 %v1096
      %v1833 = vpop.f32.mrf.mxu0
      %v1834 = vadd.f32 %v1665, %v1833
      %v1835 = vpop.f32.mrf.mxu0
      %v1836 = vadd.f32 %v1667, %v1835
      %1837 = vmatmul.bf16.gmra.mxu0 %v1101
      %v1838 = vpop.f32.mrf.mxu0
      %v1839 = vadd.f32 %v1670, %v1838
      %v1840 = vpop.f32.mrf.mxu0
      %v1841 = vadd.f32 %v1672, %v1840
      %1842 = vmatmul.bf16.gmra.mxu0 %v1106
      %v1843 = vpop.f32.mrf.mxu0
      %v1844 = vadd.f32 %v1675, %v1843
      %v1845 = vpop.f32.mrf.mxu0
      %v1846 = vadd.f32 %v1677, %v1845
      %1847 = vmatmul.bf16.gmra.mxu0 %v1111
      %v1848 = vpop.f32.mrf.mxu0
      %v1849 = vadd.f32 %v1680, %v1848
      %v1850 = vpop.f32.mrf.mxu0
      %v1851 = vadd.f32 %v1682, %v1850
      %1852 = vmatmul.bf16.gmra.mxu0 %v1116
      %v1853 = vpop.f32.mrf.mxu0
      %v1854 = vadd.f32 %v1685, %v1853
      %v1855 = vpop.f32.mrf.mxu0
      %v1856 = vadd.f32 %v1687, %v1855
      %1857 = vmatmul.bf16.gmra.mxu0 %v1121
      %v1858 = vpop.f32.mrf.mxu0
      %v1859 = vadd.f32 %v1690, %v1858
      %v1860 = vpop.f32.mrf.mxu0
      %v1861 = vadd.f32 %v1692, %v1860
      %1862 = vdwg.mxu0
      %1863 = vmatpush.bf16.msra.mxu0 %v1468
      %1864 = vmatpush.bf16.msra.mxu0 %v1467
      %1865 = vmatpush.bf16.msra.mxu0 %v1466
      %1866 = vmatpush.bf16.msra.mxu0 %v1465
      %1867 = vmatpush.bf16.msra.mxu0 %v1464
      %1868 = vmatpush.bf16.msra.mxu0 %v1463
      %1869 = vmatpush.bf16.msra.mxu0 %v1462
      %1870 = vmatpush.bf16.msra.mxu0 %v1461
      %1871 = vmatmul.bf16.gmra.mxu0 %v967
      %v1872 = vpop.f32.mrf.mxu0
      %v1873 = vadd.f32 %v1704, %v1872
      %v1874 = vpop.f32.mrf.mxu0
      %v1875 = vadd.f32 %v1706, %v1874
      %1876 = vmatmul.bf16.gmra.mxu0 %v972
      %v1877 = vpop.f32.mrf.mxu0
      %v1878 = vadd.f32 %v1709, %v1877
      %v1879 = vpop.f32.mrf.mxu0
      %v1880 = vadd.f32 %v1711, %v1879
      %1881 = vmatmul.bf16.gmra.mxu0 %v977
      %v1882 = vpop.f32.mrf.mxu0
      %v1883 = vadd.f32 %v1714, %v1882
      %v1884 = vpop.f32.mrf.mxu0
      %v1885 = vadd.f32 %v1716, %v1884
      %1886 = vmatmul.bf16.gmra.mxu0 %v982
      %v1887 = vpop.f32.mrf.mxu0
      %v1888 = vadd.f32 %v1719, %v1887
      %v1889 = vpop.f32.mrf.mxu0
      %v1890 = vadd.f32 %v1721, %v1889
      %1891 = vmatmul.bf16.gmra.mxu0 %v987
      %v1892 = vpop.f32.mrf.mxu0
      %v1893 = vadd.f32 %v1724, %v1892
      %v1894 = vpop.f32.mrf.mxu0
      %v1895 = vadd.f32 %v1726, %v1894
      %1896 = vmatmul.bf16.gmra.mxu0 %v992
      %v1897 = vpop.f32.mrf.mxu0
      %v1898 = vadd.f32 %v1729, %v1897
      %v1899 = vpop.f32.mrf.mxu0
      %v1900 = vadd.f32 %v1731, %v1899
      %1901 = vmatmul.bf16.gmra.mxu0 %v997
      %v1902 = vpop.f32.mrf.mxu0
      %v1903 = vadd.f32 %v1734, %v1902
      %v1904 = vpop.f32.mrf.mxu0
      %v1905 = vadd.f32 %v1736, %v1904
      %1906 = vmatmul.bf16.gmra.mxu0 %v1002
      %v1907 = vpop.f32.mrf.mxu0
      %v1908 = vadd.f32 %v1739, %v1907
      %v1909 = vpop.f32.mrf.mxu0
      %v1910 = vadd.f32 %v1741, %v1909
      %1911 = vmatmul.bf16.gmra.mxu0 %v1007
      %v1912 = vpop.f32.mrf.mxu0
      %v1913 = vadd.f32 %v1744, %v1912
      %v1914 = vpop.f32.mrf.mxu0
      %v1915 = vadd.f32 %v1746, %v1914
      %1916 = vmatmul.bf16.gmra.mxu0 %v1012
      %v1917 = vpop.f32.mrf.mxu0
      %v1918 = vadd.f32 %v1749, %v1917
      %v1919 = vpop.f32.mrf.mxu0
      %v1920 = vadd.f32 %v1751, %v1919
      %1921 = vmatmul.bf16.gmra.mxu0 %v1017
      %v1922 = vpop.f32.mrf.mxu0
      %v1923 = vadd.f32 %v1754, %v1922
      %v1924 = vpop.f32.mrf.mxu0
      %v1925 = vadd.f32 %v1756, %v1924
      %1926 = vmatmul.bf16.gmra.mxu0 %v1022
      %v1927 = vpop.f32.mrf.mxu0
      %v1928 = vadd.f32 %v1759, %v1927
      %v1929 = vpop.f32.mrf.mxu0
      %v1930 = vadd.f32 %v1761, %v1929
      %1931 = vmatmul.bf16.gmra.mxu0 %v1027
      %v1932 = vpop.f32.mrf.mxu0
      %v1933 = vadd.f32 %v1764, %v1932
      %v1934 = vpop.f32.mrf.mxu0
      %v1935 = vadd.f32 %v1766, %v1934
      %1936 = vmatmul.bf16.gmra.mxu0 %v1032
      %v1937 = vpop.f32.mrf.mxu0
      %v1938 = vadd.f32 %v1769, %v1937
      %v1939 = vpop.f32.mrf.mxu0
      %v1940 = vadd.f32 %v1771, %v1939
      %1941 = vmatmul.bf16.gmra.mxu0 %v1037
      %v1942 = vpop.f32.mrf.mxu0
      %v1943 = vadd.f32 %v1774, %v1942
      %v1944 = vpop.f32.mrf.mxu0
      %v1945 = vadd.f32 %v1776, %v1944
      %1946 = vmatmul.bf16.gmra.mxu0 %v1042
      %v1947 = vpop.f32.mrf.mxu0
      %v1948 = vadd.f32 %v1779, %v1947
      %v1949 = vpop.f32.mrf.mxu0
      %v1950 = vadd.f32 %v1781, %v1949
      %1951 = vmatmul.bf16.gmra.mxu0 %v1047
      %v1952 = vpop.f32.mrf.mxu0
      %v1953 = vadd.f32 %v1784, %v1952
      %v1954 = vpop.f32.mrf.mxu0
      %v1955 = vadd.f32 %v1786, %v1954
      %1956 = vmatmul.bf16.gmra.mxu0 %v1052
      %v1957 = vpop.f32.mrf.mxu0
      %v1958 = vadd.f32 %v1789, %v1957
      %v1959 = vpop.f32.mrf.mxu0
      %v1960 = vadd.f32 %v1791, %v1959
      %1961 = vmatmul.bf16.gmra.mxu0 %v1057
      %v1962 = vpop.f32.mrf.mxu0
      %v1963 = vadd.f32 %v1794, %v1962
      %v1964 = vpop.f32.mrf.mxu0
      %v1965 = vadd.f32 %v1796, %v1964
      %1966 = vmatmul.bf16.gmra.mxu0 %v1062
      %v1967 = vpop.f32.mrf.mxu0
      %v1968 = vadd.f32 %v1799, %v1967
      %v1969 = vpop.f32.mrf.mxu0
      %v1970 = vadd.f32 %v1801, %v1969
      %1971 = vmatmul.bf16.gmra.mxu0 %v1067
      %v1972 = vpop.f32.mrf.mxu0
      %v1973 = vadd.f32 %v1804, %v1972
      %v1974 = vpop.f32.mrf.mxu0
      %v1975 = vadd.f32 %v1806, %v1974
      %1976 = vmatmul.bf16.gmra.mxu0 %v1072
      %v1977 = vpop.f32.mrf.mxu0
      %v1978 = vadd.f32 %v1809, %v1977
      %v1979 = vpop.f32.mrf.mxu0
      %v1980 = vadd.f32 %v1811, %v1979
      %1981 = vmatmul.bf16.gmra.mxu0 %v1077
      %v1982 = vpop.f32.mrf.mxu0
      %v1983 = vadd.f32 %v1814, %v1982
      %v1984 = vpop.f32.mrf.mxu0
      %v1985 = vadd.f32 %v1816, %v1984
      %1986 = vmatmul.bf16.gmra.mxu0 %v1082
      %v1987 = vpop.f32.mrf.mxu0
      %v1988 = vadd.f32 %v1819, %v1987
      %v1989 = vpop.f32.mrf.mxu0
      %v1990 = vadd.f32 %v1821, %v1989
      %1991 = vmatmul.bf16.gmra.mxu0 %v1087
      %v1992 = vpop.f32.mrf.mxu0
      %v1993 = vadd.f32 %v1824, %v1992
      %v1994 = vpop.f32.mrf.mxu0
      %v1995 = vadd.f32 %v1826, %v1994
      %1996 = vmatmul.bf16.gmra.mxu0 %v1092
      %v1997 = vpop.f32.mrf.mxu0
      %v1998 = vadd.f32 %v1829, %v1997
      %v1999 = vpop.f32.mrf.mxu0
      %v2000 = vadd.f32 %v1831, %v1999
      %2001 = vmatmul.bf16.gmra.mxu0 %v1097
      %v2002 = vpop.f32.mrf.mxu0
      %v2003 = vadd.f32 %v1834, %v2002
      %v2004 = vpop.f32.mrf.mxu0
      %v2005 = vadd.f32 %v1836, %v2004
      %2006 = vmatmul.bf16.gmra.mxu0 %v1102
      %v2007 = vpop.f32.mrf.mxu0
      %v2008 = vadd.f32 %v1839, %v2007
      %v2009 = vpop.f32.mrf.mxu0
      %v2010 = vadd.f32 %v1841, %v2009
      %2011 = vmatmul.bf16.gmra.mxu0 %v1107
      %v2012 = vpop.f32.mrf.mxu0
      %v2013 = vadd.f32 %v1844, %v2012
      %v2014 = vpop.f32.mrf.mxu0
      %v2015 = vadd.f32 %v1846, %v2014
      %2016 = vmatmul.bf16.gmra.mxu0 %v1112
      %v2017 = vpop.f32.mrf.mxu0
      %v2018 = vadd.f32 %v1849, %v2017
      %v2019 = vpop.f32.mrf.mxu0
      %v2020 = vadd.f32 %v1851, %v2019
      %2021 = vmatmul.bf16.gmra.mxu0 %v1117
      %v2022 = vpop.f32.mrf.mxu0
      %v2023 = vadd.f32 %v1854, %v2022
      %v2024 = vpop.f32.mrf.mxu0
      %v2025 = vadd.f32 %v1856, %v2024
      %2026 = vmatmul.bf16.gmra.mxu0 %v1122
      %v2027 = vpop.f32.mrf.mxu0
      %v2028 = vadd.f32 %v1859, %v2027
      %v2029 = vpop.f32.mrf.mxu0
      %v2030 = vadd.f32 %v1861, %v2029
      %2031 = vdwg.mxu0
      %2032 = vmatpush.bf16.msra.mxu0 %v1476
      %2033 = vmatpush.bf16.msra.mxu0 %v1475
      %2034 = vmatpush.bf16.msra.mxu0 %v1474
      %2035 = vmatpush.bf16.msra.mxu0 %v1473
      %2036 = vmatpush.bf16.msra.mxu0 %v1472
      %2037 = vmatpush.bf16.msra.mxu0 %v1471
      %2038 = vmatpush.bf16.msra.mxu0 %v1470
      %2039 = vmatpush.bf16.msra.mxu0 %v1469
      %2040 = vmatmul.bf16.gmra.mxu0 %v968
      %v2041 = vpop.f32.mrf.mxu0
      %v2042 = vadd.f32 %v1873, %v2041
      %v2043 = vpop.f32.mrf.mxu0
      %v2044 = vadd.f32 %v1875, %v2043
      %2045 = vmatmul.bf16.gmra.mxu0 %v973
      %v2046 = vpop.f32.mrf.mxu0
      %v2047 = vadd.f32 %v1878, %v2046
      %v2048 = vpop.f32.mrf.mxu0
      %v2049 = vadd.f32 %v1880, %v2048
      %2050 = vmatmul.bf16.gmra.mxu0 %v978
      %v2051 = vpop.f32.mrf.mxu0
      %v2052 = vadd.f32 %v1883, %v2051
      %v2053 = vpop.f32.mrf.mxu0
      %v2054 = vadd.f32 %v1885, %v2053
      %2055 = vmatmul.bf16.gmra.mxu0 %v983
      %v2056 = vpop.f32.mrf.mxu0
      %v2057 = vadd.f32 %v1888, %v2056
      %v2058 = vpop.f32.mrf.mxu0
      %v2059 = vadd.f32 %v1890, %v2058
      %2060 = vmatmul.bf16.gmra.mxu0 %v988
      %v2061 = vpop.f32.mrf.mxu0
      %v2062 = vadd.f32 %v1893, %v2061
      %v2063 = vpop.f32.mrf.mxu0
      %v2064 = vadd.f32 %v1895, %v2063
      %2065 = vmatmul.bf16.gmra.mxu0 %v993
      %v2066 = vpop.f32.mrf.mxu0
      %v2067 = vadd.f32 %v1898, %v2066
      %v2068 = vpop.f32.mrf.mxu0
      %v2069 = vadd.f32 %v1900, %v2068
      %2070 = vmatmul.bf16.gmra.mxu0 %v998
      %v2071 = vpop.f32.mrf.mxu0
      %v2072 = vadd.f32 %v1903, %v2071
      %v2073 = vpop.f32.mrf.mxu0
      %v2074 = vadd.f32 %v1905, %v2073
      %2075 = vmatmul.bf16.gmra.mxu0 %v1003
      %v2076 = vpop.f32.mrf.mxu0
      %v2077 = vadd.f32 %v1908, %v2076
      %v2078 = vpop.f32.mrf.mxu0
      %v2079 = vadd.f32 %v1910, %v2078
      %2080 = vmatmul.bf16.gmra.mxu0 %v1008
      %v2081 = vpop.f32.mrf.mxu0
      %v2082 = vadd.f32 %v1913, %v2081
      %v2083 = vpop.f32.mrf.mxu0
      %v2084 = vadd.f32 %v1915, %v2083
      %2085 = vmatmul.bf16.gmra.mxu0 %v1013
      %v2086 = vpop.f32.mrf.mxu0
      %v2087 = vadd.f32 %v1918, %v2086
      %v2088 = vpop.f32.mrf.mxu0
      %v2089 = vadd.f32 %v1920, %v2088
      %2090 = vmatmul.bf16.gmra.mxu0 %v1018
      %v2091 = vpop.f32.mrf.mxu0
      %v2092 = vadd.f32 %v1923, %v2091
      %v2093 = vpop.f32.mrf.mxu0
      %v2094 = vadd.f32 %v1925, %v2093
      %2095 = vmatmul.bf16.gmra.mxu0 %v1023
      %v2096 = vpop.f32.mrf.mxu0
      %v2097 = vadd.f32 %v1928, %v2096
      %v2098 = vpop.f32.mrf.mxu0
      %v2099 = vadd.f32 %v1930, %v2098
      %2100 = vmatmul.bf16.gmra.mxu0 %v1028
      %v2101 = vpop.f32.mrf.mxu0
      %v2102 = vadd.f32 %v1933, %v2101
      %v2103 = vpop.f32.mrf.mxu0
      %v2104 = vadd.f32 %v1935, %v2103
      %2105 = vmatmul.bf16.gmra.mxu0 %v1033
      %v2106 = vpop.f32.mrf.mxu0
      %v2107 = vadd.f32 %v1938, %v2106
      %v2108 = vpop.f32.mrf.mxu0
      %v2109 = vadd.f32 %v1940, %v2108
      %2110 = vmatmul.bf16.gmra.mxu0 %v1038
      %v2111 = vpop.f32.mrf.mxu0
      %v2112 = vadd.f32 %v1943, %v2111
      %v2113 = vpop.f32.mrf.mxu0
      %v2114 = vadd.f32 %v1945, %v2113
      %2115 = vmatmul.bf16.gmra.mxu0 %v1043
      %v2116 = vpop.f32.mrf.mxu0
      %v2117 = vadd.f32 %v1948, %v2116
      %v2118 = vpop.f32.mrf.mxu0
      %v2119 = vadd.f32 %v1950, %v2118
      %2120 = vmatmul.bf16.gmra.mxu0 %v1048
      %v2121 = vpop.f32.mrf.mxu0
      %v2122 = vadd.f32 %v1953, %v2121
      %v2123 = vpop.f32.mrf.mxu0
      %v2124 = vadd.f32 %v1955, %v2123
      %2125 = vmatmul.bf16.gmra.mxu0 %v1053
      %v2126 = vpop.f32.mrf.mxu0
      %v2127 = vadd.f32 %v1958, %v2126
      %v2128 = vpop.f32.mrf.mxu0
      %v2129 = vadd.f32 %v1960, %v2128
      %2130 = vmatmul.bf16.gmra.mxu0 %v1058
      %v2131 = vpop.f32.mrf.mxu0
      %v2132 = vadd.f32 %v1963, %v2131
      %v2133 = vpop.f32.mrf.mxu0
      %v2134 = vadd.f32 %v1965, %v2133
      %2135 = vmatmul.bf16.gmra.mxu0 %v1063
      %v2136 = vpop.f32.mrf.mxu0
      %v2137 = vadd.f32 %v1968, %v2136
      %v2138 = vpop.f32.mrf.mxu0
      %v2139 = vadd.f32 %v1970, %v2138
      %2140 = vmatmul.bf16.gmra.mxu0 %v1068
      %v2141 = vpop.f32.mrf.mxu0
      %v2142 = vadd.f32 %v1973, %v2141
      %v2143 = vpop.f32.mrf.mxu0
      %v2144 = vadd.f32 %v1975, %v2143
      %2145 = vmatmul.bf16.gmra.mxu0 %v1073
      %v2146 = vpop.f32.mrf.mxu0
      %v2147 = vadd.f32 %v1978, %v2146
      %v2148 = vpop.f32.mrf.mxu0
      %v2149 = vadd.f32 %v1980, %v2148
      %2150 = vmatmul.bf16.gmra.mxu0 %v1078
      %v2151 = vpop.f32.mrf.mxu0
      %v2152 = vadd.f32 %v1983, %v2151
      %v2153 = vpop.f32.mrf.mxu0
      %v2154 = vadd.f32 %v1985, %v2153
      %2155 = vmatmul.bf16.gmra.mxu0 %v1083
      %v2156 = vpop.f32.mrf.mxu0
      %v2157 = vadd.f32 %v1988, %v2156
      %v2158 = vpop.f32.mrf.mxu0
      %v2159 = vadd.f32 %v1990, %v2158
      %2160 = vmatmul.bf16.gmra.mxu0 %v1088
      %v2161 = vpop.f32.mrf.mxu0
      %v2162 = vadd.f32 %v1993, %v2161
      %v2163 = vpop.f32.mrf.mxu0
      %v2164 = vadd.f32 %v1995, %v2163
      %2165 = vmatmul.bf16.gmra.mxu0 %v1093
      %v2166 = vpop.f32.mrf.mxu0
      %v2167 = vadd.f32 %v1998, %v2166
      %v2168 = vpop.f32.mrf.mxu0
      %v2169 = vadd.f32 %v2000, %v2168
      %2170 = vmatmul.bf16.gmra.mxu0 %v1098
      %v2171 = vpop.f32.mrf.mxu0
      %v2172 = vadd.f32 %v2003, %v2171
      %v2173 = vpop.f32.mrf.mxu0
      %v2174 = vadd.f32 %v2005, %v2173
      %2175 = vmatmul.bf16.gmra.mxu0 %v1103
      %v2176 = vpop.f32.mrf.mxu0
      %v2177 = vadd.f32 %v2008, %v2176
      %v2178 = vpop.f32.mrf.mxu0
      %v2179 = vadd.f32 %v2010, %v2178
      %2180 = vmatmul.bf16.gmra.mxu0 %v1108
      %v2181 = vpop.f32.mrf.mxu0
      %v2182 = vadd.f32 %v2013, %v2181
      %v2183 = vpop.f32.mrf.mxu0
      %v2184 = vadd.f32 %v2015, %v2183
      %2185 = vmatmul.bf16.gmra.mxu0 %v1113
      %v2186 = vpop.f32.mrf.mxu0
      %v2187 = vadd.f32 %v2018, %v2186
      %v2188 = vpop.f32.mrf.mxu0
      %v2189 = vadd.f32 %v2020, %v2188
      %2190 = vmatmul.bf16.gmra.mxu0 %v1118
      %v2191 = vpop.f32.mrf.mxu0
      %v2192 = vadd.f32 %v2023, %v2191
      %v2193 = vpop.f32.mrf.mxu0
      %v2194 = vadd.f32 %v2025, %v2193
      %2195 = vmatmul.bf16.gmra.mxu0 %v1123
      %v2196 = vpop.f32.mrf.mxu0
      %v2197 = vadd.f32 %v2028, %v2196
      %v2198 = vpop.f32.mrf.mxu0
      %v2199 = vadd.f32 %v2030, %v2198
      %2200 = vdwg.mxu0
      %2201 = vmatpush.bf16.msra.mxu0 %v1484
      %2202 = vmatpush.bf16.msra.mxu0 %v1483
      %2203 = vmatpush.bf16.msra.mxu0 %v1482
      %2204 = vmatpush.bf16.msra.mxu0 %v1481
      %2205 = vmatpush.bf16.msra.mxu0 %v1480
      %2206 = vmatpush.bf16.msra.mxu0 %v1479
      %2207 = vmatpush.bf16.msra.mxu0 %v1478
      %2208 = vmatpush.bf16.msra.mxu0 %v1477
      %2209 = vmatmul.bf16.gmra.mxu0 %v969
      %v2210 = vpop.f32.mrf.mxu0
      %v2211 = vadd.f32 %v2042, %v2210
      %v2212 = vpop.f32.mrf.mxu0
      %v2213 = vadd.f32 %v2044, %v2212
      %2214 = vmatmul.bf16.gmra.mxu0 %v974
      %v2215 = vpop.f32.mrf.mxu0
      %v2216 = vadd.f32 %v2047, %v2215
      %v2217 = vpop.f32.mrf.mxu0
      %v2218 = vadd.f32 %v2049, %v2217
      %2219 = vmatmul.bf16.gmra.mxu0 %v979
      %v2220 = vpop.f32.mrf.mxu0
      %v2221 = vadd.f32 %v2052, %v2220
      %v2222 = vpop.f32.mrf.mxu0
      %v2223 = vadd.f32 %v2054, %v2222
      %2224 = vmatmul.bf16.gmra.mxu0 %v984
      %v2225 = vpop.f32.mrf.mxu0
      %v2226 = vadd.f32 %v2057, %v2225
      %v2227 = vpop.f32.mrf.mxu0
      %v2228 = vadd.f32 %v2059, %v2227
      %2229 = vmatmul.bf16.gmra.mxu0 %v989
      %v2230 = vpop.f32.mrf.mxu0
      %v2231 = vadd.f32 %v2062, %v2230
      %v2232 = vpop.f32.mrf.mxu0
      %v2233 = vadd.f32 %v2064, %v2232
      %2234 = vmatmul.bf16.gmra.mxu0 %v994
      %v2235 = vpop.f32.mrf.mxu0
      %v2236 = vadd.f32 %v2067, %v2235
      %v2237 = vpop.f32.mrf.mxu0
      %v2238 = vadd.f32 %v2069, %v2237
      %2239 = vmatmul.bf16.gmra.mxu0 %v999
      %v2240 = vpop.f32.mrf.mxu0
      %v2241 = vadd.f32 %v2072, %v2240
      %v2242 = vpop.f32.mrf.mxu0
      %v2243 = vadd.f32 %v2074, %v2242
      %2244 = vmatmul.bf16.gmra.mxu0 %v1004
      %v2245 = vpop.f32.mrf.mxu0
      %v2246 = vadd.f32 %v2077, %v2245
      %v2247 = vpop.f32.mrf.mxu0
      %v2248 = vadd.f32 %v2079, %v2247
      %2249 = vmatmul.bf16.gmra.mxu0 %v1009
      %v2250 = vpop.f32.mrf.mxu0
      %v2251 = vadd.f32 %v2082, %v2250
      %v2252 = vpop.f32.mrf.mxu0
      %v2253 = vadd.f32 %v2084, %v2252
      %2254 = vmatmul.bf16.gmra.mxu0 %v1014
      %v2255 = vpop.f32.mrf.mxu0
      %v2256 = vadd.f32 %v2087, %v2255
      %v2257 = vpop.f32.mrf.mxu0
      %v2258 = vadd.f32 %v2089, %v2257
      %2259 = vmatmul.bf16.gmra.mxu0 %v1019
      %v2260 = vpop.f32.mrf.mxu0
      %v2261 = vadd.f32 %v2092, %v2260
      %v2262 = vpop.f32.mrf.mxu0
      %v2263 = vadd.f32 %v2094, %v2262
      %2264 = vmatmul.bf16.gmra.mxu0 %v1024
      %v2265 = vpop.f32.mrf.mxu0
      %v2266 = vadd.f32 %v2097, %v2265
      %v2267 = vpop.f32.mrf.mxu0
      %v2268 = vadd.f32 %v2099, %v2267
      %2269 = vmatmul.bf16.gmra.mxu0 %v1029
      %v2270 = vpop.f32.mrf.mxu0
      %v2271 = vadd.f32 %v2102, %v2270
      %v2272 = vpop.f32.mrf.mxu0
      %v2273 = vadd.f32 %v2104, %v2272
      %2274 = vmatmul.bf16.gmra.mxu0 %v1034
      %v2275 = vpop.f32.mrf.mxu0
      %v2276 = vadd.f32 %v2107, %v2275
      %v2277 = vpop.f32.mrf.mxu0
      %v2278 = vadd.f32 %v2109, %v2277
      %2279 = vmatmul.bf16.gmra.mxu0 %v1039
      %v2280 = vpop.f32.mrf.mxu0
      %v2281 = vadd.f32 %v2112, %v2280
      %v2282 = vpop.f32.mrf.mxu0
      %v2283 = vadd.f32 %v2114, %v2282
      %2284 = vmatmul.bf16.gmra.mxu0 %v1044
      %v2285 = vpop.f32.mrf.mxu0
      %v2286 = vadd.f32 %v2117, %v2285
      %v2287 = vpop.f32.mrf.mxu0
      %v2288 = vadd.f32 %v2119, %v2287
      %2289 = vmatmul.bf16.gmra.mxu0 %v1049
      %v2290 = vpop.f32.mrf.mxu0
      %v2291 = vadd.f32 %v2122, %v2290
      %v2292 = vpop.f32.mrf.mxu0
      %v2293 = vadd.f32 %v2124, %v2292
      %2294 = vmatmul.bf16.gmra.mxu0 %v1054
      %v2295 = vpop.f32.mrf.mxu0
      %v2296 = vadd.f32 %v2127, %v2295
      %v2297 = vpop.f32.mrf.mxu0
      %v2298 = vadd.f32 %v2129, %v2297
      %2299 = vmatmul.bf16.gmra.mxu0 %v1059
      %v2300 = vpop.f32.mrf.mxu0
      %v2301 = vadd.f32 %v2132, %v2300
      %v2302 = vpop.f32.mrf.mxu0
      %v2303 = vadd.f32 %v2134, %v2302
      %2304 = vmatmul.bf16.gmra.mxu0 %v1064
      %v2305 = vpop.f32.mrf.mxu0
      %v2306 = vadd.f32 %v2137, %v2305
      %v2307 = vpop.f32.mrf.mxu0
      %v2308 = vadd.f32 %v2139, %v2307
      %2309 = vmatmul.bf16.gmra.mxu0 %v1069
      %v2310 = vpop.f32.mrf.mxu0
      %v2311 = vadd.f32 %v2142, %v2310
      %v2312 = vpop.f32.mrf.mxu0
      %v2313 = vadd.f32 %v2144, %v2312
      %2314 = vmatmul.bf16.gmra.mxu0 %v1074
      %v2315 = vpop.f32.mrf.mxu0
      %v2316 = vadd.f32 %v2147, %v2315
      %v2317 = vpop.f32.mrf.mxu0
      %v2318 = vadd.f32 %v2149, %v2317
      %2319 = vmatmul.bf16.gmra.mxu0 %v1079
      %v2320 = vpop.f32.mrf.mxu0
      %v2321 = vadd.f32 %v2152, %v2320
      %v2322 = vpop.f32.mrf.mxu0
      %v2323 = vadd.f32 %v2154, %v2322
      %2324 = vmatmul.bf16.gmra.mxu0 %v1084
      %v2325 = vpop.f32.mrf.mxu0
      %v2326 = vadd.f32 %v2157, %v2325
      %v2327 = vpop.f32.mrf.mxu0
      %v2328 = vadd.f32 %v2159, %v2327
      %2329 = vmatmul.bf16.gmra.mxu0 %v1089
      %v2330 = vpop.f32.mrf.mxu0
      %v2331 = vadd.f32 %v2162, %v2330
      %v2332 = vpop.f32.mrf.mxu0
      %v2333 = vadd.f32 %v2164, %v2332
      %2334 = vmatmul.bf16.gmra.mxu0 %v1094
      %v2335 = vpop.f32.mrf.mxu0
      %v2336 = vadd.f32 %v2167, %v2335
      %v2337 = vpop.f32.mrf.mxu0
      %v2338 = vadd.f32 %v2169, %v2337
      %2339 = vmatmul.bf16.gmra.mxu0 %v1099
      %v2340 = vpop.f32.mrf.mxu0
      %v2341 = vadd.f32 %v2172, %v2340
      %v2342 = vpop.f32.mrf.mxu0
      %v2343 = vadd.f32 %v2174, %v2342
      %2344 = vmatmul.bf16.gmra.mxu0 %v1104
      %v2345 = vpop.f32.mrf.mxu0
      %v2346 = vadd.f32 %v2177, %v2345
      %v2347 = vpop.f32.mrf.mxu0
      %v2348 = vadd.f32 %v2179, %v2347
      %2349 = vmatmul.bf16.gmra.mxu0 %v1109
      %v2350 = vpop.f32.mrf.mxu0
      %v2351 = vadd.f32 %v2182, %v2350
      %v2352 = vpop.f32.mrf.mxu0
      %v2353 = vadd.f32 %v2184, %v2352
      %2354 = vmatmul.bf16.gmra.mxu0 %v1114
      %v2355 = vpop.f32.mrf.mxu0
      %v2356 = vadd.f32 %v2187, %v2355
      %v2357 = vpop.f32.mrf.mxu0
      %v2358 = vadd.f32 %v2189, %v2357
      %2359 = vmatmul.bf16.gmra.mxu0 %v1119
      %v2360 = vpop.f32.mrf.mxu0
      %v2361 = vadd.f32 %v2192, %v2360
      %v2362 = vpop.f32.mrf.mxu0
      %v2363 = vadd.f32 %v2194, %v2362
      %2364 = vmatmul.bf16.gmra.mxu0 %v1124
      %v2365 = vpop.f32.mrf.mxu0
      %v2366 = vadd.f32 %v2197, %v2365
      %v2367 = vpop.f32.mrf.mxu0
      %v2368 = vadd.f32 %v2199, %v2367
      %2369 = vdwg.mxu0
      %vm2370 = vcmp.gt.f32.partialorder %v2211, 0.0
      %vm2371 = vcmp.gt.f32.partialorder %v2213, 0.0
      %vm2372 = vcmp.gt.f32.partialorder %v2216, 0.0
      %vm2373 = vcmp.gt.f32.partialorder %v2218, 0.0
      %vm2374 = vcmp.gt.f32.partialorder %v2221, 0.0
      %vm2375 = vcmp.gt.f32.partialorder %v2223, 0.0
      %vm2376 = vcmp.gt.f32.partialorder %v2226, 0.0
      %vm2377 = vcmp.gt.f32.partialorder %v2228, 0.0
      %vm2378 = vcmp.gt.f32.partialorder %v2231, 0.0
      %vm2379 = vcmp.gt.f32.partialorder %v2233, 0.0
      %vm2380 = vcmp.gt.f32.partialorder %v2236, 0.0
      %vm2381 = vcmp.gt.f32.partialorder %v2238, 0.0
      %vm2382 = vcmp.gt.f32.partialorder %v2241, 0.0
      %vm2383 = vcmp.gt.f32.partialorder %v2243, 0.0
      %vm2384 = vcmp.gt.f32.partialorder %v2246, 0.0
      %vm2385 = vcmp.gt.f32.partialorder %v2248, 0.0
      %vm2386 = vcmp.gt.f32.partialorder %v2251, 0.0
      %vm2387 = vcmp.gt.f32.partialorder %v2253, 0.0
      %vm2388 = vcmp.gt.f32.partialorder %v2256, 0.0
      %vm2389 = vcmp.gt.f32.partialorder %v2258, 0.0
      %vm2390 = vcmp.gt.f32.partialorder %v2261, 0.0
      %vm2391 = vcmp.gt.f32.partialorder %v2263, 0.0
      %vm2392 = vcmp.gt.f32.partialorder %v2266, 0.0
      %vm2393 = vcmp.gt.f32.partialorder %v2268, 0.0
      %vm2394 = vcmp.gt.f32.partialorder %v2271, 0.0
      %vm2395 = vcmp.gt.f32.partialorder %v2273, 0.0
      %vm2396 = vcmp.gt.f32.partialorder %v2276, 0.0
      %vm2397 = vcmp.gt.f32.partialorder %v2278, 0.0
      %vm2398 = vcmp.gt.f32.partialorder %v2281, 0.0
      %vm2399 = vcmp.gt.f32.partialorder %v2283, 0.0
      %vm2400 = vcmp.gt.f32.partialorder %v2286, 0.0
      %vm2401 = vcmp.gt.f32.partialorder %v2288, 0.0
      %vm2402 = vcmp.gt.f32.partialorder %v2291, 0.0
      %vm2403 = vcmp.gt.f32.partialorder %v2293, 0.0
      %vm2404 = vcmp.gt.f32.partialorder %v2296, 0.0
      %vm2405 = vcmp.gt.f32.partialorder %v2298, 0.0
      %vm2406 = vcmp.gt.f32.partialorder %v2301, 0.0
      %vm2407 = vcmp.gt.f32.partialorder %v2303, 0.0
      %vm2408 = vcmp.gt.f32.partialorder %v2306, 0.0
      %vm2409 = vcmp.gt.f32.partialorder %v2308, 0.0
      %vm2410 = vcmp.gt.f32.partialorder %v2311, 0.0
      %vm2411 = vcmp.gt.f32.partialorder %v2313, 0.0
      %vm2412 = vcmp.gt.f32.partialorder %v2316, 0.0
      %vm2413 = vcmp.gt.f32.partialorder %v2318, 0.0
      %vm2414 = vcmp.gt.f32.partialorder %v2321, 0.0
      %vm2415 = vcmp.gt.f32.partialorder %v2323, 0.0
      %vm2416 = vcmp.gt.f32.partialorder %v2326, 0.0
      %vm2417 = vcmp.gt.f32.partialorder %v2328, 0.0
      %vm2418 = vcmp.gt.f32.partialorder %v2331, 0.0
      %vm2419 = vcmp.gt.f32.partialorder %v2333, 0.0
      %vm2420 = vcmp.gt.f32.partialorder %v2336, 0.0
      %vm2421 = vcmp.gt.f32.partialorder %v2338, 0.0
      %vm2422 = vcmp.gt.f32.partialorder %v2341, 0.0
      %vm2423 = vcmp.gt.f32.partialorder %v2343, 0.0
      %vm2424 = vcmp.gt.f32.partialorder %v2346, 0.0
      %vm2425 = vcmp.gt.f32.partialorder %v2348, 0.0
      %vm2426 = vcmp.gt.f32.partialorder %v2351, 0.0
      %vm2427 = vcmp.gt.f32.partialorder %v2353, 0.0
      %vm2428 = vcmp.gt.f32.partialorder %v2356, 0.0
      %vm2429 = vcmp.gt.f32.partialorder %v2358, 0.0
      %vm2430 = vcmp.gt.f32.partialorder %v2361, 0.0
      %vm2431 = vcmp.gt.f32.partialorder %v2363, 0.0
      %vm2432 = vcmp.gt.f32.partialorder %v2366, 0.0
      %vm2433 = vcmp.gt.f32.partialorder %v2368, 0.0
      %v2434 = vmin.f32 %v2211, 0.0
      %v2435 = vmin.f32 %v2213, 0.0
      %v2436 = vmin.f32 %v2216, 0.0
      %v2437 = vmin.f32 %v2218, 0.0
      %v2438 = vmin.f32 %v2221, 0.0
      %v2439 = vmin.f32 %v2223, 0.0
      %v2440 = vmin.f32 %v2226, 0.0
      %v2441 = vmin.f32 %v2228, 0.0
      %v2442 = vmin.f32 %v2231, 0.0
      %v2443 = vmin.f32 %v2233, 0.0
      %v2444 = vmin.f32 %v2236, 0.0
      %v2445 = vmin.f32 %v2238, 0.0
      %v2446 = vmin.f32 %v2241, 0.0
      %v2447 = vmin.f32 %v2243, 0.0
      %v2448 = vmin.f32 %v2246, 0.0
      %v2449 = vmin.f32 %v2248, 0.0
      %v2450 = vmin.f32 %v2251, 0.0
      %v2451 = vmin.f32 %v2253, 0.0
      %v2452 = vmin.f32 %v2256, 0.0
      %v2453 = vmin.f32 %v2258, 0.0
      %v2454 = vmin.f32 %v2261, 0.0
      %v2455 = vmin.f32 %v2263, 0.0
      %v2456 = vmin.f32 %v2266, 0.0
      %v2457 = vmin.f32 %v2268, 0.0
      %v2458 = vmin.f32 %v2271, 0.0
      %v2459 = vmin.f32 %v2273, 0.0
      %v2460 = vmin.f32 %v2276, 0.0
      %v2461 = vmin.f32 %v2278, 0.0
      %v2462 = vmin.f32 %v2281, 0.0
      %v2463 = vmin.f32 %v2283, 0.0
      %v2464 = vmin.f32 %v2286, 0.0
      %v2465 = vmin.f32 %v2288, 0.0
      %v2466 = vmin.f32 %v2291, 0.0
      %v2467 = vmin.f32 %v2293, 0.0
      %v2468 = vmin.f32 %v2296, 0.0
      %v2469 = vmin.f32 %v2298, 0.0
      %v2470 = vmin.f32 %v2301, 0.0
      %v2471 = vmin.f32 %v2303, 0.0
      %v2472 = vmin.f32 %v2306, 0.0
      %v2473 = vmin.f32 %v2308, 0.0
      %v2474 = vmin.f32 %v2311, 0.0
      %v2475 = vmin.f32 %v2313, 0.0
      %v2476 = vmin.f32 %v2316, 0.0
      %v2477 = vmin.f32 %v2318, 0.0
      %v2478 = vmin.f32 %v2321, 0.0
      %v2479 = vmin.f32 %v2323, 0.0
      %v2480 = vmin.f32 %v2326, 0.0
      %v2481 = vmin.f32 %v2328, 0.0
      %v2482 = vmin.f32 %v2331, 0.0
      %v2483 = vmin.f32 %v2333, 0.0
      %v2484 = vmin.f32 %v2336, 0.0
      %v2485 = vmin.f32 %v2338, 0.0
      %v2486 = vmin.f32 %v2341, 0.0
      %v2487 = vmin.f32 %v2343, 0.0
      %v2488 = vmin.f32 %v2346, 0.0
      %v2489 = vmin.f32 %v2348, 0.0
      %v2490 = vmin.f32 %v2351, 0.0
      %v2491 = vmin.f32 %v2353, 0.0
      %v2492 = vmin.f32 %v2356, 0.0
      %v2493 = vmin.f32 %v2358, 0.0
      %v2494 = vmin.f32 %v2361, 0.0
      %v2495 = vmin.f32 %v2363, 0.0
      %v2496 = vmin.f32 %v2366, 0.0
      %v2497 = vmin.f32 %v2368, 0.0
      %v2498 = vmul.f32 %v2434, 1.442695
      %v2499 = vpow.pop %v2498
      %v2500 = vmul.f32 %v2435, 1.442695
      %v2501 = vpow.pop %v2500
      %v2502 = vmul.f32 %v2436, 1.442695
      %v2503 = vpow.pop %v2502
      %v2504 = vmul.f32 %v2437, 1.442695
      %v2505 = vpow.pop %v2504
      %v2506 = vmul.f32 %v2438, 1.442695
      %v2507 = vpow.pop %v2506
      %v2508 = vmul.f32 %v2439, 1.442695
      %v2509 = vpow.pop %v2508
      %v2510 = vmul.f32 %v2440, 1.442695
      %v2511 = vpow.pop %v2510
      %v2512 = vmul.f32 %v2441, 1.442695
      %v2513 = vpow.pop %v2512
      %v2514 = vmul.f32 %v2442, 1.442695
      %v2515 = vpow.pop %v2514
      %v2516 = vmul.f32 %v2443, 1.442695
      %v2517 = vpow.pop %v2516
      %v2518 = vmul.f32 %v2444, 1.442695
      %v2519 = vpow.pop %v2518
      %v2520 = vmul.f32 %v2445, 1.442695
      %v2521 = vpow.pop %v2520
      %v2522 = vmul.f32 %v2446, 1.442695
      %v2523 = vpow.pop %v2522
      %v2524 = vmul.f32 %v2447, 1.442695
      %v2525 = vpow.pop %v2524
      %v2526 = vmul.f32 %v2448, 1.442695
      %v2527 = vpow.pop %v2526
      %v2528 = vmul.f32 %v2449, 1.442695
      %v2529 = vpow.pop %v2528
      %v2530 = vmul.f32 %v2450, 1.442695
      %v2531 = vpow.pop %v2530
      %v2532 = vmul.f32 %v2451, 1.442695
      %v2533 = vpow.pop %v2532
      %v2534 = vmul.f32 %v2452, 1.442695
      %v2535 = vpow.pop %v2534
      %v2536 = vmul.f32 %v2453, 1.442695
      %v2537 = vpow.pop %v2536
      %v2538 = vmul.f32 %v2454, 1.442695
      %v2539 = vpow.pop %v2538
      %v2540 = vmul.f32 %v2455, 1.442695
      %v2541 = vpow.pop %v2540
      %v2542 = vmul.f32 %v2456, 1.442695
      %v2543 = vpow.pop %v2542
      %v2544 = vmul.f32 %v2457, 1.442695
      %v2545 = vpow.pop %v2544
      %v2546 = vmul.f32 %v2458, 1.442695
      %v2547 = vpow.pop %v2546
      %v2548 = vmul.f32 %v2459, 1.442695
      %v2549 = vpow.pop %v2548
      %v2550 = vmul.f32 %v2460, 1.442695
      %v2551 = vpow.pop %v2550
      %v2552 = vmul.f32 %v2461, 1.442695
      %v2553 = vpow.pop %v2552
      %v2554 = vmul.f32 %v2462, 1.442695
      %v2555 = vpow.pop %v2554
      %v2556 = vmul.f32 %v2463, 1.442695
      %v2557 = vpow.pop %v2556
      %v2558 = vmul.f32 %v2464, 1.442695
      %v2559 = vpow.pop %v2558
      %v2560 = vmul.f32 %v2465, 1.442695
      %v2561 = vpow.pop %v2560
      %v2562 = vmul.f32 %v2466, 1.442695
      %v2563 = vpow.pop %v2562
      %v2564 = vmul.f32 %v2467, 1.442695
      %v2565 = vpow.pop %v2564
      %v2566 = vmul.f32 %v2468, 1.442695
      %v2567 = vpow.pop %v2566
      %v2568 = vmul.f32 %v2469, 1.442695
      %v2569 = vpow.pop %v2568
      %v2570 = vmul.f32 %v2470, 1.442695
      %v2571 = vpow.pop %v2570
      %v2572 = vmul.f32 %v2471, 1.442695
      %v2573 = vpow.pop %v2572
      %v2574 = vmul.f32 %v2472, 1.442695
      %v2575 = vpow.pop %v2574
      %v2576 = vmul.f32 %v2473, 1.442695
      %v2577 = vpow.pop %v2576
      %v2578 = vmul.f32 %v2474, 1.442695
      %v2579 = vpow.pop %v2578
      %v2580 = vmul.f32 %v2475, 1.442695
      %v2581 = vpow.pop %v2580
      %v2582 = vmul.f32 %v2476, 1.442695
      %v2583 = vpow.pop %v2582
      %v2584 = vmul.f32 %v2477, 1.442695
      %v2585 = vpow.pop %v2584
      %v2586 = vmul.f32 %v2478, 1.442695
      %v2587 = vpow.pop %v2586
      %v2588 = vmul.f32 %v2479, 1.442695
      %v2589 = vpow.pop %v2588
      %v2590 = vmul.f32 %v2480, 1.442695
      %v2591 = vpow.pop %v2590
      %v2592 = vmul.f32 %v2481, 1.442695
      %v2593 = vpow.pop %v2592
      %v2594 = vmul.f32 %v2482, 1.442695
      %v2595 = vpow.pop %v2594
      %v2596 = vmul.f32 %v2483, 1.442695
      %v2597 = vpow.pop %v2596
      %v2598 = vmul.f32 %v2484, 1.442695
      %v2599 = vpow.pop %v2598
      %v2600 = vmul.f32 %v2485, 1.442695
      %v2601 = vpow.pop %v2600
      %v2602 = vmul.f32 %v2486, 1.442695
      %v2603 = vpow.pop %v2602
      %v2604 = vmul.f32 %v2487, 1.442695
      %v2605 = vpow.pop %v2604
      %v2606 = vmul.f32 %v2488, 1.442695
      %v2607 = vpow.pop %v2606
      %v2608 = vmul.f32 %v2489, 1.442695
      %v2609 = vpow.pop %v2608
      %v2610 = vmul.f32 %v2490, 1.442695
      %v2611 = vpow.pop %v2610
      %v2612 = vmul.f32 %v2491, 1.442695
      %v2613 = vpow.pop %v2612
      %v2614 = vmul.f32 %v2492, 1.442695
      %v2615 = vpow.pop %v2614
      %v2616 = vmul.f32 %v2493, 1.442695
      %v2617 = vpow.pop %v2616
      %v2618 = vmul.f32 %v2494, 1.442695
      %v2619 = vpow.pop %v2618
      %v2620 = vmul.f32 %v2495, 1.442695
      %v2621 = vpow.pop %v2620
      %v2622 = vmul.f32 %v2496, 1.442695
      %v2623 = vpow.pop %v2622
      %v2624 = vmul.f32 %v2497, 1.442695
      %v2625 = vpow.pop %v2624
      %v2626 = vsub.f32 %v2499, 1.0
      %v2627 = vsub.f32 %v2501, 1.0
      %v2628 = vsub.f32 %v2503, 1.0
      %v2629 = vsub.f32 %v2505, 1.0
      %v2630 = vsub.f32 %v2507, 1.0
      %v2631 = vsub.f32 %v2509, 1.0
      %v2632 = vsub.f32 %v2511, 1.0
      %v2633 = vsub.f32 %v2513, 1.0
      %v2634 = vsub.f32 %v2515, 1.0
      %v2635 = vsub.f32 %v2517, 1.0
      %v2636 = vsub.f32 %v2519, 1.0
      %v2637 = vsub.f32 %v2521, 1.0
      %v2638 = vsub.f32 %v2523, 1.0
      %v2639 = vsub.f32 %v2525, 1.0
      %v2640 = vsub.f32 %v2527, 1.0
      %v2641 = vsub.f32 %v2529, 1.0
      %v2642 = vsub.f32 %v2531, 1.0
      %v2643 = vsub.f32 %v2533, 1.0
      %v2644 = vsub.f32 %v2535, 1.0
      %v2645 = vsub.f32 %v2537, 1.0
      %v2646 = vsub.f32 %v2539, 1.0
      %v2647 = vsub.f32 %v2541, 1.0
      %v2648 = vsub.f32 %v2543, 1.0
      %v2649 = vsub.f32 %v2545, 1.0
      %v2650 = vsub.f32 %v2547, 1.0
      %v2651 = vsub.f32 %v2549, 1.0
      %v2652 = vsub.f32 %v2551, 1.0
      %v2653 = vsub.f32 %v2553, 1.0
      %v2654 = vsub.f32 %v2555, 1.0
      %v2655 = vsub.f32 %v2557, 1.0
      %v2656 = vsub.f32 %v2559, 1.0
      %v2657 = vsub.f32 %v2561, 1.0
      %v2658 = vsub.f32 %v2563, 1.0
      %v2659 = vsub.f32 %v2565, 1.0
      %v2660 = vsub.f32 %v2567, 1.0
      %v2661 = vsub.f32 %v2569, 1.0
      %v2662 = vsub.f32 %v2571, 1.0
      %v2663 = vsub.f32 %v2573, 1.0
      %v2664 = vsub.f32 %v2575, 1.0
      %v2665 = vsub.f32 %v2577, 1.0
      %v2666 = vsub.f32 %v2579, 1.0
      %v2667 = vsub.f32 %v2581, 1.0
      %v2668 = vsub.f32 %v2583, 1.0
      %v2669 = vsub.f32 %v2585, 1.0
      %v2670 = vsub.f32 %v2587, 1.0
      %v2671 = vsub.f32 %v2589, 1.0
      %v2672 = vsub.f32 %v2591, 1.0
      %v2673 = vsub.f32 %v2593, 1.0
      %v2674 = vsub.f32 %v2595, 1.0
      %v2675 = vsub.f32 %v2597, 1.0
      %v2676 = vsub.f32 %v2599, 1.0
      %v2677 = vsub.f32 %v2601, 1.0
      %v2678 = vsub.f32 %v2603, 1.0
      %v2679 = vsub.f32 %v2605, 1.0
      %v2680 = vsub.f32 %v2607, 1.0
      %v2681 = vsub.f32 %v2609, 1.0
      %v2682 = vsub.f32 %v2611, 1.0
      %v2683 = vsub.f32 %v2613, 1.0
      %v2684 = vsub.f32 %v2615, 1.0
      %v2685 = vsub.f32 %v2617, 1.0
      %v2686 = vsub.f32 %v2619, 1.0
      %v2687 = vsub.f32 %v2621, 1.0
      %v2688 = vsub.f32 %v2623, 1.0
      %v2689 = vsub.f32 %v2625, 1.0
      %v2690 = vsel %vm2370, %v2211, %v2626
      %v2691 = vsel %vm2371, %v2213, %v2627
      %v2692 = vsel %vm2372, %v2216, %v2628
      %v2693 = vsel %vm2373, %v2218, %v2629
      %v2694 = vsel %vm2374, %v2221, %v2630
      %v2695 = vsel %vm2375, %v2223, %v2631
      %v2696 = vsel %vm2376, %v2226, %v2632
      %v2697 = vsel %vm2377, %v2228, %v2633
      %v2698 = vsel %vm2378, %v2231, %v2634
      %v2699 = vsel %vm2379, %v2233, %v2635
      %v2700 = vsel %vm2380, %v2236, %v2636
      %v2701 = vsel %vm2381, %v2238, %v2637
      %v2702 = vsel %vm2382, %v2241, %v2638
      %v2703 = vsel %vm2383, %v2243, %v2639
      %v2704 = vsel %vm2384, %v2246, %v2640
      %v2705 = vsel %vm2385, %v2248, %v2641
      %v2706 = vsel %vm2386, %v2251, %v2642
      %v2707 = vsel %vm2387, %v2253, %v2643
      %v2708 = vsel %vm2388, %v2256, %v2644
      %v2709 = vsel %vm2389, %v2258, %v2645
      %v2710 = vsel %vm2390, %v2261, %v2646
      %v2711 = vsel %vm2391, %v2263, %v2647
      %v2712 = vsel %vm2392, %v2266, %v2648
      %v2713 = vsel %vm2393, %v2268, %v2649
      %v2714 = vsel %vm2394, %v2271, %v2650
      %v2715 = vsel %vm2395, %v2273, %v2651
      %v2716 = vsel %vm2396, %v2276, %v2652
      %v2717 = vsel %vm2397, %v2278, %v2653
      %v2718 = vsel %vm2398, %v2281, %v2654
      %v2719 = vsel %vm2399, %v2283, %v2655
      %v2720 = vsel %vm2400, %v2286, %v2656
      %v2721 = vsel %vm2401, %v2288, %v2657
      %v2722 = vsel %vm2402, %v2291, %v2658
      %v2723 = vsel %vm2403, %v2293, %v2659
      %v2724 = vsel %vm2404, %v2296, %v2660
      %v2725 = vsel %vm2405, %v2298, %v2661
      %v2726 = vsel %vm2406, %v2301, %v2662
      %v2727 = vsel %vm2407, %v2303, %v2663
      %v2728 = vsel %vm2408, %v2306, %v2664
      %v2729 = vsel %vm2409, %v2308, %v2665
      %v2730 = vsel %vm2410, %v2311, %v2666
      %v2731 = vsel %vm2411, %v2313, %v2667
      %v2732 = vsel %vm2412, %v2316, %v2668
      %v2733 = vsel %vm2413, %v2318, %v2669
      %v2734 = vsel %vm2414, %v2321, %v2670
      %v2735 = vsel %vm2415, %v2323, %v2671
      %v2736 = vsel %vm2416, %v2326, %v2672
      %v2737 = vsel %vm2417, %v2328, %v2673
      %v2738 = vsel %vm2418, %v2331, %v2674
      %v2739 = vsel %vm2419, %v2333, %v2675
      %v2740 = vsel %vm2420, %v2336, %v2676
      %v2741 = vsel %vm2421, %v2338, %v2677
      %v2742 = vsel %vm2422, %v2341, %v2678
      %v2743 = vsel %vm2423, %v2343, %v2679
      %v2744 = vsel %vm2424, %v2346, %v2680
      %v2745 = vsel %vm2425, %v2348, %v2681
      %v2746 = vsel %vm2426, %v2351, %v2682
      %v2747 = vsel %vm2427, %v2353, %v2683
      %v2748 = vsel %vm2428, %v2356, %v2684
      %v2749 = vsel %vm2429, %v2358, %v2685
      %v2750 = vsel %vm2430, %v2361, %v2686
      %v2751 = vsel %vm2431, %v2363, %v2687
      %v2752 = vsel %vm2432, %v2366, %v2688
      %v2753 = vsel %vm2433, %v2368, %v2689
      %v2754 = vpack.c.bf16 %v2690, %v2690
      %v2755 = vpack.c.bf16 %v2691, %v2691
      %v2756 = vpack.c.bf16 %v2692, %v2692
      %v2757 = vpack.c.bf16 %v2693, %v2693
      %v2758 = vpack.c.bf16 %v2694, %v2694
      %v2759 = vpack.c.bf16 %v2695, %v2695
      %v2760 = vpack.c.bf16 %v2696, %v2696
      %v2761 = vpack.c.bf16 %v2697, %v2697
      %v2762 = vpack.c.bf16 %v2698, %v2698
      %v2763 = vpack.c.bf16 %v2699, %v2699
      %v2764 = vpack.c.bf16 %v2700, %v2700
      %v2765 = vpack.c.bf16 %v2701, %v2701
      %v2766 = vpack.c.bf16 %v2702, %v2702
      %v2767 = vpack.c.bf16 %v2703, %v2703
      %v2768 = vpack.c.bf16 %v2704, %v2704
      %v2769 = vpack.c.bf16 %v2705, %v2705
      %v2770 = vpack.c.bf16 %v2706, %v2706
      %v2771 = vpack.c.bf16 %v2707, %v2707
      %v2772 = vpack.c.bf16 %v2708, %v2708
      %v2773 = vpack.c.bf16 %v2709, %v2709
      %v2774 = vpack.c.bf16 %v2710, %v2710
      %v2775 = vpack.c.bf16 %v2711, %v2711
      %v2776 = vpack.c.bf16 %v2712, %v2712
      %v2777 = vpack.c.bf16 %v2713, %v2713
      %v2778 = vpack.c.bf16 %v2714, %v2714
      %v2779 = vpack.c.bf16 %v2715, %v2715
      %v2780 = vpack.c.bf16 %v2716, %v2716
      %v2781 = vpack.c.bf16 %v2717, %v2717
      %v2782 = vpack.c.bf16 %v2718, %v2718
      %v2783 = vpack.c.bf16 %v2719, %v2719
      %v2784 = vpack.c.bf16 %v2720, %v2720
      %v2785 = vpack.c.bf16 %v2721, %v2721
      %v2786 = vpack.c.bf16 %v2722, %v2722
      %v2787 = vpack.c.bf16 %v2723, %v2723
      %v2788 = vpack.c.bf16 %v2724, %v2724
      %v2789 = vpack.c.bf16 %v2725, %v2725
      %v2790 = vpack.c.bf16 %v2726, %v2726
      %v2791 = vpack.c.bf16 %v2727, %v2727
      %v2792 = vpack.c.bf16 %v2728, %v2728
      %v2793 = vpack.c.bf16 %v2729, %v2729
      %v2794 = vpack.c.bf16 %v2730, %v2730
      %v2795 = vpack.c.bf16 %v2731, %v2731
      %v2796 = vpack.c.bf16 %v2732, %v2732
      %v2797 = vpack.c.bf16 %v2733, %v2733
      %v2798 = vpack.c.bf16 %v2734, %v2734
      %v2799 = vpack.c.bf16 %v2735, %v2735
      %v2800 = vpack.c.bf16 %v2736, %v2736
      %v2801 = vpack.c.bf16 %v2737, %v2737
      %v2802 = vpack.c.bf16 %v2738, %v2738
      %v2803 = vpack.c.bf16 %v2739, %v2739
      %v2804 = vpack.c.bf16 %v2740, %v2740
      %v2805 = vpack.c.bf16 %v2741, %v2741
      %v2806 = vpack.c.bf16 %v2742, %v2742
      %v2807 = vpack.c.bf16 %v2743, %v2743
      %v2808 = vpack.c.bf16 %v2744, %v2744
      %v2809 = vpack.c.bf16 %v2745, %v2745
      %v2810 = vpack.c.bf16 %v2746, %v2746
      %v2811 = vpack.c.bf16 %v2747, %v2747
      %v2812 = vpack.c.bf16 %v2748, %v2748
      %v2813 = vpack.c.bf16 %v2749, %v2749
      %v2814 = vpack.c.bf16 %v2750, %v2750
      %v2815 = vpack.c.bf16 %v2751, %v2751
      %v2816 = vpack.c.bf16 %v2752, %v2752
      %v2817 = vpack.c.bf16 %v2753, %v2753
      %2818 = vst [vmem:[%s175] sm:$0xf] %v2754
      %2819 = vst [vmem:[%s175 + $0x4] sm:$0xf] %v2755
      %2820 = vst [vmem:[%s175 + $0x8] sm:$0xf] %v2756
      %2821 = vst [vmem:[%s175 + $0xc] sm:$0xf] %v2757
      %2822 = vst [vmem:[%s175 + $0x10] sm:$0xf] %v2758
      %2823 = vst [vmem:[%s175 + $0x14] sm:$0xf] %v2759
      %2824 = vst [vmem:[%s175 + $0x18] sm:$0xf] %v2760
      %2825 = vst [vmem:[%s175 + $0x1c] sm:$0xf] %v2761
      %2826 = vst [vmem:[%s175 + $0x20] sm:$0xf] %v2762
      %2827 = vst [vmem:[%s175 + $0x24] sm:$0xf] %v2763
      %2828 = vst [vmem:[%s175 + $0x28] sm:$0xf] %v2764
      %2829 = vst [vmem:[%s175 + $0x2c] sm:$0xf] %v2765
      %2830 = vst [vmem:[%s175 + $0x30] sm:$0xf] %v2766
      %2831 = vst [vmem:[%s175 + $0x34] sm:$0xf] %v2767
      %2832 = vst [vmem:[%s175 + $0x38] sm:$0xf] %v2768
      %2833 = vst [vmem:[%s175 + $0x3c] sm:$0xf] %v2769
      %2834 = vst [vmem:[%s175 + $0x40] sm:$0xf] %v2770
      %2835 = vst [vmem:[%s175 + $0x44] sm:$0xf] %v2771
      %2836 = vst [vmem:[%s175 + $0x48] sm:$0xf] %v2772
      %2837 = vst [vmem:[%s175 + $0x4c] sm:$0xf] %v2773
      %2838 = vst [vmem:[%s175 + $0x50] sm:$0xf] %v2774
      %2839 = vst [vmem:[%s175 + $0x54] sm:$0xf] %v2775
      %2840 = vst [vmem:[%s175 + $0x58] sm:$0xf] %v2776
      %2841 = vst [vmem:[%s175 + $0x5c] sm:$0xf] %v2777
      %2842 = vst [vmem:[%s175 + $0x60] sm:$0xf] %v2778
      %2843 = vst [vmem:[%s175 + $0x64] sm:$0xf] %v2779
      %2844 = vst [vmem:[%s175 + $0x68] sm:$0xf] %v2780
      %2845 = vst [vmem:[%s175 + $0x6c] sm:$0xf] %v2781
      %2846 = vst [vmem:[%s175 + $0x70] sm:$0xf] %v2782
      %2847 = vst [vmem:[%s175 + $0x74] sm:$0xf] %v2783
      %2848 = vst [vmem:[%s175 + $0x78] sm:$0xf] %v2784
      %2849 = vst [vmem:[%s175 + $0x7c] sm:$0xf] %v2785
      %2850 = vst [vmem:[%s175 + $0x80] sm:$0xf] %v2786
      %2851 = vst [vmem:[%s175 + $0x84] sm:$0xf] %v2787
      %2852 = vst [vmem:[%s175 + $0x88] sm:$0xf] %v2788
      %2853 = vst [vmem:[%s175 + $0x8c] sm:$0xf] %v2789
      %2854 = vst [vmem:[%s175 + $0x90] sm:$0xf] %v2790
      %2855 = vst [vmem:[%s175 + $0x94] sm:$0xf] %v2791
      %2856 = vst [vmem:[%s175 + $0x98] sm:$0xf] %v2792
      %2857 = vst [vmem:[%s175 + $0x9c] sm:$0xf] %v2793
      %2858 = vst [vmem:[%s175 + $0xa0] sm:$0xf] %v2794
      %2859 = vst [vmem:[%s175 + $0xa4] sm:$0xf] %v2795
      %2860 = vst [vmem:[%s175 + $0xa8] sm:$0xf] %v2796
      %2861 = vst [vmem:[%s175 + $0xac] sm:$0xf] %v2797
      %2862 = vst [vmem:[%s175 + $0xb0] sm:$0xf] %v2798
      %2863 = vst [vmem:[%s175 + $0xb4] sm:$0xf] %v2799
      %2864 = vst [vmem:[%s175 + $0xb8] sm:$0xf] %v2800
      %2865 = vst [vmem:[%s175 + $0xbc] sm:$0xf] %v2801
      %2866 = vst [vmem:[%s175 + $0xc0] sm:$0xf] %v2802
      %2867 = vst [vmem:[%s175 + $0xc4] sm:$0xf] %v2803
      %2868 = vst [vmem:[%s175 + $0xc8] sm:$0xf] %v2804
      %2869 = vst [vmem:[%s175 + $0xcc] sm:$0xf] %v2805
      %2870 = vst [vmem:[%s175 + $0xd0] sm:$0xf] %v2806
      %2871 = vst [vmem:[%s175 + $0xd4] sm:$0xf] %v2807
      %2872 = vst [vmem:[%s175 + $0xd8] sm:$0xf] %v2808
      %2873 = vst [vmem:[%s175 + $0xdc] sm:$0xf] %v2809
      %2874 = vst [vmem:[%s175 + $0xe0] sm:$0xf] %v2810
      %2875 = vst [vmem:[%s175 + $0xe4] sm:$0xf] %v2811
      %2876 = vst [vmem:[%s175 + $0xe8] sm:$0xf] %v2812
      %2877 = vst [vmem:[%s175 + $0xec] sm:$0xf] %v2813
      %2878 = vst [vmem:[%s175 + $0xf0] sm:$0xf] %v2814
      %2879 = vst [vmem:[%s175 + $0xf4] sm:$0xf] %v2815
      %2880 = vst [vmem:[%s175 + $0xf8] sm:$0xf] %v2816
      %2881 = vst [vmem:[%s175 + $0xfc] sm:$0xf] %v2817
      %s2882 = smul.u32 64, %s14
      %p2883 = scmp.lt.s32.totalorder %s2882, 191
      %s2884 = scalar_select %p2883, %s2882, 191
      %s2885 = smul.addr %s2884, 4
      %s2886 = scalar_lea.vmem %s3, %s2885
      // Predicated region
      $region33: #{net_forward.7} parent=31 // pred_check
        %p2887 = pneg %p100
      $region34: #{net_forward.7} parent=31 // pred_check_branch
        %2889 = sbr.rel (%p2887) target = $region36
      $region35: #{net_forward.7} parent=31 // pred_region
        %s2890 = smul.u32 64, %s14
      $region36: #{net_forward.7} parent=31 // pred_fallthru
        _
    $region32: #{net_forward.7} parent=5 // pred_fallthru
      _
    %p2891 = scmp.le.s32.totalorder 2, %s9
    // Predicated region
    $region37: #{net_forward.7} parent=5 // pred_check
      %p2892 = pneg %p2891
    $region38: #{net_forward.7} parent=5 // pred_check_branch
      %2894 = sbr.rel (%p2892) target = $region40
    $region39: #{net_forward.7} parent=5 // pred_region
      %s2895 = ssub.s32 %s9, 2
      // Predicated region
      $region41: #{net_forward.7} parent=39 // pred_check
        %p2896 = pneg %p106
      $region42: #{net_forward.7} parent=39 // pred_check_branch
        %2898 = sbr.rel (%p2896) target = $region44
      $region43: #{net_forward.7} parent=39 // pred_region
        %s2899 = smul.u32 64, %s15
        %p2900 = scmp.lt.s32.totalorder %s2899, 191
        %s2901 = scalar_select %p2900, %s2899, 191
        %s2902 = smul.addr %s2901, 4
        %s2903 = scalar_lea.vmem %s3, %s2902
      $region44: #{net_forward.7} parent=39 // pred_fallthru
        _
    $region40: #{net_forward.7} parent=5 // pred_fallthru
      _
  $region6: #{net_forward.7} parent=0 // loop_footer
    %s13 = sadd.s32 1, %s9
  $region7: #{net_forward.7} parent=0 // loop_footer_branch
    %8 = sbr.rel target = $region3
  $region8: #{net_forward.7} parent=0 // loop_exit
    _

// kernel: net_forward.8
$region0: #{net_forward.8}
  #allocation0 [shape = 'u32[]', space=smem, size = 0x4, offset = 0x4, fixed_abs, tag = 'smem constant byte address 0x4 - core index']
  #allocation1 [shape = 'u32[72,128]{1,0:T(1,128)}', space=vmem, size = 0x9000, scoped, tag = 'internal scratch']
  %s0 = inlined_call_operand.vmem [shape: bf16[224,1024], index: 0, kind: input, shape index: {}]
  %s1 = inlined_call_operand.vmem [shape: bf16[1024,128], index: 1, kind: input, shape index: {}]
  %s2 = inlined_call_operand.vmem [shape: f32[1,128], index: 2, kind: input, shape index: {}]
  %s3 = inlined_call_operand.vmem [shape: bf16[224,128], index: 3, kind: output, shape index: {}]
  %s4 = sld [smem:[#allocation0]]
  $region22: #{net_forward.8} parent=0
    _
  %s6 = ssub.s32 1, %s4
  %s7 = scalar_select 0, %s6, %s4
  // Predicated region
  $region2: #{net_forward.8} parent=0 // pred_check
    _
  $region3: #{net_forward.8} parent=0 // pred_check_branch
    %9 = sbr.rel (0) target = $region5
  $region4: #{net_forward.8} parent=0 // pred_region
    _
  $region5: #{net_forward.8} parent=0 // pred_fallthru
    _
  // Predicated region
  $region6: #{net_forward.8} parent=0 // pred_check
    _
  $region7: #{net_forward.8} parent=0 // pred_check_branch
    %11 = sbr.rel (0) target = $region9
  $region8: #{net_forward.8} parent=0 // pred_region
    _
  $region9: #{net_forward.8} parent=0 // pred_fallthru
    _
  // Predicated region
  $region10: #{net_forward.8} parent=0 // pred_check
    _
  $region11: #{net_forward.8} parent=0 // pred_check_branch
    %13 = sbr.rel (0) target = $region13
  $region12: #{net_forward.8} parent=0 // pred_region
    _
  $region13: #{net_forward.8} parent=0 // pred_fallthru
    _
  %v14 = vld [vmem:[%s0] sm:$0xff]
  %v15 = vld [vmem:[%s0 + $0x8] sm:$0xff]
  %v16 = vld [vmem:[%s0 + $0x10] sm:$0xff]
  %v17 = vld [vmem:[%s0 + $0x18] sm:$0xff]
  %v18 = vld [vmem:[%s0 + $0x20] sm:$0xff]
  %v19 = vld [vmem:[%s0 + $0x28] sm:$0xff]
  %v20 = vld [vmem:[%s0 + $0x30] sm:$0xff]
  %v21 = vld [vmem:[%s0 + $0x38] sm:$0xff]
  %v22 = vld [vmem:[%s0 + $0x40] sm:$0xff]
  %v23 = vld [vmem:[%s0 + $0x48] sm:$0xff]
  %v24 = vld [vmem:[%s0 + $0x50] sm:$0xff]
  %v25 = vld [vmem:[%s0 + $0x58] sm:$0xff]
  %v26 = vld [vmem:[%s0 + $0x60] sm:$0xff]
  %v27 = vld [vmem:[%s0 + $0x68] sm:$0xff]
  %v28 = vld [vmem:[%s0 + $0x70] sm:$0xff]
  %v29 = vld [vmem:[%s0 + $0x78] sm:$0xff]
  %v30 = vld [vmem:[%s0 + $0x80] sm:$0xff]
  %v31 = vld [vmem:[%s0 + $0x88] sm:$0xff]
  %v32 = vld [vmem:[%s0 + $0x90] sm:$0xff]
  %v33 = vld [vmem:[%s0 + $0x98] sm:$0xff]
  %v34 = vld [vmem:[%s0 + $0xa0] sm:$0xff]
  %v35 = vld [vmem:[%s0 + $0xa8] sm:$0xff]
  %v36 = vld [vmem:[%s0 + $0xb0] sm:$0xff]
  %v37 = vld [vmem:[%s0 + $0xb8] sm:$0xff]
  %v38 = vld [vmem:[%s0 + $0xc0] sm:$0xff]
  %v39 = vld [vmem:[%s0 + $0xc8] sm:$0xff]
  %v40 = vld [vmem:[%s0 + $0xd0] sm:$0xff]
  %v41 = vld [vmem:[%s0 + $0xd8] sm:$0xff]
  %v42 = vld [vmem:[%s0 + $0xe0] sm:$0xff]
  %v43 = vld [vmem:[%s0 + $0xe8] sm:$0xff]
  %v44 = vld [vmem:[%s0 + $0xf0] sm:$0xff]
  %v45 = vld [vmem:[%s0 + $0xf8] sm:$0xff]
  %v46 = vld [vmem:[%s0 + $0x100] sm:$0xff]
  %v47 = vld [vmem:[%s0 + $0x108] sm:$0xff]
  %v48 = vld [vmem:[%s0 + $0x110] sm:$0xff]
  %v49 = vld [vmem:[%s0 + $0x118] sm:$0xff]
  %v50 = vld [vmem:[%s0 + $0x120] sm:$0xff]
  %v51 = vld [vmem:[%s0 + $0x128] sm:$0xff]
  %v52 = vld [vmem:[%s0 + $0x130] sm:$0xff]
  %v53 = vld [vmem:[%s0 + $0x138] sm:$0xff]
  %v54 = vld [vmem:[%s0 + $0x140] sm:$0xff]
  %v55 = vld [vmem:[%s0 + $0x148] sm:$0xff]
  %v56 = vld [vmem:[%s0 + $0x150] sm:$0xff]
  %v57 = vld [vmem:[%s0 + $0x158] sm:$0xff]
  %v58 = vld [vmem:[%s0 + $0x160] sm:$0xff]
  %v59 = vld [vmem:[%s0 + $0x168] sm:$0xff]
  %v60 = vld [vmem:[%s0 + $0x170] sm:$0xff]
  %v61 = vld [vmem:[%s0 + $0x178] sm:$0xff]
  %v62 = vld [vmem:[%s0 + $0x180] sm:$0xff]
  %v63 = vld [vmem:[%s0 + $0x188] sm:$0xff]
  %v64 = vld [vmem:[%s0 + $0x190] sm:$0xff]
  %v65 = vld [vmem:[%s0 + $0x198] sm:$0xff]
  %v66 = vld [vmem:[%s0 + $0x1a0] sm:$0xff]
  %v67 = vld [vmem:[%s0 + $0x1a8] sm:$0xff]
  %v68 = vld [vmem:[%s0 + $0x1b0] sm:$0xff]
  %v69 = vld [vmem:[%s0 + $0x1b8] sm:$0xff]
  %v70 = vld [vmem:[%s0 + $0x1c0] sm:$0xff]
  %v71 = vld [vmem:[%s0 + $0x1c8] sm:$0xff]
  %v72 = vld [vmem:[%s0 + $0x1d0] sm:$0xff]
  %v73 = vld [vmem:[%s0 + $0x1d8] sm:$0xff]
  %v74 = vld [vmem:[%s0 + $0x1e0] sm:$0xff]
  %v75 = vld [vmem:[%s0 + $0x1e8] sm:$0xff]
  %v76 = vld [vmem:[%s0 + $0x1f0] sm:$0xff]
  %v77 = vld [vmem:[%s0 + $0x1f8] sm:$0xff]
  %v78 = vld [vmem:[%s0 + $0x200] sm:$0xff]
  %v79 = vld [vmem:[%s0 + $0x208] sm:$0xff]
  %v80 = vld [vmem:[%s0 + $0x210] sm:$0xff]
  %v81 = vld [vmem:[%s0 + $0x218] sm:$0xff]
  %v82 = vld [vmem:[%s0 + $0x220] sm:$0xff]
  %v83 = vld [vmem:[%s0 + $0x228] sm:$0xff]
  %v84 = vld [vmem:[%s0 + $0x230] sm:$0xff]
  %v85 = vld [vmem:[%s0 + $0x238] sm:$0xff]
  %v86 = vld [vmem:[%s0 + $0x240] sm:$0xff]
  %v87 = vld [vmem:[%s0 + $0x248] sm:$0xff]
  %v88 = vld [vmem:[%s0 + $0x250] sm:$0xff]
  %v89 = vld [vmem:[%s0 + $0x258] sm:$0xff]
  %v90 = vld [vmem:[%s0 + $0x260] sm:$0xff]
  %v91 = vld [vmem:[%s0 + $0x268] sm:$0xff]
  %v92 = vld [vmem:[%s0 + $0x270] sm:$0xff]
  %v93 = vld [vmem:[%s0 + $0x278] sm:$0xff]
  %v94 = vld [vmem:[%s0 + $0x280] sm:$0xff]
  %v95 = vld [vmem:[%s0 + $0x288] sm:$0xff]
  %v96 = vld [vmem:[%s0 + $0x290] sm:$0xff]
  %v97 = vld [vmem:[%s0 + $0x298] sm:$0xff]
  %v98 = vld [vmem:[%s0 + $0x2a0] sm:$0xff]
  %v99 = vld [vmem:[%s0 + $0x2a8] sm:$0xff]
  %v100 = vld [vmem:[%s0 + $0x2b0] sm:$0xff]
  %v101 = vld [vmem:[%s0 + $0x2b8] sm:$0xff]
  %v102 = vld [vmem:[%s0 + $0x2c0] sm:$0xff]
  %v103 = vld [vmem:[%s0 + $0x2c8] sm:$0xff]
  %v104 = vld [vmem:[%s0 + $0x2d0] sm:$0xff]
  %v105 = vld [vmem:[%s0 + $0x2d8] sm:$0xff]
  %v106 = vld [vmem:[%s0 + $0x2e0] sm:$0xff]
  %v107 = vld [vmem:[%s0 + $0x2e8] sm:$0xff]
  %v108 = vld [vmem:[%s0 + $0x2f0] sm:$0xff]
  %v109 = vld [vmem:[%s0 + $0x2f8] sm:$0xff]
  %v110 = vld [vmem:[%s0 + $0x300] sm:$0xff]
  %v111 = vld [vmem:[%s0 + $0x308] sm:$0xff]
  %v112 = vld [vmem:[%s0 + $0x310] sm:$0xff]
  %v113 = vld [vmem:[%s0 + $0x318] sm:$0xff]
  %v114 = vld [vmem:[%s0 + $0x320] sm:$0xff]
  %v115 = vld [vmem:[%s0 + $0x328] sm:$0xff]
  %v116 = vld [vmem:[%s0 + $0x330] sm:$0xff]
  %v117 = vld [vmem:[%s0 + $0x338] sm:$0xff]
  %v118 = vld [vmem:[%s0 + $0x340] sm:$0xff]
  %v119 = vld [vmem:[%s0 + $0x348] sm:$0xff]
  %v120 = vld [vmem:[%s0 + $0x350] sm:$0xff]
  %v121 = vld [vmem:[%s0 + $0x358] sm:$0xff]
  %v122 = vld [vmem:[%s0 + $0x360] sm:$0xff]
  %v123 = vld [vmem:[%s0 + $0x368] sm:$0xff]
  %v124 = vld [vmem:[%s0 + $0x370] sm:$0xff]
  %v125 = vld [vmem:[%s0 + $0x378] sm:$0xff]
  %v126 = vld [vmem:[%s1] sm:$0xf]
  %v127 = vld [vmem:[%s1 + $0x4] sm:$0xf]
  %v128 = vld [vmem:[%s1 + $0x8] sm:$0xf]
  %v129 = vld [vmem:[%s1 + $0xc] sm:$0xf]
  %v130 = vld [vmem:[%s1 + $0x10] sm:$0xf]
  %v131 = vld [vmem:[%s1 + $0x14] sm:$0xf]
  %v132 = vld [vmem:[%s1 + $0x18] sm:$0xf]
  %v133 = vld [vmem:[%s1 + $0x1c] sm:$0xf]
  %v134 = vld [vmem:[%s1 + $0x20] sm:$0xf]
  %v135 = vld [vmem:[%s1 + $0x24] sm:$0xf]
  %v136 = vld [vmem:[%s1 + $0x28] sm:$0xf]
  %v137 = vld [vmem:[%s1 + $0x2c] sm:$0xf]
  %v138 = vld [vmem:[%s1 + $0x30] sm:$0xf]
  %v139 = vld [vmem:[%s1 + $0x34] sm:$0xf]
  %v140 = vld [vmem:[%s1 + $0x38] sm:$0xf]
  %v141 = vld [vmem:[%s1 + $0x3c] sm:$0xf]
  %v142 = vld [vmem:[%s1 + $0x40] sm:$0xf]
  %v143 = vld [vmem:[%s1 + $0x44] sm:$0xf]
  %v144 = vld [vmem:[%s1 + $0x48] sm:$0xf]
  %v145 = vld [vmem:[%s1 + $0x4c] sm:$0xf]
  %v146 = vld [vmem:[%s1 + $0x50] sm:$0xf]
  %v147 = vld [vmem:[%s1 + $0x54] sm:$0xf]
  %v148 = vld [vmem:[%s1 + $0x58] sm:$0xf]
  %v149 = vld [vmem:[%s1 + $0x5c] sm:$0xf]
  %v150 = vld [vmem:[%s1 + $0x60] sm:$0xf]
  %v151 = vld [vmem:[%s1 + $0x64] sm:$0xf]
  %v152 = vld [vmem:[%s1 + $0x68] sm:$0xf]
  %v153 = vld [vmem:[%s1 + $0x6c] sm:$0xf]
  %v154 = vld [vmem:[%s1 + $0x70] sm:$0xf]
  %v155 = vld [vmem:[%s1 + $0x74] sm:$0xf]
  %v156 = vld [vmem:[%s1 + $0x78] sm:$0xf]
  %v157 = vld [vmem:[%s1 + $0x7c] sm:$0xf]
  %v158 = vld [vmem:[%s1 + $0x80] sm:$0xf]
  %v159 = vld [vmem:[%s1 + $0x84] sm:$0xf]
  %v160 = vld [vmem:[%s1 + $0x88] sm:$0xf]
  %v161 = vld [vmem:[%s1 + $0x8c] sm:$0xf]
  %v162 = vld [vmem:[%s1 + $0x90] sm:$0xf]
  %v163 = vld [vmem:[%s1 + $0x94] sm:$0xf]
  %v164 = vld [vmem:[%s1 + $0x98] sm:$0xf]
  %v165 = vld [vmem:[%s1 + $0x9c] sm:$0xf]
  %v166 = vld [vmem:[%s1 + $0xa0] sm:$0xf]
  %v167 = vld [vmem:[%s1 + $0xa4] sm:$0xf]
  %v168 = vld [vmem:[%s1 + $0xa8] sm:$0xf]
  %v169 = vld [vmem:[%s1 + $0xac] sm:$0xf]
  %v170 = vld [vmem:[%s1 + $0xb0] sm:$0xf]
  %v171 = vld [vmem:[%s1 + $0xb4] sm:$0xf]
  %v172 = vld [vmem:[%s1 + $0xb8] sm:$0xf]
  %v173 = vld [vmem:[%s1 + $0xbc] sm:$0xf]
  %v174 = vld [vmem:[%s1 + $0xc0] sm:$0xf]
  %v175 = vld [vmem:[%s1 + $0xc4] sm:$0xf]
  %v176 = vld [vmem:[%s1 + $0xc8] sm:$0xf]
  %v177 = vld [vmem:[%s1 + $0xcc] sm:$0xf]
  %v178 = vld [vmem:[%s1 + $0xd0] sm:$0xf]
  %v179 = vld [vmem:[%s1 + $0xd4] sm:$0xf]
  %v180 = vld [vmem:[%s1 + $0xd8] sm:$0xf]
  %v181 = vld [vmem:[%s1 + $0xdc] sm:$0xf]
  %v182 = vld [vmem:[%s1 + $0xe0] sm:$0xf]
  %v183 = vld [vmem:[%s1 + $0xe4] sm:$0xf]
  %v184 = vld [vmem:[%s1 + $0xe8] sm:$0xf]
  %v185 = vld [vmem:[%s1 + $0xec] sm:$0xf]
  %v186 = vld [vmem:[%s1 + $0xf0] sm:$0xf]
  %v187 = vld [vmem:[%s1 + $0xf4] sm:$0xf]
  %v188 = vld [vmem:[%s1 + $0xf8] sm:$0xf]
  %v189 = vld [vmem:[%s1 + $0xfc] sm:$0xf]
  %v190 = vld [vmem:[%s1 + $0x100] sm:$0xf]
  %v191 = vld [vmem:[%s1 + $0x104] sm:$0xf]
  %v192 = vld [vmem:[%s1 + $0x108] sm:$0xf]
  %v193 = vld [vmem:[%s1 + $0x10c] sm:$0xf]
  %v194 = vld [vmem:[%s1 + $0x110] sm:$0xf]
  %v195 = vld [vmem:[%s1 + $0x114] sm:$0xf]
  %v196 = vld [vmem:[%s1 + $0x118] sm:$0xf]
  %v197 = vld [vmem:[%s1 + $0x11c] sm:$0xf]
  %v198 = vld [vmem:[%s1 + $0x120] sm:$0xf]
  %v199 = vld [vmem:[%s1 + $0x124] sm:$0xf]
  %v200 = vld [vmem:[%s1 + $0x128] sm:$0xf]
  %v201 = vld [vmem:[%s1 + $0x12c] sm:$0xf]
  %v202 = vld [vmem:[%s1 + $0x130] sm:$0xf]
  %v203 = vld [vmem:[%s1 + $0x134] sm:$0xf]
  %v204 = vld [vmem:[%s1 + $0x138] sm:$0xf]
  %v205 = vld [vmem:[%s1 + $0x13c] sm:$0xf]
  %v206 = vld [vmem:[%s1 + $0x140] sm:$0xf]
  %v207 = vld [vmem:[%s1 + $0x144] sm:$0xf]
  %v208 = vld [vmem:[%s1 + $0x148] sm:$0xf]
  %v209 = vld [vmem:[%s1 + $0x14c] sm:$0xf]
  %v210 = vld [vmem:[%s1 + $0x150] sm:$0xf]
  %v211 = vld [vmem:[%s1 + $0x154] sm:$0xf]
  %v212 = vld [vmem:[%s1 + $0x158] sm:$0xf]
  %v213 = vld [vmem:[%s1 + $0x15c] sm:$0xf]
  %v214 = vld [vmem:[%s1 + $0x160] sm:$0xf]
  %v215 = vld [vmem:[%s1 + $0x164] sm:$0xf]
  %v216 = vld [vmem:[%s1 + $0x168] sm:$0xf]
  %v217 = vld [vmem:[%s1 + $0x16c] sm:$0xf]
  %v218 = vld [vmem:[%s1 + $0x170] sm:$0xf]
  %v219 = vld [vmem:[%s1 + $0x174] sm:$0xf]
  %v220 = vld [vmem:[%s1 + $0x178] sm:$0xf]
  %v221 = vld [vmem:[%s1 + $0x17c] sm:$0xf]
  %v222 = vld [vmem:[%s1 + $0x180] sm:$0xf]
  %v223 = vld [vmem:[%s1 + $0x184] sm:$0xf]
  %v224 = vld [vmem:[%s1 + $0x188] sm:$0xf]
  %v225 = vld [vmem:[%s1 + $0x18c] sm:$0xf]
  %v226 = vld [vmem:[%s1 + $0x190] sm:$0xf]
  %v227 = vld [vmem:[%s1 + $0x194] sm:$0xf]
  %v228 = vld [vmem:[%s1 + $0x198] sm:$0xf]
  %v229 = vld [vmem:[%s1 + $0x19c] sm:$0xf]
  %v230 = vld [vmem:[%s1 + $0x1a0] sm:$0xf]
  %v231 = vld [vmem:[%s1 + $0x1a4] sm:$0xf]
  %v232 = vld [vmem:[%s1 + $0x1a8] sm:$0xf]
  %v233 = vld [vmem:[%s1 + $0x1ac] sm:$0xf]
  %v234 = vld [vmem:[%s1 + $0x1b0] sm:$0xf]
  %v235 = vld [vmem:[%s1 + $0x1b4] sm:$0xf]
  %v236 = vld [vmem:[%s1 + $0x1b8] sm:$0xf]
  %v237 = vld [vmem:[%s1 + $0x1bc] sm:$0xf]
  %v238 = vld [vmem:[%s1 + $0x1c0] sm:$0xf]
  %v239 = vld [vmem:[%s1 + $0x1c4] sm:$0xf]
  %v240 = vld [vmem:[%s1 + $0x1c8] sm:$0xf]
  %v241 = vld [vmem:[%s1 + $0x1cc] sm:$0xf]
  %v242 = vld [vmem:[%s1 + $0x1d0] sm:$0xf]
  %v243 = vld [vmem:[%s1 + $0x1d4] sm:$0xf]
  %v244 = vld [vmem:[%s1 + $0x1d8] sm:$0xf]
  %v245 = vld [vmem:[%s1 + $0x1dc] sm:$0xf]
  %v246 = vld [vmem:[%s1 + $0x1e0] sm:$0xf]
  %v247 = vld [vmem:[%s1 + $0x1e4] sm:$0xf]
  %v248 = vld [vmem:[%s1 + $0x1e8] sm:$0xf]
  %v249 = vld [vmem:[%s1 + $0x1ec] sm:$0xf]
  %v250 = vld [vmem:[%s1 + $0x1f0] sm:$0xf]
  %v251 = vld [vmem:[%s1 + $0x1f4] sm:$0xf]
  %v252 = vld [vmem:[%s1 + $0x1f8] sm:$0xf]
  %v253 = vld [vmem:[%s1 + $0x1fc] sm:$0xf]
  %v254 = vld [vmem:[%s2] sm:$0x1]
  %v256 = vperm.slane %v254, 0
  %v370 = vunpack.c.l.b16 %v14
  %v371 = vunpack.c.h.b16 %v14
  %v372 = vunpack.c.l.b16 %v15
  %v373 = vunpack.c.h.b16 %v15
  %v374 = vunpack.c.l.b16 %v16
  %v375 = vunpack.c.h.b16 %v16
  %v376 = vunpack.c.l.b16 %v17
  %v377 = vunpack.c.h.b16 %v17
  %v378 = vunpack.c.l.b16 %v18
  %v379 = vunpack.c.h.b16 %v18
  %v380 = vunpack.c.l.b16 %v19
  %v381 = vunpack.c.h.b16 %v19
  %v382 = vunpack.c.l.b16 %v20
  %v383 = vunpack.c.h.b16 %v20
  %v384 = vunpack.c.l.b16 %v21
  %v385 = vunpack.c.h.b16 %v21
  %v386 = vunpack.c.l.b16 %v22
  %v387 = vunpack.c.h.b16 %v22
  %v388 = vunpack.c.l.b16 %v23
  %v389 = vunpack.c.h.b16 %v23
  %v390 = vunpack.c.l.b16 %v24
  %v391 = vunpack.c.h.b16 %v24
  %v392 = vunpack.c.l.b16 %v25
  %v393 = vunpack.c.h.b16 %v25
  %v394 = vunpack.c.l.b16 %v26
  %v395 = vunpack.c.h.b16 %v26
  %v396 = vunpack.c.l.b16 %v27
  %v397 = vunpack.c.h.b16 %v27
  %v398 = vunpack.c.l.b16 %v28
  %v399 = vunpack.c.h.b16 %v28
  %v400 = vunpack.c.l.b16 %v29
  %v401 = vunpack.c.h.b16 %v29
  %v402 = vunpack.c.l.b16 %v30
  %v403 = vunpack.c.h.b16 %v30
  %v404 = vunpack.c.l.b16 %v31
  %v405 = vunpack.c.h.b16 %v31
  %v406 = vunpack.c.l.b16 %v32
  %v407 = vunpack.c.h.b16 %v32
  %v408 = vunpack.c.l.b16 %v33
  %v409 = vunpack.c.h.b16 %v33
  %v410 = vunpack.c.l.b16 %v34
  %v411 = vunpack.c.h.b16 %v34
  %v412 = vunpack.c.l.b16 %v35
  %v413 = vunpack.c.h.b16 %v35
  %v414 = vunpack.c.l.b16 %v36
  %v415 = vunpack.c.h.b16 %v36
  %v416 = vunpack.c.l.b16 %v37
  %v417 = vunpack.c.h.b16 %v37
  %v418 = vunpack.c.l.b16 %v38
  %v419 = vunpack.c.h.b16 %v38
  %v420 = vunpack.c.l.b16 %v39
  %v421 = vunpack.c.h.b16 %v39
  %v422 = vunpack.c.l.b16 %v40
  %v423 = vunpack.c.h.b16 %v40
  %v424 = vunpack.c.l.b16 %v41
  %v425 = vunpack.c.h.b16 %v41
  %v426 = vunpack.c.l.b16 %v42
  %v427 = vunpack.c.h.b16 %v42
  %v428 = vunpack.c.l.b16 %v43
  %v429 = vunpack.c.h.b16 %v43
  %v430 = vunpack.c.l.b16 %v44
  %v431 = vunpack.c.h.b16 %v44
  %v432 = vunpack.c.l.b16 %v45
  %v433 = vunpack.c.h.b16 %v45
  %v434 = vunpack.c.l.b16 %v46
  %v435 = vunpack.c.h.b16 %v46
  %v436 = vunpack.c.l.b16 %v47
  %v437 = vunpack.c.h.b16 %v47
  %v438 = vunpack.c.l.b16 %v48
  %v439 = vunpack.c.h.b16 %v48
  %v440 = vunpack.c.l.b16 %v49
  %v441 = vunpack.c.h.b16 %v49
  %v442 = vunpack.c.l.b16 %v50
  %v443 = vunpack.c.h.b16 %v50
  %v444 = vunpack.c.l.b16 %v51
  %v445 = vunpack.c.h.b16 %v51
  %v446 = vunpack.c.l.b16 %v52
  %v447 = vunpack.c.h.b16 %v52
  %v448 = vunpack.c.l.b16 %v53
  %v449 = vunpack.c.h.b16 %v53
  %v450 = vunpack.c.l.b16 %v54
  %v451 = vunpack.c.h.b16 %v54
  %v452 = vunpack.c.l.b16 %v55
  %v453 = vunpack.c.h.b16 %v55
  %v454 = vunpack.c.l.b16 %v56
  %v455 = vunpack.c.h.b16 %v56
  %v456 = vunpack.c.l.b16 %v57
  %v457 = vunpack.c.h.b16 %v57
  %v458 = vunpack.c.l.b16 %v58
  %v459 = vunpack.c.h.b16 %v58
  %v460 = vunpack.c.l.b16 %v59
  %v461 = vunpack.c.h.b16 %v59
  %v462 = vunpack.c.l.b16 %v60
  %v463 = vunpack.c.h.b16 %v60
  %v464 = vunpack.c.l.b16 %v61
  %v465 = vunpack.c.h.b16 %v61
  %v466 = vunpack.c.l.b16 %v62
  %v467 = vunpack.c.h.b16 %v62
  %v468 = vunpack.c.l.b16 %v63
  %v469 = vunpack.c.h.b16 %v63
  %v470 = vunpack.c.l.b16 %v64
  %v471 = vunpack.c.h.b16 %v64
  %v472 = vunpack.c.l.b16 %v65
  %v473 = vunpack.c.h.b16 %v65
  %v474 = vunpack.c.l.b16 %v66
  %v475 = vunpack.c.h.b16 %v66
  %v476 = vunpack.c.l.b16 %v67
  %v477 = vunpack.c.h.b16 %v67
  %v478 = vunpack.c.l.b16 %v68
  %v479 = vunpack.c.h.b16 %v68
  %v480 = vunpack.c.l.b16 %v69
  %v481 = vunpack.c.h.b16 %v69
  %v482 = vunpack.c.l.b16 %v70
  %v483 = vunpack.c.h.b16 %v70
  %v484 = vunpack.c.l.b16 %v71
  %v485 = vunpack.c.h.b16 %v71
  %v486 = vunpack.c.l.b16 %v72
  %v487 = vunpack.c.h.b16 %v72
  %v488 = vunpack.c.l.b16 %v73
  %v489 = vunpack.c.h.b16 %v73
  %v490 = vunpack.c.l.b16 %v74
  %v491 = vunpack.c.h.b16 %v74
  %v492 = vunpack.c.l.b16 %v75
  %v493 = vunpack.c.h.b16 %v75
  %v494 = vunpack.c.l.b16 %v76
  %v495 = vunpack.c.h.b16 %v76
  %v496 = vunpack.c.l.b16 %v77
  %v497 = vunpack.c.h.b16 %v77
  %v498 = vunpack.c.l.b16 %v78
  %v499 = vunpack.c.h.b16 %v78
  %v500 = vunpack.c.l.b16 %v79
  %v501 = vunpack.c.h.b16 %v79
  %v502 = vunpack.c.l.b16 %v80
  %v503 = vunpack.c.h.b16 %v80
  %v504 = vunpack.c.l.b16 %v81
  %v505 = vunpack.c.h.b16 %v81
  %v506 = vunpack.c.l.b16 %v82
  %v507 = vunpack.c.h.b16 %v82
  %v508 = vunpack.c.l.b16 %v83
  %v509 = vunpack.c.h.b16 %v83
  %v510 = vunpack.c.l.b16 %v84
  %v511 = vunpack.c.h.b16 %v84
  %v512 = vunpack.c.l.b16 %v85
  %v513 = vunpack.c.h.b16 %v85
  %v514 = vunpack.c.l.b16 %v86
  %v515 = vunpack.c.h.b16 %v86
  %v516 = vunpack.c.l.b16 %v87
  %v517 = vunpack.c.h.b16 %v87
  %v518 = vunpack.c.l.b16 %v88
  %v519 = vunpack.c.h.b16 %v88
  %v520 = vunpack.c.l.b16 %v89
  %v521 = vunpack.c.h.b16 %v89
  %v522 = vunpack.c.l.b16 %v90
  %v523 = vunpack.c.h.b16 %v90
  %v524 = vunpack.c.l.b16 %v91
  %v525 = vunpack.c.h.b16 %v91
  %v526 = vunpack.c.l.b16 %v92
  %v527 = vunpack.c.h.b16 %v92
  %v528 = vunpack.c.l.b16 %v93
  %v529 = vunpack.c.h.b16 %v93
  %v530 = vunpack.c.l.b16 %v94
  %v531 = vunpack.c.h.b16 %v94
  %v532 = vunpack.c.l.b16 %v95
  %v533 = vunpack.c.h.b16 %v95
  %v534 = vunpack.c.l.b16 %v96
  %v535 = vunpack.c.h.b16 %v96
  %v536 = vunpack.c.l.b16 %v97
  %v537 = vunpack.c.h.b16 %v97
  %v538 = vunpack.c.l.b16 %v98
  %v539 = vunpack.c.h.b16 %v98
  %v540 = vunpack.c.l.b16 %v99
  %v541 = vunpack.c.h.b16 %v99
  %v542 = vunpack.c.l.b16 %v100
  %v543 = vunpack.c.h.b16 %v100
  %v544 = vunpack.c.l.b16 %v101
  %v545 = vunpack.c.h.b16 %v101
  %v546 = vunpack.c.l.b16 %v102
  %v547 = vunpack.c.h.b16 %v102
  %v548 = vunpack.c.l.b16 %v103
  %v549 = vunpack.c.h.b16 %v103
  %v550 = vunpack.c.l.b16 %v104
  %v551 = vunpack.c.h.b16 %v104
  %v552 = vunpack.c.l.b16 %v105
  %v553 = vunpack.c.h.b16 %v105
  %v554 = vunpack.c.l.b16 %v106
  %v555 = vunpack.c.h.b16 %v106
  %v556 = vunpack.c.l.b16 %v107
  %v557 = vunpack.c.h.b16 %v107
  %v558 = vunpack.c.l.b16 %v108
  %v559 = vunpack.c.h.b16 %v108
  %v560 = vunpack.c.l.b16 %v109
  %v561 = vunpack.c.h.b16 %v109
  %v562 = vunpack.c.l.b16 %v110
  %v563 = vunpack.c.h.b16 %v110
  %v564 = vunpack.c.l.b16 %v111
  %v565 = vunpack.c.h.b16 %v111
  %v566 = vunpack.c.l.b16 %v112
  %v567 = vunpack.c.h.b16 %v112
  %v568 = vunpack.c.l.b16 %v113
  %v569 = vunpack.c.h.b16 %v113
  %v570 = vunpack.c.l.b16 %v114
  %v571 = vunpack.c.h.b16 %v114
  %v572 = vunpack.c.l.b16 %v115
  %v573 = vunpack.c.h.b16 %v115
  %v574 = vunpack.c.l.b16 %v116
  %v575 = vunpack.c.h.b16 %v116
  %v576 = vunpack.c.l.b16 %v117
  %v577 = vunpack.c.h.b16 %v117
  %v578 = vunpack.c.l.b16 %v118
  %v579 = vunpack.c.h.b16 %v118
  %v580 = vunpack.c.l.b16 %v119
  %v581 = vunpack.c.h.b16 %v119
  %v582 = vunpack.c.l.b16 %v120
  %v583 = vunpack.c.h.b16 %v120
  %v584 = vunpack.c.l.b16 %v121
  %v585 = vunpack.c.h.b16 %v121
  %v586 = vunpack.c.l.b16 %v122
  %v587 = vunpack.c.h.b16 %v122
  %v588 = vunpack.c.l.b16 %v123
  %v589 = vunpack.c.h.b16 %v123
  %v590 = vunpack.c.l.b16 %v124
  %v591 = vunpack.c.h.b16 %v124
  %v592 = vunpack.c.l.b16 %v125
  %v593 = vunpack.c.h.b16 %v125
  %v594 = vpack.c.b16 %v378, %v370
  %v595 = vpack.c.b16 %v379, %v371
  %v596 = vpack.c.b16 %v380, %v372
  %v597 = vpack.c.b16 %v381, %v373
  %v598 = vpack.c.b16 %v382, %v374
  %v599 = vpack.c.b16 %v383, %v375
  %v600 = vpack.c.b16 %v384, %v376
  %v601 = vpack.c.b16 %v385, %v377
  %v602 = vpack.c.b16 %v394, %v386
  %v603 = vpack.c.b16 %v395, %v387
  %v604 = vpack.c.b16 %v396, %v388
  %v605 = vpack.c.b16 %v397, %v389
  %v606 = vpack.c.b16 %v398, %v390
  %v607 = vpack.c.b16 %v399, %v391
  %v608 = vpack.c.b16 %v400, %v392
  %v609 = vpack.c.b16 %v401, %v393
  %v610 = vpack.c.b16 %v410, %v402
  %v611 = vpack.c.b16 %v411, %v403
  %v612 = vpack.c.b16 %v412, %v404
  %v613 = vpack.c.b16 %v413, %v405
  %v614 = vpack.c.b16 %v414, %v406
  %v615 = vpack.c.b16 %v415, %v407
  %v616 = vpack.c.b16 %v416, %v408
  %v617 = vpack.c.b16 %v417, %v409
  %v618 = vpack.c.b16 %v426, %v418
  %v619 = vpack.c.b16 %v427, %v419
  %v620 = vpack.c.b16 %v428, %v420
  %v621 = vpack.c.b16 %v429, %v421
  %v622 = vpack.c.b16 %v430, %v422
  %v623 = vpack.c.b16 %v431, %v423
  %v624 = vpack.c.b16 %v432, %v424
  %v625 = vpack.c.b16 %v433, %v425
  %v626 = vpack.c.b16 %v442, %v434
  %v627 = vpack.c.b16 %v443, %v435
  %v628 = vpack.c.b16 %v444, %v436
  %v629 = vpack.c.b16 %v445, %v437
  %v630 = vpack.c.b16 %v446, %v438
  %v631 = vpack.c.b16 %v447, %v439
  %v632 = vpack.c.b16 %v448, %v440
  %v633 = vpack.c.b16 %v449, %v441
  %v634 = vpack.c.b16 %v458, %v450
  %v635 = vpack.c.b16 %v459, %v451
  %v636 = vpack.c.b16 %v460, %v452
  %v637 = vpack.c.b16 %v461, %v453
  %v638 = vpack.c.b16 %v462, %v454
  %v639 = vpack.c.b16 %v463, %v455
  %v640 = vpack.c.b16 %v464, %v456
  %v641 = vpack.c.b16 %v465, %v457
  %v642 = vpack.c.b16 %v474, %v466
  %v643 = vpack.c.b16 %v475, %v467
  %v644 = vpack.c.b16 %v476, %v468
  %v645 = vpack.c.b16 %v477, %v469
  %v646 = vpack.c.b16 %v478, %v470
  %v647 = vpack.c.b16 %v479, %v471
  %v648 = vpack.c.b16 %v480, %v472
  %v649 = vpack.c.b16 %v481, %v473
  %v650 = vpack.c.b16 %v490, %v482
  %v651 = vpack.c.b16 %v491, %v483
  %v652 = vpack.c.b16 %v492, %v484
  %v653 = vpack.c.b16 %v493, %v485
  %v654 = vpack.c.b16 %v494, %v486
  %v655 = vpack.c.b16 %v495, %v487
  %v656 = vpack.c.b16 %v496, %v488
  %v657 = vpack.c.b16 %v497, %v489
  %v658 = vpack.c.b16 %v506, %v498
  %v659 = vpack.c.b16 %v507, %v499
  %v660 = vpack.c.b16 %v508, %v500
  %v661 = vpack.c.b16 %v509, %v501
  %v662 = vpack.c.b16 %v510, %v502
  %v663 = vpack.c.b16 %v511, %v503
  %v664 = vpack.c.b16 %v512, %v504
  %v665 = vpack.c.b16 %v513, %v505
  %v666 = vpack.c.b16 %v522, %v514
  %v667 = vpack.c.b16 %v523, %v515
  %v668 = vpack.c.b16 %v524, %v516
  %v669 = vpack.c.b16 %v525, %v517
  %v670 = vpack.c.b16 %v526, %v518
  %v671 = vpack.c.b16 %v527, %v519
  %v672 = vpack.c.b16 %v528, %v520
  %v673 = vpack.c.b16 %v529, %v521
  %v674 = vpack.c.b16 %v538, %v530
  %v675 = vpack.c.b16 %v539, %v531
  %v676 = vpack.c.b16 %v540, %v532
  %v677 = vpack.c.b16 %v541, %v533
  %v678 = vpack.c.b16 %v542, %v534
  %v679 = vpack.c.b16 %v543, %v535
  %v680 = vpack.c.b16 %v544, %v536
  %v681 = vpack.c.b16 %v545, %v537
  %v682 = vpack.c.b16 %v554, %v546
  %v683 = vpack.c.b16 %v555, %v547
  %v684 = vpack.c.b16 %v556, %v548
  %v685 = vpack.c.b16 %v557, %v549
  %v686 = vpack.c.b16 %v558, %v550
  %v687 = vpack.c.b16 %v559, %v551
  %v688 = vpack.c.b16 %v560, %v552
  %v689 = vpack.c.b16 %v561, %v553
  %v690 = vpack.c.b16 %v570, %v562
  %v691 = vpack.c.b16 %v571, %v563
  %v692 = vpack.c.b16 %v572, %v564
  %v693 = vpack.c.b16 %v573, %v565
  %v694 = vpack.c.b16 %v574, %v566
  %v695 = vpack.c.b16 %v575, %v567
  %v696 = vpack.c.b16 %v576, %v568
  %v697 = vpack.c.b16 %v577, %v569
  %v698 = vpack.c.b16 %v586, %v578
  %v699 = vpack.c.b16 %v587, %v579
  %v700 = vpack.c.b16 %v588, %v580
  %v701 = vpack.c.b16 %v589, %v581
  %v702 = vpack.c.b16 %v590, %v582
  %v703 = vpack.c.b16 %v591, %v583
  %v704 = vpack.c.b16 %v592, %v584
  %v705 = vpack.c.b16 %v593, %v585
  %v946 = vunpack.c.l.b16 %v126
  %v947 = vunpack.c.l.b16 %v127
  %v948 = vunpack.c.l.b16 %v128
  %v949 = vunpack.c.l.b16 %v129
  %v950 = vunpack.c.l.b16 %v130
  %v951 = vunpack.c.l.b16 %v131
  %v952 = vunpack.c.l.b16 %v132
  %v953 = vunpack.c.l.b16 %v133
  %v954 = vunpack.c.l.b16 %v134
  %v955 = vunpack.c.l.b16 %v135
  %v956 = vunpack.c.l.b16 %v136
  %v957 = vunpack.c.l.b16 %v137
  %v958 = vunpack.c.l.b16 %v138
  %v959 = vunpack.c.l.b16 %v139
  %v960 = vunpack.c.l.b16 %v140
  %v961 = vunpack.c.l.b16 %v141
  %v962 = vunpack.c.l.b16 %v142
  %v963 = vunpack.c.l.b16 %v143
  %v964 = vunpack.c.l.b16 %v144
  %v965 = vunpack.c.l.b16 %v145
  %v966 = vunpack.c.l.b16 %v146
  %v967 = vunpack.c.l.b16 %v147
  %v968 = vunpack.c.l.b16 %v148
  %v969 = vunpack.c.l.b16 %v149
  %v970 = vunpack.c.l.b16 %v150
  %v971 = vunpack.c.l.b16 %v151
  %v972 = vunpack.c.l.b16 %v152
  %v973 = vunpack.c.l.b16 %v153
  %v974 = vunpack.c.l.b16 %v154
  %v975 = vunpack.c.l.b16 %v155
  %v976 = vunpack.c.l.b16 %v156
  %v977 = vunpack.c.l.b16 %v157
  %v978 = vunpack.c.l.b16 %v158
  %v979 = vunpack.c.l.b16 %v159
  %v980 = vunpack.c.l.b16 %v160
  %v981 = vunpack.c.l.b16 %v161
  %v982 = vunpack.c.l.b16 %v162
  %v983 = vunpack.c.l.b16 %v163
  %v984 = vunpack.c.l.b16 %v164
  %v985 = vunpack.c.l.b16 %v165
  %v986 = vunpack.c.l.b16 %v166
  %v987 = vunpack.c.l.b16 %v167
  %v988 = vunpack.c.l.b16 %v168
  %v989 = vunpack.c.l.b16 %v169
  %v990 = vunpack.c.l.b16 %v170
  %v991 = vunpack.c.l.b16 %v171
  %v992 = vunpack.c.l.b16 %v172
  %v993 = vunpack.c.l.b16 %v173
  %v994 = vunpack.c.l.b16 %v174
  %v995 = vunpack.c.l.b16 %v175
  %v996 = vunpack.c.l.b16 %v176
  %v997 = vunpack.c.l.b16 %v177
  %v998 = vunpack.c.l.b16 %v178
  %v999 = vunpack.c.l.b16 %v179
  %v1000 = vunpack.c.l.b16 %v180
  %v1001 = vunpack.c.l.b16 %v181
  %v1002 = vunpack.c.l.b16 %v182
  %v1003 = vunpack.c.l.b16 %v183
  %v1004 = vunpack.c.l.b16 %v184
  %v1005 = vunpack.c.l.b16 %v185
  %v1006 = vunpack.c.l.b16 %v186
  %v1007 = vunpack.c.l.b16 %v187
  %v1008 = vunpack.c.l.b16 %v188
  %v1009 = vunpack.c.l.b16 %v189
  %v1010 = vunpack.c.l.b16 %v190
  %v1011 = vunpack.c.l.b16 %v191
  %v1012 = vunpack.c.l.b16 %v192
  %v1013 = vunpack.c.l.b16 %v193
  %v1014 = vunpack.c.l.b16 %v194
  %v1015 = vunpack.c.l.b16 %v195
  %v1016 = vunpack.c.l.b16 %v196
  %v1017 = vunpack.c.l.b16 %v197
  %v1018 = vunpack.c.l.b16 %v198
  %v1019 = vunpack.c.l.b16 %v199
  %v1020 = vunpack.c.l.b16 %v200
  %v1021 = vunpack.c.l.b16 %v201
  %v1022 = vunpack.c.l.b16 %v202
  %v1023 = vunpack.c.l.b16 %v203
  %v1024 = vunpack.c.l.b16 %v204
  %v1025 = vunpack.c.l.b16 %v205
  %v1026 = vunpack.c.l.b16 %v206
  %v1027 = vunpack.c.l.b16 %v207
  %v1028 = vunpack.c.l.b16 %v208
  %v1029 = vunpack.c.l.b16 %v209
  %v1030 = vunpack.c.l.b16 %v210
  %v1031 = vunpack.c.l.b16 %v211
  %v1032 = vunpack.c.l.b16 %v212
  %v1033 = vunpack.c.l.b16 %v213
  %v1034 = vunpack.c.l.b16 %v214
  %v1035 = vunpack.c.l.b16 %v215
  %v1036 = vunpack.c.l.b16 %v216
  %v1037 = vunpack.c.l.b16 %v217
  %v1038 = vunpack.c.l.b16 %v218
  %v1039 = vunpack.c.l.b16 %v219
  %v1040 = vunpack.c.l.b16 %v220
  %v1041 = vunpack.c.l.b16 %v221
  %v1042 = vunpack.c.l.b16 %v222
  %v1043 = vunpack.c.l.b16 %v223
  %v1044 = vunpack.c.l.b16 %v224
  %v1045 = vunpack.c.l.b16 %v225
  %v1046 = vunpack.c.l.b16 %v226
  %v1047 = vunpack.c.l.b16 %v227
  %v1048 = vunpack.c.l.b16 %v228
  %v1049 = vunpack.c.l.b16 %v229
  %v1050 = vunpack.c.l.b16 %v230
  %v1051 = vunpack.c.l.b16 %v231
  %v1052 = vunpack.c.l.b16 %v232
  %v1053 = vunpack.c.l.b16 %v233
  %v1054 = vunpack.c.l.b16 %v234
  %v1055 = vunpack.c.l.b16 %v235
  %v1056 = vunpack.c.l.b16 %v236
  %v1057 = vunpack.c.l.b16 %v237
  %v1058 = vunpack.c.l.b16 %v238
  %v1059 = vunpack.c.l.b16 %v239
  %v1060 = vunpack.c.l.b16 %v240
  %v1061 = vunpack.c.l.b16 %v241
  %v1062 = vunpack.c.l.b16 %v242
  %v1063 = vunpack.c.l.b16 %v243
  %v1064 = vunpack.c.l.b16 %v244
  %v1065 = vunpack.c.l.b16 %v245
  %v1066 = vunpack.c.l.b16 %v246
  %v1067 = vunpack.c.l.b16 %v247
  %v1068 = vunpack.c.l.b16 %v248
  %v1069 = vunpack.c.l.b16 %v249
  %v1070 = vunpack.c.l.b16 %v250
  %v1071 = vunpack.c.l.b16 %v251
  %v1072 = vunpack.c.l.b16 %v252
  %v1073 = vunpack.c.l.b16 %v253
  %v1074 = vpack.c.b16 %v947, %v946
  %v1075 = vpack.c.b16 %v949, %v948
  %v1076 = vpack.c.b16 %v951, %v950
  %v1077 = vpack.c.b16 %v953, %v952
  %v1078 = vpack.c.b16 %v955, %v954
  %v1079 = vpack.c.b16 %v957, %v956
  %v1080 = vpack.c.b16 %v959, %v958
  %v1081 = vpack.c.b16 %v961, %v960
  %v1082 = vpack.c.b16 %v963, %v962
  %v1083 = vpack.c.b16 %v965, %v964
  %v1084 = vpack.c.b16 %v967, %v966
  %v1085 = vpack.c.b16 %v969, %v968
  %v1086 = vpack.c.b16 %v971, %v970
  %v1087 = vpack.c.b16 %v973, %v972
  %v1088 = vpack.c.b16 %v975, %v974
  %v1089 = vpack.c.b16 %v977, %v976
  %v1090 = vpack.c.b16 %v979, %v978
  %v1091 = vpack.c.b16 %v981, %v980
  %v1092 = vpack.c.b16 %v983, %v982
  %v1093 = vpack.c.b16 %v985, %v984
  %v1094 = vpack.c.b16 %v987, %v986
  %v1095 = vpack.c.b16 %v989, %v988
  %v1096 = vpack.c.b16 %v991, %v990
  %v1097 = vpack.c.b16 %v993, %v992
  %v1098 = vpack.c.b16 %v995, %v994
  %v1099 = vpack.c.b16 %v997, %v996
  %v1100 = vpack.c.b16 %v999, %v998
  %v1101 = vpack.c.b16 %v1001, %v1000
  %v1102 = vpack.c.b16 %v1003, %v1002
  %v1103 = vpack.c.b16 %v1005, %v1004
  %v1104 = vpack.c.b16 %v1007, %v1006
  %v1105 = vpack.c.b16 %v1009, %v1008
  %v1106 = vpack.c.b16 %v1011, %v1010
  %v1107 = vpack.c.b16 %v1013, %v1012
  %v1108 = vpack.c.b16 %v1015, %v1014
  %v1109 = vpack.c.b16 %v1017, %v1016
  %v1110 = vpack.c.b16 %v1019, %v1018
  %v1111 = vpack.c.b16 %v1021, %v1020
  %v1112 = vpack.c.b16 %v1023, %v1022
  %v1113 = vpack.c.b16 %v1025, %v1024
  %v1114 = vpack.c.b16 %v1027, %v1026
  %v1115 = vpack.c.b16 %v1029, %v1028
  %v1116 = vpack.c.b16 %v1031, %v1030
  %v1117 = vpack.c.b16 %v1033, %v1032
  %v1118 = vpack.c.b16 %v1035, %v1034
  %v1119 = vpack.c.b16 %v1037, %v1036
  %v1120 = vpack.c.b16 %v1039, %v1038
  %v1121 = vpack.c.b16 %v1041, %v1040
  %v1122 = vpack.c.b16 %v1043, %v1042
  %v1123 = vpack.c.b16 %v1045, %v1044
  %v1124 = vpack.c.b16 %v1047, %v1046
  %v1125 = vpack.c.b16 %v1049, %v1048
  %v1126 = vpack.c.b16 %v1051, %v1050
  %v1127 = vpack.c.b16 %v1053, %v1052
  %v1128 = vpack.c.b16 %v1055, %v1054
  %v1129 = vpack.c.b16 %v1057, %v1056
  %v1130 = vpack.c.b16 %v1059, %v1058
  %v1131 = vpack.c.b16 %v1061, %v1060
  %v1132 = vpack.c.b16 %v1063, %v1062
  %v1133 = vpack.c.b16 %v1065, %v1064
  %v1134 = vpack.c.b16 %v1067, %v1066
  %v1135 = vpack.c.b16 %v1069, %v1068
  %v1136 = vpack.c.b16 %v1071, %v1070
  %v1137 = vpack.c.b16 %v1073, %v1072
  %1202 = vmatpush.bf16.msra.mxu0 %v1081
  %1203 = vmatpush.bf16.msra.mxu0 %v1080
  %1204 = vmatpush.bf16.msra.mxu0 %v1079
  %1205 = vmatpush.bf16.msra.mxu0 %v1078
  %1206 = vmatpush.bf16.msra.mxu0 %v1077
  %1207 = vmatpush.bf16.msra.mxu0 %v1076
  %1208 = vmatpush.bf16.msra.mxu0 %v1075
  %1209 = vmatpush.bf16.msra.mxu0 %v1074
  %1210 = vmatmul.bf16.gmra.mxu0 %v594
  %v1211 = vpop.f32.mrf.mxu0
  %v1212 = vadd.f32 %v256, %v1211
  %v1213 = vpop.f32.mrf.mxu0
  %v1214 = vadd.f32 %v256, %v1213
  %1215 = vmatmul.bf16.gmra.mxu0 %v602
  %v1216 = vpop.f32.mrf.mxu0
  %v1217 = vadd.f32 %v256, %v1216
  %v1218 = vpop.f32.mrf.mxu0
  %v1219 = vadd.f32 %v256, %v1218
  %1220 = vmatmul.bf16.gmra.mxu0 %v610
  %v1221 = vpop.f32.mrf.mxu0
  %v1222 = vadd.f32 %v256, %v1221
  %v1223 = vpop.f32.mrf.mxu0
  %v1224 = vadd.f32 %v256, %v1223
  %1225 = vmatmul.bf16.gmra.mxu0 %v618
  %v1226 = vpop.f32.mrf.mxu0
  %v1227 = vadd.f32 %v256, %v1226
  %v1228 = vpop.f32.mrf.mxu0
  %v1229 = vadd.f32 %v256, %v1228
  %1230 = vmatmul.bf16.gmra.mxu0 %v626
  %v1231 = vpop.f32.mrf.mxu0
  %v1232 = vadd.f32 %v256, %v1231
  %v1233 = vpop.f32.mrf.mxu0
  %v1234 = vadd.f32 %v256, %v1233
  %1235 = vmatmul.bf16.gmra.mxu0 %v634
  %v1236 = vpop.f32.mrf.mxu0
  %v1237 = vadd.f32 %v256, %v1236
  %v1238 = vpop.f32.mrf.mxu0
  %v1239 = vadd.f32 %v256, %v1238
  %1240 = vmatmul.bf16.gmra.mxu0 %v642
  %v1241 = vpop.f32.mrf.mxu0
  %v1242 = vadd.f32 %v256, %v1241
  %v1243 = vpop.f32.mrf.mxu0
  %v1244 = vadd.f32 %v256, %v1243
  %1245 = vmatmul.bf16.gmra.mxu0 %v650
  %v1246 = vpop.f32.mrf.mxu0
  %v1247 = vadd.f32 %v256, %v1246
  %v1248 = vpop.f32.mrf.mxu0
  %v1249 = vadd.f32 %v256, %v1248
  %1250 = vmatmul.bf16.gmra.mxu0 %v658
  %v1251 = vpop.f32.mrf.mxu0
  %v1252 = vadd.f32 %v256, %v1251
  %v1253 = vpop.f32.mrf.mxu0
  %v1254 = vadd.f32 %v256, %v1253
  %1255 = vmatmul.bf16.gmra.mxu0 %v666
  %v1256 = vpop.f32.mrf.mxu0
  %v1257 = vadd.f32 %v256, %v1256
  %v1258 = vpop.f32.mrf.mxu0
  %v1259 = vadd.f32 %v256, %v1258
  %1260 = vmatmul.bf16.gmra.mxu0 %v674
  %v1261 = vpop.f32.mrf.mxu0
  %v1262 = vadd.f32 %v256, %v1261
  %v1263 = vpop.f32.mrf.mxu0
  %v1264 = vadd.f32 %v256, %v1263
  %1265 = vmatmul.bf16.gmra.mxu0 %v682
  %v1266 = vpop.f32.mrf.mxu0
  %v1267 = vadd.f32 %v256, %v1266
  %v1268 = vpop.f32.mrf.mxu0
  %v1269 = vadd.f32 %v256, %v1268
  %1270 = vmatmul.bf16.gmra.mxu0 %v690
  %v1271 = vpop.f32.mrf.mxu0
  %v1272 = vadd.f32 %v256, %v1271
  %v1273 = vpop.f32.mrf.mxu0
  %v1274 = vadd.f32 %v256, %v1273
  %1275 = vmatmul.bf16.gmra.mxu0 %v698
  %v1276 = vpop.f32.mrf.mxu0
  %v1277 = vadd.f32 %v256, %v1276
  %v1278 = vpop.f32.mrf.mxu0
  %v1279 = vadd.f32 %v256, %v1278
  %1280 = vdwg.mxu0
  %1281 = vmatpush.bf16.msra.mxu0 %v1089
  %1282 = vmatpush.bf16.msra.mxu0 %v1088
  %1283 = vmatpush.bf16.msra.mxu0 %v1087
  %1284 = vmatpush.bf16.msra.mxu0 %v1086
  %1285 = vmatpush.bf16.msra.mxu0 %v1085
  %1286 = vmatpush.bf16.msra.mxu0 %v1084
  %1287 = vmatpush.bf16.msra.mxu0 %v1083
  %1288 = vmatpush.bf16.msra.mxu0 %v1082
  %1289 = vmatmul.bf16.gmra.mxu0 %v595
  %v1290 = vpop.f32.mrf.mxu0
  %v1291 = vadd.f32 %v1212, %v1290
  %v1292 = vpop.f32.mrf.mxu0
  %v1293 = vadd.f32 %v1214, %v1292
  %1294 = vmatmul.bf16.gmra.mxu0 %v603
  %v1295 = vpop.f32.mrf.mxu0
  %v1296 = vadd.f32 %v1217, %v1295
  %v1297 = vpop.f32.mrf.mxu0
  %v1298 = vadd.f32 %v1219, %v1297
  %1299 = vmatmul.bf16.gmra.mxu0 %v611
  %v1300 = vpop.f32.mrf.mxu0
  %v1301 = vadd.f32 %v1222, %v1300
  %v1302 = vpop.f32.mrf.mxu0
  %v1303 = vadd.f32 %v1224, %v1302
  %1304 = vmatmul.bf16.gmra.mxu0 %v619
  %v1305 = vpop.f32.mrf.mxu0
  %v1306 = vadd.f32 %v1227, %v1305
  %v1307 = vpop.f32.mrf.mxu0
  %v1308 = vadd.f32 %v1229, %v1307
  %1309 = vmatmul.bf16.gmra.mxu0 %v627
  %v1310 = vpop.f32.mrf.mxu0
  %v1311 = vadd.f32 %v1232, %v1310
  %v1312 = vpop.f32.mrf.mxu0
  %v1313 = vadd.f32 %v1234, %v1312
  %1314 = vmatmul.bf16.gmra.mxu0 %v635
  %v1315 = vpop.f32.mrf.mxu0
  %v1316 = vadd.f32 %v1237, %v1315
  %v1317 = vpop.f32.mrf.mxu0
  %v1318 = vadd.f32 %v1239, %v1317
  %1319 = vmatmul.bf16.gmra.mxu0 %v643
  %v1320 = vpop.f32.mrf.mxu0
  %v1321 = vadd.f32 %v1242, %v1320
  %v1322 = vpop.f32.mrf.mxu0
  %v1323 = vadd.f32 %v1244, %v1322
  %1324 = vmatmul.bf16.gmra.mxu0 %v651
  %v1325 = vpop.f32.mrf.mxu0
  %v1326 = vadd.f32 %v1247, %v1325
  %v1327 = vpop.f32.mrf.mxu0
  %v1328 = vadd.f32 %v1249, %v1327
  %1329 = vmatmul.bf16.gmra.mxu0 %v659
  %v1330 = vpop.f32.mrf.mxu0
  %v1331 = vadd.f32 %v1252, %v1330
  %v1332 = vpop.f32.mrf.mxu0
  %v1333 = vadd.f32 %v1254, %v1332
  %1334 = vmatmul.bf16.gmra.mxu0 %v667
  %v1335 = vpop.f32.mrf.mxu0
  %v1336 = vadd.f32 %v1257, %v1335
  %v1337 = vpop.f32.mrf.mxu0
  %v1338 = vadd.f32 %v1259, %v1337
  %1339 = vmatmul.bf16.gmra.mxu0 %v675
  %v1340 = vpop.f32.mrf.mxu0
  %v1341 = vadd.f32 %v1262, %v1340
  %v1342 = vpop.f32.mrf.mxu0
  %v1343 = vadd.f32 %v1264, %v1342
  %1344 = vmatmul.bf16.gmra.mxu0 %v683
  %v1345 = vpop.f32.mrf.mxu0
  %v1346 = vadd.f32 %v1267, %v1345
  %v1347 = vpop.f32.mrf.mxu0
  %v1348 = vadd.f32 %v1269, %v1347
  %1349 = vmatmul.bf16.gmra.mxu0 %v691
  %v1350 = vpop.f32.mrf.mxu0
  %v1351 = vadd.f32 %v1272, %v1350
  %v1352 = vpop.f32.mrf.mxu0
  %v1353 = vadd.f32 %v1274, %v1352
  %1354 = vmatmul.bf16.gmra.mxu0 %v699
  %v1355 = vpop.f32.mrf.mxu0
  %v1356 = vadd.f32 %v1277, %v1355
  %v1357 = vpop.f32.mrf.mxu0
  %v1358 = vadd.f32 %v1279, %v1357
  %1359 = vdwg.mxu0
  %1360 = vmatpush.bf16.msra.mxu0 %v1097
  %1361 = vmatpush.bf16.msra.mxu0 %v1096
  %1362 = vmatpush.bf16.msra.mxu0 %v1095
  %1363 = vmatpush.bf16.msra.mxu0 %v1094
  %1364 = vmatpush.bf16.msra.mxu0 %v1093
  %1365 = vmatpush.bf16.msra.mxu0 %v1092
  %1366 = vmatpush.bf16.msra.mxu0 %v1091
  %1367 = vmatpush.bf16.msra.mxu0 %v1090
  %1368 = vmatmul.bf16.gmra.mxu0 %v596
  %v1369 = vpop.f32.mrf.mxu0
  %v1370 = vadd.f32 %v1291, %v1369
  %v1371 = vpop.f32.mrf.mxu0
  %v1372 = vadd.f32 %v1293, %v1371
  %1373 = vmatmul.bf16.gmra.mxu0 %v604
  %v1374 = vpop.f32.mrf.mxu0
  %v1375 = vadd.f32 %v1296, %v1374
  %v1376 = vpop.f32.mrf.mxu0
  %v1377 = vadd.f32 %v1298, %v1376
  %1378 = vmatmul.bf16.gmra.mxu0 %v612
  %v1379 = vpop.f32.mrf.mxu0
  %v1380 = vadd.f32 %v1301, %v1379
  %v1381 = vpop.f32.mrf.mxu0
  %v1382 = vadd.f32 %v1303, %v1381
  %1383 = vmatmul.bf16.gmra.mxu0 %v620
  %v1384 = vpop.f32.mrf.mxu0
  %v1385 = vadd.f32 %v1306, %v1384
  %v1386 = vpop.f32.mrf.mxu0
  %v1387 = vadd.f32 %v1308, %v1386
  %1388 = vmatmul.bf16.gmra.mxu0 %v628
  %v1389 = vpop.f32.mrf.mxu0
  %v1390 = vadd.f32 %v1311, %v1389
  %v1391 = vpop.f32.mrf.mxu0
  %v1392 = vadd.f32 %v1313, %v1391
  %1393 = vmatmul.bf16.gmra.mxu0 %v636
  %v1394 = vpop.f32.mrf.mxu0
  %v1395 = vadd.f32 %v1316, %v1394
  %v1396 = vpop.f32.mrf.mxu0
  %v1397 = vadd.f32 %v1318, %v1396
  %1398 = vmatmul.bf16.gmra.mxu0 %v644
  %v1399 = vpop.f32.mrf.mxu0
  %v1400 = vadd.f32 %v1321, %v1399
  %v1401 = vpop.f32.mrf.mxu0
  %v1402 = vadd.f32 %v1323, %v1401
  %1403 = vmatmul.bf16.gmra.mxu0 %v652
  %v1404 = vpop.f32.mrf.mxu0
  %v1405 = vadd.f32 %v1326, %v1404
  %v1406 = vpop.f32.mrf.mxu0
  %v1407 = vadd.f32 %v1328, %v1406
  %1408 = vmatmul.bf16.gmra.mxu0 %v660
  %v1409 = vpop.f32.mrf.mxu0
  %v1410 = vadd.f32 %v1331, %v1409
  %v1411 = vpop.f32.mrf.mxu0
  %v1412 = vadd.f32 %v1333, %v1411
  %1413 = vmatmul.bf16.gmra.mxu0 %v668
  %v1414 = vpop.f32.mrf.mxu0
  %v1415 = vadd.f32 %v1336, %v1414
  %v1416 = vpop.f32.mrf.mxu0
  %v1417 = vadd.f32 %v1338, %v1416
  %1418 = vmatmul.bf16.gmra.mxu0 %v676
  %v1419 = vpop.f32.mrf.mxu0
  %v1420 = vadd.f32 %v1341, %v1419
  %v1421 = vpop.f32.mrf.mxu0
  %v1422 = vadd.f32 %v1343, %v1421
  %1423 = vmatmul.bf16.gmra.mxu0 %v684
  %v1424 = vpop.f32.mrf.mxu0
  %v1425 = vadd.f32 %v1346, %v1424
  %v1426 = vpop.f32.mrf.mxu0
  %v1427 = vadd.f32 %v1348, %v1426
  %1428 = vmatmul.bf16.gmra.mxu0 %v692
  %v1429 = vpop.f32.mrf.mxu0
  %v1430 = vadd.f32 %v1351, %v1429
  %v1431 = vpop.f32.mrf.mxu0
  %v1432 = vadd.f32 %v1353, %v1431
  %1433 = vmatmul.bf16.gmra.mxu0 %v700
  %v1434 = vpop.f32.mrf.mxu0
  %v1435 = vadd.f32 %v1356, %v1434
  %v1436 = vpop.f32.mrf.mxu0
  %v1437 = vadd.f32 %v1358, %v1436
  %1438 = vdwg.mxu0
  %1439 = vmatpush.bf16.msra.mxu0 %v1105
  %1440 = vmatpush.bf16.msra.mxu0 %v1104
  %1441 = vmatpush.bf16.msra.mxu0 %v1103
  %1442 = vmatpush.bf16.msra.mxu0 %v1102
  %1443 = vmatpush.bf16.msra.mxu0 %v1101
  %1444 = vmatpush.bf16.msra.mxu0 %v1100
  %1445 = vmatpush.bf16.msra.mxu0 %v1099
  %1446 = vmatpush.bf16.msra.mxu0 %v1098
  %1447 = vmatmul.bf16.gmra.mxu0 %v597
  %v1448 = vpop.f32.mrf.mxu0
  %v1449 = vadd.f32 %v1370, %v1448
  %v1450 = vpop.f32.mrf.mxu0
  %v1451 = vadd.f32 %v1372, %v1450
  %1452 = vmatmul.bf16.gmra.mxu0 %v605
  %v1453 = vpop.f32.mrf.mxu0
  %v1454 = vadd.f32 %v1375, %v1453
  %v1455 = vpop.f32.mrf.mxu0
  %v1456 = vadd.f32 %v1377, %v1455
  %1457 = vmatmul.bf16.gmra.mxu0 %v613
  %v1458 = vpop.f32.mrf.mxu0
  %v1459 = vadd.f32 %v1380, %v1458
  %v1460 = vpop.f32.mrf.mxu0
  %v1461 = vadd.f32 %v1382, %v1460
  %1462 = vmatmul.bf16.gmra.mxu0 %v621
  %v1463 = vpop.f32.mrf.mxu0
  %v1464 = vadd.f32 %v1385, %v1463
  %v1465 = vpop.f32.mrf.mxu0
  %v1466 = vadd.f32 %v1387, %v1465
  %1467 = vmatmul.bf16.gmra.mxu0 %v629
  %v1468 = vpop.f32.mrf.mxu0
  %v1469 = vadd.f32 %v1390, %v1468
  %v1470 = vpop.f32.mrf.mxu0
  %v1471 = vadd.f32 %v1392, %v1470
  %1472 = vmatmul.bf16.gmra.mxu0 %v637
  %v1473 = vpop.f32.mrf.mxu0
  %v1474 = vadd.f32 %v1395, %v1473
  %v1475 = vpop.f32.mrf.mxu0
  %v1476 = vadd.f32 %v1397, %v1475
  %1477 = vmatmul.bf16.gmra.mxu0 %v645
  %v1478 = vpop.f32.mrf.mxu0
  %v1479 = vadd.f32 %v1400, %v1478
  %v1480 = vpop.f32.mrf.mxu0
  %v1481 = vadd.f32 %v1402, %v1480
  %1482 = vmatmul.bf16.gmra.mxu0 %v653
  %v1483 = vpop.f32.mrf.mxu0
  %v1484 = vadd.f32 %v1405, %v1483
  %v1485 = vpop.f32.mrf.mxu0
  %v1486 = vadd.f32 %v1407, %v1485
  %1487 = vmatmul.bf16.gmra.mxu0 %v661
  %v1488 = vpop.f32.mrf.mxu0
  %v1489 = vadd.f32 %v1410, %v1488
  %v1490 = vpop.f32.mrf.mxu0
  %v1491 = vadd.f32 %v1412, %v1490
  %1492 = vmatmul.bf16.gmra.mxu0 %v669
  %v1493 = vpop.f32.mrf.mxu0
  %v1494 = vadd.f32 %v1415, %v1493
  %v1495 = vpop.f32.mrf.mxu0
  %v1496 = vadd.f32 %v1417, %v1495
  %1497 = vmatmul.bf16.gmra.mxu0 %v677
  %v1498 = vpop.f32.mrf.mxu0
  %v1499 = vadd.f32 %v1420, %v1498
  %v1500 = vpop.f32.mrf.mxu0
  %v1501 = vadd.f32 %v1422, %v1500
  %1502 = vmatmul.bf16.gmra.mxu0 %v685
  %v1503 = vpop.f32.mrf.mxu0
  %v1504 = vadd.f32 %v1425, %v1503
  %v1505 = vpop.f32.mrf.mxu0
  %v1506 = vadd.f32 %v1427, %v1505
  %1507 = vmatmul.bf16.gmra.mxu0 %v693
  %v1508 = vpop.f32.mrf.mxu0
  %v1509 = vadd.f32 %v1430, %v1508
  %v1510 = vpop.f32.mrf.mxu0
  %v1511 = vadd.f32 %v1432, %v1510
  %1512 = vmatmul.bf16.gmra.mxu0 %v701
  %v1513 = vpop.f32.mrf.mxu0
  %v1514 = vadd.f32 %v1435, %v1513
  %v1515 = vpop.f32.mrf.mxu0
  %v1516 = vadd.f32 %v1437, %v1515
  %1517 = vdwg.mxu0
  %1518 = vmatpush.bf16.msra.mxu0 %v1113
  %1519 = vmatpush.bf16.msra.mxu0 %v1112
  %1520 = vmatpush.bf16.msra.mxu0 %v1111
  %1521 = vmatpush.bf16.msra.mxu0 %v1110
  %1522 = vmatpush.bf16.msra.mxu0 %v1109
  %1523 = vmatpush.bf16.msra.mxu0 %v1108
  %1524 = vmatpush.bf16.msra.mxu0 %v1107
  %1525 = vmatpush.bf16.msra.mxu0 %v1106
  %1526 = vmatmul.bf16.gmra.mxu0 %v598
  %v1527 = vpop.f32.mrf.mxu0
  %v1528 = vadd.f32 %v1449, %v1527
  %v1529 = vpop.f32.mrf.mxu0
  %v1530 = vadd.f32 %v1451, %v1529
  %1531 = vmatmul.bf16.gmra.mxu0 %v606
  %v1532 = vpop.f32.mrf.mxu0
  %v1533 = vadd.f32 %v1454, %v1532
  %v1534 = vpop.f32.mrf.mxu0
  %v1535 = vadd.f32 %v1456, %v1534
  %1536 = vmatmul.bf16.gmra.mxu0 %v614
  %v1537 = vpop.f32.mrf.mxu0
  %v1538 = vadd.f32 %v1459, %v1537
  %v1539 = vpop.f32.mrf.mxu0
  %v1540 = vadd.f32 %v1461, %v1539
  %1541 = vmatmul.bf16.gmra.mxu0 %v622
  %v1542 = vpop.f32.mrf.mxu0
  %v1543 = vadd.f32 %v1464, %v1542
  %v1544 = vpop.f32.mrf.mxu0
  %v1545 = vadd.f32 %v1466, %v1544
  %1546 = vmatmul.bf16.gmra.mxu0 %v630
  %v1547 = vpop.f32.mrf.mxu0
  %v1548 = vadd.f32 %v1469, %v1547
  %v1549 = vpop.f32.mrf.mxu0
  %v1550 = vadd.f32 %v1471, %v1549
  %1551 = vmatmul.bf16.gmra.mxu0 %v638
  %v1552 = vpop.f32.mrf.mxu0
  %v1553 = vadd.f32 %v1474, %v1552
  %v1554 = vpop.f32.mrf.mxu0
  %v1555 = vadd.f32 %v1476, %v1554
  %1556 = vmatmul.bf16.gmra.mxu0 %v646
  %v1557 = vpop.f32.mrf.mxu0
  %v1558 = vadd.f32 %v1479, %v1557
  %v1559 = vpop.f32.mrf.mxu0
  %v1560 = vadd.f32 %v1481, %v1559
  %1561 = vmatmul.bf16.gmra.mxu0 %v654
  %v1562 = vpop.f32.mrf.mxu0
  %v1563 = vadd.f32 %v1484, %v1562
  %v1564 = vpop.f32.mrf.mxu0
  %v1565 = vadd.f32 %v1486, %v1564
  %1566 = vmatmul.bf16.gmra.mxu0 %v662
  %v1567 = vpop.f32.mrf.mxu0
  %v1568 = vadd.f32 %v1489, %v1567
  %v1569 = vpop.f32.mrf.mxu0
  %v1570 = vadd.f32 %v1491, %v1569
  %1571 = vmatmul.bf16.gmra.mxu0 %v670
  %v1572 = vpop.f32.mrf.mxu0
  %v1573 = vadd.f32 %v1494, %v1572
  %v1574 = vpop.f32.mrf.mxu0
  %v1575 = vadd.f32 %v1496, %v1574
  %1576 = vmatmul.bf16.gmra.mxu0 %v678
  %v1577 = vpop.f32.mrf.mxu0
  %v1578 = vadd.f32 %v1499, %v1577
  %v1579 = vpop.f32.mrf.mxu0
  %v1580 = vadd.f32 %v1501, %v1579
  %1581 = vmatmul.bf16.gmra.mxu0 %v686
  %v1582 = vpop.f32.mrf.mxu0
  %v1583 = vadd.f32 %v1504, %v1582
  %v1584 = vpop.f32.mrf.mxu0
  %v1585 = vadd.f32 %v1506, %v1584
  %1586 = vmatmul.bf16.gmra.mxu0 %v694
  %v1587 = vpop.f32.mrf.mxu0
  %v1588 = vadd.f32 %v1509, %v1587
  %v1589 = vpop.f32.mrf.mxu0
  %v1590 = vadd.f32 %v1511, %v1589
  %1591 = vmatmul.bf16.gmra.mxu0 %v702
  %v1592 = vpop.f32.mrf.mxu0
  %v1593 = vadd.f32 %v1514, %v1592
  %v1594 = vpop.f32.mrf.mxu0
  %v1595 = vadd.f32 %v1516, %v1594
  %1596 = vdwg.mxu0
  %1597 = vmatpush.bf16.msra.mxu0 %v1121
  %1598 = vmatpush.bf16.msra.mxu0 %v1120
  %1599 = vmatpush.bf16.msra.mxu0 %v1119
  %1600 = vmatpush.bf16.msra.mxu0 %v1118
  %1601 = vmatpush.bf16.msra.mxu0 %v1117
  %1602 = vmatpush.bf16.msra.mxu0 %v1116
  %1603 = vmatpush.bf16.msra.mxu0 %v1115
  %1604 = vmatpush.bf16.msra.mxu0 %v1114
  %1605 = vmatmul.bf16.gmra.mxu0 %v599
  %v1606 = vpop.f32.mrf.mxu0
  %v1607 = vadd.f32 %v1528, %v1606
  %v1608 = vpop.f32.mrf.mxu0
  %v1609 = vadd.f32 %v1530, %v1608
  %1610 = vmatmul.bf16.gmra.mxu0 %v607
  %v1611 = vpop.f32.mrf.mxu0
  %v1612 = vadd.f32 %v1533, %v1611
  %v1613 = vpop.f32.mrf.mxu0
  %v1614 = vadd.f32 %v1535, %v1613
  %1615 = vmatmul.bf16.gmra.mxu0 %v615
  %v1616 = vpop.f32.mrf.mxu0
  %v1617 = vadd.f32 %v1538, %v1616
  %v1618 = vpop.f32.mrf.mxu0
  %v1619 = vadd.f32 %v1540, %v1618
  %1620 = vmatmul.bf16.gmra.mxu0 %v623
  %v1621 = vpop.f32.mrf.mxu0
  %v1622 = vadd.f32 %v1543, %v1621
  %v1623 = vpop.f32.mrf.mxu0
  %v1624 = vadd.f32 %v1545, %v1623
  %1625 = vmatmul.bf16.gmra.mxu0 %v631
  %v1626 = vpop.f32.mrf.mxu0
  %v1627 = vadd.f32 %v1548, %v1626
  %v1628 = vpop.f32.mrf.mxu0
  %v1629 = vadd.f32 %v1550, %v1628
  %1630 = vmatmul.bf16.gmra.mxu0 %v639
  %v1631 = vpop.f32.mrf.mxu0
  %v1632 = vadd.f32 %v1553, %v1631
  %v1633 = vpop.f32.mrf.mxu0
  %v1634 = vadd.f32 %v1555, %v1633
  %1635 = vmatmul.bf16.gmra.mxu0 %v647
  %v1636 = vpop.f32.mrf.mxu0
  %v1637 = vadd.f32 %v1558, %v1636
  %v1638 = vpop.f32.mrf.mxu0
  %v1639 = vadd.f32 %v1560, %v1638
  %1640 = vmatmul.bf16.gmra.mxu0 %v655
  %v1641 = vpop.f32.mrf.mxu0
  %v1642 = vadd.f32 %v1563, %v1641
  %v1643 = vpop.f32.mrf.mxu0
  %v1644 = vadd.f32 %v1565, %v1643
  %1645 = vmatmul.bf16.gmra.mxu0 %v663
  %v1646 = vpop.f32.mrf.mxu0
  %v1647 = vadd.f32 %v1568, %v1646
  %v1648 = vpop.f32.mrf.mxu0
  %v1649 = vadd.f32 %v1570, %v1648
  %1650 = vmatmul.bf16.gmra.mxu0 %v671
  %v1651 = vpop.f32.mrf.mxu0
  %v1652 = vadd.f32 %v1573, %v1651
  %v1653 = vpop.f32.mrf.mxu0
  %v1654 = vadd.f32 %v1575, %v1653
  %1655 = vmatmul.bf16.gmra.mxu0 %v679
  %v1656 = vpop.f32.mrf.mxu0
  %v1657 = vadd.f32 %v1578, %v1656
  %v1658 = vpop.f32.mrf.mxu0
  %v1659 = vadd.f32 %v1580, %v1658
  %1660 = vmatmul.bf16.gmra.mxu0 %v687
  %v1661 = vpop.f32.mrf.mxu0
  %v1662 = vadd.f32 %v1583, %v1661
  %v1663 = vpop.f32.mrf.mxu0
  %v1664 = vadd.f32 %v1585, %v1663
  %1665 = vmatmul.bf16.gmra.mxu0 %v695
  %v1666 = vpop.f32.mrf.mxu0
  %v1667 = vadd.f32 %v1588, %v1666
  %v1668 = vpop.f32.mrf.mxu0
  %v1669 = vadd.f32 %v1590, %v1668
  %1670 = vmatmul.bf16.gmra.mxu0 %v703
  %v1671 = vpop.f32.mrf.mxu0
  %v1672 = vadd.f32 %v1593, %v1671
  %v1673 = vpop.f32.mrf.mxu0
  %v1674 = vadd.f32 %v1595, %v1673
  %1675 = vdwg.mxu0
  %1676 = vmatpush.bf16.msra.mxu0 %v1129
  %1677 = vmatpush.bf16.msra.mxu0 %v1128
  %1678 = vmatpush.bf16.msra.mxu0 %v1127
  %1679 = vmatpush.bf16.msra.mxu0 %v1126
  %1680 = vmatpush.bf16.msra.mxu0 %v1125
  %1681 = vmatpush.bf16.msra.mxu0 %v1124
  %1682 = vmatpush.bf16.msra.mxu0 %v1123
  %1683 = vmatpush.bf16.msra.mxu0 %v1122
  %1684 = vmatmul.bf16.gmra.mxu0 %v600
  %v1685 = vpop.f32.mrf.mxu0
  %v1686 = vadd.f32 %v1607, %v1685
  %v1687 = vpop.f32.mrf.mxu0
  %v1688 = vadd.f32 %v1609, %v1687
  %1689 = vmatmul.bf16.gmra.mxu0 %v608
  %v1690 = vpop.f32.mrf.mxu0
  %v1691 = vadd.f32 %v1612, %v1690
  %v1692 = vpop.f32.mrf.mxu0
  %v1693 = vadd.f32 %v1614, %v1692
  %1694 = vmatmul.bf16.gmra.mxu0 %v616
  %v1695 = vpop.f32.mrf.mxu0
  %v1696 = vadd.f32 %v1617, %v1695
  %v1697 = vpop.f32.mrf.mxu0
  %v1698 = vadd.f32 %v1619, %v1697
  %1699 = vmatmul.bf16.gmra.mxu0 %v624
  %v1700 = vpop.f32.mrf.mxu0
  %v1701 = vadd.f32 %v1622, %v1700
  %v1702 = vpop.f32.mrf.mxu0
  %v1703 = vadd.f32 %v1624, %v1702
  %1704 = vmatmul.bf16.gmra.mxu0 %v632
  %v1705 = vpop.f32.mrf.mxu0
  %v1706 = vadd.f32 %v1627, %v1705
  %v1707 = vpop.f32.mrf.mxu0
  %v1708 = vadd.f32 %v1629, %v1707
  %1709 = vmatmul.bf16.gmra.mxu0 %v640
  %v1710 = vpop.f32.mrf.mxu0
  %v1711 = vadd.f32 %v1632, %v1710
  %v1712 = vpop.f32.mrf.mxu0
  %v1713 = vadd.f32 %v1634, %v1712
  %1714 = vmatmul.bf16.gmra.mxu0 %v648
  %v1715 = vpop.f32.mrf.mxu0
  %v1716 = vadd.f32 %v1637, %v1715
  %v1717 = vpop.f32.mrf.mxu0
  %v1718 = vadd.f32 %v1639, %v1717
  %1719 = vmatmul.bf16.gmra.mxu0 %v656
  %v1720 = vpop.f32.mrf.mxu0
  %v1721 = vadd.f32 %v1642, %v1720
  %v1722 = vpop.f32.mrf.mxu0
  %v1723 = vadd.f32 %v1644, %v1722
  %1724 = vmatmul.bf16.gmra.mxu0 %v664
  %v1725 = vpop.f32.mrf.mxu0
  %v1726 = vadd.f32 %v1647, %v1725
  %v1727 = vpop.f32.mrf.mxu0
  %v1728 = vadd.f32 %v1649, %v1727
  %1729 = vmatmul.bf16.gmra.mxu0 %v672
  %v1730 = vpop.f32.mrf.mxu0
  %v1731 = vadd.f32 %v1652, %v1730
  %v1732 = vpop.f32.mrf.mxu0
  %v1733 = vadd.f32 %v1654, %v1732
  %1734 = vmatmul.bf16.gmra.mxu0 %v680
  %v1735 = vpop.f32.mrf.mxu0
  %v1736 = vadd.f32 %v1657, %v1735
  %v1737 = vpop.f32.mrf.mxu0
  %v1738 = vadd.f32 %v1659, %v1737
  %1739 = vmatmul.bf16.gmra.mxu0 %v688
  %v1740 = vpop.f32.mrf.mxu0
  %v1741 = vadd.f32 %v1662, %v1740
  %v1742 = vpop.f32.mrf.mxu0
  %v1743 = vadd.f32 %v1664, %v1742
  %1744 = vmatmul.bf16.gmra.mxu0 %v696
  %v1745 = vpop.f32.mrf.mxu0
  %v1746 = vadd.f32 %v1667, %v1745
  %v1747 = vpop.f32.mrf.mxu0
  %v1748 = vadd.f32 %v1669, %v1747
  %1749 = vmatmul.bf16.gmra.mxu0 %v704
  %v1750 = vpop.f32.mrf.mxu0
  %v1751 = vadd.f32 %v1672, %v1750
  %v1752 = vpop.f32.mrf.mxu0
  %v1753 = vadd.f32 %v1674, %v1752
  %1754 = vdwg.mxu0
  %1755 = vmatpush.bf16.msra.mxu0 %v1137
  %1756 = vmatpush.bf16.msra.mxu0 %v1136
  %1757 = vmatpush.bf16.msra.mxu0 %v1135
  %1758 = vmatpush.bf16.msra.mxu0 %v1134
  %1759 = vmatpush.bf16.msra.mxu0 %v1133
  %1760 = vmatpush.bf16.msra.mxu0 %v1132
  %1761 = vmatpush.bf16.msra.mxu0 %v1131
  %1762 = vmatpush.bf16.msra.mxu0 %v1130
  %1763 = vmatmul.bf16.gmra.mxu0 %v601
  %v1764 = vpop.f32.mrf.mxu0
  %v1765 = vadd.f32 %v1686, %v1764
  %v1766 = vpop.f32.mrf.mxu0
  %v1767 = vadd.f32 %v1688, %v1766
  %1768 = vmatmul.bf16.gmra.mxu0 %v609
  %v1769 = vpop.f32.mrf.mxu0
  %v1770 = vadd.f32 %v1691, %v1769
  %v1771 = vpop.f32.mrf.mxu0
  %v1772 = vadd.f32 %v1693, %v1771
  %1773 = vmatmul.bf16.gmra.mxu0 %v617
  %v1774 = vpop.f32.mrf.mxu0
  %v1775 = vadd.f32 %v1696, %v1774
  %v1776 = vpop.f32.mrf.mxu0
  %v1777 = vadd.f32 %v1698, %v1776
  %1778 = vmatmul.bf16.gmra.mxu0 %v625
  %v1779 = vpop.f32.mrf.mxu0
  %v1780 = vadd.f32 %v1701, %v1779
  %v1781 = vpop.f32.mrf.mxu0
  %v1782 = vadd.f32 %v1703, %v1781
  %1783 = vmatmul.bf16.gmra.mxu0 %v633
  %v1784 = vpop.f32.mrf.mxu0
  %v1785 = vadd.f32 %v1706, %v1784
  %v1786 = vpop.f32.mrf.mxu0
  %v1787 = vadd.f32 %v1708, %v1786
  %1788 = vmatmul.bf16.gmra.mxu0 %v641
  %v1789 = vpop.f32.mrf.mxu0
  %v1790 = vadd.f32 %v1711, %v1789
  %v1791 = vpop.f32.mrf.mxu0
  %v1792 = vadd.f32 %v1713, %v1791
  %1793 = vmatmul.bf16.gmra.mxu0 %v649
  %v1794 = vpop.f32.mrf.mxu0
  %v1795 = vadd.f32 %v1716, %v1794
  %v1796 = vpop.f32.mrf.mxu0
  %v1797 = vadd.f32 %v1718, %v1796
  %1798 = vmatmul.bf16.gmra.mxu0 %v657
  %v1799 = vpop.f32.mrf.mxu0
  %v1800 = vadd.f32 %v1721, %v1799
  %v1801 = vpop.f32.mrf.mxu0
  %v1802 = vadd.f32 %v1723, %v1801
  %1803 = vmatmul.bf16.gmra.mxu0 %v665
  %v1804 = vpop.f32.mrf.mxu0
  %v1805 = vadd.f32 %v1726, %v1804
  %v1806 = vpop.f32.mrf.mxu0
  %v1807 = vadd.f32 %v1728, %v1806
  %1808 = vmatmul.bf16.gmra.mxu0 %v673
  %v1809 = vpop.f32.mrf.mxu0
  %v1810 = vadd.f32 %v1731, %v1809
  %v1811 = vpop.f32.mrf.mxu0
  %v1812 = vadd.f32 %v1733, %v1811
  %1813 = vmatmul.bf16.gmra.mxu0 %v681
  %v1814 = vpop.f32.mrf.mxu0
  %v1815 = vadd.f32 %v1736, %v1814
  %v1816 = vpop.f32.mrf.mxu0
  %v1817 = vadd.f32 %v1738, %v1816
  %1818 = vmatmul.bf16.gmra.mxu0 %v689
  %v1819 = vpop.f32.mrf.mxu0
  %v1820 = vadd.f32 %v1741, %v1819
  %v1821 = vpop.f32.mrf.mxu0
  %v1822 = vadd.f32 %v1743, %v1821
  %1823 = vmatmul.bf16.gmra.mxu0 %v697
  %v1824 = vpop.f32.mrf.mxu0
  %v1825 = vadd.f32 %v1746, %v1824
  %v1826 = vpop.f32.mrf.mxu0
  %v1827 = vadd.f32 %v1748, %v1826
  %1828 = vmatmul.bf16.gmra.mxu0 %v705
  %v1829 = vpop.f32.mrf.mxu0
  %v1830 = vadd.f32 %v1751, %v1829
  %v1831 = vpop.f32.mrf.mxu0
  %v1832 = vadd.f32 %v1753, %v1831
  %1833 = vdwg.mxu0
  %vm1834 = vcmp.gt.f32.partialorder %v1765, 0.0
  %vm1835 = vcmp.gt.f32.partialorder %v1767, 0.0
  %vm1836 = vcmp.gt.f32.partialorder %v1770, 0.0
  %vm1837 = vcmp.gt.f32.partialorder %v1772, 0.0
  %vm1838 = vcmp.gt.f32.partialorder %v1775, 0.0
  %vm1839 = vcmp.gt.f32.partialorder %v1777, 0.0
  %vm1840 = vcmp.gt.f32.partialorder %v1780, 0.0
  %vm1841 = vcmp.gt.f32.partialorder %v1782, 0.0
  %vm1842 = vcmp.gt.f32.partialorder %v1785, 0.0
  %vm1843 = vcmp.gt.f32.partialorder %v1787, 0.0
  %vm1844 = vcmp.gt.f32.partialorder %v1790, 0.0
  %vm1845 = vcmp.gt.f32.partialorder %v1792, 0.0
  %vm1846 = vcmp.gt.f32.partialorder %v1795, 0.0
  %vm1847 = vcmp.gt.f32.partialorder %v1797, 0.0
  %vm1848 = vcmp.gt.f32.partialorder %v1800, 0.0
  %vm1849 = vcmp.gt.f32.partialorder %v1802, 0.0
  %vm1850 = vcmp.gt.f32.partialorder %v1805, 0.0
  %vm1851 = vcmp.gt.f32.partialorder %v1807, 0.0
  %vm1852 = vcmp.gt.f32.partialorder %v1810, 0.0
  %vm1853 = vcmp.gt.f32.partialorder %v1812, 0.0
  %vm1854 = vcmp.gt.f32.partialorder %v1815, 0.0
  %vm1855 = vcmp.gt.f32.partialorder %v1817, 0.0
  %vm1856 = vcmp.gt.f32.partialorder %v1820, 0.0
  %vm1857 = vcmp.gt.f32.partialorder %v1822, 0.0
  %vm1858 = vcmp.gt.f32.partialorder %v1825, 0.0
  %vm1859 = vcmp.gt.f32.partialorder %v1827, 0.0
  %vm1860 = vcmp.gt.f32.partialorder %v1830, 0.0
  %vm1861 = vcmp.gt.f32.partialorder %v1832, 0.0
  %v1862 = vmin.f32 %v1765, 0.0
  %v1863 = vmin.f32 %v1767, 0.0
  %v1864 = vmin.f32 %v1770, 0.0
  %v1865 = vmin.f32 %v1772, 0.0
  %v1866 = vmin.f32 %v1775, 0.0
  %v1867 = vmin.f32 %v1777, 0.0
  %v1868 = vmin.f32 %v1780, 0.0
  %v1869 = vmin.f32 %v1782, 0.0
  %v1870 = vmin.f32 %v1785, 0.0
  %v1871 = vmin.f32 %v1787, 0.0
  %v1872 = vmin.f32 %v1790, 0.0
  %v1873 = vmin.f32 %v1792, 0.0
  %v1874 = vmin.f32 %v1795, 0.0
  %v1875 = vmin.f32 %v1797, 0.0
  %v1876 = vmin.f32 %v1800, 0.0
  %v1877 = vmin.f32 %v1802, 0.0
  %v1878 = vmin.f32 %v1805, 0.0
  %v1879 = vmin.f32 %v1807, 0.0
  %v1880 = vmin.f32 %v1810, 0.0
  %v1881 = vmin.f32 %v1812, 0.0
  %v1882 = vmin.f32 %v1815, 0.0
  %v1883 = vmin.f32 %v1817, 0.0
  %v1884 = vmin.f32 %v1820, 0.0
  %v1885 = vmin.f32 %v1822, 0.0
  %v1886 = vmin.f32 %v1825, 0.0
  %v1887 = vmin.f32 %v1827, 0.0
  %v1888 = vmin.f32 %v1830, 0.0
  %v1889 = vmin.f32 %v1832, 0.0
  %v1890 = vmul.f32 %v1862, 1.442695
  %v1891 = vpow.pop %v1890
  %v1892 = vmul.f32 %v1863, 1.442695
  %v1893 = vpow.pop %v1892
  %v1894 = vmul.f32 %v1864, 1.442695
  %v1895 = vpow.pop %v1894
  %v1896 = vmul.f32 %v1865, 1.442695
  %v1897 = vpow.pop %v1896
  %v1898 = vmul.f32 %v1866, 1.442695
  %v1899 = vpow.pop %v1898
  %v1900 = vmul.f32 %v1867, 1.442695
  %v1901 = vpow.pop %v1900
  %v1902 = vmul.f32 %v1868, 1.442695
  %v1903 = vpow.pop %v1902
  %v1904 = vmul.f32 %v1869, 1.442695
  %v1905 = vpow.pop %v1904
  %v1906 = vmul.f32 %v1870, 1.442695
  %v1907 = vpow.pop %v1906
  %v1908 = vmul.f32 %v1871, 1.442695
  %v1909 = vpow.pop %v1908
  %v1910 = vmul.f32 %v1872, 1.442695
  %v1911 = vpow.pop %v1910
  %v1912 = vmul.f32 %v1873, 1.442695
  %v1913 = vpow.pop %v1912
  %v1914 = vmul.f32 %v1874, 1.442695
  %v1915 = vpow.pop %v1914
  %v1916 = vmul.f32 %v1875, 1.442695
  %v1917 = vpow.pop %v1916
  %v1918 = vmul.f32 %v1876, 1.442695
  %v1919 = vpow.pop %v1918
  %v1920 = vmul.f32 %v1877, 1.442695
  %v1921 = vpow.pop %v1920
  %v1922 = vmul.f32 %v1878, 1.442695
  %v1923 = vpow.pop %v1922
  %v1924 = vmul.f32 %v1879, 1.442695
  %v1925 = vpow.pop %v1924
  %v1926 = vmul.f32 %v1880, 1.442695
  %v1927 = vpow.pop %v1926
  %v1928 = vmul.f32 %v1881, 1.442695
  %v1929 = vpow.pop %v1928
  %v1930 = vmul.f32 %v1882, 1.442695
  %v1931 = vpow.pop %v1930
  %v1932 = vmul.f32 %v1883, 1.442695
  %v1933 = vpow.pop %v1932
  %v1934 = vmul.f32 %v1884, 1.442695
  %v1935 = vpow.pop %v1934
  %v1936 = vmul.f32 %v1885, 1.442695
  %v1937 = vpow.pop %v1936
  %v1938 = vmul.f32 %v1886, 1.442695
  %v1939 = vpow.pop %v1938
  %v1940 = vmul.f32 %v1887, 1.442695
  %v1941 = vpow.pop %v1940
  %v1942 = vmul.f32 %v1888, 1.442695
  %v1943 = vpow.pop %v1942
  %v1944 = vmul.f32 %v1889, 1.442695
  %v1945 = vpow.pop %v1944
  %v1946 = vsub.f32 %v1891, 1.0
  %v1947 = vsub.f32 %v1893, 1.0
  %v1948 = vsub.f32 %v1895, 1.0
  %v1949 = vsub.f32 %v1897, 1.0
  %v1950 = vsub.f32 %v1899, 1.0
  %v1951 = vsub.f32 %v1901, 1.0
  %v1952 = vsub.f32 %v1903, 1.0
  %v1953 = vsub.f32 %v1905, 1.0
  %v1954 = vsub.f32 %v1907, 1.0
  %v1955 = vsub.f32 %v1909, 1.0
  %v1956 = vsub.f32 %v1911, 1.0
  %v1957 = vsub.f32 %v1913, 1.0
  %v1958 = vsub.f32 %v1915, 1.0
  %v1959 = vsub.f32 %v1917, 1.0
  %v1960 = vsub.f32 %v1919, 1.0
  %v1961 = vsub.f32 %v1921, 1.0
  %v1962 = vsub.f32 %v1923, 1.0
  %v1963 = vsub.f32 %v1925, 1.0
  %v1964 = vsub.f32 %v1927, 1.0
  %v1965 = vsub.f32 %v1929, 1.0
  %v1966 = vsub.f32 %v1931, 1.0
  %v1967 = vsub.f32 %v1933, 1.0
  %v1968 = vsub.f32 %v1935, 1.0
  %v1969 = vsub.f32 %v1937, 1.0
  %v1970 = vsub.f32 %v1939, 1.0
  %v1971 = vsub.f32 %v1941, 1.0
  %v1972 = vsub.f32 %v1943, 1.0
  %v1973 = vsub.f32 %v1945, 1.0
  %v1974 = vsel %vm1834, %v1765, %v1946
  %v1975 = vsel %vm1835, %v1767, %v1947
  %v1976 = vsel %vm1836, %v1770, %v1948
  %v1977 = vsel %vm1837, %v1772, %v1949
  %v1978 = vsel %vm1838, %v1775, %v1950
  %v1979 = vsel %vm1839, %v1777, %v1951
  %v1980 = vsel %vm1840, %v1780, %v1952
  %v1981 = vsel %vm1841, %v1782, %v1953
  %v1982 = vsel %vm1842, %v1785, %v1954
  %v1983 = vsel %vm1843, %v1787, %v1955
  %v1984 = vsel %vm1844, %v1790, %v1956
  %v1985 = vsel %vm1845, %v1792, %v1957
  %v1986 = vsel %vm1846, %v1795, %v1958
  %v1987 = vsel %vm1847, %v1797, %v1959
  %v1988 = vsel %vm1848, %v1800, %v1960
  %v1989 = vsel %vm1849, %v1802, %v1961
  %v1990 = vsel %vm1850, %v1805, %v1962
  %v1991 = vsel %vm1851, %v1807, %v1963
  %v1992 = vsel %vm1852, %v1810, %v1964
  %v1993 = vsel %vm1853, %v1812, %v1965
  %v1994 = vsel %vm1854, %v1815, %v1966
  %v1995 = vsel %vm1855, %v1817, %v1967
  %v1996 = vsel %vm1856, %v1820, %v1968
  %v1997 = vsel %vm1857, %v1822, %v1969
  %v1998 = vsel %vm1858, %v1825, %v1970
  %v1999 = vsel %vm1859, %v1827, %v1971
  %v2000 = vsel %vm1860, %v1830, %v1972
  %v2001 = vsel %vm1861, %v1832, %v1973
  %v2002 = vpack.c.bf16 %v1974, %v1974
  %v2003 = vpack.c.bf16 %v1975, %v1975
  %v2004 = vpack.c.bf16 %v1976, %v1976
  %v2005 = vpack.c.bf16 %v1977, %v1977
  %v2006 = vpack.c.bf16 %v1978, %v1978
  %v2007 = vpack.c.bf16 %v1979, %v1979
  %v2008 = vpack.c.bf16 %v1980, %v1980
  %v2009 = vpack.c.bf16 %v1981, %v1981
  %v2010 = vpack.c.bf16 %v1982, %v1982
  %v2011 = vpack.c.bf16 %v1983, %v1983
  %v2012 = vpack.c.bf16 %v1984, %v1984
  %v2013 = vpack.c.bf16 %v1985, %v1985
  %v2014 = vpack.c.bf16 %v1986, %v1986
  %v2015 = vpack.c.bf16 %v1987, %v1987
  %v2016 = vpack.c.bf16 %v1988, %v1988
  %v2017 = vpack.c.bf16 %v1989, %v1989
  %v2018 = vpack.c.bf16 %v1990, %v1990
  %v2019 = vpack.c.bf16 %v1991, %v1991
  %v2020 = vpack.c.bf16 %v1992, %v1992
  %v2021 = vpack.c.bf16 %v1993, %v1993
  %v2022 = vpack.c.bf16 %v1994, %v1994
  %v2023 = vpack.c.bf16 %v1995, %v1995
  %v2024 = vpack.c.bf16 %v1996, %v1996
  %v2025 = vpack.c.bf16 %v1997, %v1997
  %v2026 = vpack.c.bf16 %v1998, %v1998
  %v2027 = vpack.c.bf16 %v1999, %v1999
  %v2028 = vpack.c.bf16 %v2000, %v2000
  %v2029 = vpack.c.bf16 %v2001, %v2001
  %2030 = vst [vmem:[%s3] sm:$0xf] %v2002
  %2031 = vst [vmem:[%s3 + $0x4] sm:$0xf] %v2003
  %2032 = vst [vmem:[%s3 + $0x8] sm:$0xf] %v2004
  %2033 = vst [vmem:[%s3 + $0xc] sm:$0xf] %v2005
  %2034 = vst [vmem:[%s3 + $0x10] sm:$0xf] %v2006
  %2035 = vst [vmem:[%s3 + $0x14] sm:$0xf] %v2007
  %2036 = vst [vmem:[%s3 + $0x18] sm:$0xf] %v2008
  %2037 = vst [vmem:[%s3 + $0x1c] sm:$0xf] %v2009
  %2038 = vst [vmem:[%s3 + $0x20] sm:$0xf] %v2010
  %2039 = vst [vmem:[%s3 + $0x24] sm:$0xf] %v2011
  %2040 = vst [vmem:[%s3 + $0x28] sm:$0xf] %v2012
  %2041 = vst [vmem:[%s3 + $0x2c] sm:$0xf] %v2013
  %2042 = vst [vmem:[%s3 + $0x30] sm:$0xf] %v2014
  %2043 = vst [vmem:[%s3 + $0x34] sm:$0xf] %v2015
  %2044 = vst [vmem:[%s3 + $0x38] sm:$0xf] %v2016
  %2045 = vst [vmem:[%s3 + $0x3c] sm:$0xf] %v2017
  %2046 = vst [vmem:[%s3 + $0x40] sm:$0xf] %v2018
  %2047 = vst [vmem:[%s3 + $0x44] sm:$0xf] %v2019
  %2048 = vst [vmem:[%s3 + $0x48] sm:$0xf] %v2020
  %2049 = vst [vmem:[%s3 + $0x4c] sm:$0xf] %v2021
  %2050 = vst [vmem:[%s3 + $0x50] sm:$0xf] %v2022
  %2051 = vst [vmem:[%s3 + $0x54] sm:$0xf] %v2023
  %2052 = vst [vmem:[%s3 + $0x58] sm:$0xf] %v2024
  %2053 = vst [vmem:[%s3 + $0x5c] sm:$0xf] %v2025
  %2054 = vst [vmem:[%s3 + $0x60] sm:$0xf] %v2026
  %2055 = vst [vmem:[%s3 + $0x64] sm:$0xf] %v2027
  %2056 = vst [vmem:[%s3 + $0x68] sm:$0xf] %v2028
  %2057 = vst [vmem:[%s3 + $0x6c] sm:$0xf] %v2029
  // Predicated region
  $region14: #{net_forward.8} parent=0 // pred_check
    _
  $region15: #{net_forward.8} parent=0 // pred_check_branch
    %2059 = sbr.rel (0) target = $region17
  $region16: #{net_forward.8} parent=0 // pred_region
    _
  $region17: #{net_forward.8} parent=0 // pred_fallthru
    _
  // Predicated region
  $region18: #{net_forward.8} parent=0 // pred_check
    _
  $region19: #{net_forward.8} parent=0 // pred_check_branch
    %2061 = sbr.rel (0) target = $region21
  $region20: #{net_forward.8} parent=0 // pred_region
    _
  $region21: #{net_forward.8} parent=0 // pred_fallthru
    _

// kernel: net_forward.9
$region0: #{net_forward.9}
  #allocation0 [shape = 'u32[]', space=smem, size = 0x4, offset = 0x4, fixed_abs, tag = 'smem constant byte address 0x4 - core index']
  #allocation1 [shape = 'u32[72,128]{1,0:T(1,128)}', space=vmem, size = 0x9000, scoped, tag = 'internal scratch']
  %s0 = inlined_call_operand.vmem [shape: bf16[120,512], index: 0, kind: input, shape index: {}]
  %s1 = inlined_call_operand.vmem [shape: bf16[512,128], index: 1, kind: input, shape index: {}]
  %s2 = inlined_call_operand.vmem [shape: f32[1,128], index: 2, kind: input, shape index: {}]
  %s3 = inlined_call_operand.vmem [shape: bf16[120,128], index: 3, kind: output, shape index: {}]
  %s4 = sld [smem:[#allocation0]]
  $region22: #{net_forward.9} parent=0
    _
  %s6 = ssub.s32 1, %s4
  %s7 = scalar_select 0, %s6, %s4
  // Predicated region
  $region2: #{net_forward.9} parent=0 // pred_check
    _
  $region3: #{net_forward.9} parent=0 // pred_check_branch
    %9 = sbr.rel (0) target = $region5
  $region4: #{net_forward.9} parent=0 // pred_region
    _
  $region5: #{net_forward.9} parent=0 // pred_fallthru
    _
  // Predicated region
  $region6: #{net_forward.9} parent=0 // pred_check
    _
  $region7: #{net_forward.9} parent=0 // pred_check_branch
    %11 = sbr.rel (0) target = $region9
  $region8: #{net_forward.9} parent=0 // pred_region
    _
  $region9: #{net_forward.9} parent=0 // pred_fallthru
    _
  // Predicated region
  $region10: #{net_forward.9} parent=0 // pred_check
    _
  $region11: #{net_forward.9} parent=0 // pred_check_branch
    %13 = sbr.rel (0) target = $region13
  $region12: #{net_forward.9} parent=0 // pred_region
    _
  $region13: #{net_forward.9} parent=0 // pred_fallthru
    _
  %v14 = vld [vmem:[%s0] sm:$0xff]
  %v15 = vld [vmem:[%s0 + $0x8] sm:$0xff]
  %v16 = vld [vmem:[%s0 + $0x10] sm:$0xff]
  %v17 = vld [vmem:[%s0 + $0x18] sm:$0xff]
  %v18 = vld [vmem:[%s0 + $0x20] sm:$0xff]
  %v19 = vld [vmem:[%s0 + $0x28] sm:$0xff]
  %v20 = vld [vmem:[%s0 + $0x30] sm:$0xff]
  %v21 = vld [vmem:[%s0 + $0x38] sm:$0xff]
  %v22 = vld [vmem:[%s0 + $0x40] sm:$0xff]
  %v23 = vld [vmem:[%s0 + $0x48] sm:$0xff]
  %v24 = vld [vmem:[%s0 + $0x50] sm:$0xff]
  %v25 = vld [vmem:[%s0 + $0x58] sm:$0xff]
  %v26 = vld [vmem:[%s0 + $0x60] sm:$0xff]
  %v27 = vld [vmem:[%s0 + $0x68] sm:$0xff]
  %v28 = vld [vmem:[%s0 + $0x70] sm:$0xff]
  %v29 = vld [vmem:[%s0 + $0x78] sm:$0xff]
  %v30 = vld [vmem:[%s0 + $0x80] sm:$0xff]
  %v31 = vld [vmem:[%s0 + $0x88] sm:$0xff]
  %v32 = vld [vmem:[%s0 + $0x90] sm:$0xff]
  %v33 = vld [vmem:[%s0 + $0x98] sm:$0xff]
  %v34 = vld [vmem:[%s0 + $0xa0] sm:$0xff]
  %v35 = vld [vmem:[%s0 + $0xa8] sm:$0xff]
  %v36 = vld [vmem:[%s0 + $0xb0] sm:$0xff]
  %v37 = vld [vmem:[%s0 + $0xb8] sm:$0xff]
  %v38 = vld [vmem:[%s0 + $0xc0] sm:$0xff]
  %v39 = vld [vmem:[%s0 + $0xc8] sm:$0xff]
  %v40 = vld [vmem:[%s0 + $0xd0] sm:$0xff]
  %v41 = vld [vmem:[%s0 + $0xd8] sm:$0xff]
  %v42 = vld [vmem:[%s0 + $0xe0] sm:$0xff]
  %v43 = vld [vmem:[%s0 + $0xe8] sm:$0xff]
  %v44 = vld [vmem:[%s1] sm:$0xf]
  %v45 = vld [vmem:[%s1 + $0x4] sm:$0xf]
  %v46 = vld [vmem:[%s1 + $0x8] sm:$0xf]
  %v47 = vld [vmem:[%s1 + $0xc] sm:$0xf]
  %v48 = vld [vmem:[%s1 + $0x10] sm:$0xf]
  %v49 = vld [vmem:[%s1 + $0x14] sm:$0xf]
  %v50 = vld [vmem:[%s1 + $0x18] sm:$0xf]
  %v51 = vld [vmem:[%s1 + $0x1c] sm:$0xf]
  %v52 = vld [vmem:[%s1 + $0x20] sm:$0xf]
  %v53 = vld [vmem:[%s1 + $0x24] sm:$0xf]
  %v54 = vld [vmem:[%s1 + $0x28] sm:$0xf]
  %v55 = vld [vmem:[%s1 + $0x2c] sm:$0xf]
  %v56 = vld [vmem:[%s1 + $0x30] sm:$0xf]
  %v57 = vld [vmem:[%s1 + $0x34] sm:$0xf]
  %v58 = vld [vmem:[%s1 + $0x38] sm:$0xf]
  %v59 = vld [vmem:[%s1 + $0x3c] sm:$0xf]
  %v60 = vld [vmem:[%s1 + $0x40] sm:$0xf]
  %v61 = vld [vmem:[%s1 + $0x44] sm:$0xf]
  %v62 = vld [vmem:[%s1 + $0x48] sm:$0xf]
  %v63 = vld [vmem:[%s1 + $0x4c] sm:$0xf]
  %v64 = vld [vmem:[%s1 + $0x50] sm:$0xf]
  %v65 = vld [vmem:[%s1 + $0x54] sm:$0xf]
  %v66 = vld [vmem:[%s1 + $0x58] sm:$0xf]
  %v67 = vld [vmem:[%s1 + $0x5c] sm:$0xf]
  %v68 = vld [vmem:[%s1 + $0x60] sm:$0xf]
  %v69 = vld [vmem:[%s1 + $0x64] sm:$0xf]
  %v70 = vld [vmem:[%s1 + $0x68] sm:$0xf]
  %v71 = vld [vmem:[%s1 + $0x6c] sm:$0xf]
  %v72 = vld [vmem:[%s1 + $0x70] sm:$0xf]
  %v73 = vld [vmem:[%s1 + $0x74] sm:$0xf]
  %v74 = vld [vmem:[%s1 + $0x78] sm:$0xf]
  %v75 = vld [vmem:[%s1 + $0x7c] sm:$0xf]
  %v76 = vld [vmem:[%s1 + $0x80] sm:$0xf]
  %v77 = vld [vmem:[%s1 + $0x84] sm:$0xf]
  %v78 = vld [vmem:[%s1 + $0x88] sm:$0xf]
  %v79 = vld [vmem:[%s1 + $0x8c] sm:$0xf]
  %v80 = vld [vmem:[%s1 + $0x90] sm:$0xf]
  %v81 = vld [vmem:[%s1 + $0x94] sm:$0xf]
  %v82 = vld [vmem:[%s1 + $0x98] sm:$0xf]
  %v83 = vld [vmem:[%s1 + $0x9c] sm:$0xf]
  %v84 = vld [vmem:[%s1 + $0xa0] sm:$0xf]
  %v85 = vld [vmem:[%s1 + $0xa4] sm:$0xf]
  %v86 = vld [vmem:[%s1 + $0xa8] sm:$0xf]
  %v87 = vld [vmem:[%s1 + $0xac] sm:$0xf]
  %v88 = vld [vmem:[%s1 + $0xb0] sm:$0xf]
  %v89 = vld [vmem:[%s1 + $0xb4] sm:$0xf]
  %v90 = vld [vmem:[%s1 + $0xb8] sm:$0xf]
  %v91 = vld [vmem:[%s1 + $0xbc] sm:$0xf]
  %v92 = vld [vmem:[%s1 + $0xc0] sm:$0xf]
  %v93 = vld [vmem:[%s1 + $0xc4] sm:$0xf]
  %v94 = vld [vmem:[%s1 + $0xc8] sm:$0xf]
  %v95 = vld [vmem:[%s1 + $0xcc] sm:$0xf]
  %v96 = vld [vmem:[%s1 + $0xd0] sm:$0xf]
  %v97 = vld [vmem:[%s1 + $0xd4] sm:$0xf]
  %v98 = vld [vmem:[%s1 + $0xd8] sm:$0xf]
  %v99 = vld [vmem:[%s1 + $0xdc] sm:$0xf]
  %v100 = vld [vmem:[%s1 + $0xe0] sm:$0xf]
  %v101 = vld [vmem:[%s1 + $0xe4] sm:$0xf]
  %v102 = vld [vmem:[%s1 + $0xe8] sm:$0xf]
  %v103 = vld [vmem:[%s1 + $0xec] sm:$0xf]
  %v104 = vld [vmem:[%s1 + $0xf0] sm:$0xf]
  %v105 = vld [vmem:[%s1 + $0xf4] sm:$0xf]
  %v106 = vld [vmem:[%s1 + $0xf8] sm:$0xf]
  %v107 = vld [vmem:[%s1 + $0xfc] sm:$0xf]
  %v108 = vld [vmem:[%s2] sm:$0x1]
  %v110 = vperm.slane %v108, 0
  %v142 = vunpack.c.l.b16 %v14
  %v143 = vunpack.c.h.b16 %v14
  %v144 = vunpack.c.l.b16 %v15
  %v145 = vunpack.c.h.b16 %v15
  %v146 = vunpack.c.l.b16 %v16
  %v147 = vunpack.c.h.b16 %v16
  %v148 = vunpack.c.l.b16 %v17
  %v149 = vunpack.c.h.b16 %v17
  %v150 = vunpack.c.l.b16 %v18
  %v151 = vunpack.c.h.b16 %v18
  %v152 = vunpack.c.l.b16 %v19
  %v153 = vunpack.c.h.b16 %v19
  %v154 = vunpack.c.l.b16 %v20
  %v155 = vunpack.c.h.b16 %v20
  %v156 = vunpack.c.l.b16 %v21
  %v157 = vunpack.c.h.b16 %v21
  %v158 = vunpack.c.l.b16 %v22
  %v159 = vunpack.c.h.b16 %v22
  %v160 = vunpack.c.l.b16 %v23
  %v161 = vunpack.c.h.b16 %v23
  %v162 = vunpack.c.l.b16 %v24
  %v163 = vunpack.c.h.b16 %v24
  %v164 = vunpack.c.l.b16 %v25
  %v165 = vunpack.c.h.b16 %v25
  %v166 = vunpack.c.l.b16 %v26
  %v167 = vunpack.c.h.b16 %v26
  %v168 = vunpack.c.l.b16 %v27
  %v169 = vunpack.c.h.b16 %v27
  %v170 = vunpack.c.l.b16 %v28
  %v171 = vunpack.c.h.b16 %v28
  %v172 = vunpack.c.l.b16 %v29
  %v173 = vunpack.c.h.b16 %v29
  %v174 = vunpack.c.l.b16 %v30
  %v175 = vunpack.c.h.b16 %v30
  %v176 = vunpack.c.l.b16 %v31
  %v177 = vunpack.c.h.b16 %v31
  %v178 = vunpack.c.l.b16 %v32
  %v179 = vunpack.c.h.b16 %v32
  %v180 = vunpack.c.l.b16 %v33
  %v181 = vunpack.c.h.b16 %v33
  %v182 = vunpack.c.l.b16 %v34
  %v183 = vunpack.c.h.b16 %v34
  %v184 = vunpack.c.l.b16 %v35
  %v185 = vunpack.c.h.b16 %v35
  %v186 = vunpack.c.l.b16 %v36
  %v187 = vunpack.c.h.b16 %v36
  %v188 = vunpack.c.l.b16 %v37
  %v189 = vunpack.c.h.b16 %v37
  %v190 = vunpack.c.l.b16 %v38
  %v191 = vunpack.c.h.b16 %v38
  %v192 = vunpack.c.l.b16 %v39
  %v193 = vunpack.c.h.b16 %v39
  %v194 = vunpack.c.l.b16 %v40
  %v195 = vunpack.c.h.b16 %v40
  %v196 = vunpack.c.l.b16 %v41
  %v197 = vunpack.c.h.b16 %v41
  %v198 = vunpack.c.l.b16 %v42
  %v199 = vunpack.c.h.b16 %v42
  %v200 = vunpack.c.l.b16 %v43
  %v201 = vunpack.c.h.b16 %v43
  %v202 = vpack.c.b16 %v146, %v142
  %v203 = vpack.c.b16 %v147, %v143
  %v204 = vpack.c.b16 %v148, %v144
  %v205 = vpack.c.b16 %v149, %v145
  %v206 = vpack.c.b16 %v154, %v150
  %v207 = vpack.c.b16 %v155, %v151
  %v208 = vpack.c.b16 %v156, %v152
  %v209 = vpack.c.b16 %v157, %v153
  %v210 = vpack.c.b16 %v162, %v158
  %v211 = vpack.c.b16 %v163, %v159
  %v212 = vpack.c.b16 %v164, %v160
  %v213 = vpack.c.b16 %v165, %v161
  %v214 = vpack.c.b16 %v170, %v166
  %v215 = vpack.c.b16 %v171, %v167
  %v216 = vpack.c.b16 %v172, %v168
  %v217 = vpack.c.b16 %v173, %v169
  %v218 = vpack.c.b16 %v178, %v174
  %v219 = vpack.c.b16 %v179, %v175
  %v220 = vpack.c.b16 %v180, %v176
  %v221 = vpack.c.b16 %v181, %v177
  %v222 = vpack.c.b16 %v186, %v182
  %v223 = vpack.c.b16 %v187, %v183
  %v224 = vpack.c.b16 %v188, %v184
  %v225 = vpack.c.b16 %v189, %v185
  %v226 = vpack.c.b16 %v194, %v190
  %v227 = vpack.c.b16 %v195, %v191
  %v228 = vpack.c.b16 %v196, %v192
  %v229 = vpack.c.b16 %v197, %v193
  %v230 = vpack.c.b16 %v198, %v198
  %v231 = vpack.c.b16 %v199, %v199
  %v232 = vpack.c.b16 %v200, %v200
  %v233 = vpack.c.b16 %v201, %v201
  %v330 = vunpack.c.l.b16 %v44
  %v331 = vunpack.c.l.b16 %v45
  %v332 = vunpack.c.l.b16 %v46
  %v333 = vunpack.c.l.b16 %v47
  %v334 = vunpack.c.l.b16 %v48
  %v335 = vunpack.c.l.b16 %v49
  %v336 = vunpack.c.l.b16 %v50
  %v337 = vunpack.c.l.b16 %v51
  %v338 = vunpack.c.l.b16 %v52
  %v339 = vunpack.c.l.b16 %v53
  %v340 = vunpack.c.l.b16 %v54
  %v341 = vunpack.c.l.b16 %v55
  %v342 = vunpack.c.l.b16 %v56
  %v343 = vunpack.c.l.b16 %v57
  %v344 = vunpack.c.l.b16 %v58
  %v345 = vunpack.c.l.b16 %v59
  %v346 = vunpack.c.l.b16 %v60
  %v347 = vunpack.c.l.b16 %v61
  %v348 = vunpack.c.l.b16 %v62
  %v349 = vunpack.c.l.b16 %v63
  %v350 = vunpack.c.l.b16 %v64
  %v351 = vunpack.c.l.b16 %v65
  %v352 = vunpack.c.l.b16 %v66
  %v353 = vunpack.c.l.b16 %v67
  %v354 = vunpack.c.l.b16 %v68
  %v355 = vunpack.c.l.b16 %v69
  %v356 = vunpack.c.l.b16 %v70
  %v357 = vunpack.c.l.b16 %v71
  %v358 = vunpack.c.l.b16 %v72
  %v359 = vunpack.c.l.b16 %v73
  %v360 = vunpack.c.l.b16 %v74
  %v361 = vunpack.c.l.b16 %v75
  %v362 = vunpack.c.l.b16 %v76
  %v363 = vunpack.c.l.b16 %v77
  %v364 = vunpack.c.l.b16 %v78
  %v365 = vunpack.c.l.b16 %v79
  %v366 = vunpack.c.l.b16 %v80
  %v367 = vunpack.c.l.b16 %v81
  %v368 = vunpack.c.l.b16 %v82
  %v369 = vunpack.c.l.b16 %v83
  %v370 = vunpack.c.l.b16 %v84
  %v371 = vunpack.c.l.b16 %v85
  %v372 = vunpack.c.l.b16 %v86
  %v373 = vunpack.c.l.b16 %v87
  %v374 = vunpack.c.l.b16 %v88
  %v375 = vunpack.c.l.b16 %v89
  %v376 = vunpack.c.l.b16 %v90
  %v377 = vunpack.c.l.b16 %v91
  %v378 = vunpack.c.l.b16 %v92
  %v379 = vunpack.c.l.b16 %v93
  %v380 = vunpack.c.l.b16 %v94
  %v381 = vunpack.c.l.b16 %v95
  %v382 = vunpack.c.l.b16 %v96
  %v383 = vunpack.c.l.b16 %v97
  %v384 = vunpack.c.l.b16 %v98
  %v385 = vunpack.c.l.b16 %v99
  %v386 = vunpack.c.l.b16 %v100
  %v387 = vunpack.c.l.b16 %v101
  %v388 = vunpack.c.l.b16 %v102
  %v389 = vunpack.c.l.b16 %v103
  %v390 = vunpack.c.l.b16 %v104
  %v391 = vunpack.c.l.b16 %v105
  %v392 = vunpack.c.l.b16 %v106
  %v393 = vunpack.c.l.b16 %v107
  %v394 = vpack.c.b16 %v331, %v330
  %v395 = vpack.c.b16 %v333, %v332
  %v396 = vpack.c.b16 %v335, %v334
  %v397 = vpack.c.b16 %v337, %v336
  %v398 = vpack.c.b16 %v339, %v338
  %v399 = vpack.c.b16 %v341, %v340
  %v400 = vpack.c.b16 %v343, %v342
  %v401 = vpack.c.b16 %v345, %v344
  %v402 = vpack.c.b16 %v347, %v346
  %v403 = vpack.c.b16 %v349, %v348
  %v404 = vpack.c.b16 %v351, %v350
  %v405 = vpack.c.b16 %v353, %v352
  %v406 = vpack.c.b16 %v355, %v354
  %v407 = vpack.c.b16 %v357, %v356
  %v408 = vpack.c.b16 %v359, %v358
  %v409 = vpack.c.b16 %v361, %v360
  %v410 = vpack.c.b16 %v363, %v362
  %v411 = vpack.c.b16 %v365, %v364
  %v412 = vpack.c.b16 %v367, %v366
  %v413 = vpack.c.b16 %v369, %v368
  %v414 = vpack.c.b16 %v371, %v370
  %v415 = vpack.c.b16 %v373, %v372
  %v416 = vpack.c.b16 %v375, %v374
  %v417 = vpack.c.b16 %v377, %v376
  %v418 = vpack.c.b16 %v379, %v378
  %v419 = vpack.c.b16 %v381, %v380
  %v420 = vpack.c.b16 %v383, %v382
  %v421 = vpack.c.b16 %v385, %v384
  %v422 = vpack.c.b16 %v387, %v386
  %v423 = vpack.c.b16 %v389, %v388
  %v424 = vpack.c.b16 %v391, %v390
  %v425 = vpack.c.b16 %v393, %v392
  %458 = vmatpush.bf16.msra.mxu0 %v401
  %459 = vmatpush.bf16.msra.mxu0 %v400
  %460 = vmatpush.bf16.msra.mxu0 %v399
  %461 = vmatpush.bf16.msra.mxu0 %v398
  %462 = vmatpush.bf16.msra.mxu0 %v397
  %463 = vmatpush.bf16.msra.mxu0 %v396
  %464 = vmatpush.bf16.msra.mxu0 %v395
  %465 = vmatpush.bf16.msra.mxu0 %v394
  %466 = vmatmul.bf16.gmra.mxu0 %v202
  %v467 = vpop.f32.mrf.mxu0
  %v468 = vadd.f32 %v110, %v467
  %v469 = vpop.f32.mrf.mxu0
  %v470 = vadd.f32 %v110, %v469
  %471 = vmatmul.bf16.gmra.mxu0 %v206
  %v472 = vpop.f32.mrf.mxu0
  %v473 = vadd.f32 %v110, %v472
  %v474 = vpop.f32.mrf.mxu0
  %v475 = vadd.f32 %v110, %v474
  %476 = vmatmul.bf16.gmra.mxu0 %v210
  %v477 = vpop.f32.mrf.mxu0
  %v478 = vadd.f32 %v110, %v477
  %v479 = vpop.f32.mrf.mxu0
  %v480 = vadd.f32 %v110, %v479
  %481 = vmatmul.bf16.gmra.mxu0 %v214
  %v482 = vpop.f32.mrf.mxu0
  %v483 = vadd.f32 %v110, %v482
  %v484 = vpop.f32.mrf.mxu0
  %v485 = vadd.f32 %v110, %v484
  %486 = vmatmul.bf16.gmra.mxu0 %v218
  %v487 = vpop.f32.mrf.mxu0
  %v488 = vadd.f32 %v110, %v487
  %v489 = vpop.f32.mrf.mxu0
  %v490 = vadd.f32 %v110, %v489
  %491 = vmatmul.bf16.gmra.mxu0 %v222
  %v492 = vpop.f32.mrf.mxu0
  %v493 = vadd.f32 %v110, %v492
  %v494 = vpop.f32.mrf.mxu0
  %v495 = vadd.f32 %v110, %v494
  %496 = vmatmul.bf16.gmra.mxu0 %v226
  %v497 = vpop.f32.mrf.mxu0
  %v498 = vadd.f32 %v110, %v497
  %v499 = vpop.f32.mrf.mxu0
  %v500 = vadd.f32 %v110, %v499
  %501 = vmatmul.bf16.gmra.mxu0 %v230
  %v502 = vpop.f32.mrf.mxu0
  %v503 = vadd.f32 %v110, %v502
  %v504 = vpop.f32.mrf.mxu0
  %505 = vdwg.mxu0
  %506 = vmatpush.bf16.msra.mxu0 %v409
  %507 = vmatpush.bf16.msra.mxu0 %v408
  %508 = vmatpush.bf16.msra.mxu0 %v407
  %509 = vmatpush.bf16.msra.mxu0 %v406
  %510 = vmatpush.bf16.msra.mxu0 %v405
  %511 = vmatpush.bf16.msra.mxu0 %v404
  %512 = vmatpush.bf16.msra.mxu0 %v403
  %513 = vmatpush.bf16.msra.mxu0 %v402
  %514 = vmatmul.bf16.gmra.mxu0 %v203
  %v515 = vpop.f32.mrf.mxu0
  %v516 = vadd.f32 %v468, %v515
  %v517 = vpop.f32.mrf.mxu0
  %v518 = vadd.f32 %v470, %v517
  %519 = vmatmul.bf16.gmra.mxu0 %v207
  %v520 = vpop.f32.mrf.mxu0
  %v521 = vadd.f32 %v473, %v520
  %v522 = vpop.f32.mrf.mxu0
  %v523 = vadd.f32 %v475, %v522
  %524 = vmatmul.bf16.gmra.mxu0 %v211
  %v525 = vpop.f32.mrf.mxu0
  %v526 = vadd.f32 %v478, %v525
  %v527 = vpop.f32.mrf.mxu0
  %v528 = vadd.f32 %v480, %v527
  %529 = vmatmul.bf16.gmra.mxu0 %v215
  %v530 = vpop.f32.mrf.mxu0
  %v531 = vadd.f32 %v483, %v530
  %v532 = vpop.f32.mrf.mxu0
  %v533 = vadd.f32 %v485, %v532
  %534 = vmatmul.bf16.gmra.mxu0 %v219
  %v535 = vpop.f32.mrf.mxu0
  %v536 = vadd.f32 %v488, %v535
  %v537 = vpop.f32.mrf.mxu0
  %v538 = vadd.f32 %v490, %v537
  %539 = vmatmul.bf16.gmra.mxu0 %v223
  %v540 = vpop.f32.mrf.mxu0
  %v541 = vadd.f32 %v493, %v540
  %v542 = vpop.f32.mrf.mxu0
  %v543 = vadd.f32 %v495, %v542
  %544 = vmatmul.bf16.gmra.mxu0 %v227
  %v545 = vpop.f32.mrf.mxu0
  %v546 = vadd.f32 %v498, %v545
  %v547 = vpop.f32.mrf.mxu0
  %v548 = vadd.f32 %v500, %v547
  %549 = vmatmul.bf16.gmra.mxu0 %v231
  %v550 = vpop.f32.mrf.mxu0
  %v551 = vadd.f32 %v503, %v550
  %v552 = vpop.f32.mrf.mxu0
  %553 = vdwg.mxu0
  %554 = vmatpush.bf16.msra.mxu0 %v417
  %555 = vmatpush.bf16.msra.mxu0 %v416
  %556 = vmatpush.bf16.msra.mxu0 %v415
  %557 = vmatpush.bf16.msra.mxu0 %v414
  %558 = vmatpush.bf16.msra.mxu0 %v413
  %559 = vmatpush.bf16.msra.mxu0 %v412
  %560 = vmatpush.bf16.msra.mxu0 %v411
  %561 = vmatpush.bf16.msra.mxu0 %v410
  %562 = vmatmul.bf16.gmra.mxu0 %v204
  %v563 = vpop.f32.mrf.mxu0
  %v564 = vadd.f32 %v516, %v563
  %v565 = vpop.f32.mrf.mxu0
  %v566 = vadd.f32 %v518, %v565
  %567 = vmatmul.bf16.gmra.mxu0 %v208
  %v568 = vpop.f32.mrf.mxu0
  %v569 = vadd.f32 %v521, %v568
  %v570 = vpop.f32.mrf.mxu0
  %v571 = vadd.f32 %v523, %v570
  %572 = vmatmul.bf16.gmra.mxu0 %v212
  %v573 = vpop.f32.mrf.mxu0
  %v574 = vadd.f32 %v526, %v573
  %v575 = vpop.f32.mrf.mxu0
  %v576 = vadd.f32 %v528, %v575
  %577 = vmatmul.bf16.gmra.mxu0 %v216
  %v578 = vpop.f32.mrf.mxu0
  %v579 = vadd.f32 %v531, %v578
  %v580 = vpop.f32.mrf.mxu0
  %v581 = vadd.f32 %v533, %v580
  %582 = vmatmul.bf16.gmra.mxu0 %v220
  %v583 = vpop.f32.mrf.mxu0
  %v584 = vadd.f32 %v536, %v583
  %v585 = vpop.f32.mrf.mxu0
  %v586 = vadd.f32 %v538, %v585
  %587 = vmatmul.bf16.gmra.mxu0 %v224
  %v588 = vpop.f32.mrf.mxu0
  %v589 = vadd.f32 %v541, %v588
  %v590 = vpop.f32.mrf.mxu0
  %v591 = vadd.f32 %v543, %v590
  %592 = vmatmul.bf16.gmra.mxu0 %v228
  %v593 = vpop.f32.mrf.mxu0
  %v594 = vadd.f32 %v546, %v593
  %v595 = vpop.f32.mrf.mxu0
  %v596 = vadd.f32 %v548, %v595
  %597 = vmatmul.bf16.gmra.mxu0 %v232
  %v598 = vpop.f32.mrf.mxu0
  %v599 = vadd.f32 %v551, %v598
  %v600 = vpop.f32.mrf.mxu0
  %601 = vdwg.mxu0
  %602 = vmatpush.bf16.msra.mxu0 %v425
  %603 = vmatpush.bf16.msra.mxu0 %v424
  %604 = vmatpush.bf16.msra.mxu0 %v423
  %605 = vmatpush.bf16.msra.mxu0 %v422
  %606 = vmatpush.bf16.msra.mxu0 %v421
  %607 = vmatpush.bf16.msra.mxu0 %v420
  %608 = vmatpush.bf16.msra.mxu0 %v419
  %609 = vmatpush.bf16.msra.mxu0 %v418
  %610 = vmatmul.bf16.gmra.mxu0 %v205
  %v611 = vpop.f32.mrf.mxu0
  %v612 = vadd.f32 %v564, %v611
  %v613 = vpop.f32.mrf.mxu0
  %v614 = vadd.f32 %v566, %v613
  %615 = vmatmul.bf16.gmra.mxu0 %v209
  %v616 = vpop.f32.mrf.mxu0
  %v617 = vadd.f32 %v569, %v616
  %v618 = vpop.f32.mrf.mxu0
  %v619 = vadd.f32 %v571, %v618
  %620 = vmatmul.bf16.gmra.mxu0 %v213
  %v621 = vpop.f32.mrf.mxu0
  %v622 = vadd.f32 %v574, %v621
  %v623 = vpop.f32.mrf.mxu0
  %v624 = vadd.f32 %v576, %v623
  %625 = vmatmul.bf16.gmra.mxu0 %v217
  %v626 = vpop.f32.mrf.mxu0
  %v627 = vadd.f32 %v579, %v626
  %v628 = vpop.f32.mrf.mxu0
  %v629 = vadd.f32 %v581, %v628
  %630 = vmatmul.bf16.gmra.mxu0 %v221
  %v631 = vpop.f32.mrf.mxu0
  %v632 = vadd.f32 %v584, %v631
  %v633 = vpop.f32.mrf.mxu0
  %v634 = vadd.f32 %v586, %v633
  %635 = vmatmul.bf16.gmra.mxu0 %v225
  %v636 = vpop.f32.mrf.mxu0
  %v637 = vadd.f32 %v589, %v636
  %v638 = vpop.f32.mrf.mxu0
  %v639 = vadd.f32 %v591, %v638
  %640 = vmatmul.bf16.gmra.mxu0 %v229
  %v641 = vpop.f32.mrf.mxu0
  %v642 = vadd.f32 %v594, %v641
  %v643 = vpop.f32.mrf.mxu0
  %v644 = vadd.f32 %v596, %v643
  %645 = vmatmul.bf16.gmra.mxu0 %v233
  %v646 = vpop.f32.mrf.mxu0
  %v647 = vadd.f32 %v599, %v646
  %v648 = vpop.f32.mrf.mxu0
  %649 = vdwg.mxu0
  %vm650 = vcmp.gt.f32.partialorder %v612, 0.0
  %vm651 = vcmp.gt.f32.partialorder %v614, 0.0
  %vm652 = vcmp.gt.f32.partialorder %v617, 0.0
  %vm653 = vcmp.gt.f32.partialorder %v619, 0.0
  %vm654 = vcmp.gt.f32.partialorder %v622, 0.0
  %vm655 = vcmp.gt.f32.partialorder %v624, 0.0
  %vm656 = vcmp.gt.f32.partialorder %v627, 0.0
  %vm657 = vcmp.gt.f32.partialorder %v629, 0.0
  %vm658 = vcmp.gt.f32.partialorder %v632, 0.0
  %vm659 = vcmp.gt.f32.partialorder %v634, 0.0
  %vm660 = vcmp.gt.f32.partialorder %v637, 0.0
  %vm661 = vcmp.gt.f32.partialorder %v639, 0.0
  %vm662 = vcmp.gt.f32.partialorder %v642, 0.0
  %vm663 = vcmp.gt.f32.partialorder %v644, 0.0
  %vm664 = vcmp.gt.f32.partialorder %v647, 0.0
  %v665 = vmin.f32 %v612, 0.0
  %v666 = vmin.f32 %v614, 0.0
  %v667 = vmin.f32 %v617, 0.0
  %v668 = vmin.f32 %v619, 0.0
  %v669 = vmin.f32 %v622, 0.0
  %v670 = vmin.f32 %v624, 0.0
  %v671 = vmin.f32 %v627, 0.0
  %v672 = vmin.f32 %v629, 0.0
  %v673 = vmin.f32 %v632, 0.0
  %v674 = vmin.f32 %v634, 0.0
  %v675 = vmin.f32 %v637, 0.0
  %v676 = vmin.f32 %v639, 0.0
  %v677 = vmin.f32 %v642, 0.0
  %v678 = vmin.f32 %v644, 0.0
  %v679 = vmin.f32 %v647, 0.0
  %v680 = vmul.f32 %v665, 1.442695
  %v681 = vpow.pop %v680
  %v682 = vmul.f32 %v666, 1.442695
  %v683 = vpow.pop %v682
  %v684 = vmul.f32 %v667, 1.442695
  %v685 = vpow.pop %v684
  %v686 = vmul.f32 %v668, 1.442695
  %v687 = vpow.pop %v686
  %v688 = vmul.f32 %v669, 1.442695
  %v689 = vpow.pop %v688
  %v690 = vmul.f32 %v670, 1.442695
  %v691 = vpow.pop %v690
  %v692 = vmul.f32 %v671, 1.442695
  %v693 = vpow.pop %v692
  %v694 = vmul.f32 %v672, 1.442695
  %v695 = vpow.pop %v694
  %v696 = vmul.f32 %v673, 1.442695
  %v697 = vpow.pop %v696
  %v698 = vmul.f32 %v674, 1.442695
  %v699 = vpow.pop %v698
  %v700 = vmul.f32 %v675, 1.442695
  %v701 = vpow.pop %v700
  %v702 = vmul.f32 %v676, 1.442695
  %v703 = vpow.pop %v702
  %v704 = vmul.f32 %v677, 1.442695
  %v705 = vpow.pop %v704
  %v706 = vmul.f32 %v678, 1.442695
  %v707 = vpow.pop %v706
  %v708 = vmul.f32 %v679, 1.442695
  %v709 = vpow.pop %v708
  %v710 = vsub.f32 %v681, 1.0
  %v711 = vsub.f32 %v683, 1.0
  %v712 = vsub.f32 %v685, 1.0
  %v713 = vsub.f32 %v687, 1.0
  %v714 = vsub.f32 %v689, 1.0
  %v715 = vsub.f32 %v691, 1.0
  %v716 = vsub.f32 %v693, 1.0
  %v717 = vsub.f32 %v695, 1.0
  %v718 = vsub.f32 %v697, 1.0
  %v719 = vsub.f32 %v699, 1.0
  %v720 = vsub.f32 %v701, 1.0
  %v721 = vsub.f32 %v703, 1.0
  %v722 = vsub.f32 %v705, 1.0
  %v723 = vsub.f32 %v707, 1.0
  %v724 = vsub.f32 %v709, 1.0
  %v725 = vsel %vm650, %v612, %v710
  %v726 = vsel %vm651, %v614, %v711
  %v727 = vsel %vm652, %v617, %v712
  %v728 = vsel %vm653, %v619, %v713
  %v729 = vsel %vm654, %v622, %v714
  %v730 = vsel %vm655, %v624, %v715
  %v731 = vsel %vm656, %v627, %v716
  %v732 = vsel %vm657, %v629, %v717
  %v733 = vsel %vm658, %v632, %v718
  %v734 = vsel %vm659, %v634, %v719
  %v735 = vsel %vm660, %v637, %v720
  %v736 = vsel %vm661, %v639, %v721
  %v737 = vsel %vm662, %v642, %v722
  %v738 = vsel %vm663, %v644, %v723
  %v739 = vsel %vm664, %v647, %v724
  %v740 = vpack.c.bf16 %v725, %v725
  %v741 = vpack.c.bf16 %v726, %v726
  %v742 = vpack.c.bf16 %v727, %v727
  %v743 = vpack.c.bf16 %v728, %v728
  %v744 = vpack.c.bf16 %v729, %v729
  %v745 = vpack.c.bf16 %v730, %v730
  %v746 = vpack.c.bf16 %v731, %v731
  %v747 = vpack.c.bf16 %v732, %v732
  %v748 = vpack.c.bf16 %v733, %v733
  %v749 = vpack.c.bf16 %v734, %v734
  %v750 = vpack.c.bf16 %v735, %v735
  %v751 = vpack.c.bf16 %v736, %v736
  %v752 = vpack.c.bf16 %v737, %v737
  %v753 = vpack.c.bf16 %v738, %v738
  %v754 = vpack.c.bf16 %v739, %v739
  %755 = vst [vmem:[%s3] sm:$0xf] %v740
  %756 = vst [vmem:[%s3 + $0x4] sm:$0xf] %v741
  %757 = vst [vmem:[%s3 + $0x8] sm:$0xf] %v742
  %758 = vst [vmem:[%s3 + $0xc] sm:$0xf] %v743
  %759 = vst [vmem:[%s3 + $0x10] sm:$0xf] %v744
  %760 = vst [vmem:[%s3 + $0x14] sm:$0xf] %v745
  %761 = vst [vmem:[%s3 + $0x18] sm:$0xf] %v746
  %762 = vst [vmem:[%s3 + $0x1c] sm:$0xf] %v747
  %763 = vst [vmem:[%s3 + $0x20] sm:$0xf] %v748
  %764 = vst [vmem:[%s3 + $0x24] sm:$0xf] %v749
  %765 = vst [vmem:[%s3 + $0x28] sm:$0xf] %v750
  %766 = vst [vmem:[%s3 + $0x2c] sm:$0xf] %v751
  %767 = vst [vmem:[%s3 + $0x30] sm:$0xf] %v752
  %768 = vst [vmem:[%s3 + $0x34] sm:$0xf] %v753
  %769 = vst [vmem:[%s3 + $0x38] sm:$0xf] %v754
  // Predicated region
  $region14: #{net_forward.9} parent=0 // pred_check
    _
  $region15: #{net_forward.9} parent=0 // pred_check_branch
    %771 = sbr.rel (0) target = $region17
  $region16: #{net_forward.9} parent=0 // pred_region
    _
  $region17: #{net_forward.9} parent=0 // pred_fallthru
    _
  // Predicated region
  $region18: #{net_forward.9} parent=0 // pred_check
    _
  $region19: #{net_forward.9} parent=0 // pred_check_branch
    %773 = sbr.rel (0) target = $region21
  $region20: #{net_forward.9} parent=0 // pred_region
    _
  $region21: #{net_forward.9} parent=0 // pred_fallthru
    _

// kernel: net_forward.10
$region0: #{net_forward.10}
  #allocation0 [shape = 'u32[]', space=smem, size = 0x4, offset = 0x4, fixed_abs, tag = 'smem constant byte address 0x4 - core index']
  #allocation1 [shape = 'u32[72,128]{1,0:T(1,128)}', space=vmem, size = 0x9000, scoped, tag = 'internal scratch']
  %s0 = inlined_call_operand.vmem [shape: bf16[40,640], index: 0, kind: input, shape index: {}]
  %s1 = inlined_call_operand.vmem [shape: bf16[640,128], index: 1, kind: input, shape index: {}]
  %s2 = inlined_call_operand.vmem [shape: f32[1,128], index: 2, kind: input, shape index: {}]
  %s3 = inlined_call_operand.vmem [shape: bf16[40,128], index: 3, kind: output, shape index: {}]
  %s4 = sld [smem:[#allocation0]]
  $region22: #{net_forward.10} parent=0
    _
  %s6 = ssub.s32 1, %s4
  %s7 = scalar_select 0, %s6, %s4
  // Predicated region
  $region2: #{net_forward.10} parent=0 // pred_check
    _
  $region3: #{net_forward.10} parent=0 // pred_check_branch
    %9 = sbr.rel (0) target = $region5
  $region4: #{net_forward.10} parent=0 // pred_region
    _
  $region5: #{net_forward.10} parent=0 // pred_fallthru
    _
  // Predicated region
  $region6: #{net_forward.10} parent=0 // pred_check
    _
  $region7: #{net_forward.10} parent=0 // pred_check_branch
    %11 = sbr.rel (0) target = $region9
  $region8: #{net_forward.10} parent=0 // pred_region
    _
  $region9: #{net_forward.10} parent=0 // pred_fallthru
    _
  // Predicated region
  $region10: #{net_forward.10} parent=0 // pred_check
    _
  $region11: #{net_forward.10} parent=0 // pred_check_branch
    %13 = sbr.rel (0) target = $region13
  $region12: #{net_forward.10} parent=0 // pred_region
    _
  $region13: #{net_forward.10} parent=0 // pred_fallthru
    _
  %v14 = vld [vmem:[%s0] sm:$0xff]
  %v15 = vld [vmem:[%s0 + $0x8] sm:$0xff]
  %v16 = vld [vmem:[%s0 + $0x10] sm:$0xf]
  %v17 = vld [vmem:[%s0 + $0x14] sm:$0xff]
  %v18 = vld [vmem:[%s0 + $0x1c] sm:$0xff]
  %v19 = vld [vmem:[%s0 + $0x24] sm:$0xf]
  %v20 = vld [vmem:[%s0 + $0x28] sm:$0xff]
  %v21 = vld [vmem:[%s0 + $0x30] sm:$0xff]
  %v22 = vld [vmem:[%s0 + $0x38] sm:$0xf]
  %v23 = vld [vmem:[%s0 + $0x3c] sm:$0xff]
  %v24 = vld [vmem:[%s0 + $0x44] sm:$0xff]
  %v25 = vld [vmem:[%s0 + $0x4c] sm:$0xf]
  %v26 = vld [vmem:[%s0 + $0x50] sm:$0xff]
  %v27 = vld [vmem:[%s0 + $0x58] sm:$0xff]
  %v28 = vld [vmem:[%s0 + $0x60] sm:$0xf]
  %v29 = vld [vmem:[%s1] sm:$0xf]
  %v30 = vld [vmem:[%s1 + $0x4] sm:$0xf]
  %v31 = vld [vmem:[%s1 + $0x8] sm:$0xf]
  %v32 = vld [vmem:[%s1 + $0xc] sm:$0xf]
  %v33 = vld [vmem:[%s1 + $0x10] sm:$0xf]
  %v34 = vld [vmem:[%s1 + $0x14] sm:$0xf]
  %v35 = vld [vmem:[%s1 + $0x18] sm:$0xf]
  %v36 = vld [vmem:[%s1 + $0x1c] sm:$0xf]
  %v37 = vld [vmem:[%s1 + $0x20] sm:$0xf]
  %v38 = vld [vmem:[%s1 + $0x24] sm:$0xf]
  %v39 = vld [vmem:[%s1 + $0x28] sm:$0xf]
  %v40 = vld [vmem:[%s1 + $0x2c] sm:$0xf]
  %v41 = vld [vmem:[%s1 + $0x30] sm:$0xf]
  %v42 = vld [vmem:[%s1 + $0x34] sm:$0xf]
  %v43 = vld [vmem:[%s1 + $0x38] sm:$0xf]
  %v44 = vld [vmem:[%s1 + $0x3c] sm:$0xf]
  %v45 = vld [vmem:[%s1 + $0x40] sm:$0xf]
  %v46 = vld [vmem:[%s1 + $0x44] sm:$0xf]
  %v47 = vld [vmem:[%s1 + $0x48] sm:$0xf]
  %v48 = vld [vmem:[%s1 + $0x4c] sm:$0xf]
  %v49 = vld [vmem:[%s1 + $0x50] sm:$0xf]
  %v50 = vld [vmem:[%s1 + $0x54] sm:$0xf]
  %v51 = vld [vmem:[%s1 + $0x58] sm:$0xf]
  %v52 = vld [vmem:[%s1 + $0x5c] sm:$0xf]
  %v53 = vld [vmem:[%s1 + $0x60] sm:$0xf]
  %v54 = vld [vmem:[%s1 + $0x64] sm:$0xf]
  %v55 = vld [vmem:[%s1 + $0x68] sm:$0xf]
  %v56 = vld [vmem:[%s1 + $0x6c] sm:$0xf]
  %v57 = vld [vmem:[%s1 + $0x70] sm:$0xf]
  %v58 = vld [vmem:[%s1 + $0x74] sm:$0xf]
  %v59 = vld [vmem:[%s1 + $0x78] sm:$0xf]
  %v60 = vld [vmem:[%s1 + $0x7c] sm:$0xf]
  %v61 = vld [vmem:[%s1 + $0x80] sm:$0xf]
  %v62 = vld [vmem:[%s1 + $0x84] sm:$0xf]
  %v63 = vld [vmem:[%s1 + $0x88] sm:$0xf]
  %v64 = vld [vmem:[%s1 + $0x8c] sm:$0xf]
  %v65 = vld [vmem:[%s1 + $0x90] sm:$0xf]
  %v66 = vld [vmem:[%s1 + $0x94] sm:$0xf]
  %v67 = vld [vmem:[%s1 + $0x98] sm:$0xf]
  %v68 = vld [vmem:[%s1 + $0x9c] sm:$0xf]
  %v69 = vld [vmem:[%s1 + $0xa0] sm:$0xf]
  %v70 = vld [vmem:[%s1 + $0xa4] sm:$0xf]
  %v71 = vld [vmem:[%s1 + $0xa8] sm:$0xf]
  %v72 = vld [vmem:[%s1 + $0xac] sm:$0xf]
  %v73 = vld [vmem:[%s1 + $0xb0] sm:$0xf]
  %v74 = vld [vmem:[%s1 + $0xb4] sm:$0xf]
  %v75 = vld [vmem:[%s1 + $0xb8] sm:$0xf]
  %v76 = vld [vmem:[%s1 + $0xbc] sm:$0xf]
  %v77 = vld [vmem:[%s1 + $0xc0] sm:$0xf]
  %v78 = vld [vmem:[%s1 + $0xc4] sm:$0xf]
  %v79 = vld [vmem:[%s1 + $0xc8] sm:$0xf]
  %v80 = vld [vmem:[%s1 + $0xcc] sm:$0xf]
  %v81 = vld [vmem:[%s1 + $0xd0] sm:$0xf]
  %v82 = vld [vmem:[%s1 + $0xd4] sm:$0xf]
  %v83 = vld [vmem:[%s1 + $0xd8] sm:$0xf]
  %v84 = vld [vmem:[%s1 + $0xdc] sm:$0xf]
  %v85 = vld [vmem:[%s1 + $0xe0] sm:$0xf]
  %v86 = vld [vmem:[%s1 + $0xe4] sm:$0xf]
  %v87 = vld [vmem:[%s1 + $0xe8] sm:$0xf]
  %v88 = vld [vmem:[%s1 + $0xec] sm:$0xf]
  %v89 = vld [vmem:[%s1 + $0xf0] sm:$0xf]
  %v90 = vld [vmem:[%s1 + $0xf4] sm:$0xf]
  %v91 = vld [vmem:[%s1 + $0xf8] sm:$0xf]
  %v92 = vld [vmem:[%s1 + $0xfc] sm:$0xf]
  %v93 = vld [vmem:[%s1 + $0x100] sm:$0xf]
  %v94 = vld [vmem:[%s1 + $0x104] sm:$0xf]
  %v95 = vld [vmem:[%s1 + $0x108] sm:$0xf]
  %v96 = vld [vmem:[%s1 + $0x10c] sm:$0xf]
  %v97 = vld [vmem:[%s1 + $0x110] sm:$0xf]
  %v98 = vld [vmem:[%s1 + $0x114] sm:$0xf]
  %v99 = vld [vmem:[%s1 + $0x118] sm:$0xf]
  %v100 = vld [vmem:[%s1 + $0x11c] sm:$0xf]
  %v101 = vld [vmem:[%s1 + $0x120] sm:$0xf]
  %v102 = vld [vmem:[%s1 + $0x124] sm:$0xf]
  %v103 = vld [vmem:[%s1 + $0x128] sm:$0xf]
  %v104 = vld [vmem:[%s1 + $0x12c] sm:$0xf]
  %v105 = vld [vmem:[%s1 + $0x130] sm:$0xf]
  %v106 = vld [vmem:[%s1 + $0x134] sm:$0xf]
  %v107 = vld [vmem:[%s1 + $0x138] sm:$0xf]
  %v108 = vld [vmem:[%s1 + $0x13c] sm:$0xf]
  %v109 = vld [vmem:[%s2] sm:$0x1]
  %v111 = vperm.slane %v109, 0
  %v128 = vunpack.c.l.b16 %v14
  %v129 = vunpack.c.h.b16 %v14
  %v130 = vunpack.c.l.b16 %v15
  %v131 = vunpack.c.h.b16 %v15
  %v132 = vunpack.c.l.b16 %v16
  %v133 = vunpack.c.l.b16 %v17
  %v134 = vunpack.c.h.b16 %v17
  %v135 = vunpack.c.l.b16 %v18
  %v136 = vunpack.c.h.b16 %v18
  %v137 = vunpack.c.l.b16 %v19
  %v138 = vunpack.c.l.b16 %v20
  %v139 = vunpack.c.h.b16 %v20
  %v140 = vunpack.c.l.b16 %v21
  %v141 = vunpack.c.h.b16 %v21
  %v142 = vunpack.c.l.b16 %v22
  %v143 = vunpack.c.l.b16 %v23
  %v144 = vunpack.c.h.b16 %v23
  %v145 = vunpack.c.l.b16 %v24
  %v146 = vunpack.c.h.b16 %v24
  %v147 = vunpack.c.l.b16 %v25
  %v148 = vunpack.c.l.b16 %v26
  %v149 = vunpack.c.h.b16 %v26
  %v150 = vunpack.c.l.b16 %v27
  %v151 = vunpack.c.h.b16 %v27
  %v152 = vunpack.c.l.b16 %v28
  %v153 = vpack.c.b16 %v133, %v128
  %v154 = vpack.c.b16 %v134, %v129
  %v155 = vpack.c.b16 %v135, %v130
  %v156 = vpack.c.b16 %v136, %v131
  %v157 = vpack.c.b16 %v137, %v132
  %v158 = vpack.c.b16 %v143, %v138
  %v159 = vpack.c.b16 %v144, %v139
  %v160 = vpack.c.b16 %v145, %v140
  %v161 = vpack.c.b16 %v146, %v141
  %v162 = vpack.c.b16 %v147, %v142
  %v163 = vpack.c.b16 %v148, %v148
  %v164 = vpack.c.b16 %v149, %v149
  %v165 = vpack.c.b16 %v150, %v150
  %v166 = vpack.c.b16 %v151, %v151
  %v167 = vpack.c.b16 %v152, %v152
  %v263 = vunpack.c.l.b16 %v29
  %v264 = vunpack.c.l.b16 %v30
  %v265 = vunpack.c.l.b16 %v31
  %v266 = vunpack.c.l.b16 %v32
  %v267 = vunpack.c.l.b16 %v33
  %v268 = vunpack.c.l.b16 %v34
  %v269 = vunpack.c.l.b16 %v35
  %v270 = vunpack.c.l.b16 %v36
  %v271 = vunpack.c.l.b16 %v37
  %v272 = vunpack.c.l.b16 %v38
  %v273 = vunpack.c.l.b16 %v39
  %v274 = vunpack.c.l.b16 %v40
  %v275 = vunpack.c.l.b16 %v41
  %v276 = vunpack.c.l.b16 %v42
  %v277 = vunpack.c.l.b16 %v43
  %v278 = vunpack.c.l.b16 %v44
  %v279 = vunpack.c.l.b16 %v45
  %v280 = vunpack.c.l.b16 %v46
  %v281 = vunpack.c.l.b16 %v47
  %v282 = vunpack.c.l.b16 %v48
  %v283 = vunpack.c.l.b16 %v49
  %v284 = vunpack.c.l.b16 %v50
  %v285 = vunpack.c.l.b16 %v51
  %v286 = vunpack.c.l.b16 %v52
  %v287 = vunpack.c.l.b16 %v53
  %v288 = vunpack.c.l.b16 %v54
  %v289 = vunpack.c.l.b16 %v55
  %v290 = vunpack.c.l.b16 %v56
  %v291 = vunpack.c.l.b16 %v57
  %v292 = vunpack.c.l.b16 %v58
  %v293 = vunpack.c.l.b16 %v59
  %v294 = vunpack.c.l.b16 %v60
  %v295 = vunpack.c.l.b16 %v61
  %v296 = vunpack.c.l.b16 %v62
  %v297 = vunpack.c.l.b16 %v63
  %v298 = vunpack.c.l.b16 %v64
  %v299 = vunpack.c.l.b16 %v65
  %v300 = vunpack.c.l.b16 %v66
  %v301 = vunpack.c.l.b16 %v67
  %v302 = vunpack.c.l.b16 %v68
  %v303 = vunpack.c.l.b16 %v69
  %v304 = vunpack.c.l.b16 %v70
  %v305 = vunpack.c.l.b16 %v71
  %v306 = vunpack.c.l.b16 %v72
  %v307 = vunpack.c.l.b16 %v73
  %v308 = vunpack.c.l.b16 %v74
  %v309 = vunpack.c.l.b16 %v75
  %v310 = vunpack.c.l.b16 %v76
  %v311 = vunpack.c.l.b16 %v77
  %v312 = vunpack.c.l.b16 %v78
  %v313 = vunpack.c.l.b16 %v79
  %v314 = vunpack.c.l.b16 %v80
  %v315 = vunpack.c.l.b16 %v81
  %v316 = vunpack.c.l.b16 %v82
  %v317 = vunpack.c.l.b16 %v83
  %v318 = vunpack.c.l.b16 %v84
  %v319 = vunpack.c.l.b16 %v85
  %v320 = vunpack.c.l.b16 %v86
  %v321 = vunpack.c.l.b16 %v87
  %v322 = vunpack.c.l.b16 %v88
  %v323 = vunpack.c.l.b16 %v89
  %v324 = vunpack.c.l.b16 %v90
  %v325 = vunpack.c.l.b16 %v91
  %v326 = vunpack.c.l.b16 %v92
  %v327 = vunpack.c.l.b16 %v93
  %v328 = vunpack.c.l.b16 %v94
  %v329 = vunpack.c.l.b16 %v95
  %v330 = vunpack.c.l.b16 %v96
  %v331 = vunpack.c.l.b16 %v97
  %v332 = vunpack.c.l.b16 %v98
  %v333 = vunpack.c.l.b16 %v99
  %v334 = vunpack.c.l.b16 %v100
  %v335 = vunpack.c.l.b16 %v101
  %v336 = vunpack.c.l.b16 %v102
  %v337 = vunpack.c.l.b16 %v103
  %v338 = vunpack.c.l.b16 %v104
  %v339 = vunpack.c.l.b16 %v105
  %v340 = vunpack.c.l.b16 %v106
  %v341 = vunpack.c.l.b16 %v107
  %v342 = vunpack.c.l.b16 %v108
  %v343 = vpack.c.b16 %v264, %v263
  %v344 = vpack.c.b16 %v266, %v265
  %v345 = vpack.c.b16 %v268, %v267
  %v346 = vpack.c.b16 %v270, %v269
  %v347 = vpack.c.b16 %v272, %v271
  %v348 = vpack.c.b16 %v274, %v273
  %v349 = vpack.c.b16 %v276, %v275
  %v350 = vpack.c.b16 %v278, %v277
  %v351 = vpack.c.b16 %v280, %v279
  %v352 = vpack.c.b16 %v282, %v281
  %v353 = vpack.c.b16 %v284, %v283
  %v354 = vpack.c.b16 %v286, %v285
  %v355 = vpack.c.b16 %v288, %v287
  %v356 = vpack.c.b16 %v290, %v289
  %v357 = vpack.c.b16 %v292, %v291
  %v358 = vpack.c.b16 %v294, %v293
  %v359 = vpack.c.b16 %v296, %v295
  %v360 = vpack.c.b16 %v298, %v297
  %v361 = vpack.c.b16 %v300, %v299
  %v362 = vpack.c.b16 %v302, %v301
  %v363 = vpack.c.b16 %v304, %v303
  %v364 = vpack.c.b16 %v306, %v305
  %v365 = vpack.c.b16 %v308, %v307
  %v366 = vpack.c.b16 %v310, %v309
  %v367 = vpack.c.b16 %v312, %v311
  %v368 = vpack.c.b16 %v314, %v313
  %v369 = vpack.c.b16 %v316, %v315
  %v370 = vpack.c.b16 %v318, %v317
  %v371 = vpack.c.b16 %v320, %v319
  %v372 = vpack.c.b16 %v322, %v321
  %v373 = vpack.c.b16 %v324, %v323
  %v374 = vpack.c.b16 %v326, %v325
  %v375 = vpack.c.b16 %v328, %v327
  %v376 = vpack.c.b16 %v330, %v329
  %v377 = vpack.c.b16 %v332, %v331
  %v378 = vpack.c.b16 %v334, %v333
  %v379 = vpack.c.b16 %v336, %v335
  %v380 = vpack.c.b16 %v338, %v337
  %v381 = vpack.c.b16 %v340, %v339
  %v382 = vpack.c.b16 %v342, %v341
  %423 = vmatpush.bf16.msra.mxu0 %v350
  %424 = vmatpush.bf16.msra.mxu0 %v349
  %425 = vmatpush.bf16.msra.mxu0 %v348
  %426 = vmatpush.bf16.msra.mxu0 %v347
  %427 = vmatpush.bf16.msra.mxu0 %v346
  %428 = vmatpush.bf16.msra.mxu0 %v345
  %429 = vmatpush.bf16.msra.mxu0 %v344
  %430 = vmatpush.bf16.msra.mxu0 %v343
  %431 = vmatmul.bf16.gmra.mxu0 %v153
  %v432 = vpop.f32.mrf.mxu0
  %v433 = vadd.f32 %v111, %v432
  %v434 = vpop.f32.mrf.mxu0
  %v435 = vadd.f32 %v111, %v434
  %436 = vmatmul.bf16.gmra.mxu0 %v158
  %v437 = vpop.f32.mrf.mxu0
  %v438 = vadd.f32 %v111, %v437
  %v439 = vpop.f32.mrf.mxu0
  %v440 = vadd.f32 %v111, %v439
  %441 = vmatmul.bf16.gmra.mxu0 %v163
  %v442 = vpop.f32.mrf.mxu0
  %v443 = vadd.f32 %v111, %v442
  %v444 = vpop.f32.mrf.mxu0
  %445 = vdwg.mxu0
  %446 = vmatpush.bf16.msra.mxu0 %v358
  %447 = vmatpush.bf16.msra.mxu0 %v357
  %448 = vmatpush.bf16.msra.mxu0 %v356
  %449 = vmatpush.bf16.msra.mxu0 %v355
  %450 = vmatpush.bf16.msra.mxu0 %v354
  %451 = vmatpush.bf16.msra.mxu0 %v353
  %452 = vmatpush.bf16.msra.mxu0 %v352
  %453 = vmatpush.bf16.msra.mxu0 %v351
  %454 = vmatmul.bf16.gmra.mxu0 %v154
  %v455 = vpop.f32.mrf.mxu0
  %v456 = vadd.f32 %v433, %v455
  %v457 = vpop.f32.mrf.mxu0
  %v458 = vadd.f32 %v435, %v457
  %459 = vmatmul.bf16.gmra.mxu0 %v159
  %v460 = vpop.f32.mrf.mxu0
  %v461 = vadd.f32 %v438, %v460
  %v462 = vpop.f32.mrf.mxu0
  %v463 = vadd.f32 %v440, %v462
  %464 = vmatmul.bf16.gmra.mxu0 %v164
  %v465 = vpop.f32.mrf.mxu0
  %v466 = vadd.f32 %v443, %v465
  %v467 = vpop.f32.mrf.mxu0
  %468 = vdwg.mxu0
  %469 = vmatpush.bf16.msra.mxu0 %v366
  %470 = vmatpush.bf16.msra.mxu0 %v365
  %471 = vmatpush.bf16.msra.mxu0 %v364
  %472 = vmatpush.bf16.msra.mxu0 %v363
  %473 = vmatpush.bf16.msra.mxu0 %v362
  %474 = vmatpush.bf16.msra.mxu0 %v361
  %475 = vmatpush.bf16.msra.mxu0 %v360
  %476 = vmatpush.bf16.msra.mxu0 %v359
  %477 = vmatmul.bf16.gmra.mxu0 %v155
  %v478 = vpop.f32.mrf.mxu0
  %v479 = vadd.f32 %v456, %v478
  %v480 = vpop.f32.mrf.mxu0
  %v481 = vadd.f32 %v458, %v480
  %482 = vmatmul.bf16.gmra.mxu0 %v160
  %v483 = vpop.f32.mrf.mxu0
  %v484 = vadd.f32 %v461, %v483
  %v485 = vpop.f32.mrf.mxu0
  %v486 = vadd.f32 %v463, %v485
  %487 = vmatmul.bf16.gmra.mxu0 %v165
  %v488 = vpop.f32.mrf.mxu0
  %v489 = vadd.f32 %v466, %v488
  %v490 = vpop.f32.mrf.mxu0
  %491 = vdwg.mxu0
  %492 = vmatpush.bf16.msra.mxu0 %v374
  %493 = vmatpush.bf16.msra.mxu0 %v373
  %494 = vmatpush.bf16.msra.mxu0 %v372
  %495 = vmatpush.bf16.msra.mxu0 %v371
  %496 = vmatpush.bf16.msra.mxu0 %v370
  %497 = vmatpush.bf16.msra.mxu0 %v369
  %498 = vmatpush.bf16.msra.mxu0 %v368
  %499 = vmatpush.bf16.msra.mxu0 %v367
  %500 = vmatmul.bf16.gmra.mxu0 %v156
  %v501 = vpop.f32.mrf.mxu0
  %v502 = vadd.f32 %v479, %v501
  %v503 = vpop.f32.mrf.mxu0
  %v504 = vadd.f32 %v481, %v503
  %505 = vmatmul.bf16.gmra.mxu0 %v161
  %v506 = vpop.f32.mrf.mxu0
  %v507 = vadd.f32 %v484, %v506
  %v508 = vpop.f32.mrf.mxu0
  %v509 = vadd.f32 %v486, %v508
  %510 = vmatmul.bf16.gmra.mxu0 %v166
  %v511 = vpop.f32.mrf.mxu0
  %v512 = vadd.f32 %v489, %v511
  %v513 = vpop.f32.mrf.mxu0
  %514 = vdwg.mxu0
  %515 = vmatpush.bf16.msra.mxu0 %v382
  %516 = vmatpush.bf16.msra.mxu0 %v381
  %517 = vmatpush.bf16.msra.mxu0 %v380
  %518 = vmatpush.bf16.msra.mxu0 %v379
  %519 = vmatpush.bf16.msra.mxu0 %v378
  %520 = vmatpush.bf16.msra.mxu0 %v377
  %521 = vmatpush.bf16.msra.mxu0 %v376
  %522 = vmatpush.bf16.msra.mxu0 %v375
  %523 = vmatmul.bf16.gmra.mxu0 %v157
  %v524 = vpop.f32.mrf.mxu0
  %v525 = vadd.f32 %v502, %v524
  %v526 = vpop.f32.mrf.mxu0
  %v527 = vadd.f32 %v504, %v526
  %528 = vmatmul.bf16.gmra.mxu0 %v162
  %v529 = vpop.f32.mrf.mxu0
  %v530 = vadd.f32 %v507, %v529
  %v531 = vpop.f32.mrf.mxu0
  %v532 = vadd.f32 %v509, %v531
  %533 = vmatmul.bf16.gmra.mxu0 %v167
  %v534 = vpop.f32.mrf.mxu0
  %v535 = vadd.f32 %v512, %v534
  %v536 = vpop.f32.mrf.mxu0
  %537 = vdwg.mxu0
  %vm538 = vcmp.gt.f32.partialorder %v525, 0.0
  %vm539 = vcmp.gt.f32.partialorder %v527, 0.0
  %vm540 = vcmp.gt.f32.partialorder %v530, 0.0
  %vm541 = vcmp.gt.f32.partialorder %v532, 0.0
  %vm542 = vcmp.gt.f32.partialorder %v535, 0.0
  %v543 = vmin.f32 %v525, 0.0
  %v544 = vmin.f32 %v527, 0.0
  %v545 = vmin.f32 %v530, 0.0
  %v546 = vmin.f32 %v532, 0.0
  %v547 = vmin.f32 %v535, 0.0
  %v548 = vmul.f32 %v543, 1.442695
  %v549 = vpow.pop %v548
  %v550 = vmul.f32 %v544, 1.442695
  %v551 = vpow.pop %v550
  %v552 = vmul.f32 %v545, 1.442695
  %v553 = vpow.pop %v552
  %v554 = vmul.f32 %v546, 1.442695
  %v555 = vpow.pop %v554
  %v556 = vmul.f32 %v547, 1.442695
  %v557 = vpow.pop %v556
  %v558 = vsub.f32 %v549, 1.0
  %v559 = vsub.f32 %v551, 1.0
  %v560 = vsub.f32 %v553, 1.0
  %v561 = vsub.f32 %v555, 1.0
  %v562 = vsub.f32 %v557, 1.0
  %v563 = vsel %vm538, %v525, %v558
  %v564 = vsel %vm539, %v527, %v559
  %v565 = vsel %vm540, %v530, %v560
  %v566 = vsel %vm541, %v532, %v561
  %v567 = vsel %vm542, %v535, %v562
  %v568 = vpack.c.bf16 %v563, %v563
  %v569 = vpack.c.bf16 %v564, %v564
  %v570 = vpack.c.bf16 %v565, %v565
  %v571 = vpack.c.bf16 %v566, %v566
  %v572 = vpack.c.bf16 %v567, %v567
  %573 = vst [vmem:[%s3] sm:$0xf] %v568
  %574 = vst [vmem:[%s3 + $0x4] sm:$0xf] %v569
  %575 = vst [vmem:[%s3 + $0x8] sm:$0xf] %v570
  %576 = vst [vmem:[%s3 + $0xc] sm:$0xf] %v571
  %577 = vst [vmem:[%s3 + $0x10] sm:$0xf] %v572
  // Predicated region
  $region14: #{net_forward.10} parent=0 // pred_check
    _
  $region15: #{net_forward.10} parent=0 // pred_check_branch
    %579 = sbr.rel (0) target = $region17
  $region16: #{net_forward.10} parent=0 // pred_region
    _
  $region17: #{net_forward.10} parent=0 // pred_fallthru
    _
  // Predicated region
  $region18: #{net_forward.10} parent=0 // pred_check
    _
  $region19: #{net_forward.10} parent=0 // pred_check_branch
    %581 = sbr.rel (0) target = $region21
  $region20: #{net_forward.10} parent=0 // pred_region
    _
  $region21: #{net_forward.10} parent=0 // pred_fallthru
    _

// kernel: net_forward.11
$region0: #{net_forward.11}
  #allocation0 [shape = 'u32[]', space=smem, size = 0x4, offset = 0x4, fixed_abs, tag = 'smem constant byte address 0x4 - core index']
  #allocation1 [shape = 'u32[72,128]{1,0:T(1,128)}', space=vmem, size = 0x9000, scoped, tag = 'internal scratch']
  %s0 = inlined_call_operand.vmem [shape: bf16[8,1152], index: 0, kind: input, shape index: {}]
  %s1 = inlined_call_operand.vmem [shape: bf16[1152,128], index: 1, kind: input, shape index: {}]
  %s2 = inlined_call_operand.vmem [shape: f32[1,128], index: 2, kind: input, shape index: {}]
  %s3 = inlined_call_operand.vmem [shape: bf16[128,128], index: 3, kind: input, shape index: {}]
  %s4 = inlined_call_operand.vmem [shape: f32[1,128], index: 4, kind: input, shape index: {}]
  %s5 = inlined_call_operand.vmem [shape: bf16[128,128], index: 5, kind: input, shape index: {}]
  %s6 = inlined_call_operand.vmem [shape: f32[1,128], index: 6, kind: input, shape index: {}]
  %s7 = inlined_call_operand.vmem [shape: f32[8,128], index: 7, kind: output, shape index: {}]
  %s8 = sld [smem:[#allocation0]]
  $region38: #{net_forward.11} parent=0
    _
  %s10 = ssub.s32 1, %s8
  %s11 = scalar_select 0, %s10, %s8
  // Predicated region
  $region2: #{net_forward.11} parent=0 // pred_check
    _
  $region3: #{net_forward.11} parent=0 // pred_check_branch
    %13 = sbr.rel (0) target = $region5
  $region4: #{net_forward.11} parent=0 // pred_region
    _
  $region5: #{net_forward.11} parent=0 // pred_fallthru
    _
  // Predicated region
  $region6: #{net_forward.11} parent=0 // pred_check
    _
  $region7: #{net_forward.11} parent=0 // pred_check_branch
    %15 = sbr.rel (0) target = $region9
  $region8: #{net_forward.11} parent=0 // pred_region
    _
  $region9: #{net_forward.11} parent=0 // pred_fallthru
    _
  // Predicated region
  $region10: #{net_forward.11} parent=0 // pred_check
    _
  $region11: #{net_forward.11} parent=0 // pred_check_branch
    %17 = sbr.rel (0) target = $region13
  $region12: #{net_forward.11} parent=0 // pred_region
    _
  $region13: #{net_forward.11} parent=0 // pred_fallthru
    _
  // Predicated region
  $region14: #{net_forward.11} parent=0 // pred_check
    _
  $region15: #{net_forward.11} parent=0 // pred_check_branch
    %19 = sbr.rel (0) target = $region17
  $region16: #{net_forward.11} parent=0 // pred_region
    _
  $region17: #{net_forward.11} parent=0 // pred_fallthru
    _
  // Predicated region
  $region18: #{net_forward.11} parent=0 // pred_check
    _
  $region19: #{net_forward.11} parent=0 // pred_check_branch
    %21 = sbr.rel (0) target = $region21
  $region20: #{net_forward.11} parent=0 // pred_region
    _
  $region21: #{net_forward.11} parent=0 // pred_fallthru
    _
  // Predicated region
  $region22: #{net_forward.11} parent=0 // pred_check
    _
  $region23: #{net_forward.11} parent=0 // pred_check_branch
    %23 = sbr.rel (0) target = $region25
  $region24: #{net_forward.11} parent=0 // pred_region
    _
  $region25: #{net_forward.11} parent=0 // pred_fallthru
    _
  // Predicated region
  $region26: #{net_forward.11} parent=0 // pred_check
    _
  $region27: #{net_forward.11} parent=0 // pred_check_branch
    %25 = sbr.rel (0) target = $region29
  $region28: #{net_forward.11} parent=0 // pred_region
    _
  $region29: #{net_forward.11} parent=0 // pred_fallthru
    _
  %v26 = vld [vmem:[%s0] sm:$0xff]
  %v27 = vld [vmem:[%s0 + $0x8] sm:$0xff]
  %v28 = vld [vmem:[%s0 + $0x10] sm:$0xff]
  %v29 = vld [vmem:[%s0 + $0x18] sm:$0xff]
  %v30 = vld [vmem:[%s0 + $0x20] sm:$0xf]
  %v31 = vld [vmem:[%s1] sm:$0xf]
  %v32 = vld [vmem:[%s1 + $0x4] sm:$0xf]
  %v33 = vld [vmem:[%s1 + $0x8] sm:$0xf]
  %v34 = vld [vmem:[%s1 + $0xc] sm:$0xf]
  %v35 = vld [vmem:[%s1 + $0x10] sm:$0xf]
  %v36 = vld [vmem:[%s1 + $0x14] sm:$0xf]
  %v37 = vld [vmem:[%s1 + $0x18] sm:$0xf]
  %v38 = vld [vmem:[%s1 + $0x1c] sm:$0xf]
  %v39 = vld [vmem:[%s1 + $0x20] sm:$0xf]
  %v40 = vld [vmem:[%s1 + $0x24] sm:$0xf]
  %v41 = vld [vmem:[%s1 + $0x28] sm:$0xf]
  %v42 = vld [vmem:[%s1 + $0x2c] sm:$0xf]
  %v43 = vld [vmem:[%s1 + $0x30] sm:$0xf]
  %v44 = vld [vmem:[%s1 + $0x34] sm:$0xf]
  %v45 = vld [vmem:[%s1 + $0x38] sm:$0xf]
  %v46 = vld [vmem:[%s1 + $0x3c] sm:$0xf]
  %v47 = vld [vmem:[%s1 + $0x40] sm:$0xf]
  %v48 = vld [vmem:[%s1 + $0x44] sm:$0xf]
  %v49 = vld [vmem:[%s1 + $0x48] sm:$0xf]
  %v50 = vld [vmem:[%s1 + $0x4c] sm:$0xf]
  %v51 = vld [vmem:[%s1 + $0x50] sm:$0xf]
  %v52 = vld [vmem:[%s1 + $0x54] sm:$0xf]
  %v53 = vld [vmem:[%s1 + $0x58] sm:$0xf]
  %v54 = vld [vmem:[%s1 + $0x5c] sm:$0xf]
  %v55 = vld [vmem:[%s1 + $0x60] sm:$0xf]
  %v56 = vld [vmem:[%s1 + $0x64] sm:$0xf]
  %v57 = vld [vmem:[%s1 + $0x68] sm:$0xf]
  %v58 = vld [vmem:[%s1 + $0x6c] sm:$0xf]
  %v59 = vld [vmem:[%s1 + $0x70] sm:$0xf]
  %v60 = vld [vmem:[%s1 + $0x74] sm:$0xf]
  %v61 = vld [vmem:[%s1 + $0x78] sm:$0xf]
  %v62 = vld [vmem:[%s1 + $0x7c] sm:$0xf]
  %v63 = vld [vmem:[%s1 + $0x80] sm:$0xf]
  %v64 = vld [vmem:[%s1 + $0x84] sm:$0xf]
  %v65 = vld [vmem:[%s1 + $0x88] sm:$0xf]
  %v66 = vld [vmem:[%s1 + $0x8c] sm:$0xf]
  %v67 = vld [vmem:[%s1 + $0x90] sm:$0xf]
  %v68 = vld [vmem:[%s1 + $0x94] sm:$0xf]
  %v69 = vld [vmem:[%s1 + $0x98] sm:$0xf]
  %v70 = vld [vmem:[%s1 + $0x9c] sm:$0xf]
  %v71 = vld [vmem:[%s1 + $0xa0] sm:$0xf]
  %v72 = vld [vmem:[%s1 + $0xa4] sm:$0xf]
  %v73 = vld [vmem:[%s1 + $0xa8] sm:$0xf]
  %v74 = vld [vmem:[%s1 + $0xac] sm:$0xf]
  %v75 = vld [vmem:[%s1 + $0xb0] sm:$0xf]
  %v76 = vld [vmem:[%s1 + $0xb4] sm:$0xf]
  %v77 = vld [vmem:[%s1 + $0xb8] sm:$0xf]
  %v78 = vld [vmem:[%s1 + $0xbc] sm:$0xf]
  %v79 = vld [vmem:[%s1 + $0xc0] sm:$0xf]
  %v80 = vld [vmem:[%s1 + $0xc4] sm:$0xf]
  %v81 = vld [vmem:[%s1 + $0xc8] sm:$0xf]
  %v82 = vld [vmem:[%s1 + $0xcc] sm:$0xf]
  %v83 = vld [vmem:[%s1 + $0xd0] sm:$0xf]
  %v84 = vld [vmem:[%s1 + $0xd4] sm:$0xf]
  %v85 = vld [vmem:[%s1 + $0xd8] sm:$0xf]
  %v86 = vld [vmem:[%s1 + $0xdc] sm:$0xf]
  %v87 = vld [vmem:[%s1 + $0xe0] sm:$0xf]
  %v88 = vld [vmem:[%s1 + $0xe4] sm:$0xf]
  %v89 = vld [vmem:[%s1 + $0xe8] sm:$0xf]
  %v90 = vld [vmem:[%s1 + $0xec] sm:$0xf]
  %v91 = vld [vmem:[%s1 + $0xf0] sm:$0xf]
  %v92 = vld [vmem:[%s1 + $0xf4] sm:$0xf]
  %v93 = vld [vmem:[%s1 + $0xf8] sm:$0xf]
  %v94 = vld [vmem:[%s1 + $0xfc] sm:$0xf]
  %v95 = vld [vmem:[%s1 + $0x100] sm:$0xf]
  %v96 = vld [vmem:[%s1 + $0x104] sm:$0xf]
  %v97 = vld [vmem:[%s1 + $0x108] sm:$0xf]
  %v98 = vld [vmem:[%s1 + $0x10c] sm:$0xf]
  %v99 = vld [vmem:[%s1 + $0x110] sm:$0xf]
  %v100 = vld [vmem:[%s1 + $0x114] sm:$0xf]
  %v101 = vld [vmem:[%s1 + $0x118] sm:$0xf]
  %v102 = vld [vmem:[%s1 + $0x11c] sm:$0xf]
  %v103 = vld [vmem:[%s1 + $0x120] sm:$0xf]
  %v104 = vld [vmem:[%s1 + $0x124] sm:$0xf]
  %v105 = vld [vmem:[%s1 + $0x128] sm:$0xf]
  %v106 = vld [vmem:[%s1 + $0x12c] sm:$0xf]
  %v107 = vld [vmem:[%s1 + $0x130] sm:$0xf]
  %v108 = vld [vmem:[%s1 + $0x134] sm:$0xf]
  %v109 = vld [vmem:[%s1 + $0x138] sm:$0xf]
  %v110 = vld [vmem:[%s1 + $0x13c] sm:$0xf]
  %v111 = vld [vmem:[%s1 + $0x140] sm:$0xf]
  %v112 = vld [vmem:[%s1 + $0x144] sm:$0xf]
  %v113 = vld [vmem:[%s1 + $0x148] sm:$0xf]
  %v114 = vld [vmem:[%s1 + $0x14c] sm:$0xf]
  %v115 = vld [vmem:[%s1 + $0x150] sm:$0xf]
  %v116 = vld [vmem:[%s1 + $0x154] sm:$0xf]
  %v117 = vld [vmem:[%s1 + $0x158] sm:$0xf]
  %v118 = vld [vmem:[%s1 + $0x15c] sm:$0xf]
  %v119 = vld [vmem:[%s1 + $0x160] sm:$0xf]
  %v120 = vld [vmem:[%s1 + $0x164] sm:$0xf]
  %v121 = vld [vmem:[%s1 + $0x168] sm:$0xf]
  %v122 = vld [vmem:[%s1 + $0x16c] sm:$0xf]
  %v123 = vld [vmem:[%s1 + $0x170] sm:$0xf]
  %v124 = vld [vmem:[%s1 + $0x174] sm:$0xf]
  %v125 = vld [vmem:[%s1 + $0x178] sm:$0xf]
  %v126 = vld [vmem:[%s1 + $0x17c] sm:$0xf]
  %v127 = vld [vmem:[%s1 + $0x180] sm:$0xf]
  %v128 = vld [vmem:[%s1 + $0x184] sm:$0xf]
  %v129 = vld [vmem:[%s1 + $0x188] sm:$0xf]
  %v130 = vld [vmem:[%s1 + $0x18c] sm:$0xf]
  %v131 = vld [vmem:[%s1 + $0x190] sm:$0xf]
  %v132 = vld [vmem:[%s1 + $0x194] sm:$0xf]
  %v133 = vld [vmem:[%s1 + $0x198] sm:$0xf]
  %v134 = vld [vmem:[%s1 + $0x19c] sm:$0xf]
  %v135 = vld [vmem:[%s1 + $0x1a0] sm:$0xf]
  %v136 = vld [vmem:[%s1 + $0x1a4] sm:$0xf]
  %v137 = vld [vmem:[%s1 + $0x1a8] sm:$0xf]
  %v138 = vld [vmem:[%s1 + $0x1ac] sm:$0xf]
  %v139 = vld [vmem:[%s1 + $0x1b0] sm:$0xf]
  %v140 = vld [vmem:[%s1 + $0x1b4] sm:$0xf]
  %v141 = vld [vmem:[%s1 + $0x1b8] sm:$0xf]
  %v142 = vld [vmem:[%s1 + $0x1bc] sm:$0xf]
  %v143 = vld [vmem:[%s1 + $0x1c0] sm:$0xf]
  %v144 = vld [vmem:[%s1 + $0x1c4] sm:$0xf]
  %v145 = vld [vmem:[%s1 + $0x1c8] sm:$0xf]
  %v146 = vld [vmem:[%s1 + $0x1cc] sm:$0xf]
  %v147 = vld [vmem:[%s1 + $0x1d0] sm:$0xf]
  %v148 = vld [vmem:[%s1 + $0x1d4] sm:$0xf]
  %v149 = vld [vmem:[%s1 + $0x1d8] sm:$0xf]
  %v150 = vld [vmem:[%s1 + $0x1dc] sm:$0xf]
  %v151 = vld [vmem:[%s1 + $0x1e0] sm:$0xf]
  %v152 = vld [vmem:[%s1 + $0x1e4] sm:$0xf]
  %v153 = vld [vmem:[%s1 + $0x1e8] sm:$0xf]
  %v154 = vld [vmem:[%s1 + $0x1ec] sm:$0xf]
  %v155 = vld [vmem:[%s1 + $0x1f0] sm:$0xf]
  %v156 = vld [vmem:[%s1 + $0x1f4] sm:$0xf]
  %v157 = vld [vmem:[%s1 + $0x1f8] sm:$0xf]
  %v158 = vld [vmem:[%s1 + $0x1fc] sm:$0xf]
  %v159 = vld [vmem:[%s1 + $0x200] sm:$0xf]
  %v160 = vld [vmem:[%s1 + $0x204] sm:$0xf]
  %v161 = vld [vmem:[%s1 + $0x208] sm:$0xf]
  %v162 = vld [vmem:[%s1 + $0x20c] sm:$0xf]
  %v163 = vld [vmem:[%s1 + $0x210] sm:$0xf]
  %v164 = vld [vmem:[%s1 + $0x214] sm:$0xf]
  %v165 = vld [vmem:[%s1 + $0x218] sm:$0xf]
  %v166 = vld [vmem:[%s1 + $0x21c] sm:$0xf]
  %v167 = vld [vmem:[%s1 + $0x220] sm:$0xf]
  %v168 = vld [vmem:[%s1 + $0x224] sm:$0xf]
  %v169 = vld [vmem:[%s1 + $0x228] sm:$0xf]
  %v170 = vld [vmem:[%s1 + $0x22c] sm:$0xf]
  %v171 = vld [vmem:[%s1 + $0x230] sm:$0xf]
  %v172 = vld [vmem:[%s1 + $0x234] sm:$0xf]
  %v173 = vld [vmem:[%s1 + $0x238] sm:$0xf]
  %v174 = vld [vmem:[%s1 + $0x23c] sm:$0xf]
  %v175 = vld [vmem:[%s2] sm:$0x1]
  %v177 = vperm.slane %v175, 0
  %v184 = vunpack.c.l.b16 %v26
  %v185 = vunpack.c.h.b16 %v26
  %v186 = vunpack.c.l.b16 %v27
  %v187 = vunpack.c.h.b16 %v27
  %v188 = vunpack.c.l.b16 %v28
  %v189 = vunpack.c.h.b16 %v28
  %v190 = vunpack.c.l.b16 %v29
  %v191 = vunpack.c.h.b16 %v29
  %v192 = vunpack.c.l.b16 %v30
  %v193 = vpack.c.b16 %v184, %v184
  %v194 = vpack.c.b16 %v185, %v185
  %v195 = vpack.c.b16 %v186, %v186
  %v196 = vpack.c.b16 %v187, %v187
  %v197 = vpack.c.b16 %v188, %v188
  %v198 = vpack.c.b16 %v189, %v189
  %v199 = vpack.c.b16 %v190, %v190
  %v200 = vpack.c.b16 %v191, %v191
  %v201 = vpack.c.b16 %v192, %v192
  %v355 = vunpack.c.l.b16 %v31
  %v356 = vunpack.c.l.b16 %v32
  %v357 = vunpack.c.l.b16 %v33
  %v358 = vunpack.c.l.b16 %v34
  %v359 = vunpack.c.l.b16 %v35
  %v360 = vunpack.c.l.b16 %v36
  %v361 = vunpack.c.l.b16 %v37
  %v362 = vunpack.c.l.b16 %v38
  %v363 = vunpack.c.l.b16 %v39
  %v364 = vunpack.c.l.b16 %v40
  %v365 = vunpack.c.l.b16 %v41
  %v366 = vunpack.c.l.b16 %v42
  %v367 = vunpack.c.l.b16 %v43
  %v368 = vunpack.c.l.b16 %v44
  %v369 = vunpack.c.l.b16 %v45
  %v370 = vunpack.c.l.b16 %v46
  %v371 = vunpack.c.l.b16 %v47
  %v372 = vunpack.c.l.b16 %v48
  %v373 = vunpack.c.l.b16 %v49
  %v374 = vunpack.c.l.b16 %v50
  %v375 = vunpack.c.l.b16 %v51
  %v376 = vunpack.c.l.b16 %v52
  %v377 = vunpack.c.l.b16 %v53
  %v378 = vunpack.c.l.b16 %v54
  %v379 = vunpack.c.l.b16 %v55
  %v380 = vunpack.c.l.b16 %v56
  %v381 = vunpack.c.l.b16 %v57
  %v382 = vunpack.c.l.b16 %v58
  %v383 = vunpack.c.l.b16 %v59
  %v384 = vunpack.c.l.b16 %v60
  %v385 = vunpack.c.l.b16 %v61
  %v386 = vunpack.c.l.b16 %v62
  %v387 = vunpack.c.l.b16 %v63
  %v388 = vunpack.c.l.b16 %v64
  %v389 = vunpack.c.l.b16 %v65
  %v390 = vunpack.c.l.b16 %v66
  %v391 = vunpack.c.l.b16 %v67
  %v392 = vunpack.c.l.b16 %v68
  %v393 = vunpack.c.l.b16 %v69
  %v394 = vunpack.c.l.b16 %v70
  %v395 = vunpack.c.l.b16 %v71
  %v396 = vunpack.c.l.b16 %v72
  %v397 = vunpack.c.l.b16 %v73
  %v398 = vunpack.c.l.b16 %v74
  %v399 = vunpack.c.l.b16 %v75
  %v400 = vunpack.c.l.b16 %v76
  %v401 = vunpack.c.l.b16 %v77
  %v402 = vunpack.c.l.b16 %v78
  %v403 = vunpack.c.l.b16 %v79
  %v404 = vunpack.c.l.b16 %v80
  %v405 = vunpack.c.l.b16 %v81
  %v406 = vunpack.c.l.b16 %v82
  %v407 = vunpack.c.l.b16 %v83
  %v408 = vunpack.c.l.b16 %v84
  %v409 = vunpack.c.l.b16 %v85
  %v410 = vunpack.c.l.b16 %v86
  %v411 = vunpack.c.l.b16 %v87
  %v412 = vunpack.c.l.b16 %v88
  %v413 = vunpack.c.l.b16 %v89
  %v414 = vunpack.c.l.b16 %v90
  %v415 = vunpack.c.l.b16 %v91
  %v416 = vunpack.c.l.b16 %v92
  %v417 = vunpack.c.l.b16 %v93
  %v418 = vunpack.c.l.b16 %v94
  %v419 = vunpack.c.l.b16 %v95
  %v420 = vunpack.c.l.b16 %v96
  %v421 = vunpack.c.l.b16 %v97
  %v422 = vunpack.c.l.b16 %v98
  %v423 = vunpack.c.l.b16 %v99
  %v424 = vunpack.c.l.b16 %v100
  %v425 = vunpack.c.l.b16 %v101
  %v426 = vunpack.c.l.b16 %v102
  %v427 = vunpack.c.l.b16 %v103
  %v428 = vunpack.c.l.b16 %v104
  %v429 = vunpack.c.l.b16 %v105
  %v430 = vunpack.c.l.b16 %v106
  %v431 = vunpack.c.l.b16 %v107
  %v432 = vunpack.c.l.b16 %v108
  %v433 = vunpack.c.l.b16 %v109
  %v434 = vunpack.c.l.b16 %v110
  %v435 = vunpack.c.l.b16 %v111
  %v436 = vunpack.c.l.b16 %v112
  %v437 = vunpack.c.l.b16 %v113
  %v438 = vunpack.c.l.b16 %v114
  %v439 = vunpack.c.l.b16 %v115
  %v440 = vunpack.c.l.b16 %v116
  %v441 = vunpack.c.l.b16 %v117
  %v442 = vunpack.c.l.b16 %v118
  %v443 = vunpack.c.l.b16 %v119
  %v444 = vunpack.c.l.b16 %v120
  %v445 = vunpack.c.l.b16 %v121
  %v446 = vunpack.c.l.b16 %v122
  %v447 = vunpack.c.l.b16 %v123
  %v448 = vunpack.c.l.b16 %v124
  %v449 = vunpack.c.l.b16 %v125
  %v450 = vunpack.c.l.b16 %v126
  %v451 = vunpack.c.l.b16 %v127
  %v452 = vunpack.c.l.b16 %v128
  %v453 = vunpack.c.l.b16 %v129
  %v454 = vunpack.c.l.b16 %v130
  %v455 = vunpack.c.l.b16 %v131
  %v456 = vunpack.c.l.b16 %v132
  %v457 = vunpack.c.l.b16 %v133
  %v458 = vunpack.c.l.b16 %v134
  %v459 = vunpack.c.l.b16 %v135
  %v460 = vunpack.c.l.b16 %v136
  %v461 = vunpack.c.l.b16 %v137
  %v462 = vunpack.c.l.b16 %v138
  %v463 = vunpack.c.l.b16 %v139
  %v464 = vunpack.c.l.b16 %v140
  %v465 = vunpack.c.l.b16 %v141
  %v466 = vunpack.c.l.b16 %v142
  %v467 = vunpack.c.l.b16 %v143
  %v468 = vunpack.c.l.b16 %v144
  %v469 = vunpack.c.l.b16 %v145
  %v470 = vunpack.c.l.b16 %v146
  %v471 = vunpack.c.l.b16 %v147
  %v472 = vunpack.c.l.b16 %v148
  %v473 = vunpack.c.l.b16 %v149
  %v474 = vunpack.c.l.b16 %v150
  %v475 = vunpack.c.l.b16 %v151
  %v476 = vunpack.c.l.b16 %v152
  %v477 = vunpack.c.l.b16 %v153
  %v478 = vunpack.c.l.b16 %v154
  %v479 = vunpack.c.l.b16 %v155
  %v480 = vunpack.c.l.b16 %v156
  %v481 = vunpack.c.l.b16 %v157
  %v482 = vunpack.c.l.b16 %v158
  %v483 = vunpack.c.l.b16 %v159
  %v484 = vunpack.c.l.b16 %v160
  %v485 = vunpack.c.l.b16 %v161
  %v486 = vunpack.c.l.b16 %v162
  %v487 = vunpack.c.l.b16 %v163
  %v488 = vunpack.c.l.b16 %v164
  %v489 = vunpack.c.l.b16 %v165
  %v490 = vunpack.c.l.b16 %v166
  %v491 = vunpack.c.l.b16 %v167
  %v492 = vunpack.c.l.b16 %v168
  %v493 = vunpack.c.l.b16 %v169
  %v494 = vunpack.c.l.b16 %v170
  %v495 = vunpack.c.l.b16 %v171
  %v496 = vunpack.c.l.b16 %v172
  %v497 = vunpack.c.l.b16 %v173
  %v498 = vunpack.c.l.b16 %v174
  %v499 = vpack.c.b16 %v356, %v355
  %v500 = vpack.c.b16 %v358, %v357
  %v501 = vpack.c.b16 %v360, %v359
  %v502 = vpack.c.b16 %v362, %v361
  %v503 = vpack.c.b16 %v364, %v363
  %v504 = vpack.c.b16 %v366, %v365
  %v505 = vpack.c.b16 %v368, %v367
  %v506 = vpack.c.b16 %v370, %v369
  %v507 = vpack.c.b16 %v372, %v371
  %v508 = vpack.c.b16 %v374, %v373
  %v509 = vpack.c.b16 %v376, %v375
  %v510 = vpack.c.b16 %v378, %v377
  %v511 = vpack.c.b16 %v380, %v379
  %v512 = vpack.c.b16 %v382, %v381
  %v513 = vpack.c.b16 %v384, %v383
  %v514 = vpack.c.b16 %v386, %v385
  %v515 = vpack.c.b16 %v388, %v387
  %v516 = vpack.c.b16 %v390, %v389
  %v517 = vpack.c.b16 %v392, %v391
  %v518 = vpack.c.b16 %v394, %v393
  %v519 = vpack.c.b16 %v396, %v395
  %v520 = vpack.c.b16 %v398, %v397
  %v521 = vpack.c.b16 %v400, %v399
  %v522 = vpack.c.b16 %v402, %v401
  %v523 = vpack.c.b16 %v404, %v403
  %v524 = vpack.c.b16 %v406, %v405
  %v525 = vpack.c.b16 %v408, %v407
  %v526 = vpack.c.b16 %v410, %v409
  %v527 = vpack.c.b16 %v412, %v411
  %v528 = vpack.c.b16 %v414, %v413
  %v529 = vpack.c.b16 %v416, %v415
  %v530 = vpack.c.b16 %v418, %v417
  %v531 = vpack.c.b16 %v420, %v419
  %v532 = vpack.c.b16 %v422, %v421
  %v533 = vpack.c.b16 %v424, %v423
  %v534 = vpack.c.b16 %v426, %v425
  %v535 = vpack.c.b16 %v428, %v427
  %v536 = vpack.c.b16 %v430, %v429
  %v537 = vpack.c.b16 %v432, %v431
  %v538 = vpack.c.b16 %v434, %v433
  %v539 = vpack.c.b16 %v436, %v435
  %v540 = vpack.c.b16 %v438, %v437
  %v541 = vpack.c.b16 %v440, %v439
  %v542 = vpack.c.b16 %v442, %v441
  %v543 = vpack.c.b16 %v444, %v443
  %v544 = vpack.c.b16 %v446, %v445
  %v545 = vpack.c.b16 %v448, %v447
  %v546 = vpack.c.b16 %v450, %v449
  %v547 = vpack.c.b16 %v452, %v451
  %v548 = vpack.c.b16 %v454, %v453
  %v549 = vpack.c.b16 %v456, %v455
  %v550 = vpack.c.b16 %v458, %v457
  %v551 = vpack.c.b16 %v460, %v459
  %v552 = vpack.c.b16 %v462, %v461
  %v553 = vpack.c.b16 %v464, %v463
  %v554 = vpack.c.b16 %v466, %v465
  %v555 = vpack.c.b16 %v468, %v467
  %v556 = vpack.c.b16 %v470, %v469
  %v557 = vpack.c.b16 %v472, %v471
  %v558 = vpack.c.b16 %v474, %v473
  %v559 = vpack.c.b16 %v476, %v475
  %v560 = vpack.c.b16 %v478, %v477
  %v561 = vpack.c.b16 %v480, %v479
  %v562 = vpack.c.b16 %v482, %v481
  %v563 = vpack.c.b16 %v484, %v483
  %v564 = vpack.c.b16 %v486, %v485
  %v565 = vpack.c.b16 %v488, %v487
  %v566 = vpack.c.b16 %v490, %v489
  %v567 = vpack.c.b16 %v492, %v491
  %v568 = vpack.c.b16 %v494, %v493
  %v569 = vpack.c.b16 %v496, %v495
  %v570 = vpack.c.b16 %v498, %v497
  %643 = vmatpush.bf16.msra.mxu0 %v506
  %644 = vmatpush.bf16.msra.mxu0 %v505
  %645 = vmatpush.bf16.msra.mxu0 %v504
  %646 = vmatpush.bf16.msra.mxu0 %v503
  %647 = vmatpush.bf16.msra.mxu0 %v502
  %648 = vmatpush.bf16.msra.mxu0 %v501
  %649 = vmatpush.bf16.msra.mxu0 %v500
  %650 = vmatpush.bf16.msra.mxu0 %v499
  %651 = vmatmul.bf16.gmra.mxu0 %v193
  %v652 = vpop.f32.mrf.mxu0
  %v653 = vadd.f32 %v177, %v652
  %v654 = vpop.f32.mrf.mxu0
  %655 = vdwg.mxu0
  %656 = vmatpush.bf16.msra.mxu0 %v514
  %657 = vmatpush.bf16.msra.mxu0 %v513
  %658 = vmatpush.bf16.msra.mxu0 %v512
  %659 = vmatpush.bf16.msra.mxu0 %v511
  %660 = vmatpush.bf16.msra.mxu0 %v510
  %661 = vmatpush.bf16.msra.mxu0 %v509
  %662 = vmatpush.bf16.msra.mxu0 %v508
  %663 = vmatpush.bf16.msra.mxu0 %v507
  %664 = vmatmul.bf16.gmra.mxu0 %v194
  %v665 = vpop.f32.mrf.mxu0
  %v666 = vadd.f32 %v653, %v665
  %v667 = vpop.f32.mrf.mxu0
  %668 = vdwg.mxu0
  %669 = vmatpush.bf16.msra.mxu0 %v522
  %670 = vmatpush.bf16.msra.mxu0 %v521
  %671 = vmatpush.bf16.msra.mxu0 %v520
  %672 = vmatpush.bf16.msra.mxu0 %v519
  %673 = vmatpush.bf16.msra.mxu0 %v518
  %674 = vmatpush.bf16.msra.mxu0 %v517
  %675 = vmatpush.bf16.msra.mxu0 %v516
  %676 = vmatpush.bf16.msra.mxu0 %v515
  %677 = vmatmul.bf16.gmra.mxu0 %v195
  %v678 = vpop.f32.mrf.mxu0
  %v679 = vadd.f32 %v666, %v678
  %v680 = vpop.f32.mrf.mxu0
  %681 = vdwg.mxu0
  %682 = vmatpush.bf16.msra.mxu0 %v530
  %683 = vmatpush.bf16.msra.mxu0 %v529
  %684 = vmatpush.bf16.msra.mxu0 %v528
  %685 = vmatpush.bf16.msra.mxu0 %v527
  %686 = vmatpush.bf16.msra.mxu0 %v526
  %687 = vmatpush.bf16.msra.mxu0 %v525
  %688 = vmatpush.bf16.msra.mxu0 %v524
  %689 = vmatpush.bf16.msra.mxu0 %v523
  %690 = vmatmul.bf16.gmra.mxu0 %v196
  %v691 = vpop.f32.mrf.mxu0
  %v692 = vadd.f32 %v679, %v691
  %v693 = vpop.f32.mrf.mxu0
  %694 = vdwg.mxu0
  %695 = vmatpush.bf16.msra.mxu0 %v538
  %696 = vmatpush.bf16.msra.mxu0 %v537
  %697 = vmatpush.bf16.msra.mxu0 %v536
  %698 = vmatpush.bf16.msra.mxu0 %v535
  %699 = vmatpush.bf16.msra.mxu0 %v534
  %700 = vmatpush.bf16.msra.mxu0 %v533
  %701 = vmatpush.bf16.msra.mxu0 %v532
  %702 = vmatpush.bf16.msra.mxu0 %v531
  %703 = vmatmul.bf16.gmra.mxu0 %v197
  %v704 = vpop.f32.mrf.mxu0
  %v705 = vadd.f32 %v692, %v704
  %v706 = vpop.f32.mrf.mxu0
  %707 = vdwg.mxu0
  %708 = vmatpush.bf16.msra.mxu0 %v546
  %709 = vmatpush.bf16.msra.mxu0 %v545
  %710 = vmatpush.bf16.msra.mxu0 %v544
  %711 = vmatpush.bf16.msra.mxu0 %v543
  %712 = vmatpush.bf16.msra.mxu0 %v542
  %713 = vmatpush.bf16.msra.mxu0 %v541
  %714 = vmatpush.bf16.msra.mxu0 %v540
  %715 = vmatpush.bf16.msra.mxu0 %v539
  %716 = vmatmul.bf16.gmra.mxu0 %v198
  %v717 = vpop.f32.mrf.mxu0
  %v718 = vadd.f32 %v705, %v717
  %v719 = vpop.f32.mrf.mxu0
  %720 = vdwg.mxu0
  %721 = vmatpush.bf16.msra.mxu0 %v554
  %722 = vmatpush.bf16.msra.mxu0 %v553
  %723 = vmatpush.bf16.msra.mxu0 %v552
  %724 = vmatpush.bf16.msra.mxu0 %v551
  %725 = vmatpush.bf16.msra.mxu0 %v550
  %726 = vmatpush.bf16.msra.mxu0 %v549
  %727 = vmatpush.bf16.msra.mxu0 %v548
  %728 = vmatpush.bf16.msra.mxu0 %v547
  %729 = vmatmul.bf16.gmra.mxu0 %v199
  %v730 = vpop.f32.mrf.mxu0
  %v731 = vadd.f32 %v718, %v730
  %v732 = vpop.f32.mrf.mxu0
  %733 = vdwg.mxu0
  %734 = vmatpush.bf16.msra.mxu0 %v562
  %735 = vmatpush.bf16.msra.mxu0 %v561
  %736 = vmatpush.bf16.msra.mxu0 %v560
  %737 = vmatpush.bf16.msra.mxu0 %v559
  %738 = vmatpush.bf16.msra.mxu0 %v558
  %739 = vmatpush.bf16.msra.mxu0 %v557
  %740 = vmatpush.bf16.msra.mxu0 %v556
  %741 = vmatpush.bf16.msra.mxu0 %v555
  %742 = vmatmul.bf16.gmra.mxu0 %v200
  %v743 = vpop.f32.mrf.mxu0
  %v744 = vadd.f32 %v731, %v743
  %v745 = vpop.f32.mrf.mxu0
  %746 = vdwg.mxu0
  %747 = vmatpush.bf16.msra.mxu0 %v570
  %748 = vmatpush.bf16.msra.mxu0 %v569
  %749 = vmatpush.bf16.msra.mxu0 %v568
  %750 = vmatpush.bf16.msra.mxu0 %v567
  %751 = vmatpush.bf16.msra.mxu0 %v566
  %752 = vmatpush.bf16.msra.mxu0 %v565
  %753 = vmatpush.bf16.msra.mxu0 %v564
  %754 = vmatpush.bf16.msra.mxu0 %v563
  %755 = vmatmul.bf16.gmra.mxu0 %v201
  %v756 = vpop.f32.mrf.mxu0
  %v757 = vadd.f32 %v744, %v756
  %v758 = vpop.f32.mrf.mxu0
  %759 = vdwg.mxu0
  %vm760 = vcmp.gt.f32.partialorder %v757, 0.0
  %v761 = vmin.f32 %v757, 0.0
  %v762 = vmul.f32 %v761, 1.442695
  %v763 = vpow.pop %v762
  %v764 = vsub.f32 %v763, 1.0
  %v765 = vsel %vm760, %v757, %v764
  %v766 = vpack.c.bf16 %v765, %v765
  %v767 = vld [vmem:[%s3] sm:$0xf]
  %v768 = vld [vmem:[%s3 + $0x4] sm:$0xf]
  %v769 = vld [vmem:[%s3 + $0x8] sm:$0xf]
  %v770 = vld [vmem:[%s3 + $0xc] sm:$0xf]
  %v771 = vld [vmem:[%s3 + $0x10] sm:$0xf]
  %v772 = vld [vmem:[%s3 + $0x14] sm:$0xf]
  %v773 = vld [vmem:[%s3 + $0x18] sm:$0xf]
  %v774 = vld [vmem:[%s3 + $0x1c] sm:$0xf]
  %v775 = vld [vmem:[%s3 + $0x20] sm:$0xf]
  %v776 = vld [vmem:[%s3 + $0x24] sm:$0xf]
  %v777 = vld [vmem:[%s3 + $0x28] sm:$0xf]
  %v778 = vld [vmem:[%s3 + $0x2c] sm:$0xf]
  %v779 = vld [vmem:[%s3 + $0x30] sm:$0xf]
  %v780 = vld [vmem:[%s3 + $0x34] sm:$0xf]
  %v781 = vld [vmem:[%s3 + $0x38] sm:$0xf]
  %v782 = vld [vmem:[%s3 + $0x3c] sm:$0xf]
  %v783 = vld [vmem:[%s4] sm:$0x1]
  %v785 = vperm.slane %v783, 0
  %v803 = vunpack.c.l.b16 %v767
  %v804 = vunpack.c.l.b16 %v768
  %v805 = vunpack.c.l.b16 %v769
  %v806 = vunpack.c.l.b16 %v770
  %v807 = vunpack.c.l.b16 %v771
  %v808 = vunpack.c.l.b16 %v772
  %v809 = vunpack.c.l.b16 %v773
  %v810 = vunpack.c.l.b16 %v774
  %v811 = vunpack.c.l.b16 %v775
  %v812 = vunpack.c.l.b16 %v776
  %v813 = vunpack.c.l.b16 %v777
  %v814 = vunpack.c.l.b16 %v778
  %v815 = vunpack.c.l.b16 %v779
  %v816 = vunpack.c.l.b16 %v780
  %v817 = vunpack.c.l.b16 %v781
  %v818 = vunpack.c.l.b16 %v782
  %v819 = vpack.c.b16 %v804, %v803
  %v820 = vpack.c.b16 %v806, %v805
  %v821 = vpack.c.b16 %v808, %v807
  %v822 = vpack.c.b16 %v810, %v809
  %v823 = vpack.c.b16 %v812, %v811
  %v824 = vpack.c.b16 %v814, %v813
  %v825 = vpack.c.b16 %v816, %v815
  %v826 = vpack.c.b16 %v818, %v817
  %835 = vmatpush.bf16.msra.mxu0 %v826
  %836 = vmatpush.bf16.msra.mxu0 %v825
  %837 = vmatpush.bf16.msra.mxu0 %v824
  %838 = vmatpush.bf16.msra.mxu0 %v823
  %839 = vmatpush.bf16.msra.mxu0 %v822
  %840 = vmatpush.bf16.msra.mxu0 %v821
  %841 = vmatpush.bf16.msra.mxu0 %v820
  %842 = vmatpush.bf16.msra.mxu0 %v819
  %843 = vmatmul.bf16.gmra.mxu0 %v766
  %v844 = vpop.f32.mrf.mxu0
  %v845 = vadd.f32 %v785, %v844
  %v846 = vpop.f32.mrf.mxu0
  %847 = vdwg.mxu0
  %vm848 = vcmp.gt.f32.partialorder %v845, 0.0
  %v849 = vmin.f32 %v845, 0.0
  %v850 = vmul.f32 %v849, 1.442695
  %v851 = vpow.pop %v850
  %v852 = vsub.f32 %v851, 1.0
  %v853 = vsel %vm848, %v845, %v852
  %v854 = vpack.c.bf16 %v853, %v853
  %v855 = vld [vmem:[%s5] sm:$0xf]
  %v856 = vld [vmem:[%s5 + $0x4] sm:$0xf]
  %v857 = vld [vmem:[%s5 + $0x8] sm:$0xf]
  %v858 = vld [vmem:[%s5 + $0xc] sm:$0xf]
  %v859 = vld [vmem:[%s5 + $0x10] sm:$0xf]
  %v860 = vld [vmem:[%s5 + $0x14] sm:$0xf]
  %v861 = vld [vmem:[%s5 + $0x18] sm:$0xf]
  %v862 = vld [vmem:[%s5 + $0x1c] sm:$0xf]
  %v863 = vld [vmem:[%s5 + $0x20] sm:$0xf]
  %v864 = vld [vmem:[%s5 + $0x24] sm:$0xf]
  %v865 = vld [vmem:[%s5 + $0x28] sm:$0xf]
  %v866 = vld [vmem:[%s5 + $0x2c] sm:$0xf]
  %v867 = vld [vmem:[%s5 + $0x30] sm:$0xf]
  %v868 = vld [vmem:[%s5 + $0x34] sm:$0xf]
  %v869 = vld [vmem:[%s5 + $0x38] sm:$0xf]
  %v870 = vld [vmem:[%s5 + $0x3c] sm:$0xf]
  %v871 = vld [vmem:[%s6] sm:$0x1]
  %v873 = vperm.slane %v871, 0
  %v891 = vunpack.c.l.b16 %v855
  %v892 = vunpack.c.l.b16 %v856
  %v893 = vunpack.c.l.b16 %v857
  %v894 = vunpack.c.l.b16 %v858
  %v895 = vunpack.c.l.b16 %v859
  %v896 = vunpack.c.l.b16 %v860
  %v897 = vunpack.c.l.b16 %v861
  %v898 = vunpack.c.l.b16 %v862
  %v899 = vunpack.c.l.b16 %v863
  %v900 = vunpack.c.l.b16 %v864
  %v901 = vunpack.c.l.b16 %v865
  %v902 = vunpack.c.l.b16 %v866
  %v903 = vunpack.c.l.b16 %v867
  %v904 = vunpack.c.l.b16 %v868
  %v905 = vunpack.c.l.b16 %v869
  %v906 = vunpack.c.l.b16 %v870
  %v907 = vpack.c.b16 %v892, %v891
  %v908 = vpack.c.b16 %v894, %v893
  %v909 = vpack.c.b16 %v896, %v895
  %v910 = vpack.c.b16 %v898, %v897
  %v911 = vpack.c.b16 %v900, %v899
  %v912 = vpack.c.b16 %v902, %v901
  %v913 = vpack.c.b16 %v904, %v903
  %v914 = vpack.c.b16 %v906, %v905
  %923 = vmatpush.bf16.msra.mxu0 %v914
  %924 = vmatpush.bf16.msra.mxu0 %v913
  %925 = vmatpush.bf16.msra.mxu0 %v912
  %926 = vmatpush.bf16.msra.mxu0 %v911
  %927 = vmatpush.bf16.msra.mxu0 %v910
  %928 = vmatpush.bf16.msra.mxu0 %v909
  %929 = vmatpush.bf16.msra.mxu0 %v908
  %930 = vmatpush.bf16.msra.mxu0 %v907
  %931 = vmatmul.bf16.gmra.mxu0 %v854
  %v932 = vpop.f32.mrf.mxu0
  %v933 = vadd.f32 %v873, %v932
  %v934 = vpop.f32.mrf.mxu0
  %935 = vdwg.mxu0
  %v936 = vlaneseq
  %v937 = vand.u32 %v936, 127
  %vm938 = vcmp.lt.s32.totalorder %v937, 10
  %v939 = vsel %vm938, %v933, -1e+30
  %940 = vmax.xlane.f32.xlu0 %v939
  %v941 = vpop.xlane.xlu0 %940
  %v942 = vsub.f32 %v939, %v941
  %v943 = vmul.f32 %v942, 1.442695
  %v944 = vpow.pop %v943
  %945 = vadd.xlane.f32.xlu0 %v944
  %v946 = vpop.xlane.xlu0 %945
  %v947 = vrcp.pop %v946
  %v948 = vmul.f32 %v944, %v947
  %949 = vst [vmem:[%s7] sm:$0xff] %v948
  // Predicated region
  $region30: #{net_forward.11} parent=0 // pred_check
    _
  $region31: #{net_forward.11} parent=0 // pred_check_branch
    %951 = sbr.rel (0) target = $region33
  $region32: #{net_forward.11} parent=0 // pred_region
    _
  $region33: #{net_forward.11} parent=0 // pred_fallthru
    _
  // Predicated region
  $region34: #{net_forward.11} parent=0 // pred_check
    _
  $region35: #{net_forward.11} parent=0 // pred_check_branch
    %953 = sbr.rel (0) target = $region37
  $region36: #{net_forward.11} parent=0 // pred_region
    _
  $region37: #{net_forward.11} parent=0 // pred_fallthru
    _

</llo_original>
